<compile_context>
chip_gen: v7x
topology: tpu7x:2x2x1
jax: 0.10.0
libtpu: 0.0.40
codegen_flags: <defaults>
</compile_context>

<pallas_src>
import functools

import jax
import jax.numpy as jnp
from jax import lax
from jax.experimental import pallas as pl
from jax.experimental.pallas import tpu as pltpu


# ----------------------------------------------------------------------------
# Fused ResidualDenseBlock kernel (one image per grid step)
# ----------------------------------------------------------------------------
def _rdb_fused_kernel(*refs, C, G, L, H, W, dense_scale):
    # refs = (x_ref, mask_ref, bnw_ref, bnb_ref,
    #         w2d_0, b_0, ..., w2d_{L-1}, b_{L-1},     # per-layer conv params
    #         o_ref,                                   # (1, C, H*W) output
    #         feat_ref, col_ref)                       # VMEM scratch
    #
    # Internal layout: channels on sublanes, zero-padded spatial flattened onto
    # the lane axis (Np = (H+2)*(W+2)).  A 3x3 tap is then a pure lane shift.
    Hp, Wp = H + 2, W + 2
    Np = Hp * Wp

    x_ref = refs[0]
    mask_ref = refs[1]
    bnw_ref = refs[2]
    bnb_ref = refs[3]
    dense_refs = refs[4:4 + 2 * L]
    o_ref = refs[4 + 2 * L]
    feat_ref = refs[5 + 2 * L]
    col_ref = refs[6 + 2 * L]

    mask = mask_ref[...]                       # (1, Np) f32; 1 inside, 0 on halo

    # Seed the VMEM-resident feature buffer with the (already zero-padded) input.
    feat_ref[0:C, :] = x_ref[0]

    cin = C
    for i in range(L):
        w2d_ref = dense_refs[2 * i]            # (G, 9*cin)
        b_ref = dense_refs[2 * i + 1]          # (G, 1)

        # im2col: col[t*cin + c, p] = feat[c, p + d_t], with d_t the lane offset
        # of tap t in the padded-flat layout.  Shifted-out strips are zeroed so
        # every column of col is well defined (finite).
        for ky in range(3):
            for kx in range(3):
                t = ky * 3 + kx
                d = (ky - 1) * Wp + (kx - 1)
                r0 = t * cin
                if d > 0:
                    col_ref[r0:r0 + cin, 0:Np - d] = feat_ref[0:cin, d:Np]
                    col_ref[r0:r0 + cin, Np - d:Np] = jnp.zeros((cin, d),
                                                                jnp.float32)
                elif d < 0:
                    col_ref[r0:r0 + cin, -d:Np] = feat_ref[0:cin, 0:Np + d]
                    col_ref[r0:r0 + cin, 0:-d] = jnp.zeros((cin, -d),
                                                           jnp.float32)
                else:
                    col_ref[r0:r0 + cin, :] = feat_ref[0:cin, :]

        # One lane-dense MXU matmul per layer: (G, 9*cin) @ (9*cin, Np).
        acc = jnp.dot(w2d_ref[...], col_ref[0:9 * cin, :],
                      preferred_element_type=jnp.float32)
        acc = jnp.maximum(acc + b_ref[...], 0.0)
        if dense_scale != 1.0:                 # normally folded into the weights
            acc = acc * dense_scale
        # Zero the halo (so the next conv sees proper "same" padding) and append
        # the new channels: torch.cat is just a channel-slice write here.
        feat_ref[cin:cin + G, :] = acc * mask
        cin += G

    # 1x1 bottleneck (+ bias; res_scale pre-folded) + residual, one matmul.
    y = jnp.dot(bnw_ref[...], feat_ref[...], preferred_element_type=jnp.float32)
    y = y + bnb_ref[...] + feat_ref[0:C, :]
    col_ref[0:C, :] = y.astype(o_ref.dtype)

    # Drop the 1-pixel halo -> lane-dense (C, H*W) output block.
    for h in range(H):
        src = (h + 1) * Wp + 1
        o_ref[0, :, h * W:(h + 1) * W] = col_ref[0:C, src:src + W]


# ----------------------------------------------------------------------------
# Wrapper: parameter repacking + single fused pallas_call
# ----------------------------------------------------------------------------
def residual_dense_block(x_nchw, params, *, dense_scale=1.0, res_scale=1.0):
    """x_nchw: (N, C, H, W) float32 (PyTorch layout). Returns (N, C, H, W)."""
    N, C, H, W = x_nchw.shape
    L = len(params["dense"])
    G = params["dense"][0][0].shape[-1]
    Hp, Wp = H + 2, W + 2
    Np = Hp * Wp
    C_total = C + L * G

    # Zero-pad the halo once and flatten padded spatial onto the lane axis.
    # (Channels stay on sublanes, so NCHW needs no transpose at all.)
    xp = jnp.pad(x_nchw, ((0, 0), (0, 0), (1, 1), (1, 1))).reshape(N, C, Np)

    # Interior mask over the padded-flat spatial axis.
    mask = jnp.pad(jnp.ones((H, W), jnp.float32),
                   ((1, 1), (1, 1))).reshape(1, Np)

    # Fold dense_scale into the conv weights/bias (valid for dense_scale >= 0
    # because ReLU is positively homogeneous); otherwise apply it in-kernel.
    if dense_scale >= 0:
        fold_ds, k_ds = float(dense_scale), 1.0
    else:
        fold_ds, k_ds = 1.0, float(dense_scale)

    dense_inputs = []
    in_specs = [
        pl.BlockSpec((1, C, Np), lambda n: (n, 0, 0)),     # padded input
        pl.BlockSpec((1, Np), lambda n: (0, 0)),           # interior mask
        pl.BlockSpec((C, C_total), lambda n: (0, 0)),      # bottleneck weight
        pl.BlockSpec((C, 1), lambda n: (0, 0)),            # bottleneck bias
    ]
    cin = C
    for (w, b) in params["dense"]:
        # HWIO (3,3,cin,G) -> (G, 9*cin); tap-major / channel-minor matches the
        # kernel's im2col row order.
        w2d = jnp.transpose(w, (3, 0, 1, 2)).reshape(G, 9 * cin) * fold_ds
        dense_inputs.append(w2d)
        dense_inputs.append((b * fold_ds).reshape(G, 1))
        in_specs.append(pl.BlockSpec((G, 9 * cin), lambda n: (0, 0)))
        in_specs.append(pl.BlockSpec((G, 1), lambda n: (0, 0)))
        cin += G

    # Fold res_scale into the bottleneck weight/bias (always valid).
    bn_w = jnp.transpose(params["bn_w"]) * res_scale            # (C, C_total)
    bn_b = (params["bn_b"] * res_scale).reshape(C, 1)

    kern = functools.partial(_rdb_fused_kernel, C=C, G=G, L=L, H=H, W=W,
                             dense_scale=k_ds)

    # TODO(synk): for large H, W add a row-tile grid axis (halo'd blocks) so the
    # working set stays under v7x's 64 MiB VMEM and the pipeline has >2 steps.
    out = pl.pallas_call(
        kern,
        out_shape=jax.ShapeDtypeStruct((N, C, H * W), x_nchw.dtype),
        grid_spec=pltpu.PrefetchScalarGridSpec(
            num_scalar_prefetch=0,
            grid=(N,),
            in_specs=in_specs,
            out_specs=pl.BlockSpec((1, C, H * W), lambda n: (n, 0, 0)),
            scratch_shapes=[
                pltpu.VMEM((C_total, Np), jnp.float32),            # feature buf
                pltpu.VMEM((9 * (C_total - G), Np), jnp.float32),  # im2col buf
            ],
        ),
        compiler_params=pltpu.CompilerParams(
            dimension_semantics=("parallel",)),
    )(xp, mask, bn_w, bn_b, *dense_inputs)

    return out.reshape(N, C, H, W)


# ----------------------------------------------------------------------------
# Pure-JAX reference for verification
# ----------------------------------------------------------------------------
def residual_dense_block_ref(x_nchw, params, *, dense_scale=1.0, res_scale=1.0):
    x = jnp.transpose(x_nchw, (0, 2, 3, 1))
    dn = ("NHWC", "HWIO", "NHWC")
    res = x
    for (w, b) in params["dense"]:
        y = lax.conv_general_dilated(res, w, (1, 1), "SAME",
                                     dimension_numbers=dn) + b
        y = jnp.maximum(y, 0.0) * dense_scale
        res = jnp.concatenate([res, y], axis=-1)
    Cfeat = res.shape[-1]
    w1 = params["bn_w"].reshape(1, 1, Cfeat, -1)
    y = lax.conv_general_dilated(res, w1, (1, 1), "SAME",
                                 dimension_numbers=dn) + params["bn_b"]
    out = y * res_scale + x
    return jnp.transpose(out, (0, 3, 1, 2))


# ----------------------------------------------------------------------------
# Deterministic parameter init (shapes from ResidualDenseBlock.__init__)
# ----------------------------------------------------------------------------
def init_params(key, in_channels, growth_rate, n_dense_layers):
    params = {"dense": []}
    c = in_channels
    for _ in range(n_dense_layers):
        key, kw, kb = jax.random.split(key, 3)
        # stored in HWIO layout (kH, kW, Cin, Cout)
        w = jax.random.normal(kw, (3, 3, c, growth_rate), jnp.float32) * 0.05
        b = jax.random.normal(kb, (growth_rate,), jnp.float32) * 0.05
        params["dense"].append((w, b))
        c += growth_rate
    key, kw, kb = jax.random.split(key, 3)
    params["bn_w"] = jax.random.normal(kw, (c, in_channels), jnp.float32) * 0.05
    params["bn_b"] = jax.random.normal(kb, (in_channels,), jnp.float32) * 0.05
    return params


if __name__ == "__main__":
    N, C, H, W = 2, 4, 16, 16
    growth_rate = 4
    n_dense_layers = 8
    dense_scale = 1.0
    res_scale = 1.0

    key = jax.random.PRNGKey(0)
    key, kx = jax.random.split(key)
    x = jax.random.normal(kx, (N, C, H, W), jnp.float32)  # PyTorch NCHW input

    params = init_params(key, C, growth_rate, n_dense_layers)

    out = residual_dense_block(x, params,
                               dense_scale=dense_scale, res_scale=res_scale)
    out = jax.block_until_ready(out)

    ref = jax.block_until_ready(
        residual_dense_block_ref(x, params,
                                 dense_scale=dense_scale, res_scale=res_scale))

    assert out.shape == (N, C, H, W), out.shape
    assert jnp.allclose(out, ref, rtol=1e-3, atol=1e-3), \
        float(jnp.max(jnp.abs(out - ref)))

    print("KERNEL_OK")
</pallas_src>

<mosaic_0001>
module attributes {stable_mosaic.version = 11 : i64} {
  func.func @_rdb_fused_kernel(%arg0: i32, %arg1: memref<1x4x324xf32, #tpu.memory_space<vmem>>, %arg2: memref<1x324xf32, #tpu.memory_space<vmem>>, %arg3: memref<4x36xf32, #tpu.memory_space<vmem>>, %arg4: memref<4x1xf32, #tpu.memory_space<vmem>>, %arg5: memref<4x36xf32, #tpu.memory_space<vmem>>, %arg6: memref<4x1xf32, #tpu.memory_space<vmem>>, %arg7: memref<4x72xf32, #tpu.memory_space<vmem>>, %arg8: memref<4x1xf32, #tpu.memory_space<vmem>>, %arg9: memref<4x108xf32, #tpu.memory_space<vmem>>, %arg10: memref<4x1xf32, #tpu.memory_space<vmem>>, %arg11: memref<4x144xf32, #tpu.memory_space<vmem>>, %arg12: memref<4x1xf32, #tpu.memory_space<vmem>>, %arg13: memref<4x180xf32, #tpu.memory_space<vmem>>, %arg14: memref<4x1xf32, #tpu.memory_space<vmem>>, %arg15: memref<4x216xf32, #tpu.memory_space<vmem>>, %arg16: memref<4x1xf32, #tpu.memory_space<vmem>>, %arg17: memref<4x252xf32, #tpu.memory_space<vmem>>, %arg18: memref<4x1xf32, #tpu.memory_space<vmem>>, %arg19: memref<4x288xf32, #tpu.memory_space<vmem>>, %arg20: memref<4x1xf32, #tpu.memory_space<vmem>>, %arg21: memref<1x4x256xf32, #tpu.memory_space<vmem>>, %arg22: memref<36x324xf32, #tpu.memory_space<vmem>>, %arg23: memref<288x324xf32, #tpu.memory_space<vmem>>) attributes {dimension_semantics = [#tpu.dimension_semantics<parallel>], iteration_bounds = array<i64: 2>, scalar_prefetch = 0 : i64, scratch_operands = 2 : i64, tpu.core_type = #tpu.core_type<tc>, window_params = [{transform_indices = @transform_0, window_bounds = array<i64: 1, 4, 324>}, {pipeline_mode = #tpu.pipeline_mode<synchronous>, transform_indices = @transform_1, window_bounds = array<i64: 1, 324>}, {pipeline_mode = #tpu.pipeline_mode<synchronous>, transform_indices = @transform_2, window_bounds = array<i64: 4, 36>}, {pipeline_mode = #tpu.pipeline_mode<synchronous>, transform_indices = @transform_3, window_bounds = array<i64: 4, 1>}, {pipeline_mode = #tpu.pipeline_mode<synchronous>, transform_indices = @transform_4, window_bounds = array<i64: 4, 36>}, {pipeline_mode = #tpu.pipeline_mode<synchronous>, transform_indices = @transform_5, window_bounds = array<i64: 4, 1>}, {pipeline_mode = #tpu.pipeline_mode<synchronous>, transform_indices = @transform_6, window_bounds = array<i64: 4, 72>}, {pipeline_mode = #tpu.pipeline_mode<synchronous>, transform_indices = @transform_7, window_bounds = array<i64: 4, 1>}, {pipeline_mode = #tpu.pipeline_mode<synchronous>, transform_indices = @transform_8, window_bounds = array<i64: 4, 108>}, {pipeline_mode = #tpu.pipeline_mode<synchronous>, transform_indices = @transform_9, window_bounds = array<i64: 4, 1>}, {pipeline_mode = #tpu.pipeline_mode<synchronous>, transform_indices = @transform_10, window_bounds = array<i64: 4, 144>}, {pipeline_mode = #tpu.pipeline_mode<synchronous>, transform_indices = @transform_11, window_bounds = array<i64: 4, 1>}, {pipeline_mode = #tpu.pipeline_mode<synchronous>, transform_indices = @transform_12, window_bounds = array<i64: 4, 180>}, {pipeline_mode = #tpu.pipeline_mode<synchronous>, transform_indices = @transform_13, window_bounds = array<i64: 4, 1>}, {pipeline_mode = #tpu.pipeline_mode<synchronous>, transform_indices = @transform_14, window_bounds = array<i64: 4, 216>}, {pipeline_mode = #tpu.pipeline_mode<synchronous>, transform_indices = @transform_15, window_bounds = array<i64: 4, 1>}, {pipeline_mode = #tpu.pipeline_mode<synchronous>, transform_indices = @transform_16, window_bounds = array<i64: 4, 252>}, {pipeline_mode = #tpu.pipeline_mode<synchronous>, transform_indices = @transform_17, window_bounds = array<i64: 4, 1>}, {pipeline_mode = #tpu.pipeline_mode<synchronous>, transform_indices = @transform_18, window_bounds = array<i64: 4, 288>}, {pipeline_mode = #tpu.pipeline_mode<synchronous>, transform_indices = @transform_19, window_bounds = array<i64: 4, 1>}, {transform_indices = @transform_20, window_bounds = array<i64: 1, 4, 256>}]} {
    %c0 = arith.constant 0 : index
    %c0_0 = arith.constant 0 : index
    %0 = vector.load %arg2[%c0, %c0_0] : memref<1x324xf32, #tpu.memory_space<vmem>>, vector<1x324xf32>
    %c0_1 = arith.constant 0 : index
    %c0_2 = arith.constant 0 : index
    %c0_3 = arith.constant 0 : index
    %1 = vector.load %arg1[%c0_1, %c0_2, %c0_3] : memref<1x4x324xf32, #tpu.memory_space<vmem>>, vector<1x4x324xf32>
    %2 = vector.shape_cast %1 : vector<1x4x324xf32> to vector<4x324xf32>
    %c0_4 = arith.constant 0 : index
    %c0_5 = arith.constant 0 : index
    %3 = vector.load %arg22[%c0_4, %c0_5] : memref<36x324xf32, #tpu.memory_space<vmem>>, vector<4x324xf32>
    tpu.vector_store %arg22[%c0_4, %c0_5], %2 {strides = array<i32>} : memref<36x324xf32, #tpu.memory_space<vmem>>, vector<4x324xf32>,
    %c0_6 = arith.constant 0 : index
    %c0_7 = arith.constant 0 : index
    %4 = vector.load %arg22[%c0_6, %c0_7] : memref<36x324xf32, #tpu.memory_space<vmem>>, vector<4x305xf32>
    %c0_8 = arith.constant 0 : index
    %c19 = arith.constant 19 : index
    %5 = vector.load %arg23[%c0_8, %c19] : memref<288x324xf32, #tpu.memory_space<vmem>>, vector<4x305xf32>
    tpu.vector_store %arg23[%c0_8, %c19], %4 {strides = array<i32>} : memref<288x324xf32, #tpu.memory_space<vmem>>, vector<4x305xf32>,
    %cst = arith.constant 0.000000e+00 : f32
    %6 = vector.broadcast %cst : f32 to vector<4x19xf32>
    %c0_9 = arith.constant 0 : index
    %c0_10 = arith.constant 0 : index
    %7 = vector.load %arg23[%c0_9, %c0_10] : memref<288x324xf32, #tpu.memory_space<vmem>>, vector<4x19xf32>
    tpu.vector_store %arg23[%c0_9, %c0_10], %6 {strides = array<i32>} : memref<288x324xf32, #tpu.memory_space<vmem>>, vector<4x19xf32>,
    %c0_11 = arith.constant 0 : index
    %c0_12 = arith.constant 0 : index
    %8 = vector.load %arg22[%c0_11, %c0_12] : memref<36x324xf32, #tpu.memory_space<vmem>>, vector<4x306xf32>
    %c4 = arith.constant 4 : index
    %c18 = arith.constant 18 : index
    %9 = vector.load %arg23[%c4, %c18] : memref<288x324xf32, #tpu.memory_space<vmem>>, vector<4x306xf32>
    tpu.vector_store %arg23[%c4, %c18], %8 {strides = array<i32>} : memref<288x324xf32, #tpu.memory_space<vmem>>, vector<4x306xf32>,
    %cst_13 = arith.constant 0.000000e+00 : f32
    %10 = vector.broadcast %cst_13 : f32 to vector<4x18xf32>
    %c4_14 = arith.constant 4 : index
    %c0_15 = arith.constant 0 : index
    %11 = vector.load %arg23[%c4_14, %c0_15] : memref<288x324xf32, #tpu.memory_space<vmem>>, vector<4x18xf32>
    tpu.vector_store %arg23[%c4_14, %c0_15], %10 {strides = array<i32>} : memref<288x324xf32, #tpu.memory_space<vmem>>, vector<4x18xf32>,
    %c0_16 = arith.constant 0 : index
    %c0_17 = arith.constant 0 : index
    %12 = vector.load %arg22[%c0_16, %c0_17] : memref<36x324xf32, #tpu.memory_space<vmem>>, vector<4x307xf32>
    %c8 = arith.constant 8 : index
    %c17 = arith.constant 17 : index
    %13 = vector.load %arg23[%c8, %c17] : memref<288x324xf32, #tpu.memory_space<vmem>>, vector<4x307xf32>
    tpu.vector_store %arg23[%c8, %c17], %12 {strides = array<i32>} : memref<288x324xf32, #tpu.memory_space<vmem>>, vector<4x307xf32>,
    %cst_18 = arith.constant 0.000000e+00 : f32
    %14 = vector.broadcast %cst_18 : f32 to vector<4x17xf32>
    %c8_19 = arith.constant 8 : index
    %c0_20 = arith.constant 0 : index
    %15 = vector.load %arg23[%c8_19, %c0_20] : memref<288x324xf32, #tpu.memory_space<vmem>>, vector<4x17xf32>
    tpu.vector_store %arg23[%c8_19, %c0_20], %14 {strides = array<i32>} : memref<288x324xf32, #tpu.memory_space<vmem>>, vector<4x17xf32>,
    %c0_21 = arith.constant 0 : index
    %c0_22 = arith.constant 0 : index
    %16 = vector.load %arg22[%c0_21, %c0_22] : memref<36x324xf32, #tpu.memory_space<vmem>>, vector<4x323xf32>
    %c12 = arith.constant 12 : index
    %c1 = arith.constant 1 : index
    %17 = vector.load %arg23[%c12, %c1] : memref<288x324xf32, #tpu.memory_space<vmem>>, vector<4x323xf32>
    tpu.vector_store %arg23[%c12, %c1], %16 {strides = array<i32>} : memref<288x324xf32, #tpu.memory_space<vmem>>, vector<4x323xf32>,
    %cst_23 = arith.constant 0.000000e+00 : f32
    %18 = vector.broadcast %cst_23 : f32 to vector<4x1xf32>
    %c12_24 = arith.constant 12 : index
    %c0_25 = arith.constant 0 : index
    %19 = vector.load %arg23[%c12_24, %c0_25] : memref<288x324xf32, #tpu.memory_space<vmem>>, vector<4x1xf32>
    tpu.vector_store %arg23[%c12_24, %c0_25], %18 {strides = array<i32>} : memref<288x324xf32, #tpu.memory_space<vmem>>, vector<4x1xf32>,
    %c0_26 = arith.constant 0 : index
    %c0_27 = arith.constant 0 : index
    %20 = vector.load %arg22[%c0_26, %c0_27] : memref<36x324xf32, #tpu.memory_space<vmem>>, vector<4x324xf32>
    %c16 = arith.constant 16 : index
    %c0_28 = arith.constant 0 : index
    %21 = vector.load %arg23[%c16, %c0_28] : memref<288x324xf32, #tpu.memory_space<vmem>>, vector<4x324xf32>
    tpu.vector_store %arg23[%c16, %c0_28], %20 {strides = array<i32>} : memref<288x324xf32, #tpu.memory_space<vmem>>, vector<4x324xf32>,
    %c0_29 = arith.constant 0 : index
    %c1_30 = arith.constant 1 : index
    %22 = vector.load %arg22[%c0_29, %c1_30] : memref<36x324xf32, #tpu.memory_space<vmem>>, vector<4x323xf32>
    %c20 = arith.constant 20 : index
    %c0_31 = arith.constant 0 : index
    %23 = vector.load %arg23[%c20, %c0_31] : memref<288x324xf32, #tpu.memory_space<vmem>>, vector<4x323xf32>
    tpu.vector_store %arg23[%c20, %c0_31], %22 {strides = array<i32>} : memref<288x324xf32, #tpu.memory_space<vmem>>, vector<4x323xf32>,
    %cst_32 = arith.constant 0.000000e+00 : f32
    %24 = vector.broadcast %cst_32 : f32 to vector<4x1xf32>
    %c20_33 = arith.constant 20 : index
    %c323 = arith.constant 323 : index
    %25 = vector.load %arg23[%c20_33, %c323] : memref<288x324xf32, #tpu.memory_space<vmem>>, vector<4x1xf32>
    tpu.vector_store %arg23[%c20_33, %c323], %24 {strides = array<i32>} : memref<288x324xf32, #tpu.memory_space<vmem>>, vector<4x1xf32>,
    %c0_34 = arith.constant 0 : index
    %c17_35 = arith.constant 17 : index
    %26 = vector.load %arg22[%c0_34, %c17_35] : memref<36x324xf32, #tpu.memory_space<vmem>>, vector<4x307xf32>
    %c24 = arith.constant 24 : index
    %c0_36 = arith.constant 0 : index
    %27 = vector.load %arg23[%c24, %c0_36] : memref<288x324xf32, #tpu.memory_space<vmem>>, vector<4x307xf32>
    tpu.vector_store %arg23[%c24, %c0_36], %26 {strides = array<i32>} : memref<288x324xf32, #tpu.memory_space<vmem>>, vector<4x307xf32>,
    %cst_37 = arith.constant 0.000000e+00 : f32
    %28 = vector.broadcast %cst_37 : f32 to vector<4x17xf32>
    %c24_38 = arith.constant 24 : index
    %c307 = arith.constant 307 : index
    %29 = vector.load %arg23[%c24_38, %c307] : memref<288x324xf32, #tpu.memory_space<vmem>>, vector<4x17xf32>
    tpu.vector_store %arg23[%c24_38, %c307], %28 {strides = array<i32>} : memref<288x324xf32, #tpu.memory_space<vmem>>, vector<4x17xf32>,
    %c0_39 = arith.constant 0 : index
    %c18_40 = arith.constant 18 : index
    %30 = vector.load %arg22[%c0_39, %c18_40] : memref<36x324xf32, #tpu.memory_space<vmem>>, vector<4x306xf32>
    %c28 = arith.constant 28 : index
    %c0_41 = arith.constant 0 : index
    %31 = vector.load %arg23[%c28, %c0_41] : memref<288x324xf32, #tpu.memory_space<vmem>>, vector<4x306xf32>
    tpu.vector_store %arg23[%c28, %c0_41], %30 {strides = array<i32>} : memref<288x324xf32, #tpu.memory_space<vmem>>, vector<4x306xf32>,
    %cst_42 = arith.constant 0.000000e+00 : f32
    %32 = vector.broadcast %cst_42 : f32 to vector<4x18xf32>
    %c28_43 = arith.constant 28 : index
    %c306 = arith.constant 306 : index
    %33 = vector.load %arg23[%c28_43, %c306] : memref<288x324xf32, #tpu.memory_space<vmem>>, vector<4x18xf32>
    tpu.vector_store %arg23[%c28_43, %c306], %32 {strides = array<i32>} : memref<288x324xf32, #tpu.memory_space<vmem>>, vector<4x18xf32>,
    %c0_44 = arith.constant 0 : index
    %c19_45 = arith.constant 19 : index
    %34 = vector.load %arg22[%c0_44, %c19_45] : memref<36x324xf32, #tpu.memory_space<vmem>>, vector<4x305xf32>
    %c32 = arith.constant 32 : index
    %c0_46 = arith.constant 0 : index
    %35 = vector.load %arg23[%c32, %c0_46] : memref<288x324xf32, #tpu.memory_space<vmem>>, vector<4x305xf32>
    tpu.vector_store %arg23[%c32, %c0_46], %34 {strides = array<i32>} : memref<288x324xf32, #tpu.memory_space<vmem>>, vector<4x305xf32>,
    %cst_47 = arith.constant 0.000000e+00 : f32
    %36 = vector.broadcast %cst_47 : f32 to vector<4x19xf32>
    %c32_48 = arith.constant 32 : index
    %c305 = arith.constant 305 : index
    %37 = vector.load %arg23[%c32_48, %c305] : memref<288x324xf32, #tpu.memory_space<vmem>>, vector<4x19xf32>
    tpu.vector_store %arg23[%c32_48, %c305], %36 {strides = array<i32>} : memref<288x324xf32, #tpu.memory_space<vmem>>, vector<4x19xf32>,
    %c0_49 = arith.constant 0 : index
    %c0_50 = arith.constant 0 : index
    %38 = vector.load %arg5[%c0_49, %c0_50] : memref<4x36xf32, #tpu.memory_space<vmem>>, vector<4x36xf32>
    %c0_51 = arith.constant 0 : index
    %c0_52 = arith.constant 0 : index
    %39 = vector.load %arg23[%c0_51, %c0_52] : memref<288x324xf32, #tpu.memory_space<vmem>>, vector<36x324xf32>
    %cst_53 = arith.constant dense<0.000000e+00> : vector<4x324xf32>
    %40 = tpu.matmul %38, %39, %cst_53 {dimension_numbers = #tpu.dot_dimension_numbers<[1], [0], [0], [1], [0, 0, 1, 1], [], []>} : vector<4x36xf32>, vector<36x324xf32>, vector<4x324xf32> -> vector<4x324xf32>
    %c0_54 = arith.constant 0 : index
    %c0_55 = arith.constant 0 : index
    %41 = vector.load %arg6[%c0_54, %c0_55] : memref<4x1xf32, #tpu.memory_space<vmem>>, vector<4x1xf32>
    %42 = vector.broadcast %41 : vector<4x1xf32> to vector<4x324xf32>
    %43 = arith.addf %40, %42 : vector<4x324xf32>
    %cst_56 = arith.constant 0.000000e+00 : f32
    %44 = vector.broadcast %cst_56 : f32 to vector<4x324xf32>
    %45 = arith.maximumf %43, %44 : vector<4x324xf32>
    %46 = vector.broadcast %0 : vector<1x324xf32> to vector<4x324xf32>
    %47 = arith.mulf %45, %46 : vector<4x324xf32>
    %c4_57 = arith.constant 4 : index
    %c0_58 = arith.constant 0 : index
    %48 = vector.load %arg22[%c4_57, %c0_58] : memref<36x324xf32, #tpu.memory_space<vmem>>, vector<4x324xf32>
    tpu.vector_store %arg22[%c4_57, %c0_58], %47 {strides = array<i32>} : memref<36x324xf32, #tpu.memory_space<vmem>>, vector<4x324xf32>,
    %c0_59 = arith.constant 0 : index
    %c0_60 = arith.constant 0 : index
    %49 = vector.load %arg22[%c0_59, %c0_60] : memref<36x324xf32, #tpu.memory_space<vmem>>, vector<8x305xf32>
    %c0_61 = arith.constant 0 : index
    %c19_62 = arith.constant 19 : index
    %50 = vector.load %arg23[%c0_61, %c19_62] : memref<288x324xf32, #tpu.memory_space<vmem>>, vector<8x305xf32>
    tpu.vector_store %arg23[%c0_61, %c19_62], %49 {strides = array<i32>} : memref<288x324xf32, #tpu.memory_space<vmem>>, vector<8x305xf32>,
    %cst_63 = arith.constant 0.000000e+00 : f32
    %51 = vector.broadcast %cst_63 : f32 to vector<8x19xf32>
    %c0_64 = arith.constant 0 : index
    %c0_65 = arith.constant 0 : index
    %52 = vector.load %arg23[%c0_64, %c0_65] : memref<288x324xf32, #tpu.memory_space<vmem>>, vector<8x19xf32>
    tpu.vector_store %arg23[%c0_64, %c0_65], %51 {strides = array<i32>} : memref<288x324xf32, #tpu.memory_space<vmem>>, vector<8x19xf32>,
    %c0_66 = arith.constant 0 : index
    %c0_67 = arith.constant 0 : index
    %53 = vector.load %arg22[%c0_66, %c0_67] : memref<36x324xf32, #tpu.memory_space<vmem>>, vector<8x306xf32>
    %c8_68 = arith.constant 8 : index
    %c18_69 = arith.constant 18 : index
    %54 = vector.load %arg23[%c8_68, %c18_69] : memref<288x324xf32, #tpu.memory_space<vmem>>, vector<8x306xf32>
    tpu.vector_store %arg23[%c8_68, %c18_69], %53 {strides = array<i32>} : memref<288x324xf32, #tpu.memory_space<vmem>>, vector<8x306xf32>,
    %cst_70 = arith.constant 0.000000e+00 : f32
    %55 = vector.broadcast %cst_70 : f32 to vector<8x18xf32>
    %c8_71 = arith.constant 8 : index
    %c0_72 = arith.constant 0 : index
    %56 = vector.load %arg23[%c8_71, %c0_72] : memref<288x324xf32, #tpu.memory_space<vmem>>, vector<8x18xf32>
    tpu.vector_store %arg23[%c8_71, %c0_72], %55 {strides = array<i32>} : memref<288x324xf32, #tpu.memory_space<vmem>>, vector<8x18xf32>,
    %c0_73 = arith.constant 0 : index
    %c0_74 = arith.constant 0 : index
    %57 = vector.load %arg22[%c0_73, %c0_74] : memref<36x324xf32, #tpu.memory_space<vmem>>, vector<8x307xf32>
    %c16_75 = arith.constant 16 : index
    %c17_76 = arith.constant 17 : index
    %58 = vector.load %arg23[%c16_75, %c17_76] : memref<288x324xf32, #tpu.memory_space<vmem>>, vector<8x307xf32>
    tpu.vector_store %arg23[%c16_75, %c17_76], %57 {strides = array<i32>} : memref<288x324xf32, #tpu.memory_space<vmem>>, vector<8x307xf32>,
    %cst_77 = arith.constant 0.000000e+00 : f32
    %59 = vector.broadcast %cst_77 : f32 to vector<8x17xf32>
    %c16_78 = arith.constant 16 : index
    %c0_79 = arith.constant 0 : index
    %60 = vector.load %arg23[%c16_78, %c0_79] : memref<288x324xf32, #tpu.memory_space<vmem>>, vector<8x17xf32>
    tpu.vector_store %arg23[%c16_78, %c0_79], %59 {strides = array<i32>} : memref<288x324xf32, #tpu.memory_space<vmem>>, vector<8x17xf32>,
    %c0_80 = arith.constant 0 : index
    %c0_81 = arith.constant 0 : index
    %61 = vector.load %arg22[%c0_80, %c0_81] : memref<36x324xf32, #tpu.memory_space<vmem>>, vector<8x323xf32>
    %c24_82 = arith.constant 24 : index
    %c1_83 = arith.constant 1 : index
    %62 = vector.load %arg23[%c24_82, %c1_83] : memref<288x324xf32, #tpu.memory_space<vmem>>, vector<8x323xf32>
    tpu.vector_store %arg23[%c24_82, %c1_83], %61 {strides = array<i32>} : memref<288x324xf32, #tpu.memory_space<vmem>>, vector<8x323xf32>,
    %cst_84 = arith.constant 0.000000e+00 : f32
    %63 = vector.broadcast %cst_84 : f32 to vector<8x1xf32>
    %c24_85 = arith.constant 24 : index
    %c0_86 = arith.constant 0 : index
    %64 = vector.load %arg23[%c24_85, %c0_86] : memref<288x324xf32, #tpu.memory_space<vmem>>, vector<8x1xf32>
    tpu.vector_store %arg23[%c24_85, %c0_86], %63 {strides = array<i32>} : memref<288x324xf32, #tpu.memory_space<vmem>>, vector<8x1xf32>,
    %c0_87 = arith.constant 0 : index
    %c0_88 = arith.constant 0 : index
    %65 = vector.load %arg22[%c0_87, %c0_88] : memref<36x324xf32, #tpu.memory_space<vmem>>, vector<8x324xf32>
    %c32_89 = arith.constant 32 : index
    %c0_90 = arith.constant 0 : index
    %66 = vector.load %arg23[%c32_89, %c0_90] : memref<288x324xf32, #tpu.memory_space<vmem>>, vector<8x324xf32>
    tpu.vector_store %arg23[%c32_89, %c0_90], %65 {strides = array<i32>} : memref<288x324xf32, #tpu.memory_space<vmem>>, vector<8x324xf32>,
    %c0_91 = arith.constant 0 : index
    %c1_92 = arith.constant 1 : index
    %67 = vector.load %arg22[%c0_91, %c1_92] : memref<36x324xf32, #tpu.memory_space<vmem>>, vector<8x323xf32>
    %c40 = arith.constant 40 : index
    %c0_93 = arith.constant 0 : index
    %68 = vector.load %arg23[%c40, %c0_93] : memref<288x324xf32, #tpu.memory_space<vmem>>, vector<8x323xf32>
    tpu.vector_store %arg23[%c40, %c0_93], %67 {strides = array<i32>} : memref<288x324xf32, #tpu.memory_space<vmem>>, vector<8x323xf32>,
    %cst_94 = arith.constant 0.000000e+00 : f32
    %69 = vector.broadcast %cst_94 : f32 to vector<8x1xf32>
    %c40_95 = arith.constant 40 : index
    %c323_96 = arith.constant 323 : index
    %70 = vector.load %arg23[%c40_95, %c323_96] : memref<288x324xf32, #tpu.memory_space<vmem>>, vector<8x1xf32>
    tpu.vector_store %arg23[%c40_95, %c323_96], %69 {strides = array<i32>} : memref<288x324xf32, #tpu.memory_space<vmem>>, vector<8x1xf32>,
    %c0_97 = arith.constant 0 : index
    %c17_98 = arith.constant 17 : index
    %71 = vector.load %arg22[%c0_97, %c17_98] : memref<36x324xf32, #tpu.memory_space<vmem>>, vector<8x307xf32>
    %c48 = arith.constant 48 : index
    %c0_99 = arith.constant 0 : index
    %72 = vector.load %arg23[%c48, %c0_99] : memref<288x324xf32, #tpu.memory_space<vmem>>, vector<8x307xf32>
    tpu.vector_store %arg23[%c48, %c0_99], %71 {strides = array<i32>} : memref<288x324xf32, #tpu.memory_space<vmem>>, vector<8x307xf32>,
    %cst_100 = arith.constant 0.000000e+00 : f32
    %73 = vector.broadcast %cst_100 : f32 to vector<8x17xf32>
    %c48_101 = arith.constant 48 : index
    %c307_102 = arith.constant 307 : index
    %74 = vector.load %arg23[%c48_101, %c307_102] : memref<288x324xf32, #tpu.memory_space<vmem>>, vector<8x17xf32>
    tpu.vector_store %arg23[%c48_101, %c307_102], %73 {strides = array<i32>} : memref<288x324xf32, #tpu.memory_space<vmem>>, vector<8x17xf32>,
    %c0_103 = arith.constant 0 : index
    %c18_104 = arith.constant 18 : index
    %75 = vector.load %arg22[%c0_103, %c18_104] : memref<36x324xf32, #tpu.memory_space<vmem>>, vector<8x306xf32>
    %c56 = arith.constant 56 : index
    %c0_105 = arith.constant 0 : index
    %76 = vector.load %arg23[%c56, %c0_105] : memref<288x324xf32, #tpu.memory_space<vmem>>, vector<8x306xf32>
    tpu.vector_store %arg23[%c56, %c0_105], %75 {strides = array<i32>} : memref<288x324xf32, #tpu.memory_space<vmem>>, vector<8x306xf32>,
    %cst_106 = arith.constant 0.000000e+00 : f32
    %77 = vector.broadcast %cst_106 : f32 to vector<8x18xf32>
    %c56_107 = arith.constant 56 : index
    %c306_108 = arith.constant 306 : index
    %78 = vector.load %arg23[%c56_107, %c306_108] : memref<288x324xf32, #tpu.memory_space<vmem>>, vector<8x18xf32>
    tpu.vector_store %arg23[%c56_107, %c306_108], %77 {strides = array<i32>} : memref<288x324xf32, #tpu.memory_space<vmem>>, vector<8x18xf32>,
    %c0_109 = arith.constant 0 : index
    %c19_110 = arith.constant 19 : index
    %79 = vector.load %arg22[%c0_109, %c19_110] : memref<36x324xf32, #tpu.memory_space<vmem>>, vector<8x305xf32>
    %c64 = arith.constant 64 : index
    %c0_111 = arith.constant 0 : index
    %80 = vector.load %arg23[%c64, %c0_111] : memref<288x324xf32, #tpu.memory_space<vmem>>, vector<8x305xf32>
    tpu.vector_store %arg23[%c64, %c0_111], %79 {strides = array<i32>} : memref<288x324xf32, #tpu.memory_space<vmem>>, vector<8x305xf32>,
    %cst_112 = arith.constant 0.000000e+00 : f32
    %81 = vector.broadcast %cst_112 : f32 to vector<8x19xf32>
    %c64_113 = arith.constant 64 : index
    %c305_114 = arith.constant 305 : index
    %82 = vector.load %arg23[%c64_113, %c305_114] : memref<288x324xf32, #tpu.memory_space<vmem>>, vector<8x19xf32>
    tpu.vector_store %arg23[%c64_113, %c305_114], %81 {strides = array<i32>} : memref<288x324xf32, #tpu.memory_space<vmem>>, vector<8x19xf32>,
    %c0_115 = arith.constant 0 : index
    %c0_116 = arith.constant 0 : index
    %83 = vector.load %arg7[%c0_115, %c0_116] : memref<4x72xf32, #tpu.memory_space<vmem>>, vector<4x72xf32>
    %c0_117 = arith.constant 0 : index
    %c0_118 = arith.constant 0 : index
    %84 = vector.load %arg23[%c0_117, %c0_118] : memref<288x324xf32, #tpu.memory_space<vmem>>, vector<72x324xf32>
    %cst_119 = arith.constant dense<0.000000e+00> : vector<4x324xf32>
    %85 = tpu.matmul %83, %84, %cst_119 {dimension_numbers = #tpu.dot_dimension_numbers<[1], [0], [0], [1], [0, 0, 1, 1], [], []>} : vector<4x72xf32>, vector<72x324xf32>, vector<4x324xf32> -> vector<4x324xf32>
    %c0_120 = arith.constant 0 : index
    %c0_121 = arith.constant 0 : index
    %86 = vector.load %arg8[%c0_120, %c0_121] : memref<4x1xf32, #tpu.memory_space<vmem>>, vector<4x1xf32>
    %87 = vector.broadcast %86 : vector<4x1xf32> to vector<4x324xf32>
    %88 = arith.addf %85, %87 : vector<4x324xf32>
    %cst_122 = arith.constant 0.000000e+00 : f32
    %89 = vector.broadcast %cst_122 : f32 to vector<4x324xf32>
    %90 = arith.maximumf %88, %89 : vector<4x324xf32>
    %91 = vector.broadcast %0 : vector<1x324xf32> to vector<4x324xf32>
    %92 = arith.mulf %90, %91 : vector<4x324xf32>
    %c8_123 = arith.constant 8 : index
    %c0_124 = arith.constant 0 : index
    %93 = vector.load %arg22[%c8_123, %c0_124] : memref<36x324xf32, #tpu.memory_space<vmem>>, vector<4x324xf32>
    tpu.vector_store %arg22[%c8_123, %c0_124], %92 {strides = array<i32>} : memref<36x324xf32, #tpu.memory_space<vmem>>, vector<4x324xf32>,
    %c0_125 = arith.constant 0 : index
    %c0_126 = arith.constant 0 : index
    %94 = vector.load %arg22[%c0_125, %c0_126] : memref<36x324xf32, #tpu.memory_space<vmem>>, vector<12x305xf32>
    %c0_127 = arith.constant 0 : index
    %c19_128 = arith.constant 19 : index
    %95 = vector.load %arg23[%c0_127, %c19_128] : memref<288x324xf32, #tpu.memory_space<vmem>>, vector<12x305xf32>
    tpu.vector_store %arg23[%c0_127, %c19_128], %94 {strides = array<i32>} : memref<288x324xf32, #tpu.memory_space<vmem>>, vector<12x305xf32>,
    %cst_129 = arith.constant 0.000000e+00 : f32
    %96 = vector.broadcast %cst_129 : f32 to vector<12x19xf32>
    %c0_130 = arith.constant 0 : index
    %c0_131 = arith.constant 0 : index
    %97 = vector.load %arg23[%c0_130, %c0_131] : memref<288x324xf32, #tpu.memory_space<vmem>>, vector<12x19xf32>
    tpu.vector_store %arg23[%c0_130, %c0_131], %96 {strides = array<i32>} : memref<288x324xf32, #tpu.memory_space<vmem>>, vector<12x19xf32>,
    %c0_132 = arith.constant 0 : index
    %c0_133 = arith.constant 0 : index
    %98 = vector.load %arg22[%c0_132, %c0_133] : memref<36x324xf32, #tpu.memory_space<vmem>>, vector<12x306xf32>
    %c12_134 = arith.constant 12 : index
    %c18_135 = arith.constant 18 : index
    %99 = vector.load %arg23[%c12_134, %c18_135] : memref<288x324xf32, #tpu.memory_space<vmem>>, vector<12x306xf32>
    tpu.vector_store %arg23[%c12_134, %c18_135], %98 {strides = array<i32>} : memref<288x324xf32, #tpu.memory_space<vmem>>, vector<12x306xf32>,
    %cst_136 = arith.constant 0.000000e+00 : f32
    %100 = vector.broadcast %cst_136 : f32 to vector<12x18xf32>
    %c12_137 = arith.constant 12 : index
    %c0_138 = arith.constant 0 : index
    %101 = vector.load %arg23[%c12_137, %c0_138] : memref<288x324xf32, #tpu.memory_space<vmem>>, vector<12x18xf32>
    tpu.vector_store %arg23[%c12_137, %c0_138], %100 {strides = array<i32>} : memref<288x324xf32, #tpu.memory_space<vmem>>, vector<12x18xf32>,
    %c0_139 = arith.constant 0 : index
    %c0_140 = arith.constant 0 : index
    %102 = vector.load %arg22[%c0_139, %c0_140] : memref<36x324xf32, #tpu.memory_space<vmem>>, vector<12x307xf32>
    %c24_141 = arith.constant 24 : index
    %c17_142 = arith.constant 17 : index
    %103 = vector.load %arg23[%c24_141, %c17_142] : memref<288x324xf32, #tpu.memory_space<vmem>>, vector<12x307xf32>
    tpu.vector_store %arg23[%c24_141, %c17_142], %102 {strides = array<i32>} : memref<288x324xf32, #tpu.memory_space<vmem>>, vector<12x307xf32>,
    %cst_143 = arith.constant 0.000000e+00 : f32
    %104 = vector.broadcast %cst_143 : f32 to vector<12x17xf32>
    %c24_144 = arith.constant 24 : index
    %c0_145 = arith.constant 0 : index
    %105 = vector.load %arg23[%c24_144, %c0_145] : memref<288x324xf32, #tpu.memory_space<vmem>>, vector<12x17xf32>
    tpu.vector_store %arg23[%c24_144, %c0_145], %104 {strides = array<i32>} : memref<288x324xf32, #tpu.memory_space<vmem>>, vector<12x17xf32>,
    %c0_146 = arith.constant 0 : index
    %c0_147 = arith.constant 0 : index
    %106 = vector.load %arg22[%c0_146, %c0_147] : memref<36x324xf32, #tpu.memory_space<vmem>>, vector<12x323xf32>
    %c36 = arith.constant 36 : index
    %c1_148 = arith.constant 1 : index
    %107 = vector.load %arg23[%c36, %c1_148] : memref<288x324xf32, #tpu.memory_space<vmem>>, vector<12x323xf32>
    tpu.vector_store %arg23[%c36, %c1_148], %106 {strides = array<i32>} : memref<288x324xf32, #tpu.memory_space<vmem>>, vector<12x323xf32>,
    %cst_149 = arith.constant 0.000000e+00 : f32
    %108 = vector.broadcast %cst_149 : f32 to vector<12x1xf32>
    %c36_150 = arith.constant 36 : index
    %c0_151 = arith.constant 0 : index
    %109 = vector.load %arg23[%c36_150, %c0_151] : memref<288x324xf32, #tpu.memory_space<vmem>>, vector<12x1xf32>
    tpu.vector_store %arg23[%c36_150, %c0_151], %108 {strides = array<i32>} : memref<288x324xf32, #tpu.memory_space<vmem>>, vector<12x1xf32>,
    %c0_152 = arith.constant 0 : index
    %c0_153 = arith.constant 0 : index
    %110 = vector.load %arg22[%c0_152, %c0_153] : memref<36x324xf32, #tpu.memory_space<vmem>>, vector<12x324xf32>
    %c48_154 = arith.constant 48 : index
    %c0_155 = arith.constant 0 : index
    %111 = vector.load %arg23[%c48_154, %c0_155] : memref<288x324xf32, #tpu.memory_space<vmem>>, vector<12x324xf32>
    tpu.vector_store %arg23[%c48_154, %c0_155], %110 {strides = array<i32>} : memref<288x324xf32, #tpu.memory_space<vmem>>, vector<12x324xf32>,
    %c0_156 = arith.constant 0 : index
    %c1_157 = arith.constant 1 : index
    %112 = vector.load %arg22[%c0_156, %c1_157] : memref<36x324xf32, #tpu.memory_space<vmem>>, vector<12x323xf32>
    %c60 = arith.constant 60 : index
    %c0_158 = arith.constant 0 : index
    %113 = vector.load %arg23[%c60, %c0_158] : memref<288x324xf32, #tpu.memory_space<vmem>>, vector<12x323xf32>
    tpu.vector_store %arg23[%c60, %c0_158], %112 {strides = array<i32>} : memref<288x324xf32, #tpu.memory_space<vmem>>, vector<12x323xf32>,
    %cst_159 = arith.constant 0.000000e+00 : f32
    %114 = vector.broadcast %cst_159 : f32 to vector<12x1xf32>
    %c60_160 = arith.constant 60 : index
    %c323_161 = arith.constant 323 : index
    %115 = vector.load %arg23[%c60_160, %c323_161] : memref<288x324xf32, #tpu.memory_space<vmem>>, vector<12x1xf32>
    tpu.vector_store %arg23[%c60_160, %c323_161], %114 {strides = array<i32>} : memref<288x324xf32, #tpu.memory_space<vmem>>, vector<12x1xf32>,
    %c0_162 = arith.constant 0 : index
    %c17_163 = arith.constant 17 : index
    %116 = vector.load %arg22[%c0_162, %c17_163] : memref<36x324xf32, #tpu.memory_space<vmem>>, vector<12x307xf32>
    %c72 = arith.constant 72 : index
    %c0_164 = arith.constant 0 : index
    %117 = vector.load %arg23[%c72, %c0_164] : memref<288x324xf32, #tpu.memory_space<vmem>>, vector<12x307xf32>
    tpu.vector_store %arg23[%c72, %c0_164], %116 {strides = array<i32>} : memref<288x324xf32, #tpu.memory_space<vmem>>, vector<12x307xf32>,
    %cst_165 = arith.constant 0.000000e+00 : f32
    %118 = vector.broadcast %cst_165 : f32 to vector<12x17xf32>
    %c72_166 = arith.constant 72 : index
    %c307_167 = arith.constant 307 : index
    %119 = vector.load %arg23[%c72_166, %c307_167] : memref<288x324xf32, #tpu.memory_space<vmem>>, vector<12x17xf32>
    tpu.vector_store %arg23[%c72_166, %c307_167], %118 {strides = array<i32>} : memref<288x324xf32, #tpu.memory_space<vmem>>, vector<12x17xf32>,
    %c0_168 = arith.constant 0 : index
    %c18_169 = arith.constant 18 : index
    %120 = vector.load %arg22[%c0_168, %c18_169] : memref<36x324xf32, #tpu.memory_space<vmem>>, vector<12x306xf32>
    %c84 = arith.constant 84 : index
    %c0_170 = arith.constant 0 : index
    %121 = vector.load %arg23[%c84, %c0_170] : memref<288x324xf32, #tpu.memory_space<vmem>>, vector<12x306xf32>
    tpu.vector_store %arg23[%c84, %c0_170], %120 {strides = array<i32>} : memref<288x324xf32, #tpu.memory_space<vmem>>, vector<12x306xf32>,
    %cst_171 = arith.constant 0.000000e+00 : f32
    %122 = vector.broadcast %cst_171 : f32 to vector<12x18xf32>
    %c84_172 = arith.constant 84 : index
    %c306_173 = arith.constant 306 : index
    %123 = vector.load %arg23[%c84_172, %c306_173] : memref<288x324xf32, #tpu.memory_space<vmem>>, vector<12x18xf32>
    tpu.vector_store %arg23[%c84_172, %c306_173], %122 {strides = array<i32>} : memref<288x324xf32, #tpu.memory_space<vmem>>, vector<12x18xf32>,
    %c0_174 = arith.constant 0 : index
    %c19_175 = arith.constant 19 : index
    %124 = vector.load %arg22[%c0_174, %c19_175] : memref<36x324xf32, #tpu.memory_space<vmem>>, vector<12x305xf32>
    %c96 = arith.constant 96 : index
    %c0_176 = arith.constant 0 : index
    %125 = vector.load %arg23[%c96, %c0_176] : memref<288x324xf32, #tpu.memory_space<vmem>>, vector<12x305xf32>
    tpu.vector_store %arg23[%c96, %c0_176], %124 {strides = array<i32>} : memref<288x324xf32, #tpu.memory_space<vmem>>, vector<12x305xf32>,
    %cst_177 = arith.constant 0.000000e+00 : f32
    %126 = vector.broadcast %cst_177 : f32 to vector<12x19xf32>
    %c96_178 = arith.constant 96 : index
    %c305_179 = arith.constant 305 : index
    %127 = vector.load %arg23[%c96_178, %c305_179] : memref<288x324xf32, #tpu.memory_space<vmem>>, vector<12x19xf32>
    tpu.vector_store %arg23[%c96_178, %c305_179], %126 {strides = array<i32>} : memref<288x324xf32, #tpu.memory_space<vmem>>, vector<12x19xf32>,
    %c0_180 = arith.constant 0 : index
    %c0_181 = arith.constant 0 : index
    %128 = vector.load %arg9[%c0_180, %c0_181] : memref<4x108xf32, #tpu.memory_space<vmem>>, vector<4x108xf32>
    %c0_182 = arith.constant 0 : index
    %c0_183 = arith.constant 0 : index
    %129 = vector.load %arg23[%c0_182, %c0_183] : memref<288x324xf32, #tpu.memory_space<vmem>>, vector<108x324xf32>
    %cst_184 = arith.constant dense<0.000000e+00> : vector<4x324xf32>
    %130 = tpu.matmul %128, %129, %cst_184 {dimension_numbers = #tpu.dot_dimension_numbers<[1], [0], [0], [1], [0, 0, 1, 1], [], []>} : vector<4x108xf32>, vector<108x324xf32>, vector<4x324xf32> -> vector<4x324xf32>
    %c0_185 = arith.constant 0 : index
    %c0_186 = arith.constant 0 : index
    %131 = vector.load %arg10[%c0_185, %c0_186] : memref<4x1xf32, #tpu.memory_space<vmem>>, vector<4x1xf32>
    %132 = vector.broadcast %131 : vector<4x1xf32> to vector<4x324xf32>
    %133 = arith.addf %130, %132 : vector<4x324xf32>
    %cst_187 = arith.constant 0.000000e+00 : f32
    %134 = vector.broadcast %cst_187 : f32 to vector<4x324xf32>
    %135 = arith.maximumf %133, %134 : vector<4x324xf32>
    %136 = vector.broadcast %0 : vector<1x324xf32> to vector<4x324xf32>
    %137 = arith.mulf %135, %136 : vector<4x324xf32>
    %c12_188 = arith.constant 12 : index
    %c0_189 = arith.constant 0 : index
    %138 = vector.load %arg22[%c12_188, %c0_189] : memref<36x324xf32, #tpu.memory_space<vmem>>, vector<4x324xf32>
    tpu.vector_store %arg22[%c12_188, %c0_189], %137 {strides = array<i32>} : memref<36x324xf32, #tpu.memory_space<vmem>>, vector<4x324xf32>,
    %c0_190 = arith.constant 0 : index
    %c0_191 = arith.constant 0 : index
    %139 = vector.load %arg22[%c0_190, %c0_191] : memref<36x324xf32, #tpu.memory_space<vmem>>, vector<16x305xf32>
    %c0_192 = arith.constant 0 : index
    %c19_193 = arith.constant 19 : index
    %140 = vector.load %arg23[%c0_192, %c19_193] : memref<288x324xf32, #tpu.memory_space<vmem>>, vector<16x305xf32>
    tpu.vector_store %arg23[%c0_192, %c19_193], %139 {strides = array<i32>} : memref<288x324xf32, #tpu.memory_space<vmem>>, vector<16x305xf32>,
    %cst_194 = arith.constant 0.000000e+00 : f32
    %141 = vector.broadcast %cst_194 : f32 to vector<16x19xf32>
    %c0_195 = arith.constant 0 : index
    %c0_196 = arith.constant 0 : index
    %142 = vector.load %arg23[%c0_195, %c0_196] : memref<288x324xf32, #tpu.memory_space<vmem>>, vector<16x19xf32>
    tpu.vector_store %arg23[%c0_195, %c0_196], %141 {strides = array<i32>} : memref<288x324xf32, #tpu.memory_space<vmem>>, vector<16x19xf32>,
    %c0_197 = arith.constant 0 : index
    %c0_198 = arith.constant 0 : index
    %143 = vector.load %arg22[%c0_197, %c0_198] : memref<36x324xf32, #tpu.memory_space<vmem>>, vector<16x306xf32>
    %c16_199 = arith.constant 16 : index
    %c18_200 = arith.constant 18 : index
    %144 = vector.load %arg23[%c16_199, %c18_200] : memref<288x324xf32, #tpu.memory_space<vmem>>, vector<16x306xf32>
    tpu.vector_store %arg23[%c16_199, %c18_200], %143 {strides = array<i32>} : memref<288x324xf32, #tpu.memory_space<vmem>>, vector<16x306xf32>,
    %cst_201 = arith.constant 0.000000e+00 : f32
    %145 = vector.broadcast %cst_201 : f32 to vector<16x18xf32>
    %c16_202 = arith.constant 16 : index
    %c0_203 = arith.constant 0 : index
    %146 = vector.load %arg23[%c16_202, %c0_203] : memref<288x324xf32, #tpu.memory_space<vmem>>, vector<16x18xf32>
    tpu.vector_store %arg23[%c16_202, %c0_203], %145 {strides = array<i32>} : memref<288x324xf32, #tpu.memory_space<vmem>>, vector<16x18xf32>,
    %c0_204 = arith.constant 0 : index
    %c0_205 = arith.constant 0 : index
    %147 = vector.load %arg22[%c0_204, %c0_205] : memref<36x324xf32, #tpu.memory_space<vmem>>, vector<16x307xf32>
    %c32_206 = arith.constant 32 : index
    %c17_207 = arith.constant 17 : index
    %148 = vector.load %arg23[%c32_206, %c17_207] : memref<288x324xf32, #tpu.memory_space<vmem>>, vector<16x307xf32>
    tpu.vector_store %arg23[%c32_206, %c17_207], %147 {strides = array<i32>} : memref<288x324xf32, #tpu.memory_space<vmem>>, vector<16x307xf32>,
    %cst_208 = arith.constant 0.000000e+00 : f32
    %149 = vector.broadcast %cst_208 : f32 to vector<16x17xf32>
    %c32_209 = arith.constant 32 : index
    %c0_210 = arith.constant 0 : index
    %150 = vector.load %arg23[%c32_209, %c0_210] : memref<288x324xf32, #tpu.memory_space<vmem>>, vector<16x17xf32>
    tpu.vector_store %arg23[%c32_209, %c0_210], %149 {strides = array<i32>} : memref<288x324xf32, #tpu.memory_space<vmem>>, vector<16x17xf32>,
    %c0_211 = arith.constant 0 : index
    %c0_212 = arith.constant 0 : index
    %151 = vector.load %arg22[%c0_211, %c0_212] : memref<36x324xf32, #tpu.memory_space<vmem>>, vector<16x323xf32>
    %c48_213 = arith.constant 48 : index
    %c1_214 = arith.constant 1 : index
    %152 = vector.load %arg23[%c48_213, %c1_214] : memref<288x324xf32, #tpu.memory_space<vmem>>, vector<16x323xf32>
    tpu.vector_store %arg23[%c48_213, %c1_214], %151 {strides = array<i32>} : memref<288x324xf32, #tpu.memory_space<vmem>>, vector<16x323xf32>,
    %cst_215 = arith.constant 0.000000e+00 : f32
    %153 = vector.broadcast %cst_215 : f32 to vector<16x1xf32>
    %c48_216 = arith.constant 48 : index
    %c0_217 = arith.constant 0 : index
    %154 = vector.load %arg23[%c48_216, %c0_217] : memref<288x324xf32, #tpu.memory_space<vmem>>, vector<16x1xf32>
    tpu.vector_store %arg23[%c48_216, %c0_217], %153 {strides = array<i32>} : memref<288x324xf32, #tpu.memory_space<vmem>>, vector<16x1xf32>,
    %c0_218 = arith.constant 0 : index
    %c0_219 = arith.constant 0 : index
    %155 = vector.load %arg22[%c0_218, %c0_219] : memref<36x324xf32, #tpu.memory_space<vmem>>, vector<16x324xf32>
    %c64_220 = arith.constant 64 : index
    %c0_221 = arith.constant 0 : index
    %156 = vector.load %arg23[%c64_220, %c0_221] : memref<288x324xf32, #tpu.memory_space<vmem>>, vector<16x324xf32>
    tpu.vector_store %arg23[%c64_220, %c0_221], %155 {strides = array<i32>} : memref<288x324xf32, #tpu.memory_space<vmem>>, vector<16x324xf32>,
    %c0_222 = arith.constant 0 : index
    %c1_223 = arith.constant 1 : index
    %157 = vector.load %arg22[%c0_222, %c1_223] : memref<36x324xf32, #tpu.memory_space<vmem>>, vector<16x323xf32>
    %c80 = arith.constant 80 : index
    %c0_224 = arith.constant 0 : index
    %158 = vector.load %arg23[%c80, %c0_224] : memref<288x324xf32, #tpu.memory_space<vmem>>, vector<16x323xf32>
    tpu.vector_store %arg23[%c80, %c0_224], %157 {strides = array<i32>} : memref<288x324xf32, #tpu.memory_space<vmem>>, vector<16x323xf32>,
    %cst_225 = arith.constant 0.000000e+00 : f32
    %159 = vector.broadcast %cst_225 : f32 to vector<16x1xf32>
    %c80_226 = arith.constant 80 : index
    %c323_227 = arith.constant 323 : index
    %160 = vector.load %arg23[%c80_226, %c323_227] : memref<288x324xf32, #tpu.memory_space<vmem>>, vector<16x1xf32>
    tpu.vector_store %arg23[%c80_226, %c323_227], %159 {strides = array<i32>} : memref<288x324xf32, #tpu.memory_space<vmem>>, vector<16x1xf32>,
    %c0_228 = arith.constant 0 : index
    %c17_229 = arith.constant 17 : index
    %161 = vector.load %arg22[%c0_228, %c17_229] : memref<36x324xf32, #tpu.memory_space<vmem>>, vector<16x307xf32>
    %c96_230 = arith.constant 96 : index
    %c0_231 = arith.constant 0 : index
    %162 = vector.load %arg23[%c96_230, %c0_231] : memref<288x324xf32, #tpu.memory_space<vmem>>, vector<16x307xf32>
    tpu.vector_store %arg23[%c96_230, %c0_231], %161 {strides = array<i32>} : memref<288x324xf32, #tpu.memory_space<vmem>>, vector<16x307xf32>,
    %cst_232 = arith.constant 0.000000e+00 : f32
    %163 = vector.broadcast %cst_232 : f32 to vector<16x17xf32>
    %c96_233 = arith.constant 96 : index
    %c307_234 = arith.constant 307 : index
    %164 = vector.load %arg23[%c96_233, %c307_234] : memref<288x324xf32, #tpu.memory_space<vmem>>, vector<16x17xf32>
    tpu.vector_store %arg23[%c96_233, %c307_234], %163 {strides = array<i32>} : memref<288x324xf32, #tpu.memory_space<vmem>>, vector<16x17xf32>,
    %c0_235 = arith.constant 0 : index
    %c18_236 = arith.constant 18 : index
    %165 = vector.load %arg22[%c0_235, %c18_236] : memref<36x324xf32, #tpu.memory_space<vmem>>, vector<16x306xf32>
    %c112 = arith.constant 112 : index
    %c0_237 = arith.constant 0 : index
    %166 = vector.load %arg23[%c112, %c0_237] : memref<288x324xf32, #tpu.memory_space<vmem>>, vector<16x306xf32>
    tpu.vector_store %arg23[%c112, %c0_237], %165 {strides = array<i32>} : memref<288x324xf32, #tpu.memory_space<vmem>>, vector<16x306xf32>,
    %cst_238 = arith.constant 0.000000e+00 : f32
    %167 = vector.broadcast %cst_238 : f32 to vector<16x18xf32>
    %c112_239 = arith.constant 112 : index
    %c306_240 = arith.constant 306 : index
    %168 = vector.load %arg23[%c112_239, %c306_240] : memref<288x324xf32, #tpu.memory_space<vmem>>, vector<16x18xf32>
    tpu.vector_store %arg23[%c112_239, %c306_240], %167 {strides = array<i32>} : memref<288x324xf32, #tpu.memory_space<vmem>>, vector<16x18xf32>,
    %c0_241 = arith.constant 0 : index
    %c19_242 = arith.constant 19 : index
    %169 = vector.load %arg22[%c0_241, %c19_242] : memref<36x324xf32, #tpu.memory_space<vmem>>, vector<16x305xf32>
    %c128 = arith.constant 128 : index
    %c0_243 = arith.constant 0 : index
    %170 = vector.load %arg23[%c128, %c0_243] : memref<288x324xf32, #tpu.memory_space<vmem>>, vector<16x305xf32>
    tpu.vector_store %arg23[%c128, %c0_243], %169 {strides = array<i32>} : memref<288x324xf32, #tpu.memory_space<vmem>>, vector<16x305xf32>,
    %cst_244 = arith.constant 0.000000e+00 : f32
    %171 = vector.broadcast %cst_244 : f32 to vector<16x19xf32>
    %c128_245 = arith.constant 128 : index
    %c305_246 = arith.constant 305 : index
    %172 = vector.load %arg23[%c128_245, %c305_246] : memref<288x324xf32, #tpu.memory_space<vmem>>, vector<16x19xf32>
    tpu.vector_store %arg23[%c128_245, %c305_246], %171 {strides = array<i32>} : memref<288x324xf32, #tpu.memory_space<vmem>>, vector<16x19xf32>,
    %c0_247 = arith.constant 0 : index
    %c0_248 = arith.constant 0 : index
    %173 = vector.load %arg11[%c0_247, %c0_248] : memref<4x144xf32, #tpu.memory_space<vmem>>, vector<4x144xf32>
    %c0_249 = arith.constant 0 : index
    %c0_250 = arith.constant 0 : index
    %174 = vector.load %arg23[%c0_249, %c0_250] : memref<288x324xf32, #tpu.memory_space<vmem>>, vector<144x324xf32>
    %cst_251 = arith.constant dense<0.000000e+00> : vector<4x324xf32>
    %175 = tpu.matmul %173, %174, %cst_251 {dimension_numbers = #tpu.dot_dimension_numbers<[1], [0], [0], [1], [0, 0, 1, 1], [], []>} : vector<4x144xf32>, vector<144x324xf32>, vector<4x324xf32> -> vector<4x324xf32>
    %c0_252 = arith.constant 0 : index
    %c0_253 = arith.constant 0 : index
    %176 = vector.load %arg12[%c0_252, %c0_253] : memref<4x1xf32, #tpu.memory_space<vmem>>, vector<4x1xf32>
    %177 = vector.broadcast %176 : vector<4x1xf32> to vector<4x324xf32>
    %178 = arith.addf %175, %177 : vector<4x324xf32>
    %cst_254 = arith.constant 0.000000e+00 : f32
    %179 = vector.broadcast %cst_254 : f32 to vector<4x324xf32>
    %180 = arith.maximumf %178, %179 : vector<4x324xf32>
    %181 = vector.broadcast %0 : vector<1x324xf32> to vector<4x324xf32>
    %182 = arith.mulf %180, %181 : vector<4x324xf32>
    %c16_255 = arith.constant 16 : index
    %c0_256 = arith.constant 0 : index
    %183 = vector.load %arg22[%c16_255, %c0_256] : memref<36x324xf32, #tpu.memory_space<vmem>>, vector<4x324xf32>
    tpu.vector_store %arg22[%c16_255, %c0_256], %182 {strides = array<i32>} : memref<36x324xf32, #tpu.memory_space<vmem>>, vector<4x324xf32>,
    %c0_257 = arith.constant 0 : index
    %c0_258 = arith.constant 0 : index
    %184 = vector.load %arg22[%c0_257, %c0_258] : memref<36x324xf32, #tpu.memory_space<vmem>>, vector<20x305xf32>
    %c0_259 = arith.constant 0 : index
    %c19_260 = arith.constant 19 : index
    %185 = vector.load %arg23[%c0_259, %c19_260] : memref<288x324xf32, #tpu.memory_space<vmem>>, vector<20x305xf32>
    tpu.vector_store %arg23[%c0_259, %c19_260], %184 {strides = array<i32>} : memref<288x324xf32, #tpu.memory_space<vmem>>, vector<20x305xf32>,
    %cst_261 = arith.constant 0.000000e+00 : f32
    %186 = vector.broadcast %cst_261 : f32 to vector<20x19xf32>
    %c0_262 = arith.constant 0 : index
    %c0_263 = arith.constant 0 : index
    %187 = vector.load %arg23[%c0_262, %c0_263] : memref<288x324xf32, #tpu.memory_space<vmem>>, vector<20x19xf32>
    tpu.vector_store %arg23[%c0_262, %c0_263], %186 {strides = array<i32>} : memref<288x324xf32, #tpu.memory_space<vmem>>, vector<20x19xf32>,
    %c0_264 = arith.constant 0 : index
    %c0_265 = arith.constant 0 : index
    %188 = vector.load %arg22[%c0_264, %c0_265] : memref<36x324xf32, #tpu.memory_space<vmem>>, vector<20x306xf32>
    %c20_266 = arith.constant 20 : index
    %c18_267 = arith.constant 18 : index
    %189 = vector.load %arg23[%c20_266, %c18_267] : memref<288x324xf32, #tpu.memory_space<vmem>>, vector<20x306xf32>
    tpu.vector_store %arg23[%c20_266, %c18_267], %188 {strides = array<i32>} : memref<288x324xf32, #tpu.memory_space<vmem>>, vector<20x306xf32>,
    %cst_268 = arith.constant 0.000000e+00 : f32
    %190 = vector.broadcast %cst_268 : f32 to vector<20x18xf32>
    %c20_269 = arith.constant 20 : index
    %c0_270 = arith.constant 0 : index
    %191 = vector.load %arg23[%c20_269, %c0_270] : memref<288x324xf32, #tpu.memory_space<vmem>>, vector<20x18xf32>
    tpu.vector_store %arg23[%c20_269, %c0_270], %190 {strides = array<i32>} : memref<288x324xf32, #tpu.memory_space<vmem>>, vector<20x18xf32>,
    %c0_271 = arith.constant 0 : index
    %c0_272 = arith.constant 0 : index
    %192 = vector.load %arg22[%c0_271, %c0_272] : memref<36x324xf32, #tpu.memory_space<vmem>>, vector<20x307xf32>
    %c40_273 = arith.constant 40 : index
    %c17_274 = arith.constant 17 : index
    %193 = vector.load %arg23[%c40_273, %c17_274] : memref<288x324xf32, #tpu.memory_space<vmem>>, vector<20x307xf32>
    tpu.vector_store %arg23[%c40_273, %c17_274], %192 {strides = array<i32>} : memref<288x324xf32, #tpu.memory_space<vmem>>, vector<20x307xf32>,
    %cst_275 = arith.constant 0.000000e+00 : f32
    %194 = vector.broadcast %cst_275 : f32 to vector<20x17xf32>
    %c40_276 = arith.constant 40 : index
    %c0_277 = arith.constant 0 : index
    %195 = vector.load %arg23[%c40_276, %c0_277] : memref<288x324xf32, #tpu.memory_space<vmem>>, vector<20x17xf32>
    tpu.vector_store %arg23[%c40_276, %c0_277], %194 {strides = array<i32>} : memref<288x324xf32, #tpu.memory_space<vmem>>, vector<20x17xf32>,
    %c0_278 = arith.constant 0 : index
    %c0_279 = arith.constant 0 : index
    %196 = vector.load %arg22[%c0_278, %c0_279] : memref<36x324xf32, #tpu.memory_space<vmem>>, vector<20x323xf32>
    %c60_280 = arith.constant 60 : index
    %c1_281 = arith.constant 1 : index
    %197 = vector.load %arg23[%c60_280, %c1_281] : memref<288x324xf32, #tpu.memory_space<vmem>>, vector<20x323xf32>
    tpu.vector_store %arg23[%c60_280, %c1_281], %196 {strides = array<i32>} : memref<288x324xf32, #tpu.memory_space<vmem>>, vector<20x323xf32>,
    %cst_282 = arith.constant 0.000000e+00 : f32
    %198 = vector.broadcast %cst_282 : f32 to vector<20x1xf32>
    %c60_283 = arith.constant 60 : index
    %c0_284 = arith.constant 0 : index
    %199 = vector.load %arg23[%c60_283, %c0_284] : memref<288x324xf32, #tpu.memory_space<vmem>>, vector<20x1xf32>
    tpu.vector_store %arg23[%c60_283, %c0_284], %198 {strides = array<i32>} : memref<288x324xf32, #tpu.memory_space<vmem>>, vector<20x1xf32>,
    %c0_285 = arith.constant 0 : index
    %c0_286 = arith.constant 0 : index
    %200 = vector.load %arg22[%c0_285, %c0_286] : memref<36x324xf32, #tpu.memory_space<vmem>>, vector<20x324xf32>
    %c80_287 = arith.constant 80 : index
    %c0_288 = arith.constant 0 : index
    %201 = vector.load %arg23[%c80_287, %c0_288] : memref<288x324xf32, #tpu.memory_space<vmem>>, vector<20x324xf32>
    tpu.vector_store %arg23[%c80_287, %c0_288], %200 {strides = array<i32>} : memref<288x324xf32, #tpu.memory_space<vmem>>, vector<20x324xf32>,
    %c0_289 = arith.constant 0 : index
    %c1_290 = arith.constant 1 : index
    %202 = vector.load %arg22[%c0_289, %c1_290] : memref<36x324xf32, #tpu.memory_space<vmem>>, vector<20x323xf32>
    %c100 = arith.constant 100 : index
    %c0_291 = arith.constant 0 : index
    %203 = vector.load %arg23[%c100, %c0_291] : memref<288x324xf32, #tpu.memory_space<vmem>>, vector<20x323xf32>
    tpu.vector_store %arg23[%c100, %c0_291], %202 {strides = array<i32>} : memref<288x324xf32, #tpu.memory_space<vmem>>, vector<20x323xf32>,
    %cst_292 = arith.constant 0.000000e+00 : f32
    %204 = vector.broadcast %cst_292 : f32 to vector<20x1xf32>
    %c100_293 = arith.constant 100 : index
    %c323_294 = arith.constant 323 : index
    %205 = vector.load %arg23[%c100_293, %c323_294] : memref<288x324xf32, #tpu.memory_space<vmem>>, vector<20x1xf32>
    tpu.vector_store %arg23[%c100_293, %c323_294], %204 {strides = array<i32>} : memref<288x324xf32, #tpu.memory_space<vmem>>, vector<20x1xf32>,
    %c0_295 = arith.constant 0 : index
    %c17_296 = arith.constant 17 : index
    %206 = vector.load %arg22[%c0_295, %c17_296] : memref<36x324xf32, #tpu.memory_space<vmem>>, vector<20x307xf32>
    %c120 = arith.constant 120 : index
    %c0_297 = arith.constant 0 : index
    %207 = vector.load %arg23[%c120, %c0_297] : memref<288x324xf32, #tpu.memory_space<vmem>>, vector<20x307xf32>
    tpu.vector_store %arg23[%c120, %c0_297], %206 {strides = array<i32>} : memref<288x324xf32, #tpu.memory_space<vmem>>, vector<20x307xf32>,
    %cst_298 = arith.constant 0.000000e+00 : f32
    %208 = vector.broadcast %cst_298 : f32 to vector<20x17xf32>
    %c120_299 = arith.constant 120 : index
    %c307_300 = arith.constant 307 : index
    %209 = vector.load %arg23[%c120_299, %c307_300] : memref<288x324xf32, #tpu.memory_space<vmem>>, vector<20x17xf32>
    tpu.vector_store %arg23[%c120_299, %c307_300], %208 {strides = array<i32>} : memref<288x324xf32, #tpu.memory_space<vmem>>, vector<20x17xf32>,
    %c0_301 = arith.constant 0 : index
    %c18_302 = arith.constant 18 : index
    %210 = vector.load %arg22[%c0_301, %c18_302] : memref<36x324xf32, #tpu.memory_space<vmem>>, vector<20x306xf32>
    %c140 = arith.constant 140 : index
    %c0_303 = arith.constant 0 : index
    %211 = vector.load %arg23[%c140, %c0_303] : memref<288x324xf32, #tpu.memory_space<vmem>>, vector<20x306xf32>
    tpu.vector_store %arg23[%c140, %c0_303], %210 {strides = array<i32>} : memref<288x324xf32, #tpu.memory_space<vmem>>, vector<20x306xf32>,
    %cst_304 = arith.constant 0.000000e+00 : f32
    %212 = vector.broadcast %cst_304 : f32 to vector<20x18xf32>
    %c140_305 = arith.constant 140 : index
    %c306_306 = arith.constant 306 : index
    %213 = vector.load %arg23[%c140_305, %c306_306] : memref<288x324xf32, #tpu.memory_space<vmem>>, vector<20x18xf32>
    tpu.vector_store %arg23[%c140_305, %c306_306], %212 {strides = array<i32>} : memref<288x324xf32, #tpu.memory_space<vmem>>, vector<20x18xf32>,
    %c0_307 = arith.constant 0 : index
    %c19_308 = arith.constant 19 : index
    %214 = vector.load %arg22[%c0_307, %c19_308] : memref<36x324xf32, #tpu.memory_space<vmem>>, vector<20x305xf32>
    %c160 = arith.constant 160 : index
    %c0_309 = arith.constant 0 : index
    %215 = vector.load %arg23[%c160, %c0_309] : memref<288x324xf32, #tpu.memory_space<vmem>>, vector<20x305xf32>
    tpu.vector_store %arg23[%c160, %c0_309], %214 {strides = array<i32>} : memref<288x324xf32, #tpu.memory_space<vmem>>, vector<20x305xf32>,
    %cst_310 = arith.constant 0.000000e+00 : f32
    %216 = vector.broadcast %cst_310 : f32 to vector<20x19xf32>
    %c160_311 = arith.constant 160 : index
    %c305_312 = arith.constant 305 : index
    %217 = vector.load %arg23[%c160_311, %c305_312] : memref<288x324xf32, #tpu.memory_space<vmem>>, vector<20x19xf32>
    tpu.vector_store %arg23[%c160_311, %c305_312], %216 {strides = array<i32>} : memref<288x324xf32, #tpu.memory_space<vmem>>, vector<20x19xf32>,
    %c0_313 = arith.constant 0 : index
    %c0_314 = arith.constant 0 : index
    %218 = vector.load %arg13[%c0_313, %c0_314] : memref<4x180xf32, #tpu.memory_space<vmem>>, vector<4x180xf32>
    %c0_315 = arith.constant 0 : index
    %c0_316 = arith.constant 0 : index
    %219 = vector.load %arg23[%c0_315, %c0_316] : memref<288x324xf32, #tpu.memory_space<vmem>>, vector<180x324xf32>
    %cst_317 = arith.constant dense<0.000000e+00> : vector<4x324xf32>
    %220 = tpu.matmul %218, %219, %cst_317 {dimension_numbers = #tpu.dot_dimension_numbers<[1], [0], [0], [1], [0, 0, 1, 1], [], []>} : vector<4x180xf32>, vector<180x324xf32>, vector<4x324xf32> -> vector<4x324xf32>
    %c0_318 = arith.constant 0 : index
    %c0_319 = arith.constant 0 : index
    %221 = vector.load %arg14[%c0_318, %c0_319] : memref<4x1xf32, #tpu.memory_space<vmem>>, vector<4x1xf32>
    %222 = vector.broadcast %221 : vector<4x1xf32> to vector<4x324xf32>
    %223 = arith.addf %220, %222 : vector<4x324xf32>
    %cst_320 = arith.constant 0.000000e+00 : f32
    %224 = vector.broadcast %cst_320 : f32 to vector<4x324xf32>
    %225 = arith.maximumf %223, %224 : vector<4x324xf32>
    %226 = vector.broadcast %0 : vector<1x324xf32> to vector<4x324xf32>
    %227 = arith.mulf %225, %226 : vector<4x324xf32>
    %c20_321 = arith.constant 20 : index
    %c0_322 = arith.constant 0 : index
    %228 = vector.load %arg22[%c20_321, %c0_322] : memref<36x324xf32, #tpu.memory_space<vmem>>, vector<4x324xf32>
    tpu.vector_store %arg22[%c20_321, %c0_322], %227 {strides = array<i32>} : memref<36x324xf32, #tpu.memory_space<vmem>>, vector<4x324xf32>,
    %c0_323 = arith.constant 0 : index
    %c0_324 = arith.constant 0 : index
    %229 = vector.load %arg22[%c0_323, %c0_324] : memref<36x324xf32, #tpu.memory_space<vmem>>, vector<24x305xf32>
    %c0_325 = arith.constant 0 : index
    %c19_326 = arith.constant 19 : index
    %230 = vector.load %arg23[%c0_325, %c19_326] : memref<288x324xf32, #tpu.memory_space<vmem>>, vector<24x305xf32>
    tpu.vector_store %arg23[%c0_325, %c19_326], %229 {strides = array<i32>} : memref<288x324xf32, #tpu.memory_space<vmem>>, vector<24x305xf32>,
    %cst_327 = arith.constant 0.000000e+00 : f32
    %231 = vector.broadcast %cst_327 : f32 to vector<24x19xf32>
    %c0_328 = arith.constant 0 : index
    %c0_329 = arith.constant 0 : index
    %232 = vector.load %arg23[%c0_328, %c0_329] : memref<288x324xf32, #tpu.memory_space<vmem>>, vector<24x19xf32>
    tpu.vector_store %arg23[%c0_328, %c0_329], %231 {strides = array<i32>} : memref<288x324xf32, #tpu.memory_space<vmem>>, vector<24x19xf32>,
    %c0_330 = arith.constant 0 : index
    %c0_331 = arith.constant 0 : index
    %233 = vector.load %arg22[%c0_330, %c0_331] : memref<36x324xf32, #tpu.memory_space<vmem>>, vector<24x306xf32>
    %c24_332 = arith.constant 24 : index
    %c18_333 = arith.constant 18 : index
    %234 = vector.load %arg23[%c24_332, %c18_333] : memref<288x324xf32, #tpu.memory_space<vmem>>, vector<24x306xf32>
    tpu.vector_store %arg23[%c24_332, %c18_333], %233 {strides = array<i32>} : memref<288x324xf32, #tpu.memory_space<vmem>>, vector<24x306xf32>,
    %cst_334 = arith.constant 0.000000e+00 : f32
    %235 = vector.broadcast %cst_334 : f32 to vector<24x18xf32>
    %c24_335 = arith.constant 24 : index
    %c0_336 = arith.constant 0 : index
    %236 = vector.load %arg23[%c24_335, %c0_336] : memref<288x324xf32, #tpu.memory_space<vmem>>, vector<24x18xf32>
    tpu.vector_store %arg23[%c24_335, %c0_336], %235 {strides = array<i32>} : memref<288x324xf32, #tpu.memory_space<vmem>>, vector<24x18xf32>,
    %c0_337 = arith.constant 0 : index
    %c0_338 = arith.constant 0 : index
    %237 = vector.load %arg22[%c0_337, %c0_338] : memref<36x324xf32, #tpu.memory_space<vmem>>, vector<24x307xf32>
    %c48_339 = arith.constant 48 : index
    %c17_340 = arith.constant 17 : index
    %238 = vector.load %arg23[%c48_339, %c17_340] : memref<288x324xf32, #tpu.memory_space<vmem>>, vector<24x307xf32>
    tpu.vector_store %arg23[%c48_339, %c17_340], %237 {strides = array<i32>} : memref<288x324xf32, #tpu.memory_space<vmem>>, vector<24x307xf32>,
    %cst_341 = arith.constant 0.000000e+00 : f32
    %239 = vector.broadcast %cst_341 : f32 to vector<24x17xf32>
    %c48_342 = arith.constant 48 : index
    %c0_343 = arith.constant 0 : index
    %240 = vector.load %arg23[%c48_342, %c0_343] : memref<288x324xf32, #tpu.memory_space<vmem>>, vector<24x17xf32>
    tpu.vector_store %arg23[%c48_342, %c0_343], %239 {strides = array<i32>} : memref<288x324xf32, #tpu.memory_space<vmem>>, vector<24x17xf32>,
    %c0_344 = arith.constant 0 : index
    %c0_345 = arith.constant 0 : index
    %241 = vector.load %arg22[%c0_344, %c0_345] : memref<36x324xf32, #tpu.memory_space<vmem>>, vector<24x323xf32>
    %c72_346 = arith.constant 72 : index
    %c1_347 = arith.constant 1 : index
    %242 = vector.load %arg23[%c72_346, %c1_347] : memref<288x324xf32, #tpu.memory_space<vmem>>, vector<24x323xf32>
    tpu.vector_store %arg23[%c72_346, %c1_347], %241 {strides = array<i32>} : memref<288x324xf32, #tpu.memory_space<vmem>>, vector<24x323xf32>,
    %cst_348 = arith.constant 0.000000e+00 : f32
    %243 = vector.broadcast %cst_348 : f32 to vector<24x1xf32>
    %c72_349 = arith.constant 72 : index
    %c0_350 = arith.constant 0 : index
    %244 = vector.load %arg23[%c72_349, %c0_350] : memref<288x324xf32, #tpu.memory_space<vmem>>, vector<24x1xf32>
    tpu.vector_store %arg23[%c72_349, %c0_350], %243 {strides = array<i32>} : memref<288x324xf32, #tpu.memory_space<vmem>>, vector<24x1xf32>,
    %c0_351 = arith.constant 0 : index
    %c0_352 = arith.constant 0 : index
    %245 = vector.load %arg22[%c0_351, %c0_352] : memref<36x324xf32, #tpu.memory_space<vmem>>, vector<24x324xf32>
    %c96_353 = arith.constant 96 : index
    %c0_354 = arith.constant 0 : index
    %246 = vector.load %arg23[%c96_353, %c0_354] : memref<288x324xf32, #tpu.memory_space<vmem>>, vector<24x324xf32>
    tpu.vector_store %arg23[%c96_353, %c0_354], %245 {strides = array<i32>} : memref<288x324xf32, #tpu.memory_space<vmem>>, vector<24x324xf32>,
    %c0_355 = arith.constant 0 : index
    %c1_356 = arith.constant 1 : index
    %247 = vector.load %arg22[%c0_355, %c1_356] : memref<36x324xf32, #tpu.memory_space<vmem>>, vector<24x323xf32>
    %c120_357 = arith.constant 120 : index
    %c0_358 = arith.constant 0 : index
    %248 = vector.load %arg23[%c120_357, %c0_358] : memref<288x324xf32, #tpu.memory_space<vmem>>, vector<24x323xf32>
    tpu.vector_store %arg23[%c120_357, %c0_358], %247 {strides = array<i32>} : memref<288x324xf32, #tpu.memory_space<vmem>>, vector<24x323xf32>,
    %cst_359 = arith.constant 0.000000e+00 : f32
    %249 = vector.broadcast %cst_359 : f32 to vector<24x1xf32>
    %c120_360 = arith.constant 120 : index
    %c323_361 = arith.constant 323 : index
    %250 = vector.load %arg23[%c120_360, %c323_361] : memref<288x324xf32, #tpu.memory_space<vmem>>, vector<24x1xf32>
    tpu.vector_store %arg23[%c120_360, %c323_361], %249 {strides = array<i32>} : memref<288x324xf32, #tpu.memory_space<vmem>>, vector<24x1xf32>,
    %c0_362 = arith.constant 0 : index
    %c17_363 = arith.constant 17 : index
    %251 = vector.load %arg22[%c0_362, %c17_363] : memref<36x324xf32, #tpu.memory_space<vmem>>, vector<24x307xf32>
    %c144 = arith.constant 144 : index
    %c0_364 = arith.constant 0 : index
    %252 = vector.load %arg23[%c144, %c0_364] : memref<288x324xf32, #tpu.memory_space<vmem>>, vector<24x307xf32>
    tpu.vector_store %arg23[%c144, %c0_364], %251 {strides = array<i32>} : memref<288x324xf32, #tpu.memory_space<vmem>>, vector<24x307xf32>,
    %cst_365 = arith.constant 0.000000e+00 : f32
    %253 = vector.broadcast %cst_365 : f32 to vector<24x17xf32>
    %c144_366 = arith.constant 144 : index
    %c307_367 = arith.constant 307 : index
    %254 = vector.load %arg23[%c144_366, %c307_367] : memref<288x324xf32, #tpu.memory_space<vmem>>, vector<24x17xf32>
    tpu.vector_store %arg23[%c144_366, %c307_367], %253 {strides = array<i32>} : memref<288x324xf32, #tpu.memory_space<vmem>>, vector<24x17xf32>,
    %c0_368 = arith.constant 0 : index
    %c18_369 = arith.constant 18 : index
    %255 = vector.load %arg22[%c0_368, %c18_369] : memref<36x324xf32, #tpu.memory_space<vmem>>, vector<24x306xf32>
    %c168 = arith.constant 168 : index
    %c0_370 = arith.constant 0 : index
    %256 = vector.load %arg23[%c168, %c0_370] : memref<288x324xf32, #tpu.memory_space<vmem>>, vector<24x306xf32>
    tpu.vector_store %arg23[%c168, %c0_370], %255 {strides = array<i32>} : memref<288x324xf32, #tpu.memory_space<vmem>>, vector<24x306xf32>,
    %cst_371 = arith.constant 0.000000e+00 : f32
    %257 = vector.broadcast %cst_371 : f32 to vector<24x18xf32>
    %c168_372 = arith.constant 168 : index
    %c306_373 = arith.constant 306 : index
    %258 = vector.load %arg23[%c168_372, %c306_373] : memref<288x324xf32, #tpu.memory_space<vmem>>, vector<24x18xf32>
    tpu.vector_store %arg23[%c168_372, %c306_373], %257 {strides = array<i32>} : memref<288x324xf32, #tpu.memory_space<vmem>>, vector<24x18xf32>,
    %c0_374 = arith.constant 0 : index
    %c19_375 = arith.constant 19 : index
    %259 = vector.load %arg22[%c0_374, %c19_375] : memref<36x324xf32, #tpu.memory_space<vmem>>, vector<24x305xf32>
    %c192 = arith.constant 192 : index
    %c0_376 = arith.constant 0 : index
    %260 = vector.load %arg23[%c192, %c0_376] : memref<288x324xf32, #tpu.memory_space<vmem>>, vector<24x305xf32>
    tpu.vector_store %arg23[%c192, %c0_376], %259 {strides = array<i32>} : memref<288x324xf32, #tpu.memory_space<vmem>>, vector<24x305xf32>,
    %cst_377 = arith.constant 0.000000e+00 : f32
    %261 = vector.broadcast %cst_377 : f32 to vector<24x19xf32>
    %c192_378 = arith.constant 192 : index
    %c305_379 = arith.constant 305 : index
    %262 = vector.load %arg23[%c192_378, %c305_379] : memref<288x324xf32, #tpu.memory_space<vmem>>, vector<24x19xf32>
    tpu.vector_store %arg23[%c192_378, %c305_379], %261 {strides = array<i32>} : memref<288x324xf32, #tpu.memory_space<vmem>>, vector<24x19xf32>,
    %c0_380 = arith.constant 0 : index
    %c0_381 = arith.constant 0 : index
    %263 = vector.load %arg15[%c0_380, %c0_381] : memref<4x216xf32, #tpu.memory_space<vmem>>, vector<4x216xf32>
    %c0_382 = arith.constant 0 : index
    %c0_383 = arith.constant 0 : index
    %264 = vector.load %arg23[%c0_382, %c0_383] : memref<288x324xf32, #tpu.memory_space<vmem>>, vector<216x324xf32>
    %cst_384 = arith.constant dense<0.000000e+00> : vector<4x324xf32>
    %265 = tpu.matmul %263, %264, %cst_384 {dimension_numbers = #tpu.dot_dimension_numbers<[1], [0], [0], [1], [0, 0, 1, 1], [], []>} : vector<4x216xf32>, vector<216x324xf32>, vector<4x324xf32> -> vector<4x324xf32>
    %c0_385 = arith.constant 0 : index
    %c0_386 = arith.constant 0 : index
    %266 = vector.load %arg16[%c0_385, %c0_386] : memref<4x1xf32, #tpu.memory_space<vmem>>, vector<4x1xf32>
    %267 = vector.broadcast %266 : vector<4x1xf32> to vector<4x324xf32>
    %268 = arith.addf %265, %267 : vector<4x324xf32>
    %cst_387 = arith.constant 0.000000e+00 : f32
    %269 = vector.broadcast %cst_387 : f32 to vector<4x324xf32>
    %270 = arith.maximumf %268, %269 : vector<4x324xf32>
    %271 = vector.broadcast %0 : vector<1x324xf32> to vector<4x324xf32>
    %272 = arith.mulf %270, %271 : vector<4x324xf32>
    %c24_388 = arith.constant 24 : index
    %c0_389 = arith.constant 0 : index
    %273 = vector.load %arg22[%c24_388, %c0_389] : memref<36x324xf32, #tpu.memory_space<vmem>>, vector<4x324xf32>
    tpu.vector_store %arg22[%c24_388, %c0_389], %272 {strides = array<i32>} : memref<36x324xf32, #tpu.memory_space<vmem>>, vector<4x324xf32>,
    %c0_390 = arith.constant 0 : index
    %c0_391 = arith.constant 0 : index
    %274 = vector.load %arg22[%c0_390, %c0_391] : memref<36x324xf32, #tpu.memory_space<vmem>>, vector<28x305xf32>
    %c0_392 = arith.constant 0 : index
    %c19_393 = arith.constant 19 : index
    %275 = vector.load %arg23[%c0_392, %c19_393] : memref<288x324xf32, #tpu.memory_space<vmem>>, vector<28x305xf32>
    tpu.vector_store %arg23[%c0_392, %c19_393], %274 {strides = array<i32>} : memref<288x324xf32, #tpu.memory_space<vmem>>, vector<28x305xf32>,
    %cst_394 = arith.constant 0.000000e+00 : f32
    %276 = vector.broadcast %cst_394 : f32 to vector<28x19xf32>
    %c0_395 = arith.constant 0 : index
    %c0_396 = arith.constant 0 : index
    %277 = vector.load %arg23[%c0_395, %c0_396] : memref<288x324xf32, #tpu.memory_space<vmem>>, vector<28x19xf32>
    tpu.vector_store %arg23[%c0_395, %c0_396], %276 {strides = array<i32>} : memref<288x324xf32, #tpu.memory_space<vmem>>, vector<28x19xf32>,
    %c0_397 = arith.constant 0 : index
    %c0_398 = arith.constant 0 : index
    %278 = vector.load %arg22[%c0_397, %c0_398] : memref<36x324xf32, #tpu.memory_space<vmem>>, vector<28x306xf32>
    %c28_399 = arith.constant 28 : index
    %c18_400 = arith.constant 18 : index
    %279 = vector.load %arg23[%c28_399, %c18_400] : memref<288x324xf32, #tpu.memory_space<vmem>>, vector<28x306xf32>
    tpu.vector_store %arg23[%c28_399, %c18_400], %278 {strides = array<i32>} : memref<288x324xf32, #tpu.memory_space<vmem>>, vector<28x306xf32>,
    %cst_401 = arith.constant 0.000000e+00 : f32
    %280 = vector.broadcast %cst_401 : f32 to vector<28x18xf32>
    %c28_402 = arith.constant 28 : index
    %c0_403 = arith.constant 0 : index
    %281 = vector.load %arg23[%c28_402, %c0_403] : memref<288x324xf32, #tpu.memory_space<vmem>>, vector<28x18xf32>
    tpu.vector_store %arg23[%c28_402, %c0_403], %280 {strides = array<i32>} : memref<288x324xf32, #tpu.memory_space<vmem>>, vector<28x18xf32>,
    %c0_404 = arith.constant 0 : index
    %c0_405 = arith.constant 0 : index
    %282 = vector.load %arg22[%c0_404, %c0_405] : memref<36x324xf32, #tpu.memory_space<vmem>>, vector<28x307xf32>
    %c56_406 = arith.constant 56 : index
    %c17_407 = arith.constant 17 : index
    %283 = vector.load %arg23[%c56_406, %c17_407] : memref<288x324xf32, #tpu.memory_space<vmem>>, vector<28x307xf32>
    tpu.vector_store %arg23[%c56_406, %c17_407], %282 {strides = array<i32>} : memref<288x324xf32, #tpu.memory_space<vmem>>, vector<28x307xf32>,
    %cst_408 = arith.constant 0.000000e+00 : f32
    %284 = vector.broadcast %cst_408 : f32 to vector<28x17xf32>
    %c56_409 = arith.constant 56 : index
    %c0_410 = arith.constant 0 : index
    %285 = vector.load %arg23[%c56_409, %c0_410] : memref<288x324xf32, #tpu.memory_space<vmem>>, vector<28x17xf32>
    tpu.vector_store %arg23[%c56_409, %c0_410], %284 {strides = array<i32>} : memref<288x324xf32, #tpu.memory_space<vmem>>, vector<28x17xf32>,
    %c0_411 = arith.constant 0 : index
    %c0_412 = arith.constant 0 : index
    %286 = vector.load %arg22[%c0_411, %c0_412] : memref<36x324xf32, #tpu.memory_space<vmem>>, vector<28x323xf32>
    %c84_413 = arith.constant 84 : index
    %c1_414 = arith.constant 1 : index
    %287 = vector.load %arg23[%c84_413, %c1_414] : memref<288x324xf32, #tpu.memory_space<vmem>>, vector<28x323xf32>
    tpu.vector_store %arg23[%c84_413, %c1_414], %286 {strides = array<i32>} : memref<288x324xf32, #tpu.memory_space<vmem>>, vector<28x323xf32>,
    %cst_415 = arith.constant 0.000000e+00 : f32
    %288 = vector.broadcast %cst_415 : f32 to vector<28x1xf32>
    %c84_416 = arith.constant 84 : index
    %c0_417 = arith.constant 0 : index
    %289 = vector.load %arg23[%c84_416, %c0_417] : memref<288x324xf32, #tpu.memory_space<vmem>>, vector<28x1xf32>
    tpu.vector_store %arg23[%c84_416, %c0_417], %288 {strides = array<i32>} : memref<288x324xf32, #tpu.memory_space<vmem>>, vector<28x1xf32>,
    %c0_418 = arith.constant 0 : index
    %c0_419 = arith.constant 0 : index
    %290 = vector.load %arg22[%c0_418, %c0_419] : memref<36x324xf32, #tpu.memory_space<vmem>>, vector<28x324xf32>
    %c112_420 = arith.constant 112 : index
    %c0_421 = arith.constant 0 : index
    %291 = vector.load %arg23[%c112_420, %c0_421] : memref<288x324xf32, #tpu.memory_space<vmem>>, vector<28x324xf32>
    tpu.vector_store %arg23[%c112_420, %c0_421], %290 {strides = array<i32>} : memref<288x324xf32, #tpu.memory_space<vmem>>, vector<28x324xf32>,
    %c0_422 = arith.constant 0 : index
    %c1_423 = arith.constant 1 : index
    %292 = vector.load %arg22[%c0_422, %c1_423] : memref<36x324xf32, #tpu.memory_space<vmem>>, vector<28x323xf32>
    %c140_424 = arith.constant 140 : index
    %c0_425 = arith.constant 0 : index
    %293 = vector.load %arg23[%c140_424, %c0_425] : memref<288x324xf32, #tpu.memory_space<vmem>>, vector<28x323xf32>
    tpu.vector_store %arg23[%c140_424, %c0_425], %292 {strides = array<i32>} : memref<288x324xf32, #tpu.memory_space<vmem>>, vector<28x323xf32>,
    %cst_426 = arith.constant 0.000000e+00 : f32
    %294 = vector.broadcast %cst_426 : f32 to vector<28x1xf32>
    %c140_427 = arith.constant 140 : index
    %c323_428 = arith.constant 323 : index
    %295 = vector.load %arg23[%c140_427, %c323_428] : memref<288x324xf32, #tpu.memory_space<vmem>>, vector<28x1xf32>
    tpu.vector_store %arg23[%c140_427, %c323_428], %294 {strides = array<i32>} : memref<288x324xf32, #tpu.memory_space<vmem>>, vector<28x1xf32>,
    %c0_429 = arith.constant 0 : index
    %c17_430 = arith.constant 17 : index
    %296 = vector.load %arg22[%c0_429, %c17_430] : memref<36x324xf32, #tpu.memory_space<vmem>>, vector<28x307xf32>
    %c168_431 = arith.constant 168 : index
    %c0_432 = arith.constant 0 : index
    %297 = vector.load %arg23[%c168_431, %c0_432] : memref<288x324xf32, #tpu.memory_space<vmem>>, vector<28x307xf32>
    tpu.vector_store %arg23[%c168_431, %c0_432], %296 {strides = array<i32>} : memref<288x324xf32, #tpu.memory_space<vmem>>, vector<28x307xf32>,
    %cst_433 = arith.constant 0.000000e+00 : f32
    %298 = vector.broadcast %cst_433 : f32 to vector<28x17xf32>
    %c168_434 = arith.constant 168 : index
    %c307_435 = arith.constant 307 : index
    %299 = vector.load %arg23[%c168_434, %c307_435] : memref<288x324xf32, #tpu.memory_space<vmem>>, vector<28x17xf32>
    tpu.vector_store %arg23[%c168_434, %c307_435], %298 {strides = array<i32>} : memref<288x324xf32, #tpu.memory_space<vmem>>, vector<28x17xf32>,
    %c0_436 = arith.constant 0 : index
    %c18_437 = arith.constant 18 : index
    %300 = vector.load %arg22[%c0_436, %c18_437] : memref<36x324xf32, #tpu.memory_space<vmem>>, vector<28x306xf32>
    %c196 = arith.constant 196 : index
    %c0_438 = arith.constant 0 : index
    %301 = vector.load %arg23[%c196, %c0_438] : memref<288x324xf32, #tpu.memory_space<vmem>>, vector<28x306xf32>
    tpu.vector_store %arg23[%c196, %c0_438], %300 {strides = array<i32>} : memref<288x324xf32, #tpu.memory_space<vmem>>, vector<28x306xf32>,
    %cst_439 = arith.constant 0.000000e+00 : f32
    %302 = vector.broadcast %cst_439 : f32 to vector<28x18xf32>
    %c196_440 = arith.constant 196 : index
    %c306_441 = arith.constant 306 : index
    %303 = vector.load %arg23[%c196_440, %c306_441] : memref<288x324xf32, #tpu.memory_space<vmem>>, vector<28x18xf32>
    tpu.vector_store %arg23[%c196_440, %c306_441], %302 {strides = array<i32>} : memref<288x324xf32, #tpu.memory_space<vmem>>, vector<28x18xf32>,
    %c0_442 = arith.constant 0 : index
    %c19_443 = arith.constant 19 : index
    %304 = vector.load %arg22[%c0_442, %c19_443] : memref<36x324xf32, #tpu.memory_space<vmem>>, vector<28x305xf32>
    %c224 = arith.constant 224 : index
    %c0_444 = arith.constant 0 : index
    %305 = vector.load %arg23[%c224, %c0_444] : memref<288x324xf32, #tpu.memory_space<vmem>>, vector<28x305xf32>
    tpu.vector_store %arg23[%c224, %c0_444], %304 {strides = array<i32>} : memref<288x324xf32, #tpu.memory_space<vmem>>, vector<28x305xf32>,
    %cst_445 = arith.constant 0.000000e+00 : f32
    %306 = vector.broadcast %cst_445 : f32 to vector<28x19xf32>
    %c224_446 = arith.constant 224 : index
    %c305_447 = arith.constant 305 : index
    %307 = vector.load %arg23[%c224_446, %c305_447] : memref<288x324xf32, #tpu.memory_space<vmem>>, vector<28x19xf32>
    tpu.vector_store %arg23[%c224_446, %c305_447], %306 {strides = array<i32>} : memref<288x324xf32, #tpu.memory_space<vmem>>, vector<28x19xf32>,
    %c0_448 = arith.constant 0 : index
    %c0_449 = arith.constant 0 : index
    %308 = vector.load %arg17[%c0_448, %c0_449] : memref<4x252xf32, #tpu.memory_space<vmem>>, vector<4x252xf32>
    %c0_450 = arith.constant 0 : index
    %c0_451 = arith.constant 0 : index
    %309 = vector.load %arg23[%c0_450, %c0_451] : memref<288x324xf32, #tpu.memory_space<vmem>>, vector<252x324xf32>
    %cst_452 = arith.constant dense<0.000000e+00> : vector<4x324xf32>
    %310 = tpu.matmul %308, %309, %cst_452 {dimension_numbers = #tpu.dot_dimension_numbers<[1], [0], [0], [1], [0, 0, 1, 1], [], []>} : vector<4x252xf32>, vector<252x324xf32>, vector<4x324xf32> -> vector<4x324xf32>
    %c0_453 = arith.constant 0 : index
    %c0_454 = arith.constant 0 : index
    %311 = vector.load %arg18[%c0_453, %c0_454] : memref<4x1xf32, #tpu.memory_space<vmem>>, vector<4x1xf32>
    %312 = vector.broadcast %311 : vector<4x1xf32> to vector<4x324xf32>
    %313 = arith.addf %310, %312 : vector<4x324xf32>
    %cst_455 = arith.constant 0.000000e+00 : f32
    %314 = vector.broadcast %cst_455 : f32 to vector<4x324xf32>
    %315 = arith.maximumf %313, %314 : vector<4x324xf32>
    %316 = vector.broadcast %0 : vector<1x324xf32> to vector<4x324xf32>
    %317 = arith.mulf %315, %316 : vector<4x324xf32>
    %c28_456 = arith.constant 28 : index
    %c0_457 = arith.constant 0 : index
    %318 = vector.load %arg22[%c28_456, %c0_457] : memref<36x324xf32, #tpu.memory_space<vmem>>, vector<4x324xf32>
    tpu.vector_store %arg22[%c28_456, %c0_457], %317 {strides = array<i32>} : memref<36x324xf32, #tpu.memory_space<vmem>>, vector<4x324xf32>,
    %c0_458 = arith.constant 0 : index
    %c0_459 = arith.constant 0 : index
    %319 = vector.load %arg22[%c0_458, %c0_459] : memref<36x324xf32, #tpu.memory_space<vmem>>, vector<32x305xf32>
    %c0_460 = arith.constant 0 : index
    %c19_461 = arith.constant 19 : index
    %320 = vector.load %arg23[%c0_460, %c19_461] : memref<288x324xf32, #tpu.memory_space<vmem>>, vector<32x305xf32>
    tpu.vector_store %arg23[%c0_460, %c19_461], %319 {strides = array<i32>} : memref<288x324xf32, #tpu.memory_space<vmem>>, vector<32x305xf32>,
    %cst_462 = arith.constant 0.000000e+00 : f32
    %321 = vector.broadcast %cst_462 : f32 to vector<32x19xf32>
    %c0_463 = arith.constant 0 : index
    %c0_464 = arith.constant 0 : index
    %322 = vector.load %arg23[%c0_463, %c0_464] : memref<288x324xf32, #tpu.memory_space<vmem>>, vector<32x19xf32>
    tpu.vector_store %arg23[%c0_463, %c0_464], %321 {strides = array<i32>} : memref<288x324xf32, #tpu.memory_space<vmem>>, vector<32x19xf32>,
    %c0_465 = arith.constant 0 : index
    %c0_466 = arith.constant 0 : index
    %323 = vector.load %arg22[%c0_465, %c0_466] : memref<36x324xf32, #tpu.memory_space<vmem>>, vector<32x306xf32>
    %c32_467 = arith.constant 32 : index
    %c18_468 = arith.constant 18 : index
    %324 = vector.load %arg23[%c32_467, %c18_468] : memref<288x324xf32, #tpu.memory_space<vmem>>, vector<32x306xf32>
    tpu.vector_store %arg23[%c32_467, %c18_468], %323 {strides = array<i32>} : memref<288x324xf32, #tpu.memory_space<vmem>>, vector<32x306xf32>,
    %cst_469 = arith.constant 0.000000e+00 : f32
    %325 = vector.broadcast %cst_469 : f32 to vector<32x18xf32>
    %c32_470 = arith.constant 32 : index
    %c0_471 = arith.constant 0 : index
    %326 = vector.load %arg23[%c32_470, %c0_471] : memref<288x324xf32, #tpu.memory_space<vmem>>, vector<32x18xf32>
    tpu.vector_store %arg23[%c32_470, %c0_471], %325 {strides = array<i32>} : memref<288x324xf32, #tpu.memory_space<vmem>>, vector<32x18xf32>,
    %c0_472 = arith.constant 0 : index
    %c0_473 = arith.constant 0 : index
    %327 = vector.load %arg22[%c0_472, %c0_473] : memref<36x324xf32, #tpu.memory_space<vmem>>, vector<32x307xf32>
    %c64_474 = arith.constant 64 : index
    %c17_475 = arith.constant 17 : index
    %328 = vector.load %arg23[%c64_474, %c17_475] : memref<288x324xf32, #tpu.memory_space<vmem>>, vector<32x307xf32>
    tpu.vector_store %arg23[%c64_474, %c17_475], %327 {strides = array<i32>} : memref<288x324xf32, #tpu.memory_space<vmem>>, vector<32x307xf32>,
    %cst_476 = arith.constant 0.000000e+00 : f32
    %329 = vector.broadcast %cst_476 : f32 to vector<32x17xf32>
    %c64_477 = arith.constant 64 : index
    %c0_478 = arith.constant 0 : index
    %330 = vector.load %arg23[%c64_477, %c0_478] : memref<288x324xf32, #tpu.memory_space<vmem>>, vector<32x17xf32>
    tpu.vector_store %arg23[%c64_477, %c0_478], %329 {strides = array<i32>} : memref<288x324xf32, #tpu.memory_space<vmem>>, vector<32x17xf32>,
    %c0_479 = arith.constant 0 : index
    %c0_480 = arith.constant 0 : index
    %331 = vector.load %arg22[%c0_479, %c0_480] : memref<36x324xf32, #tpu.memory_space<vmem>>, vector<32x323xf32>
    %c96_481 = arith.constant 96 : index
    %c1_482 = arith.constant 1 : index
    %332 = vector.load %arg23[%c96_481, %c1_482] : memref<288x324xf32, #tpu.memory_space<vmem>>, vector<32x323xf32>
    tpu.vector_store %arg23[%c96_481, %c1_482], %331 {strides = array<i32>} : memref<288x324xf32, #tpu.memory_space<vmem>>, vector<32x323xf32>,
    %cst_483 = arith.constant 0.000000e+00 : f32
    %333 = vector.broadcast %cst_483 : f32 to vector<32x1xf32>
    %c96_484 = arith.constant 96 : index
    %c0_485 = arith.constant 0 : index
    %334 = vector.load %arg23[%c96_484, %c0_485] : memref<288x324xf32, #tpu.memory_space<vmem>>, vector<32x1xf32>
    tpu.vector_store %arg23[%c96_484, %c0_485], %333 {strides = array<i32>} : memref<288x324xf32, #tpu.memory_space<vmem>>, vector<32x1xf32>,
    %c0_486 = arith.constant 0 : index
    %c0_487 = arith.constant 0 : index
    %335 = vector.load %arg22[%c0_486, %c0_487] : memref<36x324xf32, #tpu.memory_space<vmem>>, vector<32x324xf32>
    %c128_488 = arith.constant 128 : index
    %c0_489 = arith.constant 0 : index
    %336 = vector.load %arg23[%c128_488, %c0_489] : memref<288x324xf32, #tpu.memory_space<vmem>>, vector<32x324xf32>
    tpu.vector_store %arg23[%c128_488, %c0_489], %335 {strides = array<i32>} : memref<288x324xf32, #tpu.memory_space<vmem>>, vector<32x324xf32>,
    %c0_490 = arith.constant 0 : index
    %c1_491 = arith.constant 1 : index
    %337 = vector.load %arg22[%c0_490, %c1_491] : memref<36x324xf32, #tpu.memory_space<vmem>>, vector<32x323xf32>
    %c160_492 = arith.constant 160 : index
    %c0_493 = arith.constant 0 : index
    %338 = vector.load %arg23[%c160_492, %c0_493] : memref<288x324xf32, #tpu.memory_space<vmem>>, vector<32x323xf32>
    tpu.vector_store %arg23[%c160_492, %c0_493], %337 {strides = array<i32>} : memref<288x324xf32, #tpu.memory_space<vmem>>, vector<32x323xf32>,
    %cst_494 = arith.constant 0.000000e+00 : f32
    %339 = vector.broadcast %cst_494 : f32 to vector<32x1xf32>
    %c160_495 = arith.constant 160 : index
    %c323_496 = arith.constant 323 : index
    %340 = vector.load %arg23[%c160_495, %c323_496] : memref<288x324xf32, #tpu.memory_space<vmem>>, vector<32x1xf32>
    tpu.vector_store %arg23[%c160_495, %c323_496], %339 {strides = array<i32>} : memref<288x324xf32, #tpu.memory_space<vmem>>, vector<32x1xf32>,
    %c0_497 = arith.constant 0 : index
    %c17_498 = arith.constant 17 : index
    %341 = vector.load %arg22[%c0_497, %c17_498] : memref<36x324xf32, #tpu.memory_space<vmem>>, vector<32x307xf32>
    %c192_499 = arith.constant 192 : index
    %c0_500 = arith.constant 0 : index
    %342 = vector.load %arg23[%c192_499, %c0_500] : memref<288x324xf32, #tpu.memory_space<vmem>>, vector<32x307xf32>
    tpu.vector_store %arg23[%c192_499, %c0_500], %341 {strides = array<i32>} : memref<288x324xf32, #tpu.memory_space<vmem>>, vector<32x307xf32>,
    %cst_501 = arith.constant 0.000000e+00 : f32
    %343 = vector.broadcast %cst_501 : f32 to vector<32x17xf32>
    %c192_502 = arith.constant 192 : index
    %c307_503 = arith.constant 307 : index
    %344 = vector.load %arg23[%c192_502, %c307_503] : memref<288x324xf32, #tpu.memory_space<vmem>>, vector<32x17xf32>
    tpu.vector_store %arg23[%c192_502, %c307_503], %343 {strides = array<i32>} : memref<288x324xf32, #tpu.memory_space<vmem>>, vector<32x17xf32>,
    %c0_504 = arith.constant 0 : index
    %c18_505 = arith.constant 18 : index
    %345 = vector.load %arg22[%c0_504, %c18_505] : memref<36x324xf32, #tpu.memory_space<vmem>>, vector<32x306xf32>
    %c224_506 = arith.constant 224 : index
    %c0_507 = arith.constant 0 : index
    %346 = vector.load %arg23[%c224_506, %c0_507] : memref<288x324xf32, #tpu.memory_space<vmem>>, vector<32x306xf32>
    tpu.vector_store %arg23[%c224_506, %c0_507], %345 {strides = array<i32>} : memref<288x324xf32, #tpu.memory_space<vmem>>, vector<32x306xf32>,
    %cst_508 = arith.constant 0.000000e+00 : f32
    %347 = vector.broadcast %cst_508 : f32 to vector<32x18xf32>
    %c224_509 = arith.constant 224 : index
    %c306_510 = arith.constant 306 : index
    %348 = vector.load %arg23[%c224_509, %c306_510] : memref<288x324xf32, #tpu.memory_space<vmem>>, vector<32x18xf32>
    tpu.vector_store %arg23[%c224_509, %c306_510], %347 {strides = array<i32>} : memref<288x324xf32, #tpu.memory_space<vmem>>, vector<32x18xf32>,
    %c0_511 = arith.constant 0 : index
    %c19_512 = arith.constant 19 : index
    %349 = vector.load %arg22[%c0_511, %c19_512] : memref<36x324xf32, #tpu.memory_space<vmem>>, vector<32x305xf32>
    %c256 = arith.constant 256 : index
    %c0_513 = arith.constant 0 : index
    %350 = vector.load %arg23[%c256, %c0_513] : memref<288x324xf32, #tpu.memory_space<vmem>>, vector<32x305xf32>
    tpu.vector_store %arg23[%c256, %c0_513], %349 {strides = array<i32>} : memref<288x324xf32, #tpu.memory_space<vmem>>, vector<32x305xf32>,
    %cst_514 = arith.constant 0.000000e+00 : f32
    %351 = vector.broadcast %cst_514 : f32 to vector<32x19xf32>
    %c256_515 = arith.constant 256 : index
    %c305_516 = arith.constant 305 : index
    %352 = vector.load %arg23[%c256_515, %c305_516] : memref<288x324xf32, #tpu.memory_space<vmem>>, vector<32x19xf32>
    tpu.vector_store %arg23[%c256_515, %c305_516], %351 {strides = array<i32>} : memref<288x324xf32, #tpu.memory_space<vmem>>, vector<32x19xf32>,
    %c0_517 = arith.constant 0 : index
    %c0_518 = arith.constant 0 : index
    %353 = vector.load %arg19[%c0_517, %c0_518] : memref<4x288xf32, #tpu.memory_space<vmem>>, vector<4x288xf32>
    %c0_519 = arith.constant 0 : index
    %c0_520 = arith.constant 0 : index
    %354 = vector.load %arg23[%c0_519, %c0_520] : memref<288x324xf32, #tpu.memory_space<vmem>>, vector<288x324xf32>
    %cst_521 = arith.constant dense<0.000000e+00> : vector<4x324xf32>
    %355 = tpu.matmul %353, %354, %cst_521 {dimension_numbers = #tpu.dot_dimension_numbers<[1], [0], [0], [1], [0, 0, 1, 1], [], []>} : vector<4x288xf32>, vector<288x324xf32>, vector<4x324xf32> -> vector<4x324xf32>
    %c0_522 = arith.constant 0 : index
    %c0_523 = arith.constant 0 : index
    %356 = vector.load %arg20[%c0_522, %c0_523] : memref<4x1xf32, #tpu.memory_space<vmem>>, vector<4x1xf32>
    %357 = vector.broadcast %356 : vector<4x1xf32> to vector<4x324xf32>
    %358 = arith.addf %355, %357 : vector<4x324xf32>
    %cst_524 = arith.constant 0.000000e+00 : f32
    %359 = vector.broadcast %cst_524 : f32 to vector<4x324xf32>
    %360 = arith.maximumf %358, %359 : vector<4x324xf32>
    %361 = vector.broadcast %0 : vector<1x324xf32> to vector<4x324xf32>
    %362 = arith.mulf %360, %361 : vector<4x324xf32>
    %c32_525 = arith.constant 32 : index
    %c0_526 = arith.constant 0 : index
    %363 = vector.load %arg22[%c32_525, %c0_526] : memref<36x324xf32, #tpu.memory_space<vmem>>, vector<4x324xf32>
    tpu.vector_store %arg22[%c32_525, %c0_526], %362 {strides = array<i32>} : memref<36x324xf32, #tpu.memory_space<vmem>>, vector<4x324xf32>,
    %c0_527 = arith.constant 0 : index
    %c0_528 = arith.constant 0 : index
    %364 = vector.load %arg3[%c0_527, %c0_528] : memref<4x36xf32, #tpu.memory_space<vmem>>, vector<4x36xf32>
    %c0_529 = arith.constant 0 : index
    %c0_530 = arith.constant 0 : index
    %365 = vector.load %arg22[%c0_529, %c0_530] : memref<36x324xf32, #tpu.memory_space<vmem>>, vector<36x324xf32>
    %cst_531 = arith.constant dense<0.000000e+00> : vector<4x324xf32>
    %366 = tpu.matmul %364, %365, %cst_531 {dimension_numbers = #tpu.dot_dimension_numbers<[1], [0], [0], [1], [0, 0, 1, 1], [], []>} : vector<4x36xf32>, vector<36x324xf32>, vector<4x324xf32> -> vector<4x324xf32>
    %c0_532 = arith.constant 0 : index
    %c0_533 = arith.constant 0 : index
    %367 = vector.load %arg4[%c0_532, %c0_533] : memref<4x1xf32, #tpu.memory_space<vmem>>, vector<4x1xf32>
    %368 = vector.broadcast %367 : vector<4x1xf32> to vector<4x324xf32>
    %369 = arith.addf %366, %368 : vector<4x324xf32>
    %c0_534 = arith.constant 0 : index
    %c0_535 = arith.constant 0 : index
    %370 = vector.load %arg22[%c0_534, %c0_535] : memref<36x324xf32, #tpu.memory_space<vmem>>, vector<4x324xf32>
    %371 = arith.addf %369, %370 : vector<4x324xf32>
    %c0_536 = arith.constant 0 : index
    %c0_537 = arith.constant 0 : index
    %372 = vector.load %arg23[%c0_536, %c0_537] : memref<288x324xf32, #tpu.memory_space<vmem>>, vector<4x324xf32>
    tpu.vector_store %arg23[%c0_536, %c0_537], %371 {strides = array<i32>} : memref<288x324xf32, #tpu.memory_space<vmem>>, vector<4x324xf32>,
    %c0_538 = arith.constant 0 : index
    %c19_539 = arith.constant 19 : index
    %373 = vector.load %arg23[%c0_538, %c19_539] : memref<288x324xf32, #tpu.memory_space<vmem>>, vector<4x16xf32>
    %c0_540 = arith.constant 0 : index
    %c0_541 = arith.constant 0 : index
    %c0_542 = arith.constant 0 : index
    %374 = vector.load %arg21[%c0_540, %c0_541, %c0_542] : memref<1x4x256xf32, #tpu.memory_space<vmem>>, vector<1x4x16xf32>
    %375 = vector.shape_cast %374 : vector<1x4x16xf32> to vector<4x16xf32>
    %376 = vector.shape_cast %373 : vector<4x16xf32> to vector<1x4x16xf32>
    tpu.vector_store %arg21[%c0_540, %c0_541, %c0_542], %376 {strides = array<i32>} : memref<1x4x256xf32, #tpu.memory_space<vmem>>, vector<1x4x16xf32>,
    %c0_543 = arith.constant 0 : index
    %c37 = arith.constant 37 : index
    %377 = vector.load %arg23[%c0_543, %c37] : memref<288x324xf32, #tpu.memory_space<vmem>>, vector<4x16xf32>
    %c0_544 = arith.constant 0 : index
    %c0_545 = arith.constant 0 : index
    %c16_546 = arith.constant 16 : index
    %378 = vector.load %arg21[%c0_544, %c0_545, %c16_546] : memref<1x4x256xf32, #tpu.memory_space<vmem>>, vector<1x4x16xf32>
    %379 = vector.shape_cast %378 : vector<1x4x16xf32> to vector<4x16xf32>
    %380 = vector.shape_cast %377 : vector<4x16xf32> to vector<1x4x16xf32>
    tpu.vector_store %arg21[%c0_544, %c0_545, %c16_546], %380 {strides = array<i32>} : memref<1x4x256xf32, #tpu.memory_space<vmem>>, vector<1x4x16xf32>,
    %c0_547 = arith.constant 0 : index
    %c55 = arith.constant 55 : index
    %381 = vector.load %arg23[%c0_547, %c55] : memref<288x324xf32, #tpu.memory_space<vmem>>, vector<4x16xf32>
    %c0_548 = arith.constant 0 : index
    %c0_549 = arith.constant 0 : index
    %c32_550 = arith.constant 32 : index
    %382 = vector.load %arg21[%c0_548, %c0_549, %c32_550] : memref<1x4x256xf32, #tpu.memory_space<vmem>>, vector<1x4x16xf32>
    %383 = vector.shape_cast %382 : vector<1x4x16xf32> to vector<4x16xf32>
    %384 = vector.shape_cast %381 : vector<4x16xf32> to vector<1x4x16xf32>
    tpu.vector_store %arg21[%c0_548, %c0_549, %c32_550], %384 {strides = array<i32>} : memref<1x4x256xf32, #tpu.memory_space<vmem>>, vector<1x4x16xf32>,
    %c0_551 = arith.constant 0 : index
    %c73 = arith.constant 73 : index
    %385 = vector.load %arg23[%c0_551, %c73] : memref<288x324xf32, #tpu.memory_space<vmem>>, vector<4x16xf32>
    %c0_552 = arith.constant 0 : index
    %c0_553 = arith.constant 0 : index
    %c48_554 = arith.constant 48 : index
    %386 = vector.load %arg21[%c0_552, %c0_553, %c48_554] : memref<1x4x256xf32, #tpu.memory_space<vmem>>, vector<1x4x16xf32>
    %387 = vector.shape_cast %386 : vector<1x4x16xf32> to vector<4x16xf32>
    %388 = vector.shape_cast %385 : vector<4x16xf32> to vector<1x4x16xf32>
    tpu.vector_store %arg21[%c0_552, %c0_553, %c48_554], %388 {strides = array<i32>} : memref<1x4x256xf32, #tpu.memory_space<vmem>>, vector<1x4x16xf32>,
    %c0_555 = arith.constant 0 : index
    %c91 = arith.constant 91 : index
    %389 = vector.load %arg23[%c0_555, %c91] : memref<288x324xf32, #tpu.memory_space<vmem>>, vector<4x16xf32>
    %c0_556 = arith.constant 0 : index
    %c0_557 = arith.constant 0 : index
    %c64_558 = arith.constant 64 : index
    %390 = vector.load %arg21[%c0_556, %c0_557, %c64_558] : memref<1x4x256xf32, #tpu.memory_space<vmem>>, vector<1x4x16xf32>
    %391 = vector.shape_cast %390 : vector<1x4x16xf32> to vector<4x16xf32>
    %392 = vector.shape_cast %389 : vector<4x16xf32> to vector<1x4x16xf32>
    tpu.vector_store %arg21[%c0_556, %c0_557, %c64_558], %392 {strides = array<i32>} : memref<1x4x256xf32, #tpu.memory_space<vmem>>, vector<1x4x16xf32>,
    %c0_559 = arith.constant 0 : index
    %c109 = arith.constant 109 : index
    %393 = vector.load %arg23[%c0_559, %c109] : memref<288x324xf32, #tpu.memory_space<vmem>>, vector<4x16xf32>
    %c0_560 = arith.constant 0 : index
    %c0_561 = arith.constant 0 : index
    %c80_562 = arith.constant 80 : index
    %394 = vector.load %arg21[%c0_560, %c0_561, %c80_562] : memref<1x4x256xf32, #tpu.memory_space<vmem>>, vector<1x4x16xf32>
    %395 = vector.shape_cast %394 : vector<1x4x16xf32> to vector<4x16xf32>
    %396 = vector.shape_cast %393 : vector<4x16xf32> to vector<1x4x16xf32>
    tpu.vector_store %arg21[%c0_560, %c0_561, %c80_562], %396 {strides = array<i32>} : memref<1x4x256xf32, #tpu.memory_space<vmem>>, vector<1x4x16xf32>,
    %c0_563 = arith.constant 0 : index
    %c127 = arith.constant 127 : index
    %397 = vector.load %arg23[%c0_563, %c127] : memref<288x324xf32, #tpu.memory_space<vmem>>, vector<4x16xf32>
    %c0_564 = arith.constant 0 : index
    %c0_565 = arith.constant 0 : index
    %c96_566 = arith.constant 96 : index
    %398 = vector.load %arg21[%c0_564, %c0_565, %c96_566] : memref<1x4x256xf32, #tpu.memory_space<vmem>>, vector<1x4x16xf32>
    %399 = vector.shape_cast %398 : vector<1x4x16xf32> to vector<4x16xf32>
    %400 = vector.shape_cast %397 : vector<4x16xf32> to vector<1x4x16xf32>
    tpu.vector_store %arg21[%c0_564, %c0_565, %c96_566], %400 {strides = array<i32>} : memref<1x4x256xf32, #tpu.memory_space<vmem>>, vector<1x4x16xf32>,
    %c0_567 = arith.constant 0 : index
    %c145 = arith.constant 145 : index
    %401 = vector.load %arg23[%c0_567, %c145] : memref<288x324xf32, #tpu.memory_space<vmem>>, vector<4x16xf32>
    %c0_568 = arith.constant 0 : index
    %c0_569 = arith.constant 0 : index
    %c112_570 = arith.constant 112 : index
    %402 = vector.load %arg21[%c0_568, %c0_569, %c112_570] : memref<1x4x256xf32, #tpu.memory_space<vmem>>, vector<1x4x16xf32>
    %403 = vector.shape_cast %402 : vector<1x4x16xf32> to vector<4x16xf32>
    %404 = vector.shape_cast %401 : vector<4x16xf32> to vector<1x4x16xf32>
    tpu.vector_store %arg21[%c0_568, %c0_569, %c112_570], %404 {strides = array<i32>} : memref<1x4x256xf32, #tpu.memory_space<vmem>>, vector<1x4x16xf32>,
    %c0_571 = arith.constant 0 : index
    %c163 = arith.constant 163 : index
    %405 = vector.load %arg23[%c0_571, %c163] : memref<288x324xf32, #tpu.memory_space<vmem>>, vector<4x16xf32>
    %c0_572 = arith.constant 0 : index
    %c0_573 = arith.constant 0 : index
    %c128_574 = arith.constant 128 : index
    %406 = vector.load %arg21[%c0_572, %c0_573, %c128_574] : memref<1x4x256xf32, #tpu.memory_space<vmem>>, vector<1x4x16xf32>
    %407 = vector.shape_cast %406 : vector<1x4x16xf32> to vector<4x16xf32>
    %408 = vector.shape_cast %405 : vector<4x16xf32> to vector<1x4x16xf32>
    tpu.vector_store %arg21[%c0_572, %c0_573, %c128_574], %408 {strides = array<i32>} : memref<1x4x256xf32, #tpu.memory_space<vmem>>, vector<1x4x16xf32>,
    %c0_575 = arith.constant 0 : index
    %c181 = arith.constant 181 : index
    %409 = vector.load %arg23[%c0_575, %c181] : memref<288x324xf32, #tpu.memory_space<vmem>>, vector<4x16xf32>
    %c0_576 = arith.constant 0 : index
    %c0_577 = arith.constant 0 : index
    %c144_578 = arith.constant 144 : index
    %410 = vector.load %arg21[%c0_576, %c0_577, %c144_578] : memref<1x4x256xf32, #tpu.memory_space<vmem>>, vector<1x4x16xf32>
    %411 = vector.shape_cast %410 : vector<1x4x16xf32> to vector<4x16xf32>
    %412 = vector.shape_cast %409 : vector<4x16xf32> to vector<1x4x16xf32>
    tpu.vector_store %arg21[%c0_576, %c0_577, %c144_578], %412 {strides = array<i32>} : memref<1x4x256xf32, #tpu.memory_space<vmem>>, vector<1x4x16xf32>,
    %c0_579 = arith.constant 0 : index
    %c199 = arith.constant 199 : index
    %413 = vector.load %arg23[%c0_579, %c199] : memref<288x324xf32, #tpu.memory_space<vmem>>, vector<4x16xf32>
    %c0_580 = arith.constant 0 : index
    %c0_581 = arith.constant 0 : index
    %c160_582 = arith.constant 160 : index
    %414 = vector.load %arg21[%c0_580, %c0_581, %c160_582] : memref<1x4x256xf32, #tpu.memory_space<vmem>>, vector<1x4x16xf32>
    %415 = vector.shape_cast %414 : vector<1x4x16xf32> to vector<4x16xf32>
    %416 = vector.shape_cast %413 : vector<4x16xf32> to vector<1x4x16xf32>
    tpu.vector_store %arg21[%c0_580, %c0_581, %c160_582], %416 {strides = array<i32>} : memref<1x4x256xf32, #tpu.memory_space<vmem>>, vector<1x4x16xf32>,
    %c0_583 = arith.constant 0 : index
    %c217 = arith.constant 217 : index
    %417 = vector.load %arg23[%c0_583, %c217] : memref<288x324xf32, #tpu.memory_space<vmem>>, vector<4x16xf32>
    %c0_584 = arith.constant 0 : index
    %c0_585 = arith.constant 0 : index
    %c176 = arith.constant 176 : index
    %418 = vector.load %arg21[%c0_584, %c0_585, %c176] : memref<1x4x256xf32, #tpu.memory_space<vmem>>, vector<1x4x16xf32>
    %419 = vector.shape_cast %418 : vector<1x4x16xf32> to vector<4x16xf32>
    %420 = vector.shape_cast %417 : vector<4x16xf32> to vector<1x4x16xf32>
    tpu.vector_store %arg21[%c0_584, %c0_585, %c176], %420 {strides = array<i32>} : memref<1x4x256xf32, #tpu.memory_space<vmem>>, vector<1x4x16xf32>,
    %c0_586 = arith.constant 0 : index
    %c235 = arith.constant 235 : index
    %421 = vector.load %arg23[%c0_586, %c235] : memref<288x324xf32, #tpu.memory_space<vmem>>, vector<4x16xf32>
    %c0_587 = arith.constant 0 : index
    %c0_588 = arith.constant 0 : index
    %c192_589 = arith.constant 192 : index
    %422 = vector.load %arg21[%c0_587, %c0_588, %c192_589] : memref<1x4x256xf32, #tpu.memory_space<vmem>>, vector<1x4x16xf32>
    %423 = vector.shape_cast %422 : vector<1x4x16xf32> to vector<4x16xf32>
    %424 = vector.shape_cast %421 : vector<4x16xf32> to vector<1x4x16xf32>
    tpu.vector_store %arg21[%c0_587, %c0_588, %c192_589], %424 {strides = array<i32>} : memref<1x4x256xf32, #tpu.memory_space<vmem>>, vector<1x4x16xf32>,
    %c0_590 = arith.constant 0 : index
    %c253 = arith.constant 253 : index
    %425 = vector.load %arg23[%c0_590, %c253] : memref<288x324xf32, #tpu.memory_space<vmem>>, vector<4x16xf32>
    %c0_591 = arith.constant 0 : index
    %c0_592 = arith.constant 0 : index
    %c208 = arith.constant 208 : index
    %426 = vector.load %arg21[%c0_591, %c0_592, %c208] : memref<1x4x256xf32, #tpu.memory_space<vmem>>, vector<1x4x16xf32>
    %427 = vector.shape_cast %426 : vector<1x4x16xf32> to vector<4x16xf32>
    %428 = vector.shape_cast %425 : vector<4x16xf32> to vector<1x4x16xf32>
    tpu.vector_store %arg21[%c0_591, %c0_592, %c208], %428 {strides = array<i32>} : memref<1x4x256xf32, #tpu.memory_space<vmem>>, vector<1x4x16xf32>,
    %c0_593 = arith.constant 0 : index
    %c271 = arith.constant 271 : index
    %429 = vector.load %arg23[%c0_593, %c271] : memref<288x324xf32, #tpu.memory_space<vmem>>, vector<4x16xf32>
    %c0_594 = arith.constant 0 : index
    %c0_595 = arith.constant 0 : index
    %c224_596 = arith.constant 224 : index
    %430 = vector.load %arg21[%c0_594, %c0_595, %c224_596] : memref<1x4x256xf32, #tpu.memory_space<vmem>>, vector<1x4x16xf32>
    %431 = vector.shape_cast %430 : vector<1x4x16xf32> to vector<4x16xf32>
    %432 = vector.shape_cast %429 : vector<4x16xf32> to vector<1x4x16xf32>
    tpu.vector_store %arg21[%c0_594, %c0_595, %c224_596], %432 {strides = array<i32>} : memref<1x4x256xf32, #tpu.memory_space<vmem>>, vector<1x4x16xf32>,
    %c0_597 = arith.constant 0 : index
    %c289 = arith.constant 289 : index
    %433 = vector.load %arg23[%c0_597, %c289] : memref<288x324xf32, #tpu.memory_space<vmem>>, vector<4x16xf32>
    %c0_598 = arith.constant 0 : index
    %c0_599 = arith.constant 0 : index
    %c240 = arith.constant 240 : index
    %434 = vector.load %arg21[%c0_598, %c0_599, %c240] : memref<1x4x256xf32, #tpu.memory_space<vmem>>, vector<1x4x16xf32>
    %435 = vector.shape_cast %434 : vector<1x4x16xf32> to vector<4x16xf32>
    %436 = vector.shape_cast %433 : vector<4x16xf32> to vector<1x4x16xf32>
    tpu.vector_store %arg21[%c0_598, %c0_599, %c240], %436 {strides = array<i32>} : memref<1x4x256xf32, #tpu.memory_space<vmem>>, vector<1x4x16xf32>,
    return
  }
  func.func @transform_0(%arg0: i32) -> (i32, i32, i32) {
    %c0_i32 = arith.constant 0 : i32
    %c0_i32_0 = arith.constant 0 : i32
    %c0_i32_1 = arith.constant 0 : i32
    return %arg0, %c0_i32, %c0_i32_0 : i32, i32, i32
  }
  func.func @transform_1(%arg0: i32) -> (i32, i32) {
    %c0_i32 = arith.constant 0 : i32
    %c0_i32_0 = arith.constant 0 : i32
    %c0_i32_1 = arith.constant 0 : i32
    return %c0_i32, %c0_i32_0 : i32, i32
  }
  func.func @transform_2(%arg0: i32) -> (i32, i32) {
    %c0_i32 = arith.constant 0 : i32
    %c0_i32_0 = arith.constant 0 : i32
    %c0_i32_1 = arith.constant 0 : i32
    return %c0_i32, %c0_i32_0 : i32, i32
  }
  func.func @transform_3(%arg0: i32) -> (i32, i32) {
    %c0_i32 = arith.constant 0 : i32
    %c0_i32_0 = arith.constant 0 : i32
    %c0_i32_1 = arith.constant 0 : i32
    return %c0_i32, %c0_i32_0 : i32, i32
  }
  func.func @transform_4(%arg0: i32) -> (i32, i32) {
    %c0_i32 = arith.constant 0 : i32
    %c0_i32_0 = arith.constant 0 : i32
    %c0_i32_1 = arith.constant 0 : i32
    return %c0_i32, %c0_i32_0 : i32, i32
  }
  func.func @transform_5(%arg0: i32) -> (i32, i32) {
    %c0_i32 = arith.constant 0 : i32
    %c0_i32_0 = arith.constant 0 : i32
    %c0_i32_1 = arith.constant 0 : i32
    return %c0_i32, %c0_i32_0 : i32, i32
  }
  func.func @transform_6(%arg0: i32) -> (i32, i32) {
    %c0_i32 = arith.constant 0 : i32
    %c0_i32_0 = arith.constant 0 : i32
    %c0_i32_1 = arith.constant 0 : i32
    return %c0_i32, %c0_i32_0 : i32, i32
  }
  func.func @transform_7(%arg0: i32) -> (i32, i32) {
    %c0_i32 = arith.constant 0 : i32
    %c0_i32_0 = arith.constant 0 : i32
    %c0_i32_1 = arith.constant 0 : i32
    return %c0_i32, %c0_i32_0 : i32, i32
  }
  func.func @transform_8(%arg0: i32) -> (i32, i32) {
    %c0_i32 = arith.constant 0 : i32
    %c0_i32_0 = arith.constant 0 : i32
    %c0_i32_1 = arith.constant 0 : i32
    return %c0_i32, %c0_i32_0 : i32, i32
  }
  func.func @transform_9(%arg0: i32) -> (i32, i32) {
    %c0_i32 = arith.constant 0 : i32
    %c0_i32_0 = arith.constant 0 : i32
    %c0_i32_1 = arith.constant 0 : i32
    return %c0_i32, %c0_i32_0 : i32, i32
  }
  func.func @transform_10(%arg0: i32) -> (i32, i32) {
    %c0_i32 = arith.constant 0 : i32
    %c0_i32_0 = arith.constant 0 : i32
    %c0_i32_1 = arith.constant 0 : i32
    return %c0_i32, %c0_i32_0 : i32, i32
  }
  func.func @transform_11(%arg0: i32) -> (i32, i32) {
    %c0_i32 = arith.constant 0 : i32
    %c0_i32_0 = arith.constant 0 : i32
    %c0_i32_1 = arith.constant 0 : i32
    return %c0_i32, %c0_i32_0 : i32, i32
  }
  func.func @transform_12(%arg0: i32) -> (i32, i32) {
    %c0_i32 = arith.constant 0 : i32
    %c0_i32_0 = arith.constant 0 : i32
    %c0_i32_1 = arith.constant 0 : i32
    return %c0_i32, %c0_i32_0 : i32, i32
  }
  func.func @transform_13(%arg0: i32) -> (i32, i32) {
    %c0_i32 = arith.constant 0 : i32
    %c0_i32_0 = arith.constant 0 : i32
    %c0_i32_1 = arith.constant 0 : i32
    return %c0_i32, %c0_i32_0 : i32, i32
  }
  func.func @transform_14(%arg0: i32) -> (i32, i32) {
    %c0_i32 = arith.constant 0 : i32
    %c0_i32_0 = arith.constant 0 : i32
    %c0_i32_1 = arith.constant 0 : i32
    return %c0_i32, %c0_i32_0 : i32, i32
  }
  func.func @transform_15(%arg0: i32) -> (i32, i32) {
    %c0_i32 = arith.constant 0 : i32
    %c0_i32_0 = arith.constant 0 : i32
    %c0_i32_1 = arith.constant 0 : i32
    return %c0_i32, %c0_i32_0 : i32, i32
  }
  func.func @transform_16(%arg0: i32) -> (i32, i32) {
    %c0_i32 = arith.constant 0 : i32
    %c0_i32_0 = arith.constant 0 : i32
    %c0_i32_1 = arith.constant 0 : i32
    return %c0_i32, %c0_i32_0 : i32, i32
  }
  func.func @transform_17(%arg0: i32) -> (i32, i32) {
    %c0_i32 = arith.constant 0 : i32
    %c0_i32_0 = arith.constant 0 : i32
    %c0_i32_1 = arith.constant 0 : i32
    return %c0_i32, %c0_i32_0 : i32, i32
  }
  func.func @transform_18(%arg0: i32) -> (i32, i32) {
    %c0_i32 = arith.constant 0 : i32
    %c0_i32_0 = arith.constant 0 : i32
    %c0_i32_1 = arith.constant 0 : i32
    return %c0_i32, %c0_i32_0 : i32, i32
  }
  func.func @transform_19(%arg0: i32) -> (i32, i32) {
    %c0_i32 = arith.constant 0 : i32
    %c0_i32_0 = arith.constant 0 : i32
    %c0_i32_1 = arith.constant 0 : i32
    return %c0_i32, %c0_i32_0 : i32, i32
  }
  func.func @transform_20(%arg0: i32) -> (i32, i32, i32) {
    %c0_i32 = arith.constant 0 : i32
    %c0_i32_0 = arith.constant 0 : i32
    %c0_i32_1 = arith.constant 0 : i32
    return %arg0, %c0_i32, %c0_i32_0 : i32, i32, i32
  }
}

</mosaic_0001>

<llo_original>
// kernel: tpu_custom_call.1
$region0: #{tpu_custom_call.1}
  #allocation0 [shape = 'u32[]', space=smem, size = 0x4, offset = 0x4, fixed_abs, tag = 'smem constant byte address 0x4 - core index']
  #allocation1 [shape = 'u32[144,128]{1,0:T(1,128)}', space=vmem, size = 0x12000, scoped, tag = 'internal scratch']
  #allocation2 [shape = 'f32[36,324]{1,0:T(8,128)}', space=vmem, size = 0xf000, scoped, tag = 'scratch operand']
  #allocation3 [shape = 'f32[288,324]{1,0:T(8,128)}', space=vmem, size = 0x6c000, scoped, tag = 'scratch operand']
  %s0 = inlined_call_operand.vmem [shape: f32[2,4,324], index: 0, kind: input, shape index: {}]
  %s1 = inlined_call_operand.hbm [shape: f32[1,324], index: 1, kind: input, shape index: {}]
  %s2 = inlined_call_operand.hbm [shape: f32[4,36], index: 2, kind: input, shape index: {}]
  %s3 = inlined_call_operand.vmem [shape: f32[4,1], index: 3, kind: input, shape index: {}]
  %s4 = inlined_call_operand.hbm [shape: f32[4,36], index: 4, kind: input, shape index: {}]
  %s5 = inlined_call_operand.vmem [shape: f32[4,1], index: 5, kind: input, shape index: {}]
  %s6 = inlined_call_operand.hbm [shape: f32[4,72], index: 6, kind: input, shape index: {}]
  %s7 = inlined_call_operand.vmem [shape: f32[4,1], index: 7, kind: input, shape index: {}]
  %s8 = inlined_call_operand.vmem [shape: f32[4,108], index: 8, kind: input, shape index: {}]
  %s9 = inlined_call_operand.vmem [shape: f32[4,1], index: 9, kind: input, shape index: {}]
  %s10 = inlined_call_operand.vmem [shape: f32[4,144], index: 10, kind: input, shape index: {}]
  %s11 = inlined_call_operand.vmem [shape: f32[4,1], index: 11, kind: input, shape index: {}]
  %s12 = inlined_call_operand.vmem [shape: f32[4,180], index: 12, kind: input, shape index: {}]
  %s13 = inlined_call_operand.vmem [shape: f32[4,1], index: 13, kind: input, shape index: {}]
  %s14 = inlined_call_operand.vmem [shape: f32[4,216], index: 14, kind: input, shape index: {}]
  %s15 = inlined_call_operand.vmem [shape: f32[4,1], index: 15, kind: input, shape index: {}]
  %s16 = inlined_call_operand.vmem [shape: f32[4,252], index: 16, kind: input, shape index: {}]
  %s17 = inlined_call_operand.vmem [shape: f32[4,1], index: 17, kind: input, shape index: {}]
  %s18 = inlined_call_operand.vmem [shape: f32[4,288], index: 18, kind: input, shape index: {}]
  %s19 = inlined_call_operand.vmem [shape: f32[4,1], index: 19, kind: input, shape index: {}]
  %s20 = inlined_call_operand.hbm [shape: f32[2,4,256], index: 20, kind: output, shape index: {}]
  %s21 = sld [smem:[#allocation0]]
  $region129: #{tpu_custom_call.1} parent=0
    _
  %s23 = ssub.s32 1, %s21
  %s24 = scalar_select 0, %s23, %s21
  $region1: #{tpu_custom_call.1} parent=0
    #allocation4 [shape = 'u8[1536]{0}', space=vmem, size = 0x800, scoped, tag = 'input window, operand 1, single buffered']
    #allocation5 [shape = 's32[2]{0}', space=sflag, size = 0x8, scoped, tag = 'scoped memory for tpu_custom_call.1']
    #allocation6 [shape = 's32[2]{0}', space=sflag, size = 0x8, scoped, tag = 'scoped memory for tpu_custom_call.1']
    #allocation7 [shape = 'u8[2048]{0}', space=vmem, size = 0x800, scoped, tag = 'input window, operand 2, single buffered']
    #allocation8 [shape = 's32[1]{0}', space=sflag, size = 0x4, scoped, tag = 'scoped memory for tpu_custom_call.1']
    #allocation9 [shape = 'u8[2048]{0}', space=vmem, size = 0x800, scoped, tag = 'input window, operand 4, single buffered']
    #allocation10 [shape = 'u8[2048]{0}', space=vmem, size = 0x800, scoped, tag = 'input window, operand 6, single buffered']
    #allocation11 [shape = 's32[1]{0}', space=sflag, size = 0x4, scoped, tag = 'scoped memory for tpu_custom_call.1']
    #allocation12 [shape = 'u8[8192]{0}', space=vmem, size = 0x2000, scoped, tag = 'output window, operand 0']
    %25 = vsyncpa [#allocation5], 0
    %26 = vsyncpa [#allocation8], 0
    %27 = vsyncpa [#allocation11], 0
    %28 = vsyncpa [#allocation6], 0
    %s29 = scalar_lea.sflag [#allocation6], 1
    %30 = vsyncpa %s29, 0
    loop: start=0, step=1, limit=4
    $region2: #{tpu_custom_call.1} parent=1 // loop_pre_header
      _
    $region3: #{tpu_custom_call.1} parent=1 // loop_header
      %s32 = sphi 0, %s36
      %p33 = scmp.ge.s32.totalorder %s32, 4
      %s42 = sphi 0, %s44
      %s45 = sphi 0, %s42
      %s46 = sphi 0, %s45
      %s62 = sphi 0, %s46
      %s66 = sphi 0, %s66
      %s68 = sphi 0, %s66
      %s69 = sphi 0, %s68
      %s83 = sphi 0, %s69
      %s87 = sphi 0, %s87
      %s89 = sphi 0, %s87
      %s90 = sphi 0, %s89
      %s104 = sphi 0, %s90
      %s108 = sphi 0, %s108
      %s110 = sphi 0, %s108
      %s111 = sphi 0, %s110
      %s125 = sphi 0, %s111
      %s129 = sphi 0, %s129
      %s131 = sphi 0, %s129
      %s132 = sphi 0, %s131
      %s146 = sphi 0, %s132
      %s150 = sphi 0, %s150
      %s152 = sphi 0, %s150
      %s153 = sphi 0, %s152
      %s167 = sphi 0, %s153
      %s171 = sphi 0, %s171
      %s173 = sphi 0, %s171
      %s174 = sphi 0, %s173
      %s188 = sphi 0, %s174
      %s192 = sphi 0, %s192
      %s194 = sphi 0, %s192
      %s195 = sphi 0, %s194
      %s209 = sphi 0, %s195
      %s213 = sphi 0, %s213
      %s215 = sphi 0, %s213
      %s216 = sphi 0, %s215
      %s230 = sphi 0, %s216
      %s234 = sphi 0, %s234
      %s236 = sphi 0, %s234
      %s237 = sphi 0, %s236
      %s251 = sphi 0, %s237
      %s255 = sphi 0, %s255
      %s257 = sphi 0, %s255
      %s258 = sphi 0, %s257
      %s272 = sphi 0, %s258
      %s276 = sphi 0, %s276
      %s278 = sphi 0, %s276
      %s279 = sphi 0, %s278
      %s293 = sphi 0, %s279
      %s297 = sphi 0, %s297
      %s299 = sphi 0, %s297
      %s300 = sphi 0, %s299
      %s314 = sphi 0, %s300
      %s318 = sphi 0, %s318
      %s320 = sphi 0, %s318
      %s321 = sphi 0, %s320
      %s335 = sphi 0, %s321
      %s339 = sphi 0, %s339
      %s341 = sphi 0, %s339
      %s342 = sphi 0, %s341
      %s356 = sphi 0, %s342
      %s360 = sphi 0, %s360
      %s362 = sphi 0, %s360
      %s363 = sphi 0, %s362
      %s377 = sphi 0, %s363
      %s381 = sphi 0, %s381
      %s383 = sphi 0, %s381
      %s384 = sphi 0, %s383
      %s398 = sphi 0, %s384
      %s402 = sphi 0, %s402
      %s404 = sphi 0, %s402
      %s405 = sphi 0, %s404
      %s419 = sphi 0, %s405
      %s423 = sphi 0, %s423
      %s425 = sphi 0, %s423
      %s426 = sphi 0, %s425
      %s440 = sphi 0, %s426
      %s444 = sphi 0, %s444
      %s446 = sphi 0, %s444
      %s447 = sphi 0, %s446
      %s461 = sphi 0, %s447
      %s467 = sphi 0, %s469
      %s470 = sphi 0, %s467
      %s471 = sphi 0, %s470
      %s487 = sphi 0, %s471
    $region4: #{tpu_custom_call.1} parent=1 // loop_header_branch
      %35 = sbr.rel (%p33) target = $region8
    $region5: #{tpu_custom_call.1} parent=1 // loop_body
      %s37 = ssub.s32 %s32, 1
      %s38 = ssub.s32 %s32, 2
      %s39 = sadd.s32 %s32, 1
      %s40 = ssub.s32 %s32, %s39
      %p41 = scmp.eq.s32.totalorder %s40, 0
      %s43 = sadd.s32 %s42, 1
      %s44 = scalar_select %p41, %s42, %s43
      %p47 = pneg %p41
      %p48 = scmp.eq.s32.totalorder %s32, 1
      %p49 = por %p47, %p48
      %p50 = scmp.ne.s32.totalorder %s42, %s45
      %p51 = scmp.eq.s32.totalorder %s32, 0
      %p52 = por %p50, %p51
      %p53 = scmp.ne.s32.totalorder %s42, %s45
      %p54 = scmp.eq.s32.totalorder %s37, 1
      %p55 = por %p53, %p54
      %p56 = scmp.ne.s32.totalorder %s45, %s46
      %p57 = scmp.eq.s32.totalorder %s37, 0
      %p58 = por %p56, %p57
      %p59 = scmp.ne.s32.totalorder %s45, %s46
      %p60 = scmp.eq.s32.totalorder %s38, 1
      %p61 = por %p59, %p60
      %p63 = scmp.ne.s32.totalorder %s46, %s62
      %p64 = scmp.eq.s32.totalorder %s38, 0
      %p65 = por %p63, %p64
      %s67 = sadd.s32 %s66, 1
      %p70 = scmp.eq.s32.totalorder %s32, 1
      %p71 = scmp.ne.s32.totalorder %s66, %s68
      %p72 = scmp.eq.s32.totalorder %s32, 0
      %p73 = por %p71, %p72
      %p74 = scmp.ne.s32.totalorder %s66, %s68
      %p75 = scmp.eq.s32.totalorder %s37, 1
      %p76 = por %p74, %p75
      %p77 = scmp.ne.s32.totalorder %s68, %s69
      %p78 = scmp.eq.s32.totalorder %s37, 0
      %p79 = por %p77, %p78
      %p80 = scmp.ne.s32.totalorder %s68, %s69
      %p81 = scmp.eq.s32.totalorder %s38, 1
      %p82 = por %p80, %p81
      %p84 = scmp.ne.s32.totalorder %s69, %s83
      %p85 = scmp.eq.s32.totalorder %s38, 0
      %p86 = por %p84, %p85
      %s88 = sadd.s32 %s87, 1
      %p91 = scmp.eq.s32.totalorder %s32, 1
      %p92 = scmp.ne.s32.totalorder %s87, %s89
      %p93 = scmp.eq.s32.totalorder %s32, 0
      %p94 = por %p92, %p93
      %p95 = scmp.ne.s32.totalorder %s87, %s89
      %p96 = scmp.eq.s32.totalorder %s37, 1
      %p97 = por %p95, %p96
      %p98 = scmp.ne.s32.totalorder %s89, %s90
      %p99 = scmp.eq.s32.totalorder %s37, 0
      %p100 = por %p98, %p99
      %p101 = scmp.ne.s32.totalorder %s89, %s90
      %p102 = scmp.eq.s32.totalorder %s38, 1
      %p103 = por %p101, %p102
      %p105 = scmp.ne.s32.totalorder %s90, %s104
      %p106 = scmp.eq.s32.totalorder %s38, 0
      %p107 = por %p105, %p106
      %s109 = sadd.s32 %s108, 1
      %p112 = scmp.eq.s32.totalorder %s32, 1
      %p113 = scmp.ne.s32.totalorder %s108, %s110
      %p114 = scmp.eq.s32.totalorder %s32, 0
      %p115 = por %p113, %p114
      %p116 = scmp.ne.s32.totalorder %s108, %s110
      %p117 = scmp.eq.s32.totalorder %s37, 1
      %p118 = por %p116, %p117
      %p119 = scmp.ne.s32.totalorder %s110, %s111
      %p120 = scmp.eq.s32.totalorder %s37, 0
      %p121 = por %p119, %p120
      %p122 = scmp.ne.s32.totalorder %s110, %s111
      %p123 = scmp.eq.s32.totalorder %s38, 1
      %p124 = por %p122, %p123
      %p126 = scmp.ne.s32.totalorder %s111, %s125
      %p127 = scmp.eq.s32.totalorder %s38, 0
      %p128 = por %p126, %p127
      %s130 = sadd.s32 %s129, 1
      %p133 = scmp.eq.s32.totalorder %s32, 1
      %p134 = scmp.ne.s32.totalorder %s129, %s131
      %p135 = scmp.eq.s32.totalorder %s32, 0
      %p136 = por %p134, %p135
      %p137 = scmp.ne.s32.totalorder %s129, %s131
      %p138 = scmp.eq.s32.totalorder %s37, 1
      %p139 = por %p137, %p138
      %p140 = scmp.ne.s32.totalorder %s131, %s132
      %p141 = scmp.eq.s32.totalorder %s37, 0
      %p142 = por %p140, %p141
      %p143 = scmp.ne.s32.totalorder %s131, %s132
      %p144 = scmp.eq.s32.totalorder %s38, 1
      %p145 = por %p143, %p144
      %p147 = scmp.ne.s32.totalorder %s132, %s146
      %p148 = scmp.eq.s32.totalorder %s38, 0
      %p149 = por %p147, %p148
      %s151 = sadd.s32 %s150, 1
      %p154 = scmp.eq.s32.totalorder %s32, 1
      %p155 = scmp.ne.s32.totalorder %s150, %s152
      %p156 = scmp.eq.s32.totalorder %s32, 0
      %p157 = por %p155, %p156
      %p158 = scmp.ne.s32.totalorder %s150, %s152
      %p159 = scmp.eq.s32.totalorder %s37, 1
      %p160 = por %p158, %p159
      %p161 = scmp.ne.s32.totalorder %s152, %s153
      %p162 = scmp.eq.s32.totalorder %s37, 0
      %p163 = por %p161, %p162
      %p164 = scmp.ne.s32.totalorder %s152, %s153
      %p165 = scmp.eq.s32.totalorder %s38, 1
      %p166 = por %p164, %p165
      %p168 = scmp.ne.s32.totalorder %s153, %s167
      %p169 = scmp.eq.s32.totalorder %s38, 0
      %p170 = por %p168, %p169
      %s172 = sadd.s32 %s171, 1
      %p175 = scmp.eq.s32.totalorder %s32, 1
      %p176 = scmp.ne.s32.totalorder %s171, %s173
      %p177 = scmp.eq.s32.totalorder %s32, 0
      %p178 = por %p176, %p177
      %p179 = scmp.ne.s32.totalorder %s171, %s173
      %p180 = scmp.eq.s32.totalorder %s37, 1
      %p181 = por %p179, %p180
      %p182 = scmp.ne.s32.totalorder %s173, %s174
      %p183 = scmp.eq.s32.totalorder %s37, 0
      %p184 = por %p182, %p183
      %p185 = scmp.ne.s32.totalorder %s173, %s174
      %p186 = scmp.eq.s32.totalorder %s38, 1
      %p187 = por %p185, %p186
      %p189 = scmp.ne.s32.totalorder %s174, %s188
      %p190 = scmp.eq.s32.totalorder %s38, 0
      %p191 = por %p189, %p190
      %s193 = sadd.s32 %s192, 1
      %p196 = scmp.eq.s32.totalorder %s32, 1
      %p197 = scmp.ne.s32.totalorder %s192, %s194
      %p198 = scmp.eq.s32.totalorder %s32, 0
      %p199 = por %p197, %p198
      %p200 = scmp.ne.s32.totalorder %s192, %s194
      %p201 = scmp.eq.s32.totalorder %s37, 1
      %p202 = por %p200, %p201
      %p203 = scmp.ne.s32.totalorder %s194, %s195
      %p204 = scmp.eq.s32.totalorder %s37, 0
      %p205 = por %p203, %p204
      %p206 = scmp.ne.s32.totalorder %s194, %s195
      %p207 = scmp.eq.s32.totalorder %s38, 1
      %p208 = por %p206, %p207
      %p210 = scmp.ne.s32.totalorder %s195, %s209
      %p211 = scmp.eq.s32.totalorder %s38, 0
      %p212 = por %p210, %p211
      %s214 = sadd.s32 %s213, 1
      %p217 = scmp.eq.s32.totalorder %s32, 1
      %p218 = scmp.ne.s32.totalorder %s213, %s215
      %p219 = scmp.eq.s32.totalorder %s32, 0
      %p220 = por %p218, %p219
      %p221 = scmp.ne.s32.totalorder %s213, %s215
      %p222 = scmp.eq.s32.totalorder %s37, 1
      %p223 = por %p221, %p222
      %p224 = scmp.ne.s32.totalorder %s215, %s216
      %p225 = scmp.eq.s32.totalorder %s37, 0
      %p226 = por %p224, %p225
      %p227 = scmp.ne.s32.totalorder %s215, %s216
      %p228 = scmp.eq.s32.totalorder %s38, 1
      %p229 = por %p227, %p228
      %p231 = scmp.ne.s32.totalorder %s216, %s230
      %p232 = scmp.eq.s32.totalorder %s38, 0
      %p233 = por %p231, %p232
      %s235 = sadd.s32 %s234, 1
      %p238 = scmp.eq.s32.totalorder %s32, 1
      %p239 = scmp.ne.s32.totalorder %s234, %s236
      %p240 = scmp.eq.s32.totalorder %s32, 0
      %p241 = por %p239, %p240
      %p242 = scmp.ne.s32.totalorder %s234, %s236
      %p243 = scmp.eq.s32.totalorder %s37, 1
      %p244 = por %p242, %p243
      %p245 = scmp.ne.s32.totalorder %s236, %s237
      %p246 = scmp.eq.s32.totalorder %s37, 0
      %p247 = por %p245, %p246
      %p248 = scmp.ne.s32.totalorder %s236, %s237
      %p249 = scmp.eq.s32.totalorder %s38, 1
      %p250 = por %p248, %p249
      %p252 = scmp.ne.s32.totalorder %s237, %s251
      %p253 = scmp.eq.s32.totalorder %s38, 0
      %p254 = por %p252, %p253
      %s256 = sadd.s32 %s255, 1
      %p259 = scmp.eq.s32.totalorder %s32, 1
      %p260 = scmp.ne.s32.totalorder %s255, %s257
      %p261 = scmp.eq.s32.totalorder %s32, 0
      %p262 = por %p260, %p261
      %p263 = scmp.ne.s32.totalorder %s255, %s257
      %p264 = scmp.eq.s32.totalorder %s37, 1
      %p265 = por %p263, %p264
      %p266 = scmp.ne.s32.totalorder %s257, %s258
      %p267 = scmp.eq.s32.totalorder %s37, 0
      %p268 = por %p266, %p267
      %p269 = scmp.ne.s32.totalorder %s257, %s258
      %p270 = scmp.eq.s32.totalorder %s38, 1
      %p271 = por %p269, %p270
      %p273 = scmp.ne.s32.totalorder %s258, %s272
      %p274 = scmp.eq.s32.totalorder %s38, 0
      %p275 = por %p273, %p274
      %s277 = sadd.s32 %s276, 1
      %p280 = scmp.eq.s32.totalorder %s32, 1
      %p281 = scmp.ne.s32.totalorder %s276, %s278
      %p282 = scmp.eq.s32.totalorder %s32, 0
      %p283 = por %p281, %p282
      %p284 = scmp.ne.s32.totalorder %s276, %s278
      %p285 = scmp.eq.s32.totalorder %s37, 1
      %p286 = por %p284, %p285
      %p287 = scmp.ne.s32.totalorder %s278, %s279
      %p288 = scmp.eq.s32.totalorder %s37, 0
      %p289 = por %p287, %p288
      %p290 = scmp.ne.s32.totalorder %s278, %s279
      %p291 = scmp.eq.s32.totalorder %s38, 1
      %p292 = por %p290, %p291
      %p294 = scmp.ne.s32.totalorder %s279, %s293
      %p295 = scmp.eq.s32.totalorder %s38, 0
      %p296 = por %p294, %p295
      %s298 = sadd.s32 %s297, 1
      %p301 = scmp.eq.s32.totalorder %s32, 1
      %p302 = scmp.ne.s32.totalorder %s297, %s299
      %p303 = scmp.eq.s32.totalorder %s32, 0
      %p304 = por %p302, %p303
      %p305 = scmp.ne.s32.totalorder %s297, %s299
      %p306 = scmp.eq.s32.totalorder %s37, 1
      %p307 = por %p305, %p306
      %p308 = scmp.ne.s32.totalorder %s299, %s300
      %p309 = scmp.eq.s32.totalorder %s37, 0
      %p310 = por %p308, %p309
      %p311 = scmp.ne.s32.totalorder %s299, %s300
      %p312 = scmp.eq.s32.totalorder %s38, 1
      %p313 = por %p311, %p312
      %p315 = scmp.ne.s32.totalorder %s300, %s314
      %p316 = scmp.eq.s32.totalorder %s38, 0
      %p317 = por %p315, %p316
      %s319 = sadd.s32 %s318, 1
      %p322 = scmp.eq.s32.totalorder %s32, 1
      %p323 = scmp.ne.s32.totalorder %s318, %s320
      %p324 = scmp.eq.s32.totalorder %s32, 0
      %p325 = por %p323, %p324
      %p326 = scmp.ne.s32.totalorder %s318, %s320
      %p327 = scmp.eq.s32.totalorder %s37, 1
      %p328 = por %p326, %p327
      %p329 = scmp.ne.s32.totalorder %s320, %s321
      %p330 = scmp.eq.s32.totalorder %s37, 0
      %p331 = por %p329, %p330
      %p332 = scmp.ne.s32.totalorder %s320, %s321
      %p333 = scmp.eq.s32.totalorder %s38, 1
      %p334 = por %p332, %p333
      %p336 = scmp.ne.s32.totalorder %s321, %s335
      %p337 = scmp.eq.s32.totalorder %s38, 0
      %p338 = por %p336, %p337
      %s340 = sadd.s32 %s339, 1
      %p343 = scmp.eq.s32.totalorder %s32, 1
      %p344 = scmp.ne.s32.totalorder %s339, %s341
      %p345 = scmp.eq.s32.totalorder %s32, 0
      %p346 = por %p344, %p345
      %p347 = scmp.ne.s32.totalorder %s339, %s341
      %p348 = scmp.eq.s32.totalorder %s37, 1
      %p349 = por %p347, %p348
      %p350 = scmp.ne.s32.totalorder %s341, %s342
      %p351 = scmp.eq.s32.totalorder %s37, 0
      %p352 = por %p350, %p351
      %p353 = scmp.ne.s32.totalorder %s341, %s342
      %p354 = scmp.eq.s32.totalorder %s38, 1
      %p355 = por %p353, %p354
      %p357 = scmp.ne.s32.totalorder %s342, %s356
      %p358 = scmp.eq.s32.totalorder %s38, 0
      %p359 = por %p357, %p358
      %s361 = sadd.s32 %s360, 1
      %p364 = scmp.eq.s32.totalorder %s32, 1
      %p365 = scmp.ne.s32.totalorder %s360, %s362
      %p366 = scmp.eq.s32.totalorder %s32, 0
      %p367 = por %p365, %p366
      %p368 = scmp.ne.s32.totalorder %s360, %s362
      %p369 = scmp.eq.s32.totalorder %s37, 1
      %p370 = por %p368, %p369
      %p371 = scmp.ne.s32.totalorder %s362, %s363
      %p372 = scmp.eq.s32.totalorder %s37, 0
      %p373 = por %p371, %p372
      %p374 = scmp.ne.s32.totalorder %s362, %s363
      %p375 = scmp.eq.s32.totalorder %s38, 1
      %p376 = por %p374, %p375
      %p378 = scmp.ne.s32.totalorder %s363, %s377
      %p379 = scmp.eq.s32.totalorder %s38, 0
      %p380 = por %p378, %p379
      %s382 = sadd.s32 %s381, 1
      %p385 = scmp.eq.s32.totalorder %s32, 1
      %p386 = scmp.ne.s32.totalorder %s381, %s383
      %p387 = scmp.eq.s32.totalorder %s32, 0
      %p388 = por %p386, %p387
      %p389 = scmp.ne.s32.totalorder %s381, %s383
      %p390 = scmp.eq.s32.totalorder %s37, 1
      %p391 = por %p389, %p390
      %p392 = scmp.ne.s32.totalorder %s383, %s384
      %p393 = scmp.eq.s32.totalorder %s37, 0
      %p394 = por %p392, %p393
      %p395 = scmp.ne.s32.totalorder %s383, %s384
      %p396 = scmp.eq.s32.totalorder %s38, 1
      %p397 = por %p395, %p396
      %p399 = scmp.ne.s32.totalorder %s384, %s398
      %p400 = scmp.eq.s32.totalorder %s38, 0
      %p401 = por %p399, %p400
      %s403 = sadd.s32 %s402, 1
      %p406 = scmp.eq.s32.totalorder %s32, 1
      %p407 = scmp.ne.s32.totalorder %s402, %s404
      %p408 = scmp.eq.s32.totalorder %s32, 0
      %p409 = por %p407, %p408
      %p410 = scmp.ne.s32.totalorder %s402, %s404
      %p411 = scmp.eq.s32.totalorder %s37, 1
      %p412 = por %p410, %p411
      %p413 = scmp.ne.s32.totalorder %s404, %s405
      %p414 = scmp.eq.s32.totalorder %s37, 0
      %p415 = por %p413, %p414
      %p416 = scmp.ne.s32.totalorder %s404, %s405
      %p417 = scmp.eq.s32.totalorder %s38, 1
      %p418 = por %p416, %p417
      %p420 = scmp.ne.s32.totalorder %s405, %s419
      %p421 = scmp.eq.s32.totalorder %s38, 0
      %p422 = por %p420, %p421
      %s424 = sadd.s32 %s423, 1
      %p427 = scmp.eq.s32.totalorder %s32, 1
      %p428 = scmp.ne.s32.totalorder %s423, %s425
      %p429 = scmp.eq.s32.totalorder %s32, 0
      %p430 = por %p428, %p429
      %p431 = scmp.ne.s32.totalorder %s423, %s425
      %p432 = scmp.eq.s32.totalorder %s37, 1
      %p433 = por %p431, %p432
      %p434 = scmp.ne.s32.totalorder %s425, %s426
      %p435 = scmp.eq.s32.totalorder %s37, 0
      %p436 = por %p434, %p435
      %p437 = scmp.ne.s32.totalorder %s425, %s426
      %p438 = scmp.eq.s32.totalorder %s38, 1
      %p439 = por %p437, %p438
      %p441 = scmp.ne.s32.totalorder %s426, %s440
      %p442 = scmp.eq.s32.totalorder %s38, 0
      %p443 = por %p441, %p442
      %s445 = sadd.s32 %s444, 1
      %p448 = scmp.eq.s32.totalorder %s32, 1
      %p449 = scmp.ne.s32.totalorder %s444, %s446
      %p450 = scmp.eq.s32.totalorder %s32, 0
      %p451 = por %p449, %p450
      %p452 = scmp.ne.s32.totalorder %s444, %s446
      %p453 = scmp.eq.s32.totalorder %s37, 1
      %p454 = por %p452, %p453
      %p455 = scmp.ne.s32.totalorder %s446, %s447
      %p456 = scmp.eq.s32.totalorder %s37, 0
      %p457 = por %p455, %p456
      %p458 = scmp.ne.s32.totalorder %s446, %s447
      %p459 = scmp.eq.s32.totalorder %s38, 1
      %p460 = por %p458, %p459
      %p462 = scmp.ne.s32.totalorder %s447, %s461
      %p463 = scmp.eq.s32.totalorder %s38, 0
      %p464 = por %p462, %p463
      %s465 = ssub.s32 %s32, %s39
      %p466 = scmp.eq.s32.totalorder %s465, 0
      %s468 = sadd.s32 %s467, 1
      %s469 = scalar_select %p466, %s467, %s468
      %p472 = pneg %p466
      %p473 = scmp.eq.s32.totalorder %s32, 1
      %p474 = por %p472, %p473
      %p475 = scmp.ne.s32.totalorder %s467, %s470
      %p476 = scmp.eq.s32.totalorder %s32, 0
      %p477 = por %p475, %p476
      %p478 = scmp.ne.s32.totalorder %s467, %s470
      %p479 = scmp.eq.s32.totalorder %s37, 1
      %p480 = por %p478, %p479
      %p481 = scmp.ne.s32.totalorder %s470, %s471
      %p482 = scmp.eq.s32.totalorder %s37, 0
      %p483 = por %p481, %p482
      %p484 = scmp.ne.s32.totalorder %s470, %s471
      %p485 = scmp.eq.s32.totalorder %s38, 1
      %p486 = por %p484, %p485
      %p488 = scmp.ne.s32.totalorder %s471, %s487
      %p489 = scmp.eq.s32.totalorder %s38, 0
      %p490 = por %p488, %p489
      %p491 = scmp.le.s32.totalorder 1, %s32
      %p492 = scmp.lt.s32.totalorder %s32, 3
      %p493 = pnand %p491, %p492
      %p494 = pneg %p493
      // Predicated region
      $region9: #{tpu_custom_call.1} parent=5 // pred_check
        _
      $region10: #{tpu_custom_call.1} parent=5 // pred_check_branch
        %496 = sbr.rel (%p493) target = $region12
      $region11: #{tpu_custom_call.1} parent=5 // pred_region
        %s497 = ssub.s32 %s32, 1
        // Predicated region
        $region13: #{tpu_custom_call.1} parent=11 // pred_check
          %p498 = pneg %p79
        $region14: #{tpu_custom_call.1} parent=11 // pred_check_branch
          %500 = sbr.rel (%p498) target = $region16
        $region15: #{tpu_custom_call.1} parent=11 // pred_region
          %s502 = ssub.s32 48, 48
          %503 = vsyncadd [#allocation5], %s502
          %s505 = sshll.u32 [#allocation4], 4
          %s506 = int_to_ptr.vmem [resolvable:$true] %s505
          %508 = dma.hbm_to_vmem [thread:$0]  %s1, 48, %s506, [#allocation5]
        $region16: #{tpu_custom_call.1} parent=11 // pred_fallthru
          _
        // Predicated region
        $region17: #{tpu_custom_call.1} parent=11 // pred_check
          %p509 = pneg %p100
        $region18: #{tpu_custom_call.1} parent=11 // pred_check_branch
          %511 = sbr.rel (%p509) target = $region20
        $region19: #{tpu_custom_call.1} parent=11 // pred_region
          %s513 = ssub.s32 64, 64
          %514 = vsyncadd [#allocation8], %s513
          %s516 = sshll.u32 [#allocation7], 4
          %s517 = int_to_ptr.vmem [resolvable:$true] %s516
          %519 = dma.hbm_to_vmem [thread:$0]  %s2, 64, %s517, [#allocation8]
        $region20: #{tpu_custom_call.1} parent=11 // pred_fallthru
          _
        // Predicated region
        $region21: #{tpu_custom_call.1} parent=11 // pred_check
          %p520 = pneg %p121
        $region22: #{tpu_custom_call.1} parent=11 // pred_check_branch
          %522 = sbr.rel (%p520) target = $region24
        $region23: #{tpu_custom_call.1} parent=11 // pred_region
          _
        $region24: #{tpu_custom_call.1} parent=11 // pred_fallthru
          _
        // Predicated region
        $region25: #{tpu_custom_call.1} parent=11 // pred_check
          %p523 = pneg %p142
        $region26: #{tpu_custom_call.1} parent=11 // pred_check_branch
          %525 = sbr.rel (%p523) target = $region28
        $region27: #{tpu_custom_call.1} parent=11 // pred_region
          %s527 = ssub.s32 64, 64
          %528 = vsyncadd [#allocation8], %s527
          %s530 = sshll.u32 [#allocation9], 4
          %s531 = int_to_ptr.vmem [resolvable:$true] %s530
          %533 = dma.hbm_to_vmem [thread:$0]  %s4, 64, %s531, [#allocation8]
        $region28: #{tpu_custom_call.1} parent=11 // pred_fallthru
          _
        // Predicated region
        $region29: #{tpu_custom_call.1} parent=11 // pred_check
          %p534 = pneg %p163
        $region30: #{tpu_custom_call.1} parent=11 // pred_check_branch
          %536 = sbr.rel (%p534) target = $region32
        $region31: #{tpu_custom_call.1} parent=11 // pred_region
          _
        $region32: #{tpu_custom_call.1} parent=11 // pred_fallthru
          _
        // Predicated region
        $region33: #{tpu_custom_call.1} parent=11 // pred_check
          %p537 = pneg %p184
        $region34: #{tpu_custom_call.1} parent=11 // pred_check_branch
          %539 = sbr.rel (%p537) target = $region36
        $region35: #{tpu_custom_call.1} parent=11 // pred_region
          %s541 = ssub.s32 64, 64
          %542 = vsyncadd [#allocation11], %s541
          %s544 = sshll.u32 [#allocation10], 4
          %s545 = int_to_ptr.vmem [resolvable:$true] %s544
          %547 = dma.hbm_to_vmem [thread:$0]  %s6, 64, %s545, [#allocation11]
        $region36: #{tpu_custom_call.1} parent=11 // pred_fallthru
          _
        // Predicated region
        $region37: #{tpu_custom_call.1} parent=11 // pred_check
          %p548 = pneg %p205
        $region38: #{tpu_custom_call.1} parent=11 // pred_check_branch
          %550 = sbr.rel (%p548) target = $region40
        $region39: #{tpu_custom_call.1} parent=11 // pred_region
          _
        $region40: #{tpu_custom_call.1} parent=11 // pred_fallthru
          _
        // Predicated region
        $region41: #{tpu_custom_call.1} parent=11 // pred_check
          %p551 = pneg %p226
        $region42: #{tpu_custom_call.1} parent=11 // pred_check_branch
          %553 = sbr.rel (%p551) target = $region44
        $region43: #{tpu_custom_call.1} parent=11 // pred_region
          _
        $region44: #{tpu_custom_call.1} parent=11 // pred_fallthru
          _
        // Predicated region
        $region45: #{tpu_custom_call.1} parent=11 // pred_check
          %p554 = pneg %p247
        $region46: #{tpu_custom_call.1} parent=11 // pred_check_branch
          %556 = sbr.rel (%p554) target = $region48
        $region47: #{tpu_custom_call.1} parent=11 // pred_region
          _
        $region48: #{tpu_custom_call.1} parent=11 // pred_fallthru
          _
        // Predicated region
        $region49: #{tpu_custom_call.1} parent=11 // pred_check
          %p557 = pneg %p268
        $region50: #{tpu_custom_call.1} parent=11 // pred_check_branch
          %559 = sbr.rel (%p557) target = $region52
        $region51: #{tpu_custom_call.1} parent=11 // pred_region
          _
        $region52: #{tpu_custom_call.1} parent=11 // pred_fallthru
          _
        // Predicated region
        $region53: #{tpu_custom_call.1} parent=11 // pred_check
          %p560 = pneg %p289
        $region54: #{tpu_custom_call.1} parent=11 // pred_check_branch
          %562 = sbr.rel (%p560) target = $region56
        $region55: #{tpu_custom_call.1} parent=11 // pred_region
          _
        $region56: #{tpu_custom_call.1} parent=11 // pred_fallthru
          _
        // Predicated region
        $region57: #{tpu_custom_call.1} parent=11 // pred_check
          %p563 = pneg %p310
        $region58: #{tpu_custom_call.1} parent=11 // pred_check_branch
          %565 = sbr.rel (%p563) target = $region60
        $region59: #{tpu_custom_call.1} parent=11 // pred_region
          _
        $region60: #{tpu_custom_call.1} parent=11 // pred_fallthru
          _
        // Predicated region
        $region61: #{tpu_custom_call.1} parent=11 // pred_check
          %p566 = pneg %p331
        $region62: #{tpu_custom_call.1} parent=11 // pred_check_branch
          %568 = sbr.rel (%p566) target = $region64
        $region63: #{tpu_custom_call.1} parent=11 // pred_region
          _
        $region64: #{tpu_custom_call.1} parent=11 // pred_fallthru
          _
        // Predicated region
        $region65: #{tpu_custom_call.1} parent=11 // pred_check
          %p569 = pneg %p352
        $region66: #{tpu_custom_call.1} parent=11 // pred_check_branch
          %571 = sbr.rel (%p569) target = $region68
        $region67: #{tpu_custom_call.1} parent=11 // pred_region
          _
        $region68: #{tpu_custom_call.1} parent=11 // pred_fallthru
          _
        // Predicated region
        $region69: #{tpu_custom_call.1} parent=11 // pred_check
          %p572 = pneg %p373
        $region70: #{tpu_custom_call.1} parent=11 // pred_check_branch
          %574 = sbr.rel (%p572) target = $region72
        $region71: #{tpu_custom_call.1} parent=11 // pred_region
          _
        $region72: #{tpu_custom_call.1} parent=11 // pred_fallthru
          _
        // Predicated region
        $region73: #{tpu_custom_call.1} parent=11 // pred_check
          %p575 = pneg %p394
        $region74: #{tpu_custom_call.1} parent=11 // pred_check_branch
          %577 = sbr.rel (%p575) target = $region76
        $region75: #{tpu_custom_call.1} parent=11 // pred_region
          _
        $region76: #{tpu_custom_call.1} parent=11 // pred_fallthru
          _
        // Predicated region
        $region77: #{tpu_custom_call.1} parent=11 // pred_check
          %p578 = pneg %p415
        $region78: #{tpu_custom_call.1} parent=11 // pred_check_branch
          %580 = sbr.rel (%p578) target = $region80
        $region79: #{tpu_custom_call.1} parent=11 // pred_region
          _
        $region80: #{tpu_custom_call.1} parent=11 // pred_fallthru
          _
        // Predicated region
        $region81: #{tpu_custom_call.1} parent=11 // pred_check
          %p581 = pneg %p436
        $region82: #{tpu_custom_call.1} parent=11 // pred_check_branch
          %583 = sbr.rel (%p581) target = $region84
        $region83: #{tpu_custom_call.1} parent=11 // pred_region
          _
        $region84: #{tpu_custom_call.1} parent=11 // pred_fallthru
          _
        // Predicated region
        $region85: #{tpu_custom_call.1} parent=11 // pred_check
          %p584 = pneg %p457
        $region86: #{tpu_custom_call.1} parent=11 // pred_check_branch
          %586 = sbr.rel (%p584) target = $region88
        $region87: #{tpu_custom_call.1} parent=11 // pred_region
          _
        $region88: #{tpu_custom_call.1} parent=11 // pred_fallthru
          _
      $region12: #{tpu_custom_call.1} parent=5 // pred_fallthru
        _
      %p587 = scmp.lt.s32.totalorder %s32, 2
      // Predicated region
      $region89: #{tpu_custom_call.1} parent=5 // pred_check
        %p588 = pneg %p587
      $region90: #{tpu_custom_call.1} parent=5 // pred_check_branch
        %590 = sbr.rel (%p588) target = $region92
      $region91: #{tpu_custom_call.1} parent=5 // pred_region
        // Predicated region
        $region93: #{tpu_custom_call.1} parent=91 // pred_check
          %p591 = pneg %p52
        $region94: #{tpu_custom_call.1} parent=91 // pred_check_branch
          %593 = sbr.rel (%p591) target = $region96
        $region95: #{tpu_custom_call.1} parent=91 // pred_region
          %p594 = scmp.lt.s32.totalorder %s32, 1
          %s595 = scalar_select %p594, %s32, 1
          %s596 = smul.addr %s595, 3
          %s597 = smul.addr %s596, 4
          %s598 = scalar_lea.vmem %s0, %s597
        $region96: #{tpu_custom_call.1} parent=91 // pred_fallthru
          _
      $region92: #{tpu_custom_call.1} parent=5 // pred_fallthru
        _
      %p599 = scmp.le.s32.totalorder 1, %s32
      %p600 = scmp.lt.s32.totalorder %s32, 3
      %p601 = pnand %p599, %p600
      %p602 = pneg %p601
      // Predicated region
      $region97: #{tpu_custom_call.1} parent=5 // pred_check
        _
      $region98: #{tpu_custom_call.1} parent=5 // pred_check_branch
        %604 = sbr.rel (%p601) target = $region100
      $region99: #{tpu_custom_call.1} parent=5 // pred_region
        %s605 = ssub.s32 %s32, 1
        // Predicated region
        $region101: #{tpu_custom_call.1} parent=99 // pred_check
          %p606 = pneg %p79
        $region102: #{tpu_custom_call.1} parent=99 // pred_check_branch
          %608 = sbr.rel (%p606) target = $region104
        $region103: #{tpu_custom_call.1} parent=99 // pred_region
          %609 = dma.done [#allocation5], 48
        $region104: #{tpu_custom_call.1} parent=99 // pred_fallthru
          _
        // Predicated region
        $region105: #{tpu_custom_call.1} parent=99 // pred_check
          %p610 = pneg %p100
        $region106: #{tpu_custom_call.1} parent=99 // pred_check_branch
          %612 = sbr.rel (%p610) target = $region108
        $region107: #{tpu_custom_call.1} parent=99 // pred_region
          %613 = dma.done [#allocation8], 64
        $region108: #{tpu_custom_call.1} parent=99 // pred_fallthru
          _
        // Predicated region
        $region109: #{tpu_custom_call.1} parent=99 // pred_check
          %p614 = pneg %p142
        $region110: #{tpu_custom_call.1} parent=99 // pred_check_branch
          %616 = sbr.rel (%p614) target = $region112
        $region111: #{tpu_custom_call.1} parent=99 // pred_region
          %617 = dma.done [#allocation8], 64
        $region112: #{tpu_custom_call.1} parent=99 // pred_fallthru
          _
        // Predicated region
        $region113: #{tpu_custom_call.1} parent=99 // pred_check
          %p618 = pneg %p184
        $region114: #{tpu_custom_call.1} parent=99 // pred_check_branch
          %620 = sbr.rel (%p618) target = $region116
        $region115: #{tpu_custom_call.1} parent=99 // pred_region
          %621 = dma.done [#allocation11], 64
        $region116: #{tpu_custom_call.1} parent=99 // pred_fallthru
          _
        %p622 = scmp.lt.s32.totalorder %s37, 1
        %s623 = scalar_select %p622, %s37, 1
        %s624 = smul.addr %s623, 3
        %s625 = smul.addr %s624, 4
        %s626 = scalar_lea.vmem %s0, %s625
        %p627 = pneg %p58
        %p628 = pneg %p55
        %p629 = pneg %p79
        %p630 = pneg %p76
        %p631 = pneg %p100
        %p632 = pneg %p97
        %p633 = pneg %p121
        %p634 = pneg %p118
        %p635 = pneg %p142
        %p636 = pneg %p139
        %p637 = pneg %p163
        %p638 = pneg %p160
        %p639 = pneg %p184
        %p640 = pneg %p181
        %p641 = pneg %p205
        %p642 = pneg %p202
        %p643 = pneg %p226
        %p644 = pneg %p223
        %p645 = pneg %p247
        %p646 = pneg %p244
        %p647 = pneg %p268
        %p648 = pneg %p265
        %p649 = pneg %p289
        %p650 = pneg %p286
        %p651 = pneg %p310
        %p652 = pneg %p307
        %p653 = pneg %p331
        %p654 = pneg %p328
        %p655 = pneg %p352
        %p656 = pneg %p349
        %p657 = pneg %p373
        %p658 = pneg %p370
        %p659 = pneg %p394
        %p660 = pneg %p391
        %p661 = pneg %p415
        %p662 = pneg %p412
        %p663 = pneg %p436
        %p664 = pneg %p433
        %p665 = pneg %p457
        %p666 = pneg %p454
        %p667 = pneg %p483
        %p668 = pneg %p480
        %s669 = sand.u32 %s470, 1
        %s670 = scalar_lea.sflag [#allocation6], %s669
        %s671 = sand.u32 %s470, 1
        %s672 = smul.addr %s671, 8
        %s673 = scalar_lea.vmem [#allocation12], %s672
        %p674 = scmp.lt.s32.totalorder %s37, 1
        %s675 = scalar_select %p674, %s37, 1
        %s676 = smul.addr %s675, 3
        %s677 = smul.addr %s676, 4
        %s678 = scalar_lea.vmem %s0, %s677
        %v679 = vld [vmem:[#allocation4] sm:$0x7]
        %v680 = vld [vmem:[%s678] sm:$0xff]
        %v681 = vld [vmem:[%s678 + $0x8] sm:$0xf]
        %v683 = vcombine.high %v680, %v680
        %685 = vst [vmem:[#allocation2] sm:$0xf] %v680
        %686 = vst [vmem:[#allocation2 + $0x8] sm:$0xf] %v683
        %vm687 = vcmask 551936
        %688 = vst.msk [vmem:[#allocation2 + $0x10] sm:$0xf] %vm687, %v681
        %v689 = vld [vmem:[#allocation2] sm:$0xf]
        %v690 = vld [vmem:[#allocation2 + $0x8] sm:$0xf]
        %v691 = vld [vmem:[#allocation2 + $0x10] sm:$0xf]
        %695 = vrot.lane.b32.xlu0 %v689, 19
        %v696 = vpop.permute.xlu0 %695
        %697 = vrot.lane.b32.xlu0 %v690, 19
        %v698 = vpop.permute.xlu0 %697
        %699 = vrot.lane.b32.xlu0 %v691, 19
        %v700 = vpop.permute.xlu0 %699
        %vm701 = vcmask 154624
        %v702 = vsel %vm701, %v696, %v698
        %v703 = vsel %vm701, %v698, %v700
        %vm707 = vcmask 1043608
        %708 = vst.msk [vmem:[#allocation3] sm:$0xf] %vm707, %v696
        %709 = vst [vmem:[#allocation3 + $0x8] sm:$0xf] %v702
        %710 = vst.msk [vmem:[#allocation3 + $0x10] sm:$0xf] %vm687, %v703
        %vm711 = vcmask 150528
        %712 = vst.msk [vmem:[#allocation3] sm:$0xf] %vm711, 0.0
        %v713 = vld [vmem:[#allocation2] sm:$0xf]
        %v714 = vld [vmem:[#allocation2 + $0x8] sm:$0xf]
        %v715 = vld [vmem:[#allocation2 + $0x10] sm:$0xf]
        %v719 = vrot.slane %v713, 4
        %v720 = vrot.slane %v714, 4
        %v721 = vrot.slane %v715, 4
        %722 = vrot.lane.b32.xlu0 %v719, 18
        %v723 = vpop.permute.xlu0 %722
        %724 = vrot.lane.b32.xlu0 %v720, 18
        %v725 = vpop.permute.xlu0 %724
        %726 = vrot.lane.b32.xlu0 %v721, 18
        %v727 = vpop.permute.xlu0 %726
        %vm728 = vcmask 146432
        %v729 = vsel %vm728, %v723, %v725
        %v730 = vsel %vm728, %v725, %v727
        %vm734 = vcmask 1047700
        %735 = vst.msk [vmem:[#allocation3] sm:$0xf0] %vm734, %v723
        %736 = vst [vmem:[#allocation3 + $0x8] sm:$0xf0] %v729
        %vm737 = vcmask 556036
        %738 = vst.msk [vmem:[#allocation3 + $0x10] sm:$0xf0] %vm737, %v730
        %vm739 = vcmask 146436
        %740 = vst.msk [vmem:[#allocation3] sm:$0xf0] %vm739, 0.0
        %v741 = vld [vmem:[#allocation2] sm:$0xf]
        %v742 = vld [vmem:[#allocation2 + $0x8] sm:$0xf]
        %v743 = vld [vmem:[#allocation2 + $0x10] sm:$0xf]
        %747 = vrot.lane.b32.xlu0 %v741, 17
        %v748 = vpop.permute.xlu0 %747
        %749 = vrot.lane.b32.xlu0 %v742, 17
        %v750 = vpop.permute.xlu0 %749
        %751 = vrot.lane.b32.xlu0 %v743, 17
        %v752 = vpop.permute.xlu0 %751
        %vm753 = vcmask 138240
        %v754 = vsel %vm753, %v748, %v750
        %v755 = vsel %vm753, %v750, %v752
        %vm759 = vcmask 1043592
        %760 = vst.msk [vmem:[#allocation3 + $0x18] sm:$0xf] %vm759, %v748
        %761 = vst [vmem:[#allocation3 + $0x20] sm:$0xf] %v754
        %762 = vst.msk [vmem:[#allocation3 + $0x28] sm:$0xf] %vm687, %v755
        %vm763 = vcmask 134144
        %764 = vst.msk [vmem:[#allocation3 + $0x18] sm:$0xf] %vm763, 0.0
        %v765 = vld [vmem:[#allocation2] sm:$0xf]
        %v766 = vld [vmem:[#allocation2 + $0x8] sm:$0xf]
        %v767 = vld [vmem:[#allocation2 + $0x10] sm:$0xf]
        %v771 = vrot.slane %v765, 4
        %v772 = vrot.slane %v766, 4
        %v773 = vrot.slane %v767, 4
        %774 = vrot.lane.b32.xlu0 %v771, 1
        %v775 = vpop.permute.xlu0 %774
        %776 = vrot.lane.b32.xlu0 %v772, 1
        %v777 = vpop.permute.xlu0 %776
        %778 = vrot.lane.b32.xlu0 %v773, 1
        %v779 = vpop.permute.xlu0 %778
        %vm780 = vcmask 7168
        %v781 = vsel %vm780, %v775, %v777
        %v782 = vsel %vm780, %v777, %v779
        %vm786 = vcmask 1047564
        %787 = vst.msk [vmem:[#allocation3 + $0x18] sm:$0xf0] %vm786, %v775
        %788 = vst [vmem:[#allocation3 + $0x20] sm:$0xf0] %v781
        %789 = vst.msk [vmem:[#allocation3 + $0x28] sm:$0xf0] %vm737, %v782
        %vm790 = vcmask 7172
        %791 = vst.msk [vmem:[#allocation3 + $0x18] sm:$0xf0] %vm790, 0.0
        %v792 = vld [vmem:[#allocation2] sm:$0xf]
        %v793 = vld [vmem:[#allocation2 + $0x8] sm:$0xf]
        %v794 = vld [vmem:[#allocation2 + $0x10] sm:$0xf]
        %795 = vst [vmem:[#allocation3 + $0x30] sm:$0xf] %v792
        %796 = vst [vmem:[#allocation3 + $0x38] sm:$0xf] %v793
        %797 = vst.msk [vmem:[#allocation3 + $0x40] sm:$0xf] %vm687, %v794
        %v798 = vld [vmem:[#allocation2] sm:$0xf]
        %v799 = vld [vmem:[#allocation2 + $0x8] sm:$0xf]
        %v800 = vld [vmem:[#allocation2 + $0x10] sm:$0xf]
        %v804 = vrot.slane %v798, 4
        %v805 = vrot.slane %v799, 4
        %v806 = vrot.slane %v800, 4
        %807 = vrot.lane.b32.xlu0 %v804, 127
        %v808 = vpop.permute.xlu0 %807
        %809 = vrot.lane.b32.xlu0 %v805, 127
        %v810 = vpop.permute.xlu0 %809
        %811 = vrot.lane.b32.xlu0 %v806, 127
        %v812 = vpop.permute.xlu0 %811
        %vm813 = vcmask 1039360
        %v814 = vsel %vm813, %v808, %v810
        %v815 = vsel %vm813, %v810, %v812
        %819 = vst [vmem:[#allocation3 + $0x30] sm:$0xf0] %v814
        %820 = vst [vmem:[#allocation3 + $0x38] sm:$0xf0] %v815
        %vm821 = vcmask 547844
        %822 = vst.msk [vmem:[#allocation3 + $0x40] sm:$0xf0] %vm821, %v812
        %vm823 = vcmask 556572
        %824 = vst.msk [vmem:[#allocation3 + $0x40] sm:$0xf0] %vm823, 0.0
        %v825 = vld [vmem:[#allocation2] sm:$0xf]
        %v826 = vld [vmem:[#allocation2 + $0x8] sm:$0xf]
        %v827 = vld [vmem:[#allocation2 + $0x10] sm:$0xf]
        %831 = vrot.lane.b32.xlu0 %v825, 111
        %v832 = vpop.permute.xlu0 %831
        %833 = vrot.lane.b32.xlu0 %v826, 111
        %v834 = vpop.permute.xlu0 %833
        %835 = vrot.lane.b32.xlu0 %v827, 111
        %v836 = vpop.permute.xlu0 %835
        %vm837 = vcmask 908288
        %v838 = vsel %vm837, %v832, %v834
        %v839 = vsel %vm837, %v834, %v836
        %843 = vst [vmem:[#allocation3 + $0x48] sm:$0xf] %v838
        %844 = vst [vmem:[#allocation3 + $0x50] sm:$0xf] %v839
        %vm845 = vcmask 412672
        %846 = vst.msk [vmem:[#allocation3 + $0x58] sm:$0xf] %vm845, %v836
        %vm847 = vcmask 552344
        %848 = vst.msk [vmem:[#allocation3 + $0x58] sm:$0xf] %vm847, 0.0
        %v849 = vld [vmem:[#allocation2] sm:$0xf]
        %v850 = vld [vmem:[#allocation2 + $0x8] sm:$0xf]
        %v851 = vld [vmem:[#allocation2 + $0x10] sm:$0xf]
        %v855 = vrot.slane %v849, 4
        %v856 = vrot.slane %v850, 4
        %v857 = vrot.slane %v851, 4
        %858 = vrot.lane.b32.xlu0 %v855, 110
        %v859 = vpop.permute.xlu0 %858
        %860 = vrot.lane.b32.xlu0 %v856, 110
        %v861 = vpop.permute.xlu0 %860
        %862 = vrot.lane.b32.xlu0 %v857, 110
        %v863 = vpop.permute.xlu0 %862
        %vm864 = vcmask 900096
        %v865 = vsel %vm864, %v859, %v861
        %v866 = vsel %vm864, %v861, %v863
        %870 = vst [vmem:[#allocation3 + $0x48] sm:$0xf0] %v865
        %871 = vst [vmem:[#allocation3 + $0x50] sm:$0xf0] %v866
        %vm872 = vcmask 408580
        %873 = vst.msk [vmem:[#allocation3 + $0x58] sm:$0xf0] %vm872, %v863
        %vm874 = vcmask 556436
        %875 = vst.msk [vmem:[#allocation3 + $0x58] sm:$0xf0] %vm874, 0.0
        %v876 = vld [vmem:[#allocation2] sm:$0xf]
        %v877 = vld [vmem:[#allocation2 + $0x8] sm:$0xf]
        %v878 = vld [vmem:[#allocation2 + $0x10] sm:$0xf]
        %882 = vrot.lane.b32.xlu0 %v876, 109
        %v883 = vpop.permute.xlu0 %882
        %884 = vrot.lane.b32.xlu0 %v877, 109
        %v885 = vpop.permute.xlu0 %884
        %886 = vrot.lane.b32.xlu0 %v878, 109
        %v887 = vpop.permute.xlu0 %886
        %vm888 = vcmask 891904
        %v889 = vsel %vm888, %v883, %v885
        %v890 = vsel %vm888, %v885, %v887
        %894 = vst [vmem:[#allocation3 + $0x60] sm:$0xf] %v889
        %895 = vst [vmem:[#allocation3 + $0x68] sm:$0xf] %v890
        %vm896 = vcmask 396288
        %897 = vst.msk [vmem:[#allocation3 + $0x70] sm:$0xf] %vm896, %v887
        %vm898 = vcmask 552328
        %899 = vst.msk [vmem:[#allocation3 + $0x70] sm:$0xf] %vm898, 0.0
        %v900 = vld [vmem:[#allocation9] sm:$0xf]
        %v901 = vld [vmem:[#allocation3] sm:$0xff]
        %v902 = vld [vmem:[#allocation3 + $0x8] sm:$0xff]
        %v903 = vld [vmem:[#allocation3 + $0x10] sm:$0xff]
        %v904 = vld [vmem:[#allocation3 + $0x18] sm:$0xff]
        %v905 = vld [vmem:[#allocation3 + $0x20] sm:$0xff]
        %v906 = vld [vmem:[#allocation3 + $0x28] sm:$0xff]
        %v907 = vld [vmem:[#allocation3 + $0x30] sm:$0xff]
        %v908 = vld [vmem:[#allocation3 + $0x38] sm:$0xff]
        %v909 = vld [vmem:[#allocation3 + $0x40] sm:$0xff]
        %v910 = vld [vmem:[#allocation3 + $0x48] sm:$0xff]
        %v911 = vld [vmem:[#allocation3 + $0x50] sm:$0xff]
        %v912 = vld [vmem:[#allocation3 + $0x58] sm:$0xff]
        %v913 = vld [vmem:[#allocation3 + $0x60] sm:$0xf]
        %v914 = vld [vmem:[#allocation3 + $0x68] sm:$0xf]
        %v915 = vld [vmem:[#allocation3 + $0x70] sm:$0xf]
        %v916 = vld [vmem:[%s5] sm:$0xf]
        %918 = vset.pattern.permute.xlu0 0
        %919 = vperm.xlu0 %918, %v916
        %v920 = vpop.permute.xlu0 %919
        %vm922 = vcmask 293888
        %v924 = vsel %vm922, %v900, 0
        %vm926 = vcmask 1043456
        %v928 = vsel %vm926, %v913, 0
        %v931 = vsel %vm926, %v914, 0
        %v934 = vsel %vm926, %v915, 0
        %936 = vmatprep.subr.mxu0 %v902
        %937 = vmatpush1.msra.mxu0 %v901
        %938 = vmatprep.subr.mxu0 %v905
        %939 = vmatpush1.msra.mxu0 %v904
        %940 = vmatprep.subr.mxu0 %v908
        %941 = vmatpush1.msra.mxu0 %v907
        %942 = vmatprep.subr.mxu0 %v911
        %943 = vmatpush1.msra.mxu0 %v910
        %944 = vmatprep.subr.mxu0 %v931
        %945 = vmatpush1.msra.mxu0 %v928
        %946 = vmatprep.subr.mxu0 0.0
        %947 = vmatpush1.msra.mxu0 0.0
        %948 = vmatprep.subr.mxu0 0.0
        %949 = vmatpush1.msra.mxu0 0.0
        %950 = vmatprep.subr.mxu0 0.0
        %951 = vmatpush1.msra.mxu0 0.0
        %952 = vmatprep.subr.mxu0 0.0
        %953 = vmatpush1.msra.mxu0 0.0
        %954 = vmatprep.subr.mxu0 0.0
        %955 = vmatpush1.msra.mxu0 0.0
        %956 = vmatprep.subr.mxu0 0.0
        %957 = vmatpush1.msra.mxu0 0.0
        %958 = vmatprep.subr.mxu0 0.0
        %959 = vmatpush1.msra.mxu0 0.0
        %960 = vmatprep.subr.mxu0 0.0
        %961 = vmatpush1.msra.mxu0 0.0
        %962 = vmatprep.subr.mxu0 0.0
        %963 = vmatpush1.msra.mxu0 0.0
        %964 = vmatprep.subr.mxu0 0.0
        %965 = vmatpush1.msra.mxu0 0.0
        %966 = vmatprep.subr.mxu0 0.0
        %967 = vmatpush1.msra.mxu0 0.0
        %968 = vmatprep.subr.mxu0 0.0
        %969 = vmatpush1.msra.mxu0 0.0
        %970 = vmatprep.subr.mxu0 0.0
        %971 = vmatpush1.msra.mxu0 0.0
        %972 = vmatprep.subr.mxu0 0.0
        %973 = vmatpush1.msra.mxu0 0.0
        %974 = vmatprep.subr.mxu0 0.0
        %975 = vmatpush1.msra.mxu0 0.0
        %976 = vmatprep.subr.mxu0 0.0
        %977 = vmatpush1.msra.mxu0 0.0
        %978 = vmatprep.subr.mxu0 0.0
        %979 = vmatpush1.msra.mxu0 0.0
        %980 = vmatprep.subr.mxu0 0.0
        %981 = vmatpush1.msra.mxu0 0.0
        %982 = vmatprep.subr.mxu0 0.0
        %983 = vmatpush1.msra.mxu0 0.0
        %984 = vmatprep.subr.mxu0 0.0
        %985 = vmatpush1.msra.mxu0 0.0
        %986 = vmatprep.subr.mxu0 0.0
        %987 = vmatpush1.msra.mxu0 0.0
        %988 = vmatprep.subr.mxu0 0.0
        %989 = vmatpush1.msra.mxu0 0.0
        %990 = vmatprep.subr.mxu0 0.0
        %991 = vmatpush1.msra.mxu0 0.0
        %992 = vmatprep.subr.mxu0 0.0
        %993 = vmatpush1.msra.mxu0 0.0
        %994 = vmatprep.subr.mxu0 0.0
        %995 = vmatpush1.msra.mxu0 0.0
        %996 = vmatprep.subr.mxu0 0.0
        %997 = vmatpush1.msra.mxu0 0.0
        %998 = vmatprep.subr.mxu0 0.0
        %999 = vmatpush1.msra.mxu0 0.0
        %1000 = vmatprep.mubr.f32.mxu0 0.0
        %1001 = vmatmul.mubr.f32.gmra.mrb[0].mxu0 %v924
        %v1002 = vpop.f32.mrb[0].mxu0
        %v1003 = vadd.f32 %v920, %v1002
        %v1004 = vpop.f32.mrb[0].mxu0
        %v1005 = vadd.f32 %v920, %v1004
        %1006 = vdwg.mxu0
        %1007 = vmatprep.subr.mxu0 0.0
        %1008 = vmatpush1.msra.mxu0 %v903
        %1009 = vmatprep.subr.mxu0 0.0
        %1010 = vmatpush1.msra.mxu0 %v906
        %1011 = vmatprep.subr.mxu0 0.0
        %1012 = vmatpush1.msra.mxu0 %v909
        %1013 = vmatprep.subr.mxu0 0.0
        %1014 = vmatpush1.msra.mxu0 %v912
        %1015 = vmatprep.subr.mxu0 0.0
        %1016 = vmatpush1.msra.mxu0 %v934
        %1017 = vmatprep.subr.mxu0 0.0
        %1018 = vmatpush1.msra.mxu0 0.0
        %1019 = vmatprep.subr.mxu0 0.0
        %1020 = vmatpush1.msra.mxu0 0.0
        %1021 = vmatprep.subr.mxu0 0.0
        %1022 = vmatpush1.msra.mxu0 0.0
        %1023 = vmatprep.subr.mxu0 0.0
        %1024 = vmatpush1.msra.mxu0 0.0
        %1025 = vmatprep.subr.mxu0 0.0
        %1026 = vmatpush1.msra.mxu0 0.0
        %1027 = vmatprep.subr.mxu0 0.0
        %1028 = vmatpush1.msra.mxu0 0.0
        %1029 = vmatprep.subr.mxu0 0.0
        %1030 = vmatpush1.msra.mxu0 0.0
        %1031 = vmatprep.subr.mxu0 0.0
        %1032 = vmatpush1.msra.mxu0 0.0
        %1033 = vmatprep.subr.mxu0 0.0
        %1034 = vmatpush1.msra.mxu0 0.0
        %1035 = vmatprep.subr.mxu0 0.0
        %1036 = vmatpush1.msra.mxu0 0.0
        %1037 = vmatprep.subr.mxu0 0.0
        %1038 = vmatpush1.msra.mxu0 0.0
        %1039 = vmatprep.subr.mxu0 0.0
        %1040 = vmatpush1.msra.mxu0 0.0
        %1041 = vmatprep.subr.mxu0 0.0
        %1042 = vmatpush1.msra.mxu0 0.0
        %1043 = vmatprep.subr.mxu0 0.0
        %1044 = vmatpush1.msra.mxu0 0.0
        %1045 = vmatprep.subr.mxu0 0.0
        %1046 = vmatpush1.msra.mxu0 0.0
        %1047 = vmatprep.subr.mxu0 0.0
        %1048 = vmatpush1.msra.mxu0 0.0
        %1049 = vmatprep.subr.mxu0 0.0
        %1050 = vmatpush1.msra.mxu0 0.0
        %1051 = vmatprep.subr.mxu0 0.0
        %1052 = vmatpush1.msra.mxu0 0.0
        %1053 = vmatprep.subr.mxu0 0.0
        %1054 = vmatpush1.msra.mxu0 0.0
        %1055 = vmatprep.subr.mxu0 0.0
        %1056 = vmatpush1.msra.mxu0 0.0
        %1057 = vmatprep.subr.mxu0 0.0
        %1058 = vmatpush1.msra.mxu0 0.0
        %1059 = vmatprep.subr.mxu0 0.0
        %1060 = vmatpush1.msra.mxu0 0.0
        %1061 = vmatprep.subr.mxu0 0.0
        %1062 = vmatpush1.msra.mxu0 0.0
        %1063 = vmatprep.subr.mxu0 0.0
        %1064 = vmatpush1.msra.mxu0 0.0
        %1065 = vmatprep.subr.mxu0 0.0
        %1066 = vmatpush1.msra.mxu0 0.0
        %1067 = vmatprep.subr.mxu0 0.0
        %1068 = vmatpush1.msra.mxu0 0.0
        %1069 = vmatprep.subr.mxu0 0.0
        %1070 = vmatpush1.msra.mxu0 0.0
        %1071 = vmatprep.mubr.f32.mxu0 0.0
        %1072 = vmatmul.mubr.f32.gmra.mrb[0].mxu0 %v924
        %v1073 = vpop.f32.mrb[0].mxu0
        %v1074 = vadd.f32 %v920, %v1073
        %v1075 = vpop.f32.mrb[0].mxu0
        %1076 = vdwg.mxu0
        %v1077 = vmax.f32 %v1003, 0.0
        %v1078 = vmax.f32 %v1005, 0.0
        %v1079 = vmax.f32 %v1074, 0.0
        %v1081 = vlaneseq
        %v1082 = vshrl.u32 %v1081, 7
        %v1083 = vsub.s32 0, %v1082
        %v1084 = vrot.slane %v679, %v1083
        %v1085 = vlaneseq
        %v1086 = vshrl.u32 %v1085, 7
        %v1087 = vsub.s32 1, %v1086
        %v1088 = vrot.slane %v679, %v1087
        %v1089 = vlaneseq
        %v1090 = vshrl.u32 %v1089, 7
        %v1091 = vsub.s32 2, %v1090
        %v1092 = vrot.slane %v679, %v1091
        %v1096 = vmul.f32 %v1077, %v1084
        %v1097 = vmul.f32 %v1078, %v1088
        %v1098 = vmul.f32 %v1079, %v1092
        %v1102 = vrot.slane %v1096, 4
        %v1103 = vrot.slane %v1097, 4
        %v1104 = vrot.slane %v1098, 4
        %1108 = vst [vmem:[#allocation2] sm:$0xf0] %v1102
        %1109 = vst [vmem:[#allocation2 + $0x8] sm:$0xf0] %v1103
        %1110 = vst.msk [vmem:[#allocation2 + $0x10] sm:$0xf0] %vm737, %v1104
        %v1111 = vld [vmem:[#allocation2] sm:$0xff]
        %v1112 = vld [vmem:[#allocation2 + $0x8] sm:$0xff]
        %v1113 = vld [vmem:[#allocation2 + $0x10] sm:$0xff]
        %1117 = vrot.lane.b32.xlu0 %v1111, 19
        %v1118 = vpop.permute.xlu0 %1117
        %1119 = vrot.lane.b32.xlu0 %v1112, 19
        %v1120 = vpop.permute.xlu0 %1119
        %1121 = vrot.lane.b32.xlu0 %v1113, 19
        %v1122 = vpop.permute.xlu0 %1121
        %v1123 = vsel %vm701, %v1118, %v1120
        %v1124 = vsel %vm701, %v1120, %v1122
        %vm1128 = vcmask 1047704
        %1129 = vst.msk [vmem:[#allocation3] sm:$0xff] %vm1128, %v1118
        %1130 = vst [vmem:[#allocation3 + $0x8] sm:$0xff] %v1123
        %vm1131 = vcmask 556032
        %1132 = vst.msk [vmem:[#allocation3 + $0x10] sm:$0xff] %vm1131, %v1124
        %1133 = vst.msk [vmem:[#allocation3] sm:$0xff] %vm701, 0.0
        %v1134 = vld [vmem:[#allocation2] sm:$0xff]
        %v1135 = vld [vmem:[#allocation2 + $0x8] sm:$0xff]
        %v1136 = vld [vmem:[#allocation2 + $0x10] sm:$0xff]
        %1140 = vrot.lane.b32.xlu0 %v1134, 18
        %v1141 = vpop.permute.xlu0 %1140
        %1142 = vrot.lane.b32.xlu0 %v1135, 18
        %v1143 = vpop.permute.xlu0 %1142
        %1144 = vrot.lane.b32.xlu0 %v1136, 18
        %v1145 = vpop.permute.xlu0 %1144
        %v1146 = vsel %vm728, %v1141, %v1143
        %v1147 = vsel %vm728, %v1143, %v1145
        %vm1151 = vcmask 1047696
        %1152 = vst.msk [vmem:[#allocation3 + $0x18] sm:$0xff] %vm1151, %v1141
        %1153 = vst [vmem:[#allocation3 + $0x20] sm:$0xff] %v1146
        %1154 = vst.msk [vmem:[#allocation3 + $0x28] sm:$0xff] %vm1131, %v1147
        %1155 = vst.msk [vmem:[#allocation3 + $0x18] sm:$0xff] %vm728, 0.0
        %v1156 = vld [vmem:[#allocation2] sm:$0xff]
        %v1157 = vld [vmem:[#allocation2 + $0x8] sm:$0xff]
        %v1158 = vld [vmem:[#allocation2 + $0x10] sm:$0xff]
        %1162 = vrot.lane.b32.xlu0 %v1156, 17
        %v1163 = vpop.permute.xlu0 %1162
        %1164 = vrot.lane.b32.xlu0 %v1157, 17
        %v1165 = vpop.permute.xlu0 %1164
        %1166 = vrot.lane.b32.xlu0 %v1158, 17
        %v1167 = vpop.permute.xlu0 %1166
        %v1168 = vsel %vm753, %v1163, %v1165
        %v1169 = vsel %vm753, %v1165, %v1167
        %vm1173 = vcmask 1047688
        %1174 = vst.msk [vmem:[#allocation3 + $0x30] sm:$0xff] %vm1173, %v1163
        %1175 = vst [vmem:[#allocation3 + $0x38] sm:$0xff] %v1168
        %1176 = vst.msk [vmem:[#allocation3 + $0x40] sm:$0xff] %vm1131, %v1169
        %1177 = vst.msk [vmem:[#allocation3 + $0x30] sm:$0xff] %vm753, 0.0
        %v1178 = vld [vmem:[#allocation2] sm:$0xff]
        %v1179 = vld [vmem:[#allocation2 + $0x8] sm:$0xff]
        %v1180 = vld [vmem:[#allocation2 + $0x10] sm:$0xff]
        %1184 = vrot.lane.b32.xlu0 %v1178, 1
        %v1185 = vpop.permute.xlu0 %1184
        %1186 = vrot.lane.b32.xlu0 %v1179, 1
        %v1187 = vpop.permute.xlu0 %1186
        %1188 = vrot.lane.b32.xlu0 %v1180, 1
        %v1189 = vpop.permute.xlu0 %1188
        %v1190 = vsel %vm780, %v1185, %v1187
        %v1191 = vsel %vm780, %v1187, %v1189
        %vm1195 = vcmask 1047560
        %1196 = vst.msk [vmem:[#allocation3 + $0x48] sm:$0xff] %vm1195, %v1185
        %1197 = vst [vmem:[#allocation3 + $0x50] sm:$0xff] %v1190
        %1198 = vst.msk [vmem:[#allocation3 + $0x58] sm:$0xff] %vm1131, %v1191
        %1199 = vst.msk [vmem:[#allocation3 + $0x48] sm:$0xff] %vm780, 0.0
        %v1200 = vld [vmem:[#allocation2] sm:$0xff]
        %v1201 = vld [vmem:[#allocation2 + $0x8] sm:$0xff]
        %v1202 = vld [vmem:[#allocation2 + $0x10] sm:$0xff]
        %1203 = vst [vmem:[#allocation3 + $0x60] sm:$0xff] %v1200
        %1204 = vst [vmem:[#allocation3 + $0x68] sm:$0xff] %v1201
        %1205 = vst.msk [vmem:[#allocation3 + $0x70] sm:$0xff] %vm1131, %v1202
        %v1206 = vld [vmem:[#allocation2] sm:$0xff]
        %v1207 = vld [vmem:[#allocation2 + $0x8] sm:$0xff]
        %v1208 = vld [vmem:[#allocation2 + $0x10] sm:$0xff]
        %1212 = vrot.lane.b32.xlu0 %v1206, 127
        %v1213 = vpop.permute.xlu0 %1212
        %1214 = vrot.lane.b32.xlu0 %v1207, 127
        %v1215 = vpop.permute.xlu0 %1214
        %1216 = vrot.lane.b32.xlu0 %v1208, 127
        %v1217 = vpop.permute.xlu0 %1216
        %v1218 = vsel %vm813, %v1213, %v1215
        %v1219 = vsel %vm813, %v1215, %v1217
        %1223 = vst [vmem:[#allocation3 + $0x78] sm:$0xff] %v1218
        %1224 = vst [vmem:[#allocation3 + $0x80] sm:$0xff] %v1219
        %vm1225 = vcmask 547840
        %1226 = vst.msk [vmem:[#allocation3 + $0x88] sm:$0xff] %vm1225, %v1217
        %vm1227 = vcmask 556568
        %1228 = vst.msk [vmem:[#allocation3 + $0x88] sm:$0xff] %vm1227, 0.0
        %v1229 = vld [vmem:[#allocation2] sm:$0xff]
        %v1230 = vld [vmem:[#allocation2 + $0x8] sm:$0xff]
        %v1231 = vld [vmem:[#allocation2 + $0x10] sm:$0xff]
        %1235 = vrot.lane.b32.xlu0 %v1229, 111
        %v1236 = vpop.permute.xlu0 %1235
        %1237 = vrot.lane.b32.xlu0 %v1230, 111
        %v1238 = vpop.permute.xlu0 %1237
        %1239 = vrot.lane.b32.xlu0 %v1231, 111
        %v1240 = vpop.permute.xlu0 %1239
        %v1241 = vsel %vm837, %v1236, %v1238
        %v1242 = vsel %vm837, %v1238, %v1240
        %1246 = vst [vmem:[#allocation3 + $0x90] sm:$0xff] %v1241
        %1247 = vst [vmem:[#allocation3 + $0x98] sm:$0xff] %v1242
        %vm1248 = vcmask 416768
        %1249 = vst.msk [vmem:[#allocation3 + $0xa0] sm:$0xff] %vm1248, %v1240
        %vm1250 = vcmask 556440
        %1251 = vst.msk [vmem:[#allocation3 + $0xa0] sm:$0xff] %vm1250, 0.0
        %v1252 = vld [vmem:[#allocation2] sm:$0xff]
        %v1253 = vld [vmem:[#allocation2 + $0x8] sm:$0xff]
        %v1254 = vld [vmem:[#allocation2 + $0x10] sm:$0xff]
        %1258 = vrot.lane.b32.xlu0 %v1252, 110
        %v1259 = vpop.permute.xlu0 %1258
        %1260 = vrot.lane.b32.xlu0 %v1253, 110
        %v1261 = vpop.permute.xlu0 %1260
        %1262 = vrot.lane.b32.xlu0 %v1254, 110
        %v1263 = vpop.permute.xlu0 %1262
        %v1264 = vsel %vm864, %v1259, %v1261
        %v1265 = vsel %vm864, %v1261, %v1263
        %1269 = vst [vmem:[#allocation3 + $0xa8] sm:$0xff] %v1264
        %1270 = vst [vmem:[#allocation3 + $0xb0] sm:$0xff] %v1265
        %vm1271 = vcmask 408576
        %1272 = vst.msk [vmem:[#allocation3 + $0xb8] sm:$0xff] %vm1271, %v1263
        %vm1273 = vcmask 556432
        %1274 = vst.msk [vmem:[#allocation3 + $0xb8] sm:$0xff] %vm1273, 0.0
        %v1275 = vld [vmem:[#allocation2] sm:$0xff]
        %v1276 = vld [vmem:[#allocation2 + $0x8] sm:$0xff]
        %v1277 = vld [vmem:[#allocation2 + $0x10] sm:$0xff]
        %1281 = vrot.lane.b32.xlu0 %v1275, 109
        %v1282 = vpop.permute.xlu0 %1281
        %1283 = vrot.lane.b32.xlu0 %v1276, 109
        %v1284 = vpop.permute.xlu0 %1283
        %1285 = vrot.lane.b32.xlu0 %v1277, 109
        %v1286 = vpop.permute.xlu0 %1285
        %v1287 = vsel %vm888, %v1282, %v1284
        %v1288 = vsel %vm888, %v1284, %v1286
        %1292 = vst [vmem:[#allocation3 + $0xc0] sm:$0xff] %v1287
        %1293 = vst [vmem:[#allocation3 + $0xc8] sm:$0xff] %v1288
        %vm1294 = vcmask 400384
        %1295 = vst.msk [vmem:[#allocation3 + $0xd0] sm:$0xff] %vm1294, %v1286
        %vm1296 = vcmask 556424
        %1297 = vst.msk [vmem:[#allocation3 + $0xd0] sm:$0xff] %vm1296, 0.0
        %v1298 = vld [vmem:[#allocation10] sm:$0xf]
        %v1299 = vld [vmem:[#allocation3] sm:$0xff]
        %v1300 = vld [vmem:[#allocation3 + $0x8] sm:$0xff]
        %v1301 = vld [vmem:[#allocation3 + $0x10] sm:$0xff]
        %v1302 = vld [vmem:[#allocation3 + $0x18] sm:$0xff]
        %v1303 = vld [vmem:[#allocation3 + $0x20] sm:$0xff]
        %v1304 = vld [vmem:[#allocation3 + $0x28] sm:$0xff]
        %v1305 = vld [vmem:[#allocation3 + $0x30] sm:$0xff]
        %v1306 = vld [vmem:[#allocation3 + $0x38] sm:$0xff]
        %v1307 = vld [vmem:[#allocation3 + $0x40] sm:$0xff]
        %v1308 = vld [vmem:[#allocation3 + $0x48] sm:$0xff]
        %v1309 = vld [vmem:[#allocation3 + $0x50] sm:$0xff]
        %v1310 = vld [vmem:[#allocation3 + $0x58] sm:$0xff]
        %v1311 = vld [vmem:[#allocation3 + $0x60] sm:$0xff]
        %v1312 = vld [vmem:[#allocation3 + $0x68] sm:$0xff]
        %v1313 = vld [vmem:[#allocation3 + $0x70] sm:$0xff]
        %v1314 = vld [vmem:[#allocation3 + $0x78] sm:$0xff]
        %v1315 = vld [vmem:[#allocation3 + $0x80] sm:$0xff]
        %v1316 = vld [vmem:[#allocation3 + $0x88] sm:$0xff]
        %v1317 = vld [vmem:[#allocation3 + $0x90] sm:$0xff]
        %v1318 = vld [vmem:[#allocation3 + $0x98] sm:$0xff]
        %v1319 = vld [vmem:[#allocation3 + $0xa0] sm:$0xff]
        %v1320 = vld [vmem:[#allocation3 + $0xa8] sm:$0xff]
        %v1321 = vld [vmem:[#allocation3 + $0xb0] sm:$0xff]
        %v1322 = vld [vmem:[#allocation3 + $0xb8] sm:$0xff]
        %v1323 = vld [vmem:[#allocation3 + $0xc0] sm:$0xff]
        %v1324 = vld [vmem:[#allocation3 + $0xc8] sm:$0xff]
        %v1325 = vld [vmem:[#allocation3 + $0xd0] sm:$0xff]
        %v1326 = vld [vmem:[%s7] sm:$0xf]
        %1328 = vset.pattern.permute.xlu0 0
        %1329 = vperm.xlu0 %1328, %v1326
        %v1330 = vpop.permute.xlu0 %1329
        %vm1332 = vcmask 588800
        %v1334 = vsel %vm1332, %v1298, 0
        %1336 = vmatprep.subr.mxu0 %v1300
        %1337 = vmatpush1.msra.mxu0 %v1299
        %1338 = vmatprep.subr.mxu0 %v1303
        %1339 = vmatpush1.msra.mxu0 %v1302
        %1340 = vmatprep.subr.mxu0 %v1306
        %1341 = vmatpush1.msra.mxu0 %v1305
        %1342 = vmatprep.subr.mxu0 %v1309
        %1343 = vmatpush1.msra.mxu0 %v1308
        %1344 = vmatprep.subr.mxu0 %v1312
        %1345 = vmatpush1.msra.mxu0 %v1311
        %1346 = vmatprep.subr.mxu0 %v1315
        %1347 = vmatpush1.msra.mxu0 %v1314
        %1348 = vmatprep.subr.mxu0 %v1318
        %1349 = vmatpush1.msra.mxu0 %v1317
        %1350 = vmatprep.subr.mxu0 %v1321
        %1351 = vmatpush1.msra.mxu0 %v1320
        %1352 = vmatprep.subr.mxu0 %v1324
        %1353 = vmatpush1.msra.mxu0 %v1323
        %1354 = vmatprep.subr.mxu0 0.0
        %1355 = vmatpush1.msra.mxu0 0.0
        %1356 = vmatprep.subr.mxu0 0.0
        %1357 = vmatpush1.msra.mxu0 0.0
        %1358 = vmatprep.subr.mxu0 0.0
        %1359 = vmatpush1.msra.mxu0 0.0
        %1360 = vmatprep.subr.mxu0 0.0
        %1361 = vmatpush1.msra.mxu0 0.0
        %1362 = vmatprep.subr.mxu0 0.0
        %1363 = vmatpush1.msra.mxu0 0.0
        %1364 = vmatprep.subr.mxu0 0.0
        %1365 = vmatpush1.msra.mxu0 0.0
        %1366 = vmatprep.subr.mxu0 0.0
        %1367 = vmatpush1.msra.mxu0 0.0
        %1368 = vmatprep.subr.mxu0 0.0
        %1369 = vmatpush1.msra.mxu0 0.0
        %1370 = vmatprep.subr.mxu0 0.0
        %1371 = vmatpush1.msra.mxu0 0.0
        %1372 = vmatprep.subr.mxu0 0.0
        %1373 = vmatpush1.msra.mxu0 0.0
        %1374 = vmatprep.subr.mxu0 0.0
        %1375 = vmatpush1.msra.mxu0 0.0
        %1376 = vmatprep.subr.mxu0 0.0
        %1377 = vmatpush1.msra.mxu0 0.0
        %1378 = vmatprep.subr.mxu0 0.0
        %1379 = vmatpush1.msra.mxu0 0.0
        %1380 = vmatprep.subr.mxu0 0.0
        %1381 = vmatpush1.msra.mxu0 0.0
        %1382 = vmatprep.subr.mxu0 0.0
        %1383 = vmatpush1.msra.mxu0 0.0
        %1384 = vmatprep.subr.mxu0 0.0
        %1385 = vmatpush1.msra.mxu0 0.0
        %1386 = vmatprep.subr.mxu0 0.0
        %1387 = vmatpush1.msra.mxu0 0.0
        %1388 = vmatprep.subr.mxu0 0.0
        %1389 = vmatpush1.msra.mxu0 0.0
        %1390 = vmatprep.subr.mxu0 0.0
        %1391 = vmatpush1.msra.mxu0 0.0
        %1392 = vmatprep.subr.mxu0 0.0
        %1393 = vmatpush1.msra.mxu0 0.0
        %1394 = vmatprep.subr.mxu0 0.0
        %1395 = vmatpush1.msra.mxu0 0.0
        %1396 = vmatprep.subr.mxu0 0.0
        %1397 = vmatpush1.msra.mxu0 0.0
        %1398 = vmatprep.subr.mxu0 0.0
        %1399 = vmatpush1.msra.mxu0 0.0
        %1400 = vmatprep.mubr.f32.mxu0 0.0
        %1401 = vmatmul.mubr.f32.gmra.mrb[0].mxu0 %v1334
        %v1402 = vpop.f32.mrb[0].mxu0
        %v1403 = vadd.f32 %v1330, %v1402
        %v1404 = vpop.f32.mrb[0].mxu0
        %v1405 = vadd.f32 %v1330, %v1404
        %1406 = vdwg.mxu0
        %1407 = vmatprep.subr.mxu0 0.0
        %1408 = vmatpush1.msra.mxu0 %v1301
        %1409 = vmatprep.subr.mxu0 0.0
        %1410 = vmatpush1.msra.mxu0 %v1304
        %1411 = vmatprep.subr.mxu0 0.0
        %1412 = vmatpush1.msra.mxu0 %v1307
        %1413 = vmatprep.subr.mxu0 0.0
        %1414 = vmatpush1.msra.mxu0 %v1310
        %1415 = vmatprep.subr.mxu0 0.0
        %1416 = vmatpush1.msra.mxu0 %v1313
        %1417 = vmatprep.subr.mxu0 0.0
        %1418 = vmatpush1.msra.mxu0 %v1316
        %1419 = vmatprep.subr.mxu0 0.0
        %1420 = vmatpush1.msra.mxu0 %v1319
        %1421 = vmatprep.subr.mxu0 0.0
        %1422 = vmatpush1.msra.mxu0 %v1322
        %1423 = vmatprep.subr.mxu0 0.0
        %1424 = vmatpush1.msra.mxu0 %v1325
        %1425 = vmatprep.subr.mxu0 0.0
        %1426 = vmatpush1.msra.mxu0 0.0
        %1427 = vmatprep.subr.mxu0 0.0
        %1428 = vmatpush1.msra.mxu0 0.0
        %1429 = vmatprep.subr.mxu0 0.0
        %1430 = vmatpush1.msra.mxu0 0.0
        %1431 = vmatprep.subr.mxu0 0.0
        %1432 = vmatpush1.msra.mxu0 0.0
        %1433 = vmatprep.subr.mxu0 0.0
        %1434 = vmatpush1.msra.mxu0 0.0
        %1435 = vmatprep.subr.mxu0 0.0
        %1436 = vmatpush1.msra.mxu0 0.0
        %1437 = vmatprep.subr.mxu0 0.0
        %1438 = vmatpush1.msra.mxu0 0.0
        %1439 = vmatprep.subr.mxu0 0.0
        %1440 = vmatpush1.msra.mxu0 0.0
        %1441 = vmatprep.subr.mxu0 0.0
        %1442 = vmatpush1.msra.mxu0 0.0
        %1443 = vmatprep.subr.mxu0 0.0
        %1444 = vmatpush1.msra.mxu0 0.0
        %1445 = vmatprep.subr.mxu0 0.0
        %1446 = vmatpush1.msra.mxu0 0.0
        %1447 = vmatprep.subr.mxu0 0.0
        %1448 = vmatpush1.msra.mxu0 0.0
        %1449 = vmatprep.subr.mxu0 0.0
        %1450 = vmatpush1.msra.mxu0 0.0
        %1451 = vmatprep.subr.mxu0 0.0
        %1452 = vmatpush1.msra.mxu0 0.0
        %1453 = vmatprep.subr.mxu0 0.0
        %1454 = vmatpush1.msra.mxu0 0.0
        %1455 = vmatprep.subr.mxu0 0.0
        %1456 = vmatpush1.msra.mxu0 0.0
        %1457 = vmatprep.subr.mxu0 0.0
        %1458 = vmatpush1.msra.mxu0 0.0
        %1459 = vmatprep.subr.mxu0 0.0
        %1460 = vmatpush1.msra.mxu0 0.0
        %1461 = vmatprep.subr.mxu0 0.0
        %1462 = vmatpush1.msra.mxu0 0.0
        %1463 = vmatprep.subr.mxu0 0.0
        %1464 = vmatpush1.msra.mxu0 0.0
        %1465 = vmatprep.subr.mxu0 0.0
        %1466 = vmatpush1.msra.mxu0 0.0
        %1467 = vmatprep.subr.mxu0 0.0
        %1468 = vmatpush1.msra.mxu0 0.0
        %1469 = vmatprep.subr.mxu0 0.0
        %1470 = vmatpush1.msra.mxu0 0.0
        %1471 = vmatprep.mubr.f32.mxu0 0.0
        %1472 = vmatmul.mubr.f32.gmra.mrb[0].mxu0 %v1334
        %v1473 = vpop.f32.mrb[0].mxu0
        %v1474 = vadd.f32 %v1330, %v1473
        %v1475 = vpop.f32.mrb[0].mxu0
        %1476 = vdwg.mxu0
        %v1477 = vmax.f32 %v1403, 0.0
        %v1478 = vmax.f32 %v1405, 0.0
        %v1479 = vmax.f32 %v1474, 0.0
        %v1480 = vmul.f32 %v1477, %v1084
        %v1481 = vmul.f32 %v1478, %v1088
        %v1482 = vmul.f32 %v1479, %v1092
        %1483 = vst [vmem:[#allocation2 + $0x18] sm:$0xf] %v1480
        %1484 = vst [vmem:[#allocation2 + $0x20] sm:$0xf] %v1481
        %1485 = vst.msk [vmem:[#allocation2 + $0x28] sm:$0xf] %vm687, %v1482
        %v1486 = vld [vmem:[#allocation2] sm:$0xff]
        %v1487 = vld [vmem:[#allocation2 + $0x8] sm:$0xff]
        %v1488 = vld [vmem:[#allocation2 + $0x10] sm:$0xff]
        %v1489 = vld [vmem:[#allocation2 + $0x18] sm:$0xf]
        %v1490 = vld [vmem:[#allocation2 + $0x20] sm:$0xf]
        %v1491 = vld [vmem:[#allocation2 + $0x28] sm:$0xf]
        %1498 = vrot.lane.b32.xlu0 %v1486, 19
        %v1499 = vpop.permute.xlu0 %1498
        %1500 = vrot.lane.b32.xlu0 %v1487, 19
        %v1501 = vpop.permute.xlu0 %1500
        %1502 = vrot.lane.b32.xlu0 %v1488, 19
        %v1503 = vpop.permute.xlu0 %1502
        %1504 = vrot.lane.b32.xlu0 %v1489, 19
        %v1505 = vpop.permute.xlu0 %1504
        %1506 = vrot.lane.b32.xlu0 %v1490, 19
        %v1507 = vpop.permute.xlu0 %1506
        %1508 = vrot.lane.b32.xlu0 %v1491, 19
        %v1509 = vpop.permute.xlu0 %1508
        %v1510 = vsel %vm701, %v1499, %v1501
        %v1511 = vsel %vm701, %v1501, %v1503
        %v1512 = vsel %vm701, %v1505, %v1507
        %v1513 = vsel %vm701, %v1507, %v1509
        %1520 = vst.msk [vmem:[#allocation3] sm:$0xff] %vm1128, %v1499
        %1521 = vst [vmem:[#allocation3 + $0x8] sm:$0xff] %v1510
        %1522 = vst.msk [vmem:[#allocation3 + $0x10] sm:$0xff] %vm1131, %v1511
        %1523 = vst.msk [vmem:[#allocation3 + $0x18] sm:$0xf] %vm707, %v1505
        %1524 = vst [vmem:[#allocation3 + $0x20] sm:$0xf] %v1512
        %1525 = vst.msk [vmem:[#allocation3 + $0x28] sm:$0xf] %vm687, %v1513
        %1526 = vst.msk [vmem:[#allocation3] sm:$0xff] %vm701, 0.0
        %1527 = vst.msk [vmem:[#allocation3 + $0x18] sm:$0xf] %vm711, 0.0
        %v1528 = vld [vmem:[#allocation2] sm:$0xff]
        %v1529 = vld [vmem:[#allocation2 + $0x8] sm:$0xff]
        %v1530 = vld [vmem:[#allocation2 + $0x10] sm:$0xff]
        %v1531 = vld [vmem:[#allocation2 + $0x18] sm:$0xf]
        %v1532 = vld [vmem:[#allocation2 + $0x20] sm:$0xf]
        %v1533 = vld [vmem:[#allocation2 + $0x28] sm:$0xf]
        %v1540 = vrot.slane %v1528, 4
        %v1541 = vrot.slane %v1529, 4
        %v1542 = vrot.slane %v1530, 4
        %v1543 = vrot.slane %v1531, 4
        %v1544 = vsel %vm926, %v1540, %v1543
        %v1545 = vrot.slane %v1532, 4
        %v1546 = vsel %vm926, %v1541, %v1545
        %v1547 = vrot.slane %v1533, 4
        %v1548 = vsel %vm926, %v1542, %v1547
        %1549 = vrot.lane.b32.xlu0 %v1540, 18
        %v1550 = vpop.permute.xlu0 %1549
        %1551 = vrot.lane.b32.xlu0 %v1541, 18
        %v1552 = vpop.permute.xlu0 %1551
        %1553 = vrot.lane.b32.xlu0 %v1542, 18
        %v1554 = vpop.permute.xlu0 %1553
        %1555 = vrot.lane.b32.xlu0 %v1544, 18
        %v1556 = vpop.permute.xlu0 %1555
        %1557 = vrot.lane.b32.xlu0 %v1546, 18
        %v1558 = vpop.permute.xlu0 %1557
        %1559 = vrot.lane.b32.xlu0 %v1548, 18
        %v1560 = vpop.permute.xlu0 %1559
        %v1561 = vsel %vm728, %v1550, %v1552
        %v1562 = vsel %vm728, %v1552, %v1554
        %v1563 = vsel %vm728, %v1556, %v1558
        %v1564 = vsel %vm728, %v1558, %v1560
        %1571 = vst.msk [vmem:[#allocation3 + $0x18] sm:$0xf0] %vm734, %v1550
        %1572 = vst [vmem:[#allocation3 + $0x20] sm:$0xf0] %v1561
        %1573 = vst.msk [vmem:[#allocation3 + $0x28] sm:$0xf0] %vm737, %v1562
        %1574 = vst.msk [vmem:[#allocation3 + $0x30] sm:$0xff] %vm1151, %v1556
        %1575 = vst [vmem:[#allocation3 + $0x38] sm:$0xff] %v1563
        %1576 = vst.msk [vmem:[#allocation3 + $0x40] sm:$0xff] %vm1131, %v1564
        %1577 = vst.msk [vmem:[#allocation3 + $0x18] sm:$0xf0] %vm739, 0.0
        %1578 = vst.msk [vmem:[#allocation3 + $0x30] sm:$0xff] %vm728, 0.0
        %v1579 = vld [vmem:[#allocation2] sm:$0xff]
        %v1580 = vld [vmem:[#allocation2 + $0x8] sm:$0xff]
        %v1581 = vld [vmem:[#allocation2 + $0x10] sm:$0xff]
        %v1582 = vld [vmem:[#allocation2 + $0x18] sm:$0xf]
        %v1583 = vld [vmem:[#allocation2 + $0x20] sm:$0xf]
        %v1584 = vld [vmem:[#allocation2 + $0x28] sm:$0xf]
        %1591 = vrot.lane.b32.xlu0 %v1579, 17
        %v1592 = vpop.permute.xlu0 %1591
        %1593 = vrot.lane.b32.xlu0 %v1580, 17
        %v1594 = vpop.permute.xlu0 %1593
        %1595 = vrot.lane.b32.xlu0 %v1581, 17
        %v1596 = vpop.permute.xlu0 %1595
        %1597 = vrot.lane.b32.xlu0 %v1582, 17
        %v1598 = vpop.permute.xlu0 %1597
        %1599 = vrot.lane.b32.xlu0 %v1583, 17
        %v1600 = vpop.permute.xlu0 %1599
        %1601 = vrot.lane.b32.xlu0 %v1584, 17
        %v1602 = vpop.permute.xlu0 %1601
        %v1603 = vsel %vm753, %v1592, %v1594
        %v1604 = vsel %vm753, %v1594, %v1596
        %v1605 = vsel %vm753, %v1598, %v1600
        %v1606 = vsel %vm753, %v1600, %v1602
        %1613 = vst.msk [vmem:[#allocation3 + $0x48] sm:$0xff] %vm1173, %v1592
        %1614 = vst [vmem:[#allocation3 + $0x50] sm:$0xff] %v1603
        %1615 = vst.msk [vmem:[#allocation3 + $0x58] sm:$0xff] %vm1131, %v1604
        %1616 = vst.msk [vmem:[#allocation3 + $0x60] sm:$0xf] %vm759, %v1598
        %1617 = vst [vmem:[#allocation3 + $0x68] sm:$0xf] %v1605
        %1618 = vst.msk [vmem:[#allocation3 + $0x70] sm:$0xf] %vm687, %v1606
        %1619 = vst.msk [vmem:[#allocation3 + $0x48] sm:$0xff] %vm753, 0.0
        %1620 = vst.msk [vmem:[#allocation3 + $0x60] sm:$0xf] %vm763, 0.0
        %v1621 = vld [vmem:[#allocation2] sm:$0xff]
        %v1622 = vld [vmem:[#allocation2 + $0x8] sm:$0xff]
        %v1623 = vld [vmem:[#allocation2 + $0x10] sm:$0xff]
        %v1624 = vld [vmem:[#allocation2 + $0x18] sm:$0xf]
        %v1625 = vld [vmem:[#allocation2 + $0x20] sm:$0xf]
        %v1626 = vld [vmem:[#allocation2 + $0x28] sm:$0xf]
        %v1633 = vrot.slane %v1621, 4
        %v1634 = vrot.slane %v1622, 4
        %v1635 = vrot.slane %v1623, 4
        %v1636 = vrot.slane %v1624, 4
        %v1637 = vsel %vm926, %v1633, %v1636
        %v1638 = vrot.slane %v1625, 4
        %v1639 = vsel %vm926, %v1634, %v1638
        %v1640 = vrot.slane %v1626, 4
        %v1641 = vsel %vm926, %v1635, %v1640
        %1642 = vrot.lane.b32.xlu0 %v1633, 1
        %v1643 = vpop.permute.xlu0 %1642
        %1644 = vrot.lane.b32.xlu0 %v1634, 1
        %v1645 = vpop.permute.xlu0 %1644
        %1646 = vrot.lane.b32.xlu0 %v1635, 1
        %v1647 = vpop.permute.xlu0 %1646
        %1648 = vrot.lane.b32.xlu0 %v1637, 1
        %v1649 = vpop.permute.xlu0 %1648
        %1650 = vrot.lane.b32.xlu0 %v1639, 1
        %v1651 = vpop.permute.xlu0 %1650
        %1652 = vrot.lane.b32.xlu0 %v1641, 1
        %v1653 = vpop.permute.xlu0 %1652
        %v1654 = vsel %vm780, %v1643, %v1645
        %v1655 = vsel %vm780, %v1645, %v1647
        %v1656 = vsel %vm780, %v1649, %v1651
        %v1657 = vsel %vm780, %v1651, %v1653
        %1664 = vst.msk [vmem:[#allocation3 + $0x60] sm:$0xf0] %vm786, %v1643
        %1665 = vst [vmem:[#allocation3 + $0x68] sm:$0xf0] %v1654
        %1666 = vst.msk [vmem:[#allocation3 + $0x70] sm:$0xf0] %vm737, %v1655
        %1667 = vst.msk [vmem:[#allocation3 + $0x78] sm:$0xff] %vm1195, %v1649
        %1668 = vst [vmem:[#allocation3 + $0x80] sm:$0xff] %v1656
        %1669 = vst.msk [vmem:[#allocation3 + $0x88] sm:$0xff] %vm1131, %v1657
        %1670 = vst.msk [vmem:[#allocation3 + $0x60] sm:$0xf0] %vm790, 0.0
        %1671 = vst.msk [vmem:[#allocation3 + $0x78] sm:$0xff] %vm780, 0.0
        %v1672 = vld [vmem:[#allocation2] sm:$0xff]
        %v1673 = vld [vmem:[#allocation2 + $0x8] sm:$0xff]
        %v1674 = vld [vmem:[#allocation2 + $0x10] sm:$0xff]
        %v1675 = vld [vmem:[#allocation2 + $0x18] sm:$0xf]
        %v1676 = vld [vmem:[#allocation2 + $0x20] sm:$0xf]
        %v1677 = vld [vmem:[#allocation2 + $0x28] sm:$0xf]
        %1678 = vst [vmem:[#allocation3 + $0x90] sm:$0xff] %v1672
        %1679 = vst [vmem:[#allocation3 + $0x98] sm:$0xff] %v1673
        %1680 = vst.msk [vmem:[#allocation3 + $0xa0] sm:$0xff] %vm1131, %v1674
        %1681 = vst [vmem:[#allocation3 + $0xa8] sm:$0xf] %v1675
        %1682 = vst [vmem:[#allocation3 + $0xb0] sm:$0xf] %v1676
        %1683 = vst.msk [vmem:[#allocation3 + $0xb8] sm:$0xf] %vm687, %v1677
        %v1684 = vld [vmem:[#allocation2] sm:$0xff]
        %v1685 = vld [vmem:[#allocation2 + $0x8] sm:$0xff]
        %v1686 = vld [vmem:[#allocation2 + $0x10] sm:$0xff]
        %v1687 = vld [vmem:[#allocation2 + $0x18] sm:$0xf]
        %v1688 = vld [vmem:[#allocation2 + $0x20] sm:$0xf]
        %v1689 = vld [vmem:[#allocation2 + $0x28] sm:$0xf]
        %v1696 = vrot.slane %v1684, 4
        %v1697 = vrot.slane %v1685, 4
        %v1698 = vrot.slane %v1686, 4
        %v1699 = vrot.slane %v1687, 4
        %v1700 = vsel %vm926, %v1696, %v1699
        %v1701 = vrot.slane %v1688, 4
        %v1702 = vsel %vm926, %v1697, %v1701
        %v1703 = vrot.slane %v1689, 4
        %v1704 = vsel %vm926, %v1698, %v1703
        %1705 = vrot.lane.b32.xlu0 %v1696, 127
        %v1706 = vpop.permute.xlu0 %1705
        %1707 = vrot.lane.b32.xlu0 %v1697, 127
        %v1708 = vpop.permute.xlu0 %1707
        %1709 = vrot.lane.b32.xlu0 %v1698, 127
        %v1710 = vpop.permute.xlu0 %1709
        %1711 = vrot.lane.b32.xlu0 %v1700, 127
        %v1712 = vpop.permute.xlu0 %1711
        %1713 = vrot.lane.b32.xlu0 %v1702, 127
        %v1714 = vpop.permute.xlu0 %1713
        %1715 = vrot.lane.b32.xlu0 %v1704, 127
        %v1716 = vpop.permute.xlu0 %1715
        %v1717 = vsel %vm813, %v1706, %v1708
        %v1718 = vsel %vm813, %v1708, %v1710
        %v1719 = vsel %vm813, %v1712, %v1714
        %v1720 = vsel %vm813, %v1714, %v1716
        %1727 = vst [vmem:[#allocation3 + $0xa8] sm:$0xf0] %v1717
        %1728 = vst [vmem:[#allocation3 + $0xb0] sm:$0xf0] %v1718
        %1729 = vst.msk [vmem:[#allocation3 + $0xb8] sm:$0xf0] %vm821, %v1710
        %1730 = vst [vmem:[#allocation3 + $0xc0] sm:$0xff] %v1719
        %1731 = vst [vmem:[#allocation3 + $0xc8] sm:$0xff] %v1720
        %1732 = vst.msk [vmem:[#allocation3 + $0xd0] sm:$0xff] %vm1225, %v1716
        %1733 = vst.msk [vmem:[#allocation3 + $0xb8] sm:$0xf0] %vm823, 0.0
        %1734 = vst.msk [vmem:[#allocation3 + $0xd0] sm:$0xff] %vm1227, 0.0
        %v1735 = vld [vmem:[#allocation2] sm:$0xff]
        %v1736 = vld [vmem:[#allocation2 + $0x8] sm:$0xff]
        %v1737 = vld [vmem:[#allocation2 + $0x10] sm:$0xff]
        %v1738 = vld [vmem:[#allocation2 + $0x18] sm:$0xf]
        %v1739 = vld [vmem:[#allocation2 + $0x20] sm:$0xf]
        %v1740 = vld [vmem:[#allocation2 + $0x28] sm:$0xf]
        %1747 = vrot.lane.b32.xlu0 %v1735, 111
        %v1748 = vpop.permute.xlu0 %1747
        %1749 = vrot.lane.b32.xlu0 %v1736, 111
        %v1750 = vpop.permute.xlu0 %1749
        %1751 = vrot.lane.b32.xlu0 %v1737, 111
        %v1752 = vpop.permute.xlu0 %1751
        %1753 = vrot.lane.b32.xlu0 %v1738, 111
        %v1754 = vpop.permute.xlu0 %1753
        %1755 = vrot.lane.b32.xlu0 %v1739, 111
        %v1756 = vpop.permute.xlu0 %1755
        %1757 = vrot.lane.b32.xlu0 %v1740, 111
        %v1758 = vpop.permute.xlu0 %1757
        %v1759 = vsel %vm837, %v1748, %v1750
        %v1760 = vsel %vm837, %v1750, %v1752
        %v1761 = vsel %vm837, %v1754, %v1756
        %v1762 = vsel %vm837, %v1756, %v1758
        %1769 = vst [vmem:[#allocation3 + $0xd8] sm:$0xff] %v1759
        %1770 = vst [vmem:[#allocation3 + $0xe0] sm:$0xff] %v1760
        %1771 = vst.msk [vmem:[#allocation3 + $0xe8] sm:$0xff] %vm1248, %v1752
        %1772 = vst [vmem:[#allocation3 + $0xf0] sm:$0xf] %v1761
        %1773 = vst [vmem:[#allocation3 + $0xf8] sm:$0xf] %v1762
        %1774 = vst.msk [vmem:[#allocation3 + $0x100] sm:$0xf] %vm845, %v1758
        %1775 = vst.msk [vmem:[#allocation3 + $0xe8] sm:$0xff] %vm1250, 0.0
        %1776 = vst.msk [vmem:[#allocation3 + $0x100] sm:$0xf] %vm847, 0.0
        %v1777 = vld [vmem:[#allocation2] sm:$0xff]
        %v1778 = vld [vmem:[#allocation2 + $0x8] sm:$0xff]
        %v1779 = vld [vmem:[#allocation2 + $0x10] sm:$0xff]
        %v1780 = vld [vmem:[#allocation2 + $0x18] sm:$0xf]
        %v1781 = vld [vmem:[#allocation2 + $0x20] sm:$0xf]
        %v1782 = vld [vmem:[#allocation2 + $0x28] sm:$0xf]
        %v1789 = vrot.slane %v1777, 4
        %v1790 = vrot.slane %v1778, 4
        %v1791 = vrot.slane %v1779, 4
        %v1792 = vrot.slane %v1780, 4
        %v1793 = vsel %vm926, %v1789, %v1792
        %v1794 = vrot.slane %v1781, 4
        %v1795 = vsel %vm926, %v1790, %v1794
        %v1796 = vrot.slane %v1782, 4
        %v1797 = vsel %vm926, %v1791, %v1796
        %1798 = vrot.lane.b32.xlu0 %v1789, 110
        %v1799 = vpop.permute.xlu0 %1798
        %1800 = vrot.lane.b32.xlu0 %v1790, 110
        %v1801 = vpop.permute.xlu0 %1800
        %1802 = vrot.lane.b32.xlu0 %v1791, 110
        %v1803 = vpop.permute.xlu0 %1802
        %1804 = vrot.lane.b32.xlu0 %v1793, 110
        %v1805 = vpop.permute.xlu0 %1804
        %1806 = vrot.lane.b32.xlu0 %v1795, 110
        %v1807 = vpop.permute.xlu0 %1806
        %1808 = vrot.lane.b32.xlu0 %v1797, 110
        %v1809 = vpop.permute.xlu0 %1808
        %v1810 = vsel %vm864, %v1799, %v1801
        %v1811 = vsel %vm864, %v1801, %v1803
        %v1812 = vsel %vm864, %v1805, %v1807
        %v1813 = vsel %vm864, %v1807, %v1809
        %1820 = vst [vmem:[#allocation3 + $0xf0] sm:$0xf0] %v1810
        %1821 = vst [vmem:[#allocation3 + $0xf8] sm:$0xf0] %v1811
        %1822 = vst.msk [vmem:[#allocation3 + $0x100] sm:$0xf0] %vm872, %v1803
        %1823 = vst [vmem:[#allocation3 + $0x108] sm:$0xff] %v1812
        %1824 = vst [vmem:[#allocation3 + $0x110] sm:$0xff] %v1813
        %1825 = vst.msk [vmem:[#allocation3 + $0x118] sm:$0xff] %vm1271, %v1809
        %1826 = vst.msk [vmem:[#allocation3 + $0x100] sm:$0xf0] %vm874, 0.0
        %1827 = vst.msk [vmem:[#allocation3 + $0x118] sm:$0xff] %vm1273, 0.0
        %v1828 = vld [vmem:[#allocation2] sm:$0xff]
        %v1829 = vld [vmem:[#allocation2 + $0x8] sm:$0xff]
        %v1830 = vld [vmem:[#allocation2 + $0x10] sm:$0xff]
        %v1831 = vld [vmem:[#allocation2 + $0x18] sm:$0xf]
        %v1832 = vld [vmem:[#allocation2 + $0x20] sm:$0xf]
        %v1833 = vld [vmem:[#allocation2 + $0x28] sm:$0xf]
        %1840 = vrot.lane.b32.xlu0 %v1828, 109
        %v1841 = vpop.permute.xlu0 %1840
        %1842 = vrot.lane.b32.xlu0 %v1829, 109
        %v1843 = vpop.permute.xlu0 %1842
        %1844 = vrot.lane.b32.xlu0 %v1830, 109
        %v1845 = vpop.permute.xlu0 %1844
        %1846 = vrot.lane.b32.xlu0 %v1831, 109
        %v1847 = vpop.permute.xlu0 %1846
        %1848 = vrot.lane.b32.xlu0 %v1832, 109
        %v1849 = vpop.permute.xlu0 %1848
        %1850 = vrot.lane.b32.xlu0 %v1833, 109
        %v1851 = vpop.permute.xlu0 %1850
        %v1852 = vsel %vm888, %v1841, %v1843
        %v1853 = vsel %vm888, %v1843, %v1845
        %v1854 = vsel %vm888, %v1847, %v1849
        %v1855 = vsel %vm888, %v1849, %v1851
        %1862 = vst [vmem:[#allocation3 + $0x120] sm:$0xff] %v1852
        %1863 = vst [vmem:[#allocation3 + $0x128] sm:$0xff] %v1853
        %1864 = vst.msk [vmem:[#allocation3 + $0x130] sm:$0xff] %vm1294, %v1845
        %1865 = vst [vmem:[#allocation3 + $0x138] sm:$0xf] %v1854
        %1866 = vst [vmem:[#allocation3 + $0x140] sm:$0xf] %v1855
        %1867 = vst.msk [vmem:[#allocation3 + $0x148] sm:$0xf] %vm896, %v1851
        %1868 = vst.msk [vmem:[#allocation3 + $0x130] sm:$0xff] %vm1296, 0.0
        %1869 = vst.msk [vmem:[#allocation3 + $0x148] sm:$0xf] %vm898, 0.0
        %v1870 = vld [vmem:[%s8] sm:$0xf]
        %v1871 = vld [vmem:[#allocation3] sm:$0xff]
        %v1872 = vld [vmem:[#allocation3 + $0x8] sm:$0xff]
        %v1873 = vld [vmem:[#allocation3 + $0x10] sm:$0xff]
        %v1874 = vld [vmem:[#allocation3 + $0x18] sm:$0xff]
        %v1875 = vld [vmem:[#allocation3 + $0x20] sm:$0xff]
        %v1876 = vld [vmem:[#allocation3 + $0x28] sm:$0xff]
        %v1877 = vld [vmem:[#allocation3 + $0x30] sm:$0xff]
        %v1878 = vld [vmem:[#allocation3 + $0x38] sm:$0xff]
        %v1879 = vld [vmem:[#allocation3 + $0x40] sm:$0xff]
        %v1880 = vld [vmem:[#allocation3 + $0x48] sm:$0xff]
        %v1881 = vld [vmem:[#allocation3 + $0x50] sm:$0xff]
        %v1882 = vld [vmem:[#allocation3 + $0x58] sm:$0xff]
        %v1883 = vld [vmem:[#allocation3 + $0x60] sm:$0xff]
        %v1884 = vld [vmem:[#allocation3 + $0x68] sm:$0xff]
        %v1885 = vld [vmem:[#allocation3 + $0x70] sm:$0xff]
        %v1886 = vld [vmem:[#allocation3 + $0x78] sm:$0xff]
        %v1887 = vld [vmem:[#allocation3 + $0x80] sm:$0xff]
        %v1888 = vld [vmem:[#allocation3 + $0x88] sm:$0xff]
        %v1889 = vld [vmem:[#allocation3 + $0x90] sm:$0xff]
        %v1890 = vld [vmem:[#allocation3 + $0x98] sm:$0xff]
        %v1891 = vld [vmem:[#allocation3 + $0xa0] sm:$0xff]
        %v1892 = vld [vmem:[#allocation3 + $0xa8] sm:$0xff]
        %v1893 = vld [vmem:[#allocation3 + $0xb0] sm:$0xff]
        %v1894 = vld [vmem:[#allocation3 + $0xb8] sm:$0xff]
        %v1895 = vld [vmem:[#allocation3 + $0xc0] sm:$0xff]
        %v1896 = vld [vmem:[#allocation3 + $0xc8] sm:$0xff]
        %v1897 = vld [vmem:[#allocation3 + $0xd0] sm:$0xff]
        %v1898 = vld [vmem:[#allocation3 + $0xd8] sm:$0xff]
        %v1899 = vld [vmem:[#allocation3 + $0xe0] sm:$0xff]
        %v1900 = vld [vmem:[#allocation3 + $0xe8] sm:$0xff]
        %v1901 = vld [vmem:[#allocation3 + $0xf0] sm:$0xff]
        %v1902 = vld [vmem:[#allocation3 + $0xf8] sm:$0xff]
        %v1903 = vld [vmem:[#allocation3 + $0x100] sm:$0xff]
        %v1904 = vld [vmem:[#allocation3 + $0x108] sm:$0xff]
        %v1905 = vld [vmem:[#allocation3 + $0x110] sm:$0xff]
        %v1906 = vld [vmem:[#allocation3 + $0x118] sm:$0xff]
        %v1907 = vld [vmem:[#allocation3 + $0x120] sm:$0xff]
        %v1908 = vld [vmem:[#allocation3 + $0x128] sm:$0xff]
        %v1909 = vld [vmem:[#allocation3 + $0x130] sm:$0xff]
        %v1910 = vld [vmem:[#allocation3 + $0x138] sm:$0xf]
        %v1911 = vld [vmem:[#allocation3 + $0x140] sm:$0xf]
        %v1912 = vld [vmem:[#allocation3 + $0x148] sm:$0xf]
        %v1913 = vld [vmem:[%s9] sm:$0xf]
        %1915 = vset.pattern.permute.xlu0 0
        %1916 = vperm.xlu0 %1915, %v1913
        %v1917 = vpop.permute.xlu0 %1916
        %vm1919 = vcmask 883712
        %v1921 = vsel %vm1919, %v1870, 0
        %v1924 = vsel %vm926, %v1910, 0
        %v1927 = vsel %vm926, %v1911, 0
        %v1930 = vsel %vm926, %v1912, 0
        %1932 = vmatprep.subr.mxu0 %v1872
        %1933 = vmatpush1.msra.mxu0 %v1871
        %1934 = vmatprep.subr.mxu0 %v1875
        %1935 = vmatpush1.msra.mxu0 %v1874
        %1936 = vmatprep.subr.mxu0 %v1878
        %1937 = vmatpush1.msra.mxu0 %v1877
        %1938 = vmatprep.subr.mxu0 %v1881
        %1939 = vmatpush1.msra.mxu0 %v1880
        %1940 = vmatprep.subr.mxu0 %v1884
        %1941 = vmatpush1.msra.mxu0 %v1883
        %1942 = vmatprep.subr.mxu0 %v1887
        %1943 = vmatpush1.msra.mxu0 %v1886
        %1944 = vmatprep.subr.mxu0 %v1890
        %1945 = vmatpush1.msra.mxu0 %v1889
        %1946 = vmatprep.subr.mxu0 %v1893
        %1947 = vmatpush1.msra.mxu0 %v1892
        %1948 = vmatprep.subr.mxu0 %v1896
        %1949 = vmatpush1.msra.mxu0 %v1895
        %1950 = vmatprep.subr.mxu0 %v1899
        %1951 = vmatpush1.msra.mxu0 %v1898
        %1952 = vmatprep.subr.mxu0 %v1902
        %1953 = vmatpush1.msra.mxu0 %v1901
        %1954 = vmatprep.subr.mxu0 %v1905
        %1955 = vmatpush1.msra.mxu0 %v1904
        %1956 = vmatprep.subr.mxu0 %v1908
        %1957 = vmatpush1.msra.mxu0 %v1907
        %1958 = vmatprep.subr.mxu0 %v1927
        %1959 = vmatpush1.msra.mxu0 %v1924
        %1960 = vmatprep.subr.mxu0 0.0
        %1961 = vmatpush1.msra.mxu0 0.0
        %1962 = vmatprep.subr.mxu0 0.0
        %1963 = vmatpush1.msra.mxu0 0.0
        %1964 = vmatprep.subr.mxu0 0.0
        %1965 = vmatpush1.msra.mxu0 0.0
        %1966 = vmatprep.subr.mxu0 0.0
        %1967 = vmatpush1.msra.mxu0 0.0
        %1968 = vmatprep.subr.mxu0 0.0
        %1969 = vmatpush1.msra.mxu0 0.0
        %1970 = vmatprep.subr.mxu0 0.0
        %1971 = vmatpush1.msra.mxu0 0.0
        %1972 = vmatprep.subr.mxu0 0.0
        %1973 = vmatpush1.msra.mxu0 0.0
        %1974 = vmatprep.subr.mxu0 0.0
        %1975 = vmatpush1.msra.mxu0 0.0
        %1976 = vmatprep.subr.mxu0 0.0
        %1977 = vmatpush1.msra.mxu0 0.0
        %1978 = vmatprep.subr.mxu0 0.0
        %1979 = vmatpush1.msra.mxu0 0.0
        %1980 = vmatprep.subr.mxu0 0.0
        %1981 = vmatpush1.msra.mxu0 0.0
        %1982 = vmatprep.subr.mxu0 0.0
        %1983 = vmatpush1.msra.mxu0 0.0
        %1984 = vmatprep.subr.mxu0 0.0
        %1985 = vmatpush1.msra.mxu0 0.0
        %1986 = vmatprep.subr.mxu0 0.0
        %1987 = vmatpush1.msra.mxu0 0.0
        %1988 = vmatprep.subr.mxu0 0.0
        %1989 = vmatpush1.msra.mxu0 0.0
        %1990 = vmatprep.subr.mxu0 0.0
        %1991 = vmatpush1.msra.mxu0 0.0
        %1992 = vmatprep.subr.mxu0 0.0
        %1993 = vmatpush1.msra.mxu0 0.0
        %1994 = vmatprep.subr.mxu0 0.0
        %1995 = vmatpush1.msra.mxu0 0.0
        %1996 = vmatprep.mubr.f32.mxu0 0.0
        %1997 = vmatmul.mubr.f32.gmra.mrb[0].mxu0 %v1921
        %v1998 = vpop.f32.mrb[0].mxu0
        %v1999 = vadd.f32 %v1917, %v1998
        %v2000 = vpop.f32.mrb[0].mxu0
        %v2001 = vadd.f32 %v1917, %v2000
        %2002 = vdwg.mxu0
        %2003 = vmatprep.subr.mxu0 0.0
        %2004 = vmatpush1.msra.mxu0 %v1873
        %2005 = vmatprep.subr.mxu0 0.0
        %2006 = vmatpush1.msra.mxu0 %v1876
        %2007 = vmatprep.subr.mxu0 0.0
        %2008 = vmatpush1.msra.mxu0 %v1879
        %2009 = vmatprep.subr.mxu0 0.0
        %2010 = vmatpush1.msra.mxu0 %v1882
        %2011 = vmatprep.subr.mxu0 0.0
        %2012 = vmatpush1.msra.mxu0 %v1885
        %2013 = vmatprep.subr.mxu0 0.0
        %2014 = vmatpush1.msra.mxu0 %v1888
        %2015 = vmatprep.subr.mxu0 0.0
        %2016 = vmatpush1.msra.mxu0 %v1891
        %2017 = vmatprep.subr.mxu0 0.0
        %2018 = vmatpush1.msra.mxu0 %v1894
        %2019 = vmatprep.subr.mxu0 0.0
        %2020 = vmatpush1.msra.mxu0 %v1897
        %2021 = vmatprep.subr.mxu0 0.0
        %2022 = vmatpush1.msra.mxu0 %v1900
        %2023 = vmatprep.subr.mxu0 0.0
        %2024 = vmatpush1.msra.mxu0 %v1903
        %2025 = vmatprep.subr.mxu0 0.0
        %2026 = vmatpush1.msra.mxu0 %v1906
        %2027 = vmatprep.subr.mxu0 0.0
        %2028 = vmatpush1.msra.mxu0 %v1909
        %2029 = vmatprep.subr.mxu0 0.0
        %2030 = vmatpush1.msra.mxu0 %v1930
        %2031 = vmatprep.subr.mxu0 0.0
        %2032 = vmatpush1.msra.mxu0 0.0
        %2033 = vmatprep.subr.mxu0 0.0
        %2034 = vmatpush1.msra.mxu0 0.0
        %2035 = vmatprep.subr.mxu0 0.0
        %2036 = vmatpush1.msra.mxu0 0.0
        %2037 = vmatprep.subr.mxu0 0.0
        %2038 = vmatpush1.msra.mxu0 0.0
        %2039 = vmatprep.subr.mxu0 0.0
        %2040 = vmatpush1.msra.mxu0 0.0
        %2041 = vmatprep.subr.mxu0 0.0
        %2042 = vmatpush1.msra.mxu0 0.0
        %2043 = vmatprep.subr.mxu0 0.0
        %2044 = vmatpush1.msra.mxu0 0.0
        %2045 = vmatprep.subr.mxu0 0.0
        %2046 = vmatpush1.msra.mxu0 0.0
        %2047 = vmatprep.subr.mxu0 0.0
        %2048 = vmatpush1.msra.mxu0 0.0
        %2049 = vmatprep.subr.mxu0 0.0
        %2050 = vmatpush1.msra.mxu0 0.0
        %2051 = vmatprep.subr.mxu0 0.0
        %2052 = vmatpush1.msra.mxu0 0.0
        %2053 = vmatprep.subr.mxu0 0.0
        %2054 = vmatpush1.msra.mxu0 0.0
        %2055 = vmatprep.subr.mxu0 0.0
        %2056 = vmatpush1.msra.mxu0 0.0
        %2057 = vmatprep.subr.mxu0 0.0
        %2058 = vmatpush1.msra.mxu0 0.0
        %2059 = vmatprep.subr.mxu0 0.0
        %2060 = vmatpush1.msra.mxu0 0.0
        %2061 = vmatprep.subr.mxu0 0.0
        %2062 = vmatpush1.msra.mxu0 0.0
        %2063 = vmatprep.subr.mxu0 0.0
        %2064 = vmatpush1.msra.mxu0 0.0
        %2065 = vmatprep.subr.mxu0 0.0
        %2066 = vmatpush1.msra.mxu0 0.0
        %2067 = vmatprep.mubr.f32.mxu0 0.0
        %2068 = vmatmul.mubr.f32.gmra.mrb[0].mxu0 %v1921
        %v2069 = vpop.f32.mrb[0].mxu0
        %v2070 = vadd.f32 %v1917, %v2069
        %v2071 = vpop.f32.mrb[0].mxu0
        %2072 = vdwg.mxu0
        %v2073 = vmax.f32 %v1999, 0.0
        %v2074 = vmax.f32 %v2001, 0.0
        %v2075 = vmax.f32 %v2070, 0.0
        %v2076 = vmul.f32 %v2073, %v1084
        %v2077 = vmul.f32 %v2074, %v1088
        %v2078 = vmul.f32 %v2075, %v1092
        %v2082 = vrot.slane %v2076, 4
        %v2083 = vrot.slane %v2077, 4
        %v2084 = vrot.slane %v2078, 4
        %2088 = vst [vmem:[#allocation2 + $0x18] sm:$0xf0] %v2082
        %2089 = vst [vmem:[#allocation2 + $0x20] sm:$0xf0] %v2083
        %2090 = vst.msk [vmem:[#allocation2 + $0x28] sm:$0xf0] %vm737, %v2084
        %v2091 = vld [vmem:[#allocation2] sm:$0xff]
        %v2092 = vld [vmem:[#allocation2 + $0x8] sm:$0xff]
        %v2093 = vld [vmem:[#allocation2 + $0x10] sm:$0xff]
        %v2094 = vld [vmem:[#allocation2 + $0x18] sm:$0xff]
        %v2095 = vld [vmem:[#allocation2 + $0x20] sm:$0xff]
        %v2096 = vld [vmem:[#allocation2 + $0x28] sm:$0xff]
        %2103 = vrot.lane.b32.xlu0 %v2091, 19
        %v2104 = vpop.permute.xlu0 %2103
        %2105 = vrot.lane.b32.xlu0 %v2092, 19
        %v2106 = vpop.permute.xlu0 %2105
        %2107 = vrot.lane.b32.xlu0 %v2093, 19
        %v2108 = vpop.permute.xlu0 %2107
        %2109 = vrot.lane.b32.xlu0 %v2094, 19
        %v2110 = vpop.permute.xlu0 %2109
        %2111 = vrot.lane.b32.xlu0 %v2095, 19
        %v2112 = vpop.permute.xlu0 %2111
        %2113 = vrot.lane.b32.xlu0 %v2096, 19
        %v2114 = vpop.permute.xlu0 %2113
        %v2115 = vsel %vm701, %v2104, %v2106
        %v2116 = vsel %vm701, %v2106, %v2108
        %v2117 = vsel %vm701, %v2110, %v2112
        %v2118 = vsel %vm701, %v2112, %v2114
        %2125 = vst.msk [vmem:[#allocation3] sm:$0xff] %vm1128, %v2104
        %2126 = vst [vmem:[#allocation3 + $0x8] sm:$0xff] %v2115
        %2127 = vst.msk [vmem:[#allocation3 + $0x10] sm:$0xff] %vm1131, %v2116
        %2128 = vst.msk [vmem:[#allocation3 + $0x18] sm:$0xff] %vm1128, %v2110
        %2129 = vst [vmem:[#allocation3 + $0x20] sm:$0xff] %v2117
        %2130 = vst.msk [vmem:[#allocation3 + $0x28] sm:$0xff] %vm1131, %v2118
        %2131 = vst.msk [vmem:[#allocation3] sm:$0xff] %vm701, 0.0
        %2132 = vst.msk [vmem:[#allocation3 + $0x18] sm:$0xff] %vm701, 0.0
        %v2133 = vld [vmem:[#allocation2] sm:$0xff]
        %v2134 = vld [vmem:[#allocation2 + $0x8] sm:$0xff]
        %v2135 = vld [vmem:[#allocation2 + $0x10] sm:$0xff]
        %v2136 = vld [vmem:[#allocation2 + $0x18] sm:$0xff]
        %v2137 = vld [vmem:[#allocation2 + $0x20] sm:$0xff]
        %v2138 = vld [vmem:[#allocation2 + $0x28] sm:$0xff]
        %2145 = vrot.lane.b32.xlu0 %v2133, 18
        %v2146 = vpop.permute.xlu0 %2145
        %2147 = vrot.lane.b32.xlu0 %v2134, 18
        %v2148 = vpop.permute.xlu0 %2147
        %2149 = vrot.lane.b32.xlu0 %v2135, 18
        %v2150 = vpop.permute.xlu0 %2149
        %2151 = vrot.lane.b32.xlu0 %v2136, 18
        %v2152 = vpop.permute.xlu0 %2151
        %2153 = vrot.lane.b32.xlu0 %v2137, 18
        %v2154 = vpop.permute.xlu0 %2153
        %2155 = vrot.lane.b32.xlu0 %v2138, 18
        %v2156 = vpop.permute.xlu0 %2155
        %v2157 = vsel %vm728, %v2146, %v2148
        %v2158 = vsel %vm728, %v2148, %v2150
        %v2159 = vsel %vm728, %v2152, %v2154
        %v2160 = vsel %vm728, %v2154, %v2156
        %2167 = vst.msk [vmem:[#allocation3 + $0x30] sm:$0xff] %vm1151, %v2146
        %2168 = vst [vmem:[#allocation3 + $0x38] sm:$0xff] %v2157
        %2169 = vst.msk [vmem:[#allocation3 + $0x40] sm:$0xff] %vm1131, %v2158
        %2170 = vst.msk [vmem:[#allocation3 + $0x48] sm:$0xff] %vm1151, %v2152
        %2171 = vst [vmem:[#allocation3 + $0x50] sm:$0xff] %v2159
        %2172 = vst.msk [vmem:[#allocation3 + $0x58] sm:$0xff] %vm1131, %v2160
        %2173 = vst.msk [vmem:[#allocation3 + $0x30] sm:$0xff] %vm728, 0.0
        %2174 = vst.msk [vmem:[#allocation3 + $0x48] sm:$0xff] %vm728, 0.0
        %v2175 = vld [vmem:[#allocation2] sm:$0xff]
        %v2176 = vld [vmem:[#allocation2 + $0x8] sm:$0xff]
        %v2177 = vld [vmem:[#allocation2 + $0x10] sm:$0xff]
        %v2178 = vld [vmem:[#allocation2 + $0x18] sm:$0xff]
        %v2179 = vld [vmem:[#allocation2 + $0x20] sm:$0xff]
        %v2180 = vld [vmem:[#allocation2 + $0x28] sm:$0xff]
        %2187 = vrot.lane.b32.xlu0 %v2175, 17
        %v2188 = vpop.permute.xlu0 %2187
        %2189 = vrot.lane.b32.xlu0 %v2176, 17
        %v2190 = vpop.permute.xlu0 %2189
        %2191 = vrot.lane.b32.xlu0 %v2177, 17
        %v2192 = vpop.permute.xlu0 %2191
        %2193 = vrot.lane.b32.xlu0 %v2178, 17
        %v2194 = vpop.permute.xlu0 %2193
        %2195 = vrot.lane.b32.xlu0 %v2179, 17
        %v2196 = vpop.permute.xlu0 %2195
        %2197 = vrot.lane.b32.xlu0 %v2180, 17
        %v2198 = vpop.permute.xlu0 %2197
        %v2199 = vsel %vm753, %v2188, %v2190
        %v2200 = vsel %vm753, %v2190, %v2192
        %v2201 = vsel %vm753, %v2194, %v2196
        %v2202 = vsel %vm753, %v2196, %v2198
        %2209 = vst.msk [vmem:[#allocation3 + $0x60] sm:$0xff] %vm1173, %v2188
        %2210 = vst [vmem:[#allocation3 + $0x68] sm:$0xff] %v2199
        %2211 = vst.msk [vmem:[#allocation3 + $0x70] sm:$0xff] %vm1131, %v2200
        %2212 = vst.msk [vmem:[#allocation3 + $0x78] sm:$0xff] %vm1173, %v2194
        %2213 = vst [vmem:[#allocation3 + $0x80] sm:$0xff] %v2201
        %2214 = vst.msk [vmem:[#allocation3 + $0x88] sm:$0xff] %vm1131, %v2202
        %2215 = vst.msk [vmem:[#allocation3 + $0x60] sm:$0xff] %vm753, 0.0
        %2216 = vst.msk [vmem:[#allocation3 + $0x78] sm:$0xff] %vm753, 0.0
        %v2217 = vld [vmem:[#allocation2] sm:$0xff]
        %v2218 = vld [vmem:[#allocation2 + $0x8] sm:$0xff]
        %v2219 = vld [vmem:[#allocation2 + $0x10] sm:$0xff]
        %v2220 = vld [vmem:[#allocation2 + $0x18] sm:$0xff]
        %v2221 = vld [vmem:[#allocation2 + $0x20] sm:$0xff]
        %v2222 = vld [vmem:[#allocation2 + $0x28] sm:$0xff]
        %2229 = vrot.lane.b32.xlu0 %v2217, 1
        %v2230 = vpop.permute.xlu0 %2229
        %2231 = vrot.lane.b32.xlu0 %v2218, 1
        %v2232 = vpop.permute.xlu0 %2231
        %2233 = vrot.lane.b32.xlu0 %v2219, 1
        %v2234 = vpop.permute.xlu0 %2233
        %2235 = vrot.lane.b32.xlu0 %v2220, 1
        %v2236 = vpop.permute.xlu0 %2235
        %2237 = vrot.lane.b32.xlu0 %v2221, 1
        %v2238 = vpop.permute.xlu0 %2237
        %2239 = vrot.lane.b32.xlu0 %v2222, 1
        %v2240 = vpop.permute.xlu0 %2239
        %v2241 = vsel %vm780, %v2230, %v2232
        %v2242 = vsel %vm780, %v2232, %v2234
        %v2243 = vsel %vm780, %v2236, %v2238
        %v2244 = vsel %vm780, %v2238, %v2240
        %2251 = vst.msk [vmem:[#allocation3 + $0x90] sm:$0xff] %vm1195, %v2230
        %2252 = vst [vmem:[#allocation3 + $0x98] sm:$0xff] %v2241
        %2253 = vst.msk [vmem:[#allocation3 + $0xa0] sm:$0xff] %vm1131, %v2242
        %2254 = vst.msk [vmem:[#allocation3 + $0xa8] sm:$0xff] %vm1195, %v2236
        %2255 = vst [vmem:[#allocation3 + $0xb0] sm:$0xff] %v2243
        %2256 = vst.msk [vmem:[#allocation3 + $0xb8] sm:$0xff] %vm1131, %v2244
        %2257 = vst.msk [vmem:[#allocation3 + $0x90] sm:$0xff] %vm780, 0.0
        %2258 = vst.msk [vmem:[#allocation3 + $0xa8] sm:$0xff] %vm780, 0.0
        %v2259 = vld [vmem:[#allocation2] sm:$0xff]
        %v2260 = vld [vmem:[#allocation2 + $0x8] sm:$0xff]
        %v2261 = vld [vmem:[#allocation2 + $0x10] sm:$0xff]
        %v2262 = vld [vmem:[#allocation2 + $0x18] sm:$0xff]
        %v2263 = vld [vmem:[#allocation2 + $0x20] sm:$0xff]
        %v2264 = vld [vmem:[#allocation2 + $0x28] sm:$0xff]
        %2265 = vst [vmem:[#allocation3 + $0xc0] sm:$0xff] %v2259
        %2266 = vst [vmem:[#allocation3 + $0xc8] sm:$0xff] %v2260
        %2267 = vst.msk [vmem:[#allocation3 + $0xd0] sm:$0xff] %vm1131, %v2261
        %2268 = vst [vmem:[#allocation3 + $0xd8] sm:$0xff] %v2262
        %2269 = vst [vmem:[#allocation3 + $0xe0] sm:$0xff] %v2263
        %2270 = vst.msk [vmem:[#allocation3 + $0xe8] sm:$0xff] %vm1131, %v2264
        %v2271 = vld [vmem:[#allocation2] sm:$0xff]
        %v2272 = vld [vmem:[#allocation2 + $0x8] sm:$0xff]
        %v2273 = vld [vmem:[#allocation2 + $0x10] sm:$0xff]
        %v2274 = vld [vmem:[#allocation2 + $0x18] sm:$0xff]
        %v2275 = vld [vmem:[#allocation2 + $0x20] sm:$0xff]
        %v2276 = vld [vmem:[#allocation2 + $0x28] sm:$0xff]
        %2283 = vrot.lane.b32.xlu0 %v2271, 127
        %v2284 = vpop.permute.xlu0 %2283
        %2285 = vrot.lane.b32.xlu0 %v2272, 127
        %v2286 = vpop.permute.xlu0 %2285
        %2287 = vrot.lane.b32.xlu0 %v2273, 127
        %v2288 = vpop.permute.xlu0 %2287
        %2289 = vrot.lane.b32.xlu0 %v2274, 127
        %v2290 = vpop.permute.xlu0 %2289
        %2291 = vrot.lane.b32.xlu0 %v2275, 127
        %v2292 = vpop.permute.xlu0 %2291
        %2293 = vrot.lane.b32.xlu0 %v2276, 127
        %v2294 = vpop.permute.xlu0 %2293
        %v2295 = vsel %vm813, %v2284, %v2286
        %v2296 = vsel %vm813, %v2286, %v2288
        %v2297 = vsel %vm813, %v2290, %v2292
        %v2298 = vsel %vm813, %v2292, %v2294
        %2305 = vst [vmem:[#allocation3 + $0xf0] sm:$0xff] %v2295
        %2306 = vst [vmem:[#allocation3 + $0xf8] sm:$0xff] %v2296
        %2307 = vst.msk [vmem:[#allocation3 + $0x100] sm:$0xff] %vm1225, %v2288
        %2308 = vst [vmem:[#allocation3 + $0x108] sm:$0xff] %v2297
        %2309 = vst [vmem:[#allocation3 + $0x110] sm:$0xff] %v2298
        %2310 = vst.msk [vmem:[#allocation3 + $0x118] sm:$0xff] %vm1225, %v2294
        %2311 = vst.msk [vmem:[#allocation3 + $0x100] sm:$0xff] %vm1227, 0.0
        %2312 = vst.msk [vmem:[#allocation3 + $0x118] sm:$0xff] %vm1227, 0.0
        %v2313 = vld [vmem:[#allocation2] sm:$0xff]
        %v2314 = vld [vmem:[#allocation2 + $0x8] sm:$0xff]
        %v2315 = vld [vmem:[#allocation2 + $0x10] sm:$0xff]
        %v2316 = vld [vmem:[#allocation2 + $0x18] sm:$0xff]
        %v2317 = vld [vmem:[#allocation2 + $0x20] sm:$0xff]
        %v2318 = vld [vmem:[#allocation2 + $0x28] sm:$0xff]
        %2325 = vrot.lane.b32.xlu0 %v2313, 111
        %v2326 = vpop.permute.xlu0 %2325
        %2327 = vrot.lane.b32.xlu0 %v2314, 111
        %v2328 = vpop.permute.xlu0 %2327
        %2329 = vrot.lane.b32.xlu0 %v2315, 111
        %v2330 = vpop.permute.xlu0 %2329
        %2331 = vrot.lane.b32.xlu0 %v2316, 111
        %v2332 = vpop.permute.xlu0 %2331
        %2333 = vrot.lane.b32.xlu0 %v2317, 111
        %v2334 = vpop.permute.xlu0 %2333
        %2335 = vrot.lane.b32.xlu0 %v2318, 111
        %v2336 = vpop.permute.xlu0 %2335
        %v2337 = vsel %vm837, %v2326, %v2328
        %v2338 = vsel %vm837, %v2328, %v2330
        %v2339 = vsel %vm837, %v2332, %v2334
        %v2340 = vsel %vm837, %v2334, %v2336
        %2347 = vst [vmem:[#allocation3 + $0x120] sm:$0xff] %v2337
        %2348 = vst [vmem:[#allocation3 + $0x128] sm:$0xff] %v2338
        %2349 = vst.msk [vmem:[#allocation3 + $0x130] sm:$0xff] %vm1248, %v2330
        %2350 = vst [vmem:[#allocation3 + $0x138] sm:$0xff] %v2339
        %2351 = vst [vmem:[#allocation3 + $0x140] sm:$0xff] %v2340
        %2352 = vst.msk [vmem:[#allocation3 + $0x148] sm:$0xff] %vm1248, %v2336
        %2353 = vst.msk [vmem:[#allocation3 + $0x130] sm:$0xff] %vm1250, 0.0
        %2354 = vst.msk [vmem:[#allocation3 + $0x148] sm:$0xff] %vm1250, 0.0
        %v2355 = vld [vmem:[#allocation2] sm:$0xff]
        %v2356 = vld [vmem:[#allocation2 + $0x8] sm:$0xff]
        %v2357 = vld [vmem:[#allocation2 + $0x10] sm:$0xff]
        %v2358 = vld [vmem:[#allocation2 + $0x18] sm:$0xff]
        %v2359 = vld [vmem:[#allocation2 + $0x20] sm:$0xff]
        %v2360 = vld [vmem:[#allocation2 + $0x28] sm:$0xff]
        %2367 = vrot.lane.b32.xlu0 %v2355, 110
        %v2368 = vpop.permute.xlu0 %2367
        %2369 = vrot.lane.b32.xlu0 %v2356, 110
        %v2370 = vpop.permute.xlu0 %2369
        %2371 = vrot.lane.b32.xlu0 %v2357, 110
        %v2372 = vpop.permute.xlu0 %2371
        %2373 = vrot.lane.b32.xlu0 %v2358, 110
        %v2374 = vpop.permute.xlu0 %2373
        %2375 = vrot.lane.b32.xlu0 %v2359, 110
        %v2376 = vpop.permute.xlu0 %2375
        %2377 = vrot.lane.b32.xlu0 %v2360, 110
        %v2378 = vpop.permute.xlu0 %2377
        %v2379 = vsel %vm864, %v2368, %v2370
        %v2380 = vsel %vm864, %v2370, %v2372
        %v2381 = vsel %vm864, %v2374, %v2376
        %v2382 = vsel %vm864, %v2376, %v2378
        %2389 = vst [vmem:[#allocation3 + $0x150] sm:$0xff] %v2379
        %2390 = vst [vmem:[#allocation3 + $0x158] sm:$0xff] %v2380
        %2391 = vst.msk [vmem:[#allocation3 + $0x160] sm:$0xff] %vm1271, %v2372
        %2392 = vst [vmem:[#allocation3 + $0x168] sm:$0xff] %v2381
        %2393 = vst [vmem:[#allocation3 + $0x170] sm:$0xff] %v2382
        %2394 = vst.msk [vmem:[#allocation3 + $0x178] sm:$0xff] %vm1271, %v2378
        %2395 = vst.msk [vmem:[#allocation3 + $0x160] sm:$0xff] %vm1273, 0.0
        %2396 = vst.msk [vmem:[#allocation3 + $0x178] sm:$0xff] %vm1273, 0.0
        %v2397 = vld [vmem:[#allocation2] sm:$0xff]
        %v2398 = vld [vmem:[#allocation2 + $0x8] sm:$0xff]
        %v2399 = vld [vmem:[#allocation2 + $0x10] sm:$0xff]
        %v2400 = vld [vmem:[#allocation2 + $0x18] sm:$0xff]
        %v2401 = vld [vmem:[#allocation2 + $0x20] sm:$0xff]
        %v2402 = vld [vmem:[#allocation2 + $0x28] sm:$0xff]
        %2409 = vrot.lane.b32.xlu0 %v2397, 109
        %v2410 = vpop.permute.xlu0 %2409
        %2411 = vrot.lane.b32.xlu0 %v2398, 109
        %v2412 = vpop.permute.xlu0 %2411
        %2413 = vrot.lane.b32.xlu0 %v2399, 109
        %v2414 = vpop.permute.xlu0 %2413
        %2415 = vrot.lane.b32.xlu0 %v2400, 109
        %v2416 = vpop.permute.xlu0 %2415
        %2417 = vrot.lane.b32.xlu0 %v2401, 109
        %v2418 = vpop.permute.xlu0 %2417
        %2419 = vrot.lane.b32.xlu0 %v2402, 109
        %v2420 = vpop.permute.xlu0 %2419
        %v2421 = vsel %vm888, %v2410, %v2412
        %v2422 = vsel %vm888, %v2412, %v2414
        %v2423 = vsel %vm888, %v2416, %v2418
        %v2424 = vsel %vm888, %v2418, %v2420
        %2431 = vst [vmem:[#allocation3 + $0x180] sm:$0xff] %v2421
        %2432 = vst [vmem:[#allocation3 + $0x188] sm:$0xff] %v2422
        %2433 = vst.msk [vmem:[#allocation3 + $0x190] sm:$0xff] %vm1294, %v2414
        %2434 = vst [vmem:[#allocation3 + $0x198] sm:$0xff] %v2423
        %2435 = vst [vmem:[#allocation3 + $0x1a0] sm:$0xff] %v2424
        %2436 = vst.msk [vmem:[#allocation3 + $0x1a8] sm:$0xff] %vm1294, %v2420
        %2437 = vst.msk [vmem:[#allocation3 + $0x190] sm:$0xff] %vm1296, 0.0
        %2438 = vst.msk [vmem:[#allocation3 + $0x1a8] sm:$0xff] %vm1296, 0.0
        %v2439 = vld [vmem:[%s10] sm:$0xff]
        %v2440 = vld [vmem:[#allocation3] sm:$0xff]
        %v2441 = vld [vmem:[#allocation3 + $0x8] sm:$0xff]
        %v2442 = vld [vmem:[#allocation3 + $0x10] sm:$0xff]
        %v2443 = vld [vmem:[#allocation3 + $0x18] sm:$0xff]
        %v2444 = vld [vmem:[#allocation3 + $0x20] sm:$0xff]
        %v2445 = vld [vmem:[#allocation3 + $0x28] sm:$0xff]
        %v2446 = vld [vmem:[#allocation3 + $0x30] sm:$0xff]
        %v2447 = vld [vmem:[#allocation3 + $0x38] sm:$0xff]
        %v2448 = vld [vmem:[#allocation3 + $0x40] sm:$0xff]
        %v2449 = vld [vmem:[#allocation3 + $0x48] sm:$0xff]
        %v2450 = vld [vmem:[#allocation3 + $0x50] sm:$0xff]
        %v2451 = vld [vmem:[#allocation3 + $0x58] sm:$0xff]
        %v2452 = vld [vmem:[#allocation3 + $0x60] sm:$0xff]
        %v2453 = vld [vmem:[#allocation3 + $0x68] sm:$0xff]
        %v2454 = vld [vmem:[#allocation3 + $0x70] sm:$0xff]
        %v2455 = vld [vmem:[#allocation3 + $0x78] sm:$0xff]
        %v2456 = vld [vmem:[#allocation3 + $0x80] sm:$0xff]
        %v2457 = vld [vmem:[#allocation3 + $0x88] sm:$0xff]
        %v2458 = vld [vmem:[#allocation3 + $0x90] sm:$0xff]
        %v2459 = vld [vmem:[#allocation3 + $0x98] sm:$0xff]
        %v2460 = vld [vmem:[#allocation3 + $0xa0] sm:$0xff]
        %v2461 = vld [vmem:[#allocation3 + $0xa8] sm:$0xff]
        %v2462 = vld [vmem:[#allocation3 + $0xb0] sm:$0xff]
        %v2463 = vld [vmem:[#allocation3 + $0xb8] sm:$0xff]
        %v2464 = vld [vmem:[#allocation3 + $0xc0] sm:$0xff]
        %v2465 = vld [vmem:[#allocation3 + $0xc8] sm:$0xff]
        %v2466 = vld [vmem:[#allocation3 + $0xd0] sm:$0xff]
        %v2467 = vld [vmem:[#allocation3 + $0xd8] sm:$0xff]
        %v2468 = vld [vmem:[#allocation3 + $0xe0] sm:$0xff]
        %v2469 = vld [vmem:[#allocation3 + $0xe8] sm:$0xff]
        %v2470 = vld [vmem:[#allocation3 + $0xf0] sm:$0xff]
        %v2471 = vld [vmem:[#allocation3 + $0xf8] sm:$0xff]
        %v2472 = vld [vmem:[#allocation3 + $0x100] sm:$0xff]
        %v2473 = vld [vmem:[#allocation3 + $0x108] sm:$0xff]
        %v2474 = vld [vmem:[#allocation3 + $0x110] sm:$0xff]
        %v2475 = vld [vmem:[#allocation3 + $0x118] sm:$0xff]
        %v2476 = vld [vmem:[#allocation3 + $0x120] sm:$0xff]
        %v2477 = vld [vmem:[#allocation3 + $0x128] sm:$0xff]
        %v2478 = vld [vmem:[#allocation3 + $0x130] sm:$0xff]
        %v2479 = vld [vmem:[#allocation3 + $0x138] sm:$0xff]
        %v2480 = vld [vmem:[#allocation3 + $0x140] sm:$0xff]
        %v2481 = vld [vmem:[#allocation3 + $0x148] sm:$0xff]
        %v2482 = vld [vmem:[#allocation3 + $0x150] sm:$0xff]
        %v2483 = vld [vmem:[#allocation3 + $0x158] sm:$0xff]
        %v2484 = vld [vmem:[#allocation3 + $0x160] sm:$0xff]
        %v2485 = vld [vmem:[#allocation3 + $0x168] sm:$0xff]
        %v2486 = vld [vmem:[#allocation3 + $0x170] sm:$0xff]
        %v2487 = vld [vmem:[#allocation3 + $0x178] sm:$0xff]
        %v2488 = vld [vmem:[#allocation3 + $0x180] sm:$0xff]
        %v2489 = vld [vmem:[#allocation3 + $0x188] sm:$0xff]
        %v2490 = vld [vmem:[#allocation3 + $0x190] sm:$0xff]
        %v2491 = vld [vmem:[#allocation3 + $0x198] sm:$0xff]
        %v2492 = vld [vmem:[#allocation3 + $0x1a0] sm:$0xff]
        %v2493 = vld [vmem:[#allocation3 + $0x1a8] sm:$0xff]
        %v2494 = vld [vmem:[%s11] sm:$0xf]
        %2496 = vset.pattern.permute.xlu0 0
        %2497 = vperm.xlu0 %2496, %v2494
        %v2498 = vpop.permute.xlu0 %2497
        %v2501 = vcombine.high %v2439, %v2439
        %vm2502 = vcmask 130048
        %v2503 = vsel %vm2502, %v2501, 0
        %2505 = vmatprep.subr.mxu0 %v2441
        %2506 = vmatpush1.msra.mxu0 %v2440
        %2507 = vmatprep.subr.mxu0 %v2444
        %2508 = vmatpush1.msra.mxu0 %v2443
        %2509 = vmatprep.subr.mxu0 %v2447
        %2510 = vmatpush1.msra.mxu0 %v2446
        %2511 = vmatprep.subr.mxu0 %v2450
        %2512 = vmatpush1.msra.mxu0 %v2449
        %2513 = vmatprep.subr.mxu0 %v2453
        %2514 = vmatpush1.msra.mxu0 %v2452
        %2515 = vmatprep.subr.mxu0 %v2456
        %2516 = vmatpush1.msra.mxu0 %v2455
        %2517 = vmatprep.subr.mxu0 %v2459
        %2518 = vmatpush1.msra.mxu0 %v2458
        %2519 = vmatprep.subr.mxu0 %v2462
        %2520 = vmatpush1.msra.mxu0 %v2461
        %2521 = vmatprep.subr.mxu0 %v2465
        %2522 = vmatpush1.msra.mxu0 %v2464
        %2523 = vmatprep.subr.mxu0 %v2468
        %2524 = vmatpush1.msra.mxu0 %v2467
        %2525 = vmatprep.subr.mxu0 %v2471
        %2526 = vmatpush1.msra.mxu0 %v2470
        %2527 = vmatprep.subr.mxu0 %v2474
        %2528 = vmatpush1.msra.mxu0 %v2473
        %2529 = vmatprep.subr.mxu0 %v2477
        %2530 = vmatpush1.msra.mxu0 %v2476
        %2531 = vmatprep.subr.mxu0 %v2480
        %2532 = vmatpush1.msra.mxu0 %v2479
        %2533 = vmatprep.subr.mxu0 %v2483
        %2534 = vmatpush1.msra.mxu0 %v2482
        %2535 = vmatprep.subr.mxu0 %v2486
        %2536 = vmatpush1.msra.mxu0 %v2485
        %2537 = vmatprep.subr.mxu0 %v2489
        %2538 = vmatpush1.msra.mxu0 %v2488
        %2539 = vmatprep.subr.mxu0 %v2492
        %2540 = vmatpush1.msra.mxu0 %v2491
        %2541 = vmatprep.subr.mxu0 0.0
        %2542 = vmatpush1.msra.mxu0 0.0
        %2543 = vmatprep.subr.mxu0 0.0
        %2544 = vmatpush1.msra.mxu0 0.0
        %2545 = vmatprep.subr.mxu0 0.0
        %2546 = vmatpush1.msra.mxu0 0.0
        %2547 = vmatprep.subr.mxu0 0.0
        %2548 = vmatpush1.msra.mxu0 0.0
        %2549 = vmatprep.subr.mxu0 0.0
        %2550 = vmatpush1.msra.mxu0 0.0
        %2551 = vmatprep.subr.mxu0 0.0
        %2552 = vmatpush1.msra.mxu0 0.0
        %2553 = vmatprep.subr.mxu0 0.0
        %2554 = vmatpush1.msra.mxu0 0.0
        %2555 = vmatprep.subr.mxu0 0.0
        %2556 = vmatpush1.msra.mxu0 0.0
        %2557 = vmatprep.subr.mxu0 0.0
        %2558 = vmatpush1.msra.mxu0 0.0
        %2559 = vmatprep.subr.mxu0 0.0
        %2560 = vmatpush1.msra.mxu0 0.0
        %2561 = vmatprep.subr.mxu0 0.0
        %2562 = vmatpush1.msra.mxu0 0.0
        %2563 = vmatprep.subr.mxu0 0.0
        %2564 = vmatpush1.msra.mxu0 0.0
        %2565 = vmatprep.subr.mxu0 0.0
        %2566 = vmatpush1.msra.mxu0 0.0
        %2567 = vmatprep.subr.mxu0 0.0
        %2568 = vmatpush1.msra.mxu0 0.0
        %2569 = vmatprep.mubr.f32.mxu0 %v2503
        %2570 = vmatmul.mubr.f32.gmra.mrb[0].mxu0 %v2439
        %v2571 = vpop.f32.mrb[0].mxu0
        %v2572 = vadd.f32 %v2498, %v2571
        %v2573 = vpop.f32.mrb[0].mxu0
        %v2574 = vadd.f32 %v2498, %v2573
        %2575 = vdwg.mxu0
        %2576 = vmatprep.subr.mxu0 0.0
        %2577 = vmatpush1.msra.mxu0 %v2442
        %2578 = vmatprep.subr.mxu0 0.0
        %2579 = vmatpush1.msra.mxu0 %v2445
        %2580 = vmatprep.subr.mxu0 0.0
        %2581 = vmatpush1.msra.mxu0 %v2448
        %2582 = vmatprep.subr.mxu0 0.0
        %2583 = vmatpush1.msra.mxu0 %v2451
        %2584 = vmatprep.subr.mxu0 0.0
        %2585 = vmatpush1.msra.mxu0 %v2454
        %2586 = vmatprep.subr.mxu0 0.0
        %2587 = vmatpush1.msra.mxu0 %v2457
        %2588 = vmatprep.subr.mxu0 0.0
        %2589 = vmatpush1.msra.mxu0 %v2460
        %2590 = vmatprep.subr.mxu0 0.0
        %2591 = vmatpush1.msra.mxu0 %v2463
        %2592 = vmatprep.subr.mxu0 0.0
        %2593 = vmatpush1.msra.mxu0 %v2466
        %2594 = vmatprep.subr.mxu0 0.0
        %2595 = vmatpush1.msra.mxu0 %v2469
        %2596 = vmatprep.subr.mxu0 0.0
        %2597 = vmatpush1.msra.mxu0 %v2472
        %2598 = vmatprep.subr.mxu0 0.0
        %2599 = vmatpush1.msra.mxu0 %v2475
        %2600 = vmatprep.subr.mxu0 0.0
        %2601 = vmatpush1.msra.mxu0 %v2478
        %2602 = vmatprep.subr.mxu0 0.0
        %2603 = vmatpush1.msra.mxu0 %v2481
        %2604 = vmatprep.subr.mxu0 0.0
        %2605 = vmatpush1.msra.mxu0 %v2484
        %2606 = vmatprep.subr.mxu0 0.0
        %2607 = vmatpush1.msra.mxu0 %v2487
        %2608 = vmatprep.subr.mxu0 0.0
        %2609 = vmatpush1.msra.mxu0 %v2490
        %2610 = vmatprep.subr.mxu0 0.0
        %2611 = vmatpush1.msra.mxu0 %v2493
        %2612 = vmatprep.subr.mxu0 0.0
        %2613 = vmatpush1.msra.mxu0 0.0
        %2614 = vmatprep.subr.mxu0 0.0
        %2615 = vmatpush1.msra.mxu0 0.0
        %2616 = vmatprep.subr.mxu0 0.0
        %2617 = vmatpush1.msra.mxu0 0.0
        %2618 = vmatprep.subr.mxu0 0.0
        %2619 = vmatpush1.msra.mxu0 0.0
        %2620 = vmatprep.subr.mxu0 0.0
        %2621 = vmatpush1.msra.mxu0 0.0
        %2622 = vmatprep.subr.mxu0 0.0
        %2623 = vmatpush1.msra.mxu0 0.0
        %2624 = vmatprep.subr.mxu0 0.0
        %2625 = vmatpush1.msra.mxu0 0.0
        %2626 = vmatprep.subr.mxu0 0.0
        %2627 = vmatpush1.msra.mxu0 0.0
        %2628 = vmatprep.subr.mxu0 0.0
        %2629 = vmatpush1.msra.mxu0 0.0
        %2630 = vmatprep.subr.mxu0 0.0
        %2631 = vmatpush1.msra.mxu0 0.0
        %2632 = vmatprep.subr.mxu0 0.0
        %2633 = vmatpush1.msra.mxu0 0.0
        %2634 = vmatprep.subr.mxu0 0.0
        %2635 = vmatpush1.msra.mxu0 0.0
        %2636 = vmatprep.subr.mxu0 0.0
        %2637 = vmatpush1.msra.mxu0 0.0
        %2638 = vmatprep.subr.mxu0 0.0
        %2639 = vmatpush1.msra.mxu0 0.0
        %2640 = vmatprep.mubr.f32.mxu0 %v2503
        %2641 = vmatmul.mubr.f32.gmra.mrb[0].mxu0 %v2439
        %v2642 = vpop.f32.mrb[0].mxu0
        %v2643 = vadd.f32 %v2498, %v2642
        %v2644 = vpop.f32.mrb[0].mxu0
        %2645 = vdwg.mxu0
        %v2646 = vmax.f32 %v2572, 0.0
        %v2647 = vmax.f32 %v2574, 0.0
        %v2648 = vmax.f32 %v2643, 0.0
        %v2649 = vmul.f32 %v2646, %v1084
        %v2650 = vmul.f32 %v2647, %v1088
        %v2651 = vmul.f32 %v2648, %v1092
        %2652 = vst [vmem:[#allocation2 + $0x30] sm:$0xf] %v2649
        %2653 = vst [vmem:[#allocation2 + $0x38] sm:$0xf] %v2650
        %2654 = vst.msk [vmem:[#allocation2 + $0x40] sm:$0xf] %vm687, %v2651
        %v2655 = vld [vmem:[#allocation2] sm:$0xff]
        %v2656 = vld [vmem:[#allocation2 + $0x8] sm:$0xff]
        %v2657 = vld [vmem:[#allocation2 + $0x10] sm:$0xff]
        %v2658 = vld [vmem:[#allocation2 + $0x18] sm:$0xff]
        %v2659 = vld [vmem:[#allocation2 + $0x20] sm:$0xff]
        %v2660 = vld [vmem:[#allocation2 + $0x28] sm:$0xff]
        %v2661 = vld [vmem:[#allocation2 + $0x30] sm:$0xf]
        %v2662 = vld [vmem:[#allocation2 + $0x38] sm:$0xf]
        %v2663 = vld [vmem:[#allocation2 + $0x40] sm:$0xf]
        %2673 = vrot.lane.b32.xlu0 %v2655, 19
        %v2674 = vpop.permute.xlu0 %2673
        %2675 = vrot.lane.b32.xlu0 %v2656, 19
        %v2676 = vpop.permute.xlu0 %2675
        %2677 = vrot.lane.b32.xlu0 %v2657, 19
        %v2678 = vpop.permute.xlu0 %2677
        %2679 = vrot.lane.b32.xlu0 %v2658, 19
        %v2680 = vpop.permute.xlu0 %2679
        %2681 = vrot.lane.b32.xlu0 %v2659, 19
        %v2682 = vpop.permute.xlu0 %2681
        %2683 = vrot.lane.b32.xlu0 %v2660, 19
        %v2684 = vpop.permute.xlu0 %2683
        %2685 = vrot.lane.b32.xlu0 %v2661, 19
        %v2686 = vpop.permute.xlu0 %2685
        %2687 = vrot.lane.b32.xlu0 %v2662, 19
        %v2688 = vpop.permute.xlu0 %2687
        %2689 = vrot.lane.b32.xlu0 %v2663, 19
        %v2690 = vpop.permute.xlu0 %2689
        %v2691 = vsel %vm701, %v2674, %v2676
        %v2692 = vsel %vm701, %v2676, %v2678
        %v2693 = vsel %vm701, %v2680, %v2682
        %v2694 = vsel %vm701, %v2682, %v2684
        %v2695 = vsel %vm701, %v2686, %v2688
        %v2696 = vsel %vm701, %v2688, %v2690
        %2706 = vst.msk [vmem:[#allocation3] sm:$0xff] %vm1128, %v2674
        %2707 = vst [vmem:[#allocation3 + $0x8] sm:$0xff] %v2691
        %2708 = vst.msk [vmem:[#allocation3 + $0x10] sm:$0xff] %vm1131, %v2692
        %2709 = vst.msk [vmem:[#allocation3 + $0x18] sm:$0xff] %vm1128, %v2680
        %2710 = vst [vmem:[#allocation3 + $0x20] sm:$0xff] %v2693
        %2711 = vst.msk [vmem:[#allocation3 + $0x28] sm:$0xff] %vm1131, %v2694
        %2712 = vst.msk [vmem:[#allocation3 + $0x30] sm:$0xf] %vm707, %v2686
        %2713 = vst [vmem:[#allocation3 + $0x38] sm:$0xf] %v2695
        %2714 = vst.msk [vmem:[#allocation3 + $0x40] sm:$0xf] %vm687, %v2696
        %2715 = vst.msk [vmem:[#allocation3] sm:$0xff] %vm701, 0.0
        %2716 = vst.msk [vmem:[#allocation3 + $0x18] sm:$0xff] %vm701, 0.0
        %2717 = vst.msk [vmem:[#allocation3 + $0x30] sm:$0xf] %vm711, 0.0
        %v2718 = vld [vmem:[#allocation2] sm:$0xff]
        %v2719 = vld [vmem:[#allocation2 + $0x8] sm:$0xff]
        %v2720 = vld [vmem:[#allocation2 + $0x10] sm:$0xff]
        %v2721 = vld [vmem:[#allocation2 + $0x18] sm:$0xff]
        %v2722 = vld [vmem:[#allocation2 + $0x20] sm:$0xff]
        %v2723 = vld [vmem:[#allocation2 + $0x28] sm:$0xff]
        %v2724 = vld [vmem:[#allocation2 + $0x30] sm:$0xf]
        %v2725 = vld [vmem:[#allocation2 + $0x38] sm:$0xf]
        %v2726 = vld [vmem:[#allocation2 + $0x40] sm:$0xf]
        %v2736 = vrot.slane %v2718, 4
        %v2737 = vrot.slane %v2719, 4
        %v2738 = vrot.slane %v2720, 4
        %v2739 = vrot.slane %v2721, 4
        %v2740 = vsel %vm926, %v2736, %v2739
        %v2741 = vrot.slane %v2722, 4
        %v2742 = vsel %vm926, %v2737, %v2741
        %v2743 = vrot.slane %v2723, 4
        %v2744 = vsel %vm926, %v2738, %v2743
        %v2745 = vrot.slane %v2724, 4
        %v2746 = vsel %vm926, %v2739, %v2745
        %v2747 = vrot.slane %v2725, 4
        %v2748 = vsel %vm926, %v2741, %v2747
        %v2749 = vrot.slane %v2726, 4
        %v2750 = vsel %vm926, %v2743, %v2749
        %2751 = vrot.lane.b32.xlu0 %v2736, 18
        %v2752 = vpop.permute.xlu0 %2751
        %2753 = vrot.lane.b32.xlu0 %v2737, 18
        %v2754 = vpop.permute.xlu0 %2753
        %2755 = vrot.lane.b32.xlu0 %v2738, 18
        %v2756 = vpop.permute.xlu0 %2755
        %2757 = vrot.lane.b32.xlu0 %v2740, 18
        %v2758 = vpop.permute.xlu0 %2757
        %2759 = vrot.lane.b32.xlu0 %v2742, 18
        %v2760 = vpop.permute.xlu0 %2759
        %2761 = vrot.lane.b32.xlu0 %v2744, 18
        %v2762 = vpop.permute.xlu0 %2761
        %2763 = vrot.lane.b32.xlu0 %v2746, 18
        %v2764 = vpop.permute.xlu0 %2763
        %2765 = vrot.lane.b32.xlu0 %v2748, 18
        %v2766 = vpop.permute.xlu0 %2765
        %2767 = vrot.lane.b32.xlu0 %v2750, 18
        %v2768 = vpop.permute.xlu0 %2767
        %v2769 = vsel %vm728, %v2752, %v2754
        %v2770 = vsel %vm728, %v2754, %v2756
        %v2771 = vsel %vm728, %v2758, %v2760
        %v2772 = vsel %vm728, %v2760, %v2762
        %v2773 = vsel %vm728, %v2764, %v2766
        %v2774 = vsel %vm728, %v2766, %v2768
        %2784 = vst.msk [vmem:[#allocation3 + $0x30] sm:$0xf0] %vm734, %v2752
        %2785 = vst [vmem:[#allocation3 + $0x38] sm:$0xf0] %v2769
        %2786 = vst.msk [vmem:[#allocation3 + $0x40] sm:$0xf0] %vm737, %v2770
        %2787 = vst.msk [vmem:[#allocation3 + $0x48] sm:$0xff] %vm1151, %v2758
        %2788 = vst [vmem:[#allocation3 + $0x50] sm:$0xff] %v2771
        %2789 = vst.msk [vmem:[#allocation3 + $0x58] sm:$0xff] %vm1131, %v2772
        %2790 = vst.msk [vmem:[#allocation3 + $0x60] sm:$0xff] %vm1151, %v2764
        %2791 = vst [vmem:[#allocation3 + $0x68] sm:$0xff] %v2773
        %2792 = vst.msk [vmem:[#allocation3 + $0x70] sm:$0xff] %vm1131, %v2774
        %2793 = vst.msk [vmem:[#allocation3 + $0x30] sm:$0xf0] %vm739, 0.0
        %2794 = vst.msk [vmem:[#allocation3 + $0x48] sm:$0xff] %vm728, 0.0
        %2795 = vst.msk [vmem:[#allocation3 + $0x60] sm:$0xff] %vm728, 0.0
        %v2796 = vld [vmem:[#allocation2] sm:$0xff]
        %v2797 = vld [vmem:[#allocation2 + $0x8] sm:$0xff]
        %v2798 = vld [vmem:[#allocation2 + $0x10] sm:$0xff]
        %v2799 = vld [vmem:[#allocation2 + $0x18] sm:$0xff]
        %v2800 = vld [vmem:[#allocation2 + $0x20] sm:$0xff]
        %v2801 = vld [vmem:[#allocation2 + $0x28] sm:$0xff]
        %v2802 = vld [vmem:[#allocation2 + $0x30] sm:$0xf]
        %v2803 = vld [vmem:[#allocation2 + $0x38] sm:$0xf]
        %v2804 = vld [vmem:[#allocation2 + $0x40] sm:$0xf]
        %2814 = vrot.lane.b32.xlu0 %v2796, 17
        %v2815 = vpop.permute.xlu0 %2814
        %2816 = vrot.lane.b32.xlu0 %v2797, 17
        %v2817 = vpop.permute.xlu0 %2816
        %2818 = vrot.lane.b32.xlu0 %v2798, 17
        %v2819 = vpop.permute.xlu0 %2818
        %2820 = vrot.lane.b32.xlu0 %v2799, 17
        %v2821 = vpop.permute.xlu0 %2820
        %2822 = vrot.lane.b32.xlu0 %v2800, 17
        %v2823 = vpop.permute.xlu0 %2822
        %2824 = vrot.lane.b32.xlu0 %v2801, 17
        %v2825 = vpop.permute.xlu0 %2824
        %2826 = vrot.lane.b32.xlu0 %v2802, 17
        %v2827 = vpop.permute.xlu0 %2826
        %2828 = vrot.lane.b32.xlu0 %v2803, 17
        %v2829 = vpop.permute.xlu0 %2828
        %2830 = vrot.lane.b32.xlu0 %v2804, 17
        %v2831 = vpop.permute.xlu0 %2830
        %v2832 = vsel %vm753, %v2815, %v2817
        %v2833 = vsel %vm753, %v2817, %v2819
        %v2834 = vsel %vm753, %v2821, %v2823
        %v2835 = vsel %vm753, %v2823, %v2825
        %v2836 = vsel %vm753, %v2827, %v2829
        %v2837 = vsel %vm753, %v2829, %v2831
        %2847 = vst.msk [vmem:[#allocation3 + $0x78] sm:$0xff] %vm1173, %v2815
        %2848 = vst [vmem:[#allocation3 + $0x80] sm:$0xff] %v2832
        %2849 = vst.msk [vmem:[#allocation3 + $0x88] sm:$0xff] %vm1131, %v2833
        %2850 = vst.msk [vmem:[#allocation3 + $0x90] sm:$0xff] %vm1173, %v2821
        %2851 = vst [vmem:[#allocation3 + $0x98] sm:$0xff] %v2834
        %2852 = vst.msk [vmem:[#allocation3 + $0xa0] sm:$0xff] %vm1131, %v2835
        %2853 = vst.msk [vmem:[#allocation3 + $0xa8] sm:$0xf] %vm759, %v2827
        %2854 = vst [vmem:[#allocation3 + $0xb0] sm:$0xf] %v2836
        %2855 = vst.msk [vmem:[#allocation3 + $0xb8] sm:$0xf] %vm687, %v2837
        %2856 = vst.msk [vmem:[#allocation3 + $0x78] sm:$0xff] %vm753, 0.0
        %2857 = vst.msk [vmem:[#allocation3 + $0x90] sm:$0xff] %vm753, 0.0
        %2858 = vst.msk [vmem:[#allocation3 + $0xa8] sm:$0xf] %vm763, 0.0
        %v2859 = vld [vmem:[#allocation2] sm:$0xff]
        %v2860 = vld [vmem:[#allocation2 + $0x8] sm:$0xff]
        %v2861 = vld [vmem:[#allocation2 + $0x10] sm:$0xff]
        %v2862 = vld [vmem:[#allocation2 + $0x18] sm:$0xff]
        %v2863 = vld [vmem:[#allocation2 + $0x20] sm:$0xff]
        %v2864 = vld [vmem:[#allocation2 + $0x28] sm:$0xff]
        %v2865 = vld [vmem:[#allocation2 + $0x30] sm:$0xf]
        %v2866 = vld [vmem:[#allocation2 + $0x38] sm:$0xf]
        %v2867 = vld [vmem:[#allocation2 + $0x40] sm:$0xf]
        %v2877 = vrot.slane %v2859, 4
        %v2878 = vrot.slane %v2860, 4
        %v2879 = vrot.slane %v2861, 4
        %v2880 = vrot.slane %v2862, 4
        %v2881 = vsel %vm926, %v2877, %v2880
        %v2882 = vrot.slane %v2863, 4
        %v2883 = vsel %vm926, %v2878, %v2882
        %v2884 = vrot.slane %v2864, 4
        %v2885 = vsel %vm926, %v2879, %v2884
        %v2886 = vrot.slane %v2865, 4
        %v2887 = vsel %vm926, %v2880, %v2886
        %v2888 = vrot.slane %v2866, 4
        %v2889 = vsel %vm926, %v2882, %v2888
        %v2890 = vrot.slane %v2867, 4
        %v2891 = vsel %vm926, %v2884, %v2890
        %2892 = vrot.lane.b32.xlu0 %v2877, 1
        %v2893 = vpop.permute.xlu0 %2892
        %2894 = vrot.lane.b32.xlu0 %v2878, 1
        %v2895 = vpop.permute.xlu0 %2894
        %2896 = vrot.lane.b32.xlu0 %v2879, 1
        %v2897 = vpop.permute.xlu0 %2896
        %2898 = vrot.lane.b32.xlu0 %v2881, 1
        %v2899 = vpop.permute.xlu0 %2898
        %2900 = vrot.lane.b32.xlu0 %v2883, 1
        %v2901 = vpop.permute.xlu0 %2900
        %2902 = vrot.lane.b32.xlu0 %v2885, 1
        %v2903 = vpop.permute.xlu0 %2902
        %2904 = vrot.lane.b32.xlu0 %v2887, 1
        %v2905 = vpop.permute.xlu0 %2904
        %2906 = vrot.lane.b32.xlu0 %v2889, 1
        %v2907 = vpop.permute.xlu0 %2906
        %2908 = vrot.lane.b32.xlu0 %v2891, 1
        %v2909 = vpop.permute.xlu0 %2908
        %v2910 = vsel %vm780, %v2893, %v2895
        %v2911 = vsel %vm780, %v2895, %v2897
        %v2912 = vsel %vm780, %v2899, %v2901
        %v2913 = vsel %vm780, %v2901, %v2903
        %v2914 = vsel %vm780, %v2905, %v2907
        %v2915 = vsel %vm780, %v2907, %v2909
        %2925 = vst.msk [vmem:[#allocation3 + $0xa8] sm:$0xf0] %vm786, %v2893
        %2926 = vst [vmem:[#allocation3 + $0xb0] sm:$0xf0] %v2910
        %2927 = vst.msk [vmem:[#allocation3 + $0xb8] sm:$0xf0] %vm737, %v2911
        %2928 = vst.msk [vmem:[#allocation3 + $0xc0] sm:$0xff] %vm1195, %v2899
        %2929 = vst [vmem:[#allocation3 + $0xc8] sm:$0xff] %v2912
        %2930 = vst.msk [vmem:[#allocation3 + $0xd0] sm:$0xff] %vm1131, %v2913
        %2931 = vst.msk [vmem:[#allocation3 + $0xd8] sm:$0xff] %vm1195, %v2905
        %2932 = vst [vmem:[#allocation3 + $0xe0] sm:$0xff] %v2914
        %2933 = vst.msk [vmem:[#allocation3 + $0xe8] sm:$0xff] %vm1131, %v2915
        %2934 = vst.msk [vmem:[#allocation3 + $0xa8] sm:$0xf0] %vm790, 0.0
        %2935 = vst.msk [vmem:[#allocation3 + $0xc0] sm:$0xff] %vm780, 0.0
        %2936 = vst.msk [vmem:[#allocation3 + $0xd8] sm:$0xff] %vm780, 0.0
        %v2937 = vld [vmem:[#allocation2] sm:$0xff]
        %v2938 = vld [vmem:[#allocation2 + $0x8] sm:$0xff]
        %v2939 = vld [vmem:[#allocation2 + $0x10] sm:$0xff]
        %v2940 = vld [vmem:[#allocation2 + $0x18] sm:$0xff]
        %v2941 = vld [vmem:[#allocation2 + $0x20] sm:$0xff]
        %v2942 = vld [vmem:[#allocation2 + $0x28] sm:$0xff]
        %v2943 = vld [vmem:[#allocation2 + $0x30] sm:$0xf]
        %v2944 = vld [vmem:[#allocation2 + $0x38] sm:$0xf]
        %v2945 = vld [vmem:[#allocation2 + $0x40] sm:$0xf]
        %2946 = vst [vmem:[#allocation3 + $0xf0] sm:$0xff] %v2937
        %2947 = vst [vmem:[#allocation3 + $0xf8] sm:$0xff] %v2938
        %2948 = vst.msk [vmem:[#allocation3 + $0x100] sm:$0xff] %vm1131, %v2939
        %2949 = vst [vmem:[#allocation3 + $0x108] sm:$0xff] %v2940
        %2950 = vst [vmem:[#allocation3 + $0x110] sm:$0xff] %v2941
        %2951 = vst.msk [vmem:[#allocation3 + $0x118] sm:$0xff] %vm1131, %v2942
        %2952 = vst [vmem:[#allocation3 + $0x120] sm:$0xf] %v2943
        %2953 = vst [vmem:[#allocation3 + $0x128] sm:$0xf] %v2944
        %2954 = vst.msk [vmem:[#allocation3 + $0x130] sm:$0xf] %vm687, %v2945
        %v2955 = vld [vmem:[#allocation2] sm:$0xff]
        %v2956 = vld [vmem:[#allocation2 + $0x8] sm:$0xff]
        %v2957 = vld [vmem:[#allocation2 + $0x10] sm:$0xff]
        %v2958 = vld [vmem:[#allocation2 + $0x18] sm:$0xff]
        %v2959 = vld [vmem:[#allocation2 + $0x20] sm:$0xff]
        %v2960 = vld [vmem:[#allocation2 + $0x28] sm:$0xff]
        %v2961 = vld [vmem:[#allocation2 + $0x30] sm:$0xf]
        %v2962 = vld [vmem:[#allocation2 + $0x38] sm:$0xf]
        %v2963 = vld [vmem:[#allocation2 + $0x40] sm:$0xf]
        %v2973 = vrot.slane %v2955, 4
        %v2974 = vrot.slane %v2956, 4
        %v2975 = vrot.slane %v2957, 4
        %v2976 = vrot.slane %v2958, 4
        %v2977 = vsel %vm926, %v2973, %v2976
        %v2978 = vrot.slane %v2959, 4
        %v2979 = vsel %vm926, %v2974, %v2978
        %v2980 = vrot.slane %v2960, 4
        %v2981 = vsel %vm926, %v2975, %v2980
        %v2982 = vrot.slane %v2961, 4
        %v2983 = vsel %vm926, %v2976, %v2982
        %v2984 = vrot.slane %v2962, 4
        %v2985 = vsel %vm926, %v2978, %v2984
        %v2986 = vrot.slane %v2963, 4
        %v2987 = vsel %vm926, %v2980, %v2986
        %2988 = vrot.lane.b32.xlu0 %v2973, 127
        %v2989 = vpop.permute.xlu0 %2988
        %2990 = vrot.lane.b32.xlu0 %v2974, 127
        %v2991 = vpop.permute.xlu0 %2990
        %2992 = vrot.lane.b32.xlu0 %v2975, 127
        %v2993 = vpop.permute.xlu0 %2992
        %2994 = vrot.lane.b32.xlu0 %v2977, 127
        %v2995 = vpop.permute.xlu0 %2994
        %2996 = vrot.lane.b32.xlu0 %v2979, 127
        %v2997 = vpop.permute.xlu0 %2996
        %2998 = vrot.lane.b32.xlu0 %v2981, 127
        %v2999 = vpop.permute.xlu0 %2998
        %3000 = vrot.lane.b32.xlu0 %v2983, 127
        %v3001 = vpop.permute.xlu0 %3000
        %3002 = vrot.lane.b32.xlu0 %v2985, 127
        %v3003 = vpop.permute.xlu0 %3002
        %3004 = vrot.lane.b32.xlu0 %v2987, 127
        %v3005 = vpop.permute.xlu0 %3004
        %v3006 = vsel %vm813, %v2989, %v2991
        %v3007 = vsel %vm813, %v2991, %v2993
        %v3008 = vsel %vm813, %v2995, %v2997
        %v3009 = vsel %vm813, %v2997, %v2999
        %v3010 = vsel %vm813, %v3001, %v3003
        %v3011 = vsel %vm813, %v3003, %v3005
        %3021 = vst [vmem:[#allocation3 + $0x120] sm:$0xf0] %v3006
        %3022 = vst [vmem:[#allocation3 + $0x128] sm:$0xf0] %v3007
        %3023 = vst.msk [vmem:[#allocation3 + $0x130] sm:$0xf0] %vm821, %v2993
        %3024 = vst [vmem:[#allocation3 + $0x138] sm:$0xff] %v3008
        %3025 = vst [vmem:[#allocation3 + $0x140] sm:$0xff] %v3009
        %3026 = vst.msk [vmem:[#allocation3 + $0x148] sm:$0xff] %vm1225, %v2999
        %3027 = vst [vmem:[#allocation3 + $0x150] sm:$0xff] %v3010
        %3028 = vst [vmem:[#allocation3 + $0x158] sm:$0xff] %v3011
        %3029 = vst.msk [vmem:[#allocation3 + $0x160] sm:$0xff] %vm1225, %v3005
        %3030 = vst.msk [vmem:[#allocation3 + $0x130] sm:$0xf0] %vm823, 0.0
        %3031 = vst.msk [vmem:[#allocation3 + $0x148] sm:$0xff] %vm1227, 0.0
        %3032 = vst.msk [vmem:[#allocation3 + $0x160] sm:$0xff] %vm1227, 0.0
        %v3033 = vld [vmem:[#allocation2] sm:$0xff]
        %v3034 = vld [vmem:[#allocation2 + $0x8] sm:$0xff]
        %v3035 = vld [vmem:[#allocation2 + $0x10] sm:$0xff]
        %v3036 = vld [vmem:[#allocation2 + $0x18] sm:$0xff]
        %v3037 = vld [vmem:[#allocation2 + $0x20] sm:$0xff]
        %v3038 = vld [vmem:[#allocation2 + $0x28] sm:$0xff]
        %v3039 = vld [vmem:[#allocation2 + $0x30] sm:$0xf]
        %v3040 = vld [vmem:[#allocation2 + $0x38] sm:$0xf]
        %v3041 = vld [vmem:[#allocation2 + $0x40] sm:$0xf]
        %3051 = vrot.lane.b32.xlu0 %v3033, 111
        %v3052 = vpop.permute.xlu0 %3051
        %3053 = vrot.lane.b32.xlu0 %v3034, 111
        %v3054 = vpop.permute.xlu0 %3053
        %3055 = vrot.lane.b32.xlu0 %v3035, 111
        %v3056 = vpop.permute.xlu0 %3055
        %3057 = vrot.lane.b32.xlu0 %v3036, 111
        %v3058 = vpop.permute.xlu0 %3057
        %3059 = vrot.lane.b32.xlu0 %v3037, 111
        %v3060 = vpop.permute.xlu0 %3059
        %3061 = vrot.lane.b32.xlu0 %v3038, 111
        %v3062 = vpop.permute.xlu0 %3061
        %3063 = vrot.lane.b32.xlu0 %v3039, 111
        %v3064 = vpop.permute.xlu0 %3063
        %3065 = vrot.lane.b32.xlu0 %v3040, 111
        %v3066 = vpop.permute.xlu0 %3065
        %3067 = vrot.lane.b32.xlu0 %v3041, 111
        %v3068 = vpop.permute.xlu0 %3067
        %v3069 = vsel %vm837, %v3052, %v3054
        %v3070 = vsel %vm837, %v3054, %v3056
        %v3071 = vsel %vm837, %v3058, %v3060
        %v3072 = vsel %vm837, %v3060, %v3062
        %v3073 = vsel %vm837, %v3064, %v3066
        %v3074 = vsel %vm837, %v3066, %v3068
        %3084 = vst [vmem:[#allocation3 + $0x168] sm:$0xff] %v3069
        %3085 = vst [vmem:[#allocation3 + $0x170] sm:$0xff] %v3070
        %3086 = vst.msk [vmem:[#allocation3 + $0x178] sm:$0xff] %vm1248, %v3056
        %3087 = vst [vmem:[#allocation3 + $0x180] sm:$0xff] %v3071
        %3088 = vst [vmem:[#allocation3 + $0x188] sm:$0xff] %v3072
        %3089 = vst.msk [vmem:[#allocation3 + $0x190] sm:$0xff] %vm1248, %v3062
        %3090 = vst [vmem:[#allocation3 + $0x198] sm:$0xf] %v3073
        %3091 = vst [vmem:[#allocation3 + $0x1a0] sm:$0xf] %v3074
        %3092 = vst.msk [vmem:[#allocation3 + $0x1a8] sm:$0xf] %vm845, %v3068
        %3093 = vst.msk [vmem:[#allocation3 + $0x178] sm:$0xff] %vm1250, 0.0
        %3094 = vst.msk [vmem:[#allocation3 + $0x190] sm:$0xff] %vm1250, 0.0
        %3095 = vst.msk [vmem:[#allocation3 + $0x1a8] sm:$0xf] %vm847, 0.0
        %v3096 = vld [vmem:[#allocation2] sm:$0xff]
        %v3097 = vld [vmem:[#allocation2 + $0x8] sm:$0xff]
        %v3098 = vld [vmem:[#allocation2 + $0x10] sm:$0xff]
        %v3099 = vld [vmem:[#allocation2 + $0x18] sm:$0xff]
        %v3100 = vld [vmem:[#allocation2 + $0x20] sm:$0xff]
        %v3101 = vld [vmem:[#allocation2 + $0x28] sm:$0xff]
        %v3102 = vld [vmem:[#allocation2 + $0x30] sm:$0xf]
        %v3103 = vld [vmem:[#allocation2 + $0x38] sm:$0xf]
        %v3104 = vld [vmem:[#allocation2 + $0x40] sm:$0xf]
        %v3114 = vrot.slane %v3096, 4
        %v3115 = vrot.slane %v3097, 4
        %v3116 = vrot.slane %v3098, 4
        %v3117 = vrot.slane %v3099, 4
        %v3118 = vsel %vm926, %v3114, %v3117
        %v3119 = vrot.slane %v3100, 4
        %v3120 = vsel %vm926, %v3115, %v3119
        %v3121 = vrot.slane %v3101, 4
        %v3122 = vsel %vm926, %v3116, %v3121
        %v3123 = vrot.slane %v3102, 4
        %v3124 = vsel %vm926, %v3117, %v3123
        %v3125 = vrot.slane %v3103, 4
        %v3126 = vsel %vm926, %v3119, %v3125
        %v3127 = vrot.slane %v3104, 4
        %v3128 = vsel %vm926, %v3121, %v3127
        %3129 = vrot.lane.b32.xlu0 %v3114, 110
        %v3130 = vpop.permute.xlu0 %3129
        %3131 = vrot.lane.b32.xlu0 %v3115, 110
        %v3132 = vpop.permute.xlu0 %3131
        %3133 = vrot.lane.b32.xlu0 %v3116, 110
        %v3134 = vpop.permute.xlu0 %3133
        %3135 = vrot.lane.b32.xlu0 %v3118, 110
        %v3136 = vpop.permute.xlu0 %3135
        %3137 = vrot.lane.b32.xlu0 %v3120, 110
        %v3138 = vpop.permute.xlu0 %3137
        %3139 = vrot.lane.b32.xlu0 %v3122, 110
        %v3140 = vpop.permute.xlu0 %3139
        %3141 = vrot.lane.b32.xlu0 %v3124, 110
        %v3142 = vpop.permute.xlu0 %3141
        %3143 = vrot.lane.b32.xlu0 %v3126, 110
        %v3144 = vpop.permute.xlu0 %3143
        %3145 = vrot.lane.b32.xlu0 %v3128, 110
        %v3146 = vpop.permute.xlu0 %3145
        %v3147 = vsel %vm864, %v3130, %v3132
        %v3148 = vsel %vm864, %v3132, %v3134
        %v3149 = vsel %vm864, %v3136, %v3138
        %v3150 = vsel %vm864, %v3138, %v3140
        %v3151 = vsel %vm864, %v3142, %v3144
        %v3152 = vsel %vm864, %v3144, %v3146
        %3162 = vst [vmem:[#allocation3 + $0x198] sm:$0xf0] %v3147
        %3163 = vst [vmem:[#allocation3 + $0x1a0] sm:$0xf0] %v3148
        %3164 = vst.msk [vmem:[#allocation3 + $0x1a8] sm:$0xf0] %vm872, %v3134
        %3165 = vst [vmem:[#allocation3 + $0x1b0] sm:$0xff] %v3149
        %3166 = vst [vmem:[#allocation3 + $0x1b8] sm:$0xff] %v3150
        %3167 = vst.msk [vmem:[#allocation3 + $0x1c0] sm:$0xff] %vm1271, %v3140
        %3168 = vst [vmem:[#allocation3 + $0x1c8] sm:$0xff] %v3151
        %3169 = vst [vmem:[#allocation3 + $0x1d0] sm:$0xff] %v3152
        %3170 = vst.msk [vmem:[#allocation3 + $0x1d8] sm:$0xff] %vm1271, %v3146
        %3171 = vst.msk [vmem:[#allocation3 + $0x1a8] sm:$0xf0] %vm874, 0.0
        %3172 = vst.msk [vmem:[#allocation3 + $0x1c0] sm:$0xff] %vm1273, 0.0
        %3173 = vst.msk [vmem:[#allocation3 + $0x1d8] sm:$0xff] %vm1273, 0.0
        %v3174 = vld [vmem:[#allocation2] sm:$0xff]
        %v3175 = vld [vmem:[#allocation2 + $0x8] sm:$0xff]
        %v3176 = vld [vmem:[#allocation2 + $0x10] sm:$0xff]
        %v3177 = vld [vmem:[#allocation2 + $0x18] sm:$0xff]
        %v3178 = vld [vmem:[#allocation2 + $0x20] sm:$0xff]
        %v3179 = vld [vmem:[#allocation2 + $0x28] sm:$0xff]
        %v3180 = vld [vmem:[#allocation2 + $0x30] sm:$0xf]
        %v3181 = vld [vmem:[#allocation2 + $0x38] sm:$0xf]
        %v3182 = vld [vmem:[#allocation2 + $0x40] sm:$0xf]
        %3192 = vrot.lane.b32.xlu0 %v3174, 109
        %v3193 = vpop.permute.xlu0 %3192
        %3194 = vrot.lane.b32.xlu0 %v3175, 109
        %v3195 = vpop.permute.xlu0 %3194
        %3196 = vrot.lane.b32.xlu0 %v3176, 109
        %v3197 = vpop.permute.xlu0 %3196
        %3198 = vrot.lane.b32.xlu0 %v3177, 109
        %v3199 = vpop.permute.xlu0 %3198
        %3200 = vrot.lane.b32.xlu0 %v3178, 109
        %v3201 = vpop.permute.xlu0 %3200
        %3202 = vrot.lane.b32.xlu0 %v3179, 109
        %v3203 = vpop.permute.xlu0 %3202
        %3204 = vrot.lane.b32.xlu0 %v3180, 109
        %v3205 = vpop.permute.xlu0 %3204
        %3206 = vrot.lane.b32.xlu0 %v3181, 109
        %v3207 = vpop.permute.xlu0 %3206
        %3208 = vrot.lane.b32.xlu0 %v3182, 109
        %v3209 = vpop.permute.xlu0 %3208
        %v3210 = vsel %vm888, %v3193, %v3195
        %v3211 = vsel %vm888, %v3195, %v3197
        %v3212 = vsel %vm888, %v3199, %v3201
        %v3213 = vsel %vm888, %v3201, %v3203
        %v3214 = vsel %vm888, %v3205, %v3207
        %v3215 = vsel %vm888, %v3207, %v3209
        %3225 = vst [vmem:[#allocation3 + $0x1e0] sm:$0xff] %v3210
        %3226 = vst [vmem:[#allocation3 + $0x1e8] sm:$0xff] %v3211
        %3227 = vst.msk [vmem:[#allocation3 + $0x1f0] sm:$0xff] %vm1294, %v3197
        %3228 = vst [vmem:[#allocation3 + $0x1f8] sm:$0xff] %v3212
        %3229 = vst [vmem:[#allocation3 + $0x200] sm:$0xff] %v3213
        %3230 = vst.msk [vmem:[#allocation3 + $0x208] sm:$0xff] %vm1294, %v3203
        %3231 = vst [vmem:[#allocation3 + $0x210] sm:$0xf] %v3214
        %3232 = vst [vmem:[#allocation3 + $0x218] sm:$0xf] %v3215
        %3233 = vst.msk [vmem:[#allocation3 + $0x220] sm:$0xf] %vm896, %v3209
        %3234 = vst.msk [vmem:[#allocation3 + $0x1f0] sm:$0xff] %vm1296, 0.0
        %3235 = vst.msk [vmem:[#allocation3 + $0x208] sm:$0xff] %vm1296, 0.0
        %3236 = vst.msk [vmem:[#allocation3 + $0x220] sm:$0xf] %vm898, 0.0
        %v3237 = vld [vmem:[%s12] sm:$0xff]
        %v3238 = vld [vmem:[#allocation3] sm:$0xff]
        %v3239 = vld [vmem:[#allocation3 + $0x8] sm:$0xff]
        %v3240 = vld [vmem:[#allocation3 + $0x10] sm:$0xff]
        %v3241 = vld [vmem:[#allocation3 + $0x18] sm:$0xff]
        %v3242 = vld [vmem:[#allocation3 + $0x20] sm:$0xff]
        %v3243 = vld [vmem:[#allocation3 + $0x28] sm:$0xff]
        %v3244 = vld [vmem:[#allocation3 + $0x30] sm:$0xff]
        %v3245 = vld [vmem:[#allocation3 + $0x38] sm:$0xff]
        %v3246 = vld [vmem:[#allocation3 + $0x40] sm:$0xff]
        %v3247 = vld [vmem:[#allocation3 + $0x48] sm:$0xff]
        %v3248 = vld [vmem:[#allocation3 + $0x50] sm:$0xff]
        %v3249 = vld [vmem:[#allocation3 + $0x58] sm:$0xff]
        %v3250 = vld [vmem:[#allocation3 + $0x60] sm:$0xff]
        %v3251 = vld [vmem:[#allocation3 + $0x68] sm:$0xff]
        %v3252 = vld [vmem:[#allocation3 + $0x70] sm:$0xff]
        %v3253 = vld [vmem:[#allocation3 + $0x78] sm:$0xff]
        %v3254 = vld [vmem:[#allocation3 + $0x80] sm:$0xff]
        %v3255 = vld [vmem:[#allocation3 + $0x88] sm:$0xff]
        %v3256 = vld [vmem:[#allocation3 + $0x90] sm:$0xff]
        %v3257 = vld [vmem:[#allocation3 + $0x98] sm:$0xff]
        %v3258 = vld [vmem:[#allocation3 + $0xa0] sm:$0xff]
        %v3259 = vld [vmem:[#allocation3 + $0xa8] sm:$0xff]
        %v3260 = vld [vmem:[#allocation3 + $0xb0] sm:$0xff]
        %v3261 = vld [vmem:[#allocation3 + $0xb8] sm:$0xff]
        %v3262 = vld [vmem:[#allocation3 + $0xc0] sm:$0xff]
        %v3263 = vld [vmem:[#allocation3 + $0xc8] sm:$0xff]
        %v3264 = vld [vmem:[#allocation3 + $0xd0] sm:$0xff]
        %v3265 = vld [vmem:[#allocation3 + $0xd8] sm:$0xff]
        %v3266 = vld [vmem:[#allocation3 + $0xe0] sm:$0xff]
        %v3267 = vld [vmem:[#allocation3 + $0xe8] sm:$0xff]
        %v3268 = vld [vmem:[#allocation3 + $0xf0] sm:$0xff]
        %v3269 = vld [vmem:[#allocation3 + $0xf8] sm:$0xff]
        %v3270 = vld [vmem:[#allocation3 + $0x100] sm:$0xff]
        %v3271 = vld [vmem:[#allocation3 + $0x108] sm:$0xff]
        %v3272 = vld [vmem:[#allocation3 + $0x110] sm:$0xff]
        %v3273 = vld [vmem:[#allocation3 + $0x118] sm:$0xff]
        %v3274 = vld [vmem:[#allocation3 + $0x120] sm:$0xff]
        %v3275 = vld [vmem:[#allocation3 + $0x128] sm:$0xff]
        %v3276 = vld [vmem:[#allocation3 + $0x130] sm:$0xff]
        %v3277 = vld [vmem:[#allocation3 + $0x138] sm:$0xff]
        %v3278 = vld [vmem:[#allocation3 + $0x140] sm:$0xff]
        %v3279 = vld [vmem:[#allocation3 + $0x148] sm:$0xff]
        %v3280 = vld [vmem:[#allocation3 + $0x150] sm:$0xff]
        %v3281 = vld [vmem:[#allocation3 + $0x158] sm:$0xff]
        %v3282 = vld [vmem:[#allocation3 + $0x160] sm:$0xff]
        %v3283 = vld [vmem:[#allocation3 + $0x168] sm:$0xff]
        %v3284 = vld [vmem:[#allocation3 + $0x170] sm:$0xff]
        %v3285 = vld [vmem:[#allocation3 + $0x178] sm:$0xff]
        %v3286 = vld [vmem:[#allocation3 + $0x180] sm:$0xff]
        %v3287 = vld [vmem:[#allocation3 + $0x188] sm:$0xff]
        %v3288 = vld [vmem:[#allocation3 + $0x190] sm:$0xff]
        %v3289 = vld [vmem:[#allocation3 + $0x198] sm:$0xff]
        %v3290 = vld [vmem:[#allocation3 + $0x1a0] sm:$0xff]
        %v3291 = vld [vmem:[#allocation3 + $0x1a8] sm:$0xff]
        %v3292 = vld [vmem:[#allocation3 + $0x1b0] sm:$0xff]
        %v3293 = vld [vmem:[#allocation3 + $0x1b8] sm:$0xff]
        %v3294 = vld [vmem:[#allocation3 + $0x1c0] sm:$0xff]
        %v3295 = vld [vmem:[#allocation3 + $0x1c8] sm:$0xff]
        %v3296 = vld [vmem:[#allocation3 + $0x1d0] sm:$0xff]
        %v3297 = vld [vmem:[#allocation3 + $0x1d8] sm:$0xff]
        %v3298 = vld [vmem:[#allocation3 + $0x1e0] sm:$0xff]
        %v3299 = vld [vmem:[#allocation3 + $0x1e8] sm:$0xff]
        %v3300 = vld [vmem:[#allocation3 + $0x1f0] sm:$0xff]
        %v3301 = vld [vmem:[#allocation3 + $0x1f8] sm:$0xff]
        %v3302 = vld [vmem:[#allocation3 + $0x200] sm:$0xff]
        %v3303 = vld [vmem:[#allocation3 + $0x208] sm:$0xff]
        %v3304 = vld [vmem:[#allocation3 + $0x210] sm:$0xf]
        %v3305 = vld [vmem:[#allocation3 + $0x218] sm:$0xf]
        %v3306 = vld [vmem:[#allocation3 + $0x220] sm:$0xf]
        %v3307 = vld [vmem:[%s13] sm:$0xf]
        %3309 = vset.pattern.permute.xlu0 0
        %3310 = vperm.xlu0 %3309, %v3307
        %v3311 = vpop.permute.xlu0 %3310
        %v3314 = vcombine.high %v3237, %v3237
        %vm3315 = vcmask 424960
        %v3316 = vsel %vm3315, %v3314, 0
        %v3319 = vsel %vm926, %v3304, 0
        %v3322 = vsel %vm926, %v3305, 0
        %v3325 = vsel %vm926, %v3306, 0
        %3327 = vmatprep.subr.mxu0 %v3239
        %3328 = vmatpush1.msra.mxu0 %v3238
        %3329 = vmatprep.subr.mxu0 %v3242
        %3330 = vmatpush1.msra.mxu0 %v3241
        %3331 = vmatprep.subr.mxu0 %v3245
        %3332 = vmatpush1.msra.mxu0 %v3244
        %3333 = vmatprep.subr.mxu0 %v3248
        %3334 = vmatpush1.msra.mxu0 %v3247
        %3335 = vmatprep.subr.mxu0 %v3251
        %3336 = vmatpush1.msra.mxu0 %v3250
        %3337 = vmatprep.subr.mxu0 %v3254
        %3338 = vmatpush1.msra.mxu0 %v3253
        %3339 = vmatprep.subr.mxu0 %v3257
        %3340 = vmatpush1.msra.mxu0 %v3256
        %3341 = vmatprep.subr.mxu0 %v3260
        %3342 = vmatpush1.msra.mxu0 %v3259
        %3343 = vmatprep.subr.mxu0 %v3263
        %3344 = vmatpush1.msra.mxu0 %v3262
        %3345 = vmatprep.subr.mxu0 %v3266
        %3346 = vmatpush1.msra.mxu0 %v3265
        %3347 = vmatprep.subr.mxu0 %v3269
        %3348 = vmatpush1.msra.mxu0 %v3268
        %3349 = vmatprep.subr.mxu0 %v3272
        %3350 = vmatpush1.msra.mxu0 %v3271
        %3351 = vmatprep.subr.mxu0 %v3275
        %3352 = vmatpush1.msra.mxu0 %v3274
        %3353 = vmatprep.subr.mxu0 %v3278
        %3354 = vmatpush1.msra.mxu0 %v3277
        %3355 = vmatprep.subr.mxu0 %v3281
        %3356 = vmatpush1.msra.mxu0 %v3280
        %3357 = vmatprep.subr.mxu0 %v3284
        %3358 = vmatpush1.msra.mxu0 %v3283
        %3359 = vmatprep.subr.mxu0 %v3287
        %3360 = vmatpush1.msra.mxu0 %v3286
        %3361 = vmatprep.subr.mxu0 %v3290
        %3362 = vmatpush1.msra.mxu0 %v3289
        %3363 = vmatprep.subr.mxu0 %v3293
        %3364 = vmatpush1.msra.mxu0 %v3292
        %3365 = vmatprep.subr.mxu0 %v3296
        %3366 = vmatpush1.msra.mxu0 %v3295
        %3367 = vmatprep.subr.mxu0 %v3299
        %3368 = vmatpush1.msra.mxu0 %v3298
        %3369 = vmatprep.subr.mxu0 %v3302
        %3370 = vmatpush1.msra.mxu0 %v3301
        %3371 = vmatprep.subr.mxu0 %v3322
        %3372 = vmatpush1.msra.mxu0 %v3319
        %3373 = vmatprep.subr.mxu0 0.0
        %3374 = vmatpush1.msra.mxu0 0.0
        %3375 = vmatprep.subr.mxu0 0.0
        %3376 = vmatpush1.msra.mxu0 0.0
        %3377 = vmatprep.subr.mxu0 0.0
        %3378 = vmatpush1.msra.mxu0 0.0
        %3379 = vmatprep.subr.mxu0 0.0
        %3380 = vmatpush1.msra.mxu0 0.0
        %3381 = vmatprep.subr.mxu0 0.0
        %3382 = vmatpush1.msra.mxu0 0.0
        %3383 = vmatprep.subr.mxu0 0.0
        %3384 = vmatpush1.msra.mxu0 0.0
        %3385 = vmatprep.subr.mxu0 0.0
        %3386 = vmatpush1.msra.mxu0 0.0
        %3387 = vmatprep.subr.mxu0 0.0
        %3388 = vmatpush1.msra.mxu0 0.0
        %3389 = vmatprep.subr.mxu0 0.0
        %3390 = vmatpush1.msra.mxu0 0.0
        %3391 = vmatprep.mubr.f32.mxu0 %v3316
        %3392 = vmatmul.mubr.f32.gmra.mrb[0].mxu0 %v3237
        %v3393 = vpop.f32.mrb[0].mxu0
        %v3394 = vadd.f32 %v3311, %v3393
        %v3395 = vpop.f32.mrb[0].mxu0
        %v3396 = vadd.f32 %v3311, %v3395
        %3397 = vdwg.mxu0
        %3398 = vmatprep.subr.mxu0 0.0
        %3399 = vmatpush1.msra.mxu0 %v3240
        %3400 = vmatprep.subr.mxu0 0.0
        %3401 = vmatpush1.msra.mxu0 %v3243
        %3402 = vmatprep.subr.mxu0 0.0
        %3403 = vmatpush1.msra.mxu0 %v3246
        %3404 = vmatprep.subr.mxu0 0.0
        %3405 = vmatpush1.msra.mxu0 %v3249
        %3406 = vmatprep.subr.mxu0 0.0
        %3407 = vmatpush1.msra.mxu0 %v3252
        %3408 = vmatprep.subr.mxu0 0.0
        %3409 = vmatpush1.msra.mxu0 %v3255
        %3410 = vmatprep.subr.mxu0 0.0
        %3411 = vmatpush1.msra.mxu0 %v3258
        %3412 = vmatprep.subr.mxu0 0.0
        %3413 = vmatpush1.msra.mxu0 %v3261
        %3414 = vmatprep.subr.mxu0 0.0
        %3415 = vmatpush1.msra.mxu0 %v3264
        %3416 = vmatprep.subr.mxu0 0.0
        %3417 = vmatpush1.msra.mxu0 %v3267
        %3418 = vmatprep.subr.mxu0 0.0
        %3419 = vmatpush1.msra.mxu0 %v3270
        %3420 = vmatprep.subr.mxu0 0.0
        %3421 = vmatpush1.msra.mxu0 %v3273
        %3422 = vmatprep.subr.mxu0 0.0
        %3423 = vmatpush1.msra.mxu0 %v3276
        %3424 = vmatprep.subr.mxu0 0.0
        %3425 = vmatpush1.msra.mxu0 %v3279
        %3426 = vmatprep.subr.mxu0 0.0
        %3427 = vmatpush1.msra.mxu0 %v3282
        %3428 = vmatprep.subr.mxu0 0.0
        %3429 = vmatpush1.msra.mxu0 %v3285
        %3430 = vmatprep.subr.mxu0 0.0
        %3431 = vmatpush1.msra.mxu0 %v3288
        %3432 = vmatprep.subr.mxu0 0.0
        %3433 = vmatpush1.msra.mxu0 %v3291
        %3434 = vmatprep.subr.mxu0 0.0
        %3435 = vmatpush1.msra.mxu0 %v3294
        %3436 = vmatprep.subr.mxu0 0.0
        %3437 = vmatpush1.msra.mxu0 %v3297
        %3438 = vmatprep.subr.mxu0 0.0
        %3439 = vmatpush1.msra.mxu0 %v3300
        %3440 = vmatprep.subr.mxu0 0.0
        %3441 = vmatpush1.msra.mxu0 %v3303
        %3442 = vmatprep.subr.mxu0 0.0
        %3443 = vmatpush1.msra.mxu0 %v3325
        %3444 = vmatprep.subr.mxu0 0.0
        %3445 = vmatpush1.msra.mxu0 0.0
        %3446 = vmatprep.subr.mxu0 0.0
        %3447 = vmatpush1.msra.mxu0 0.0
        %3448 = vmatprep.subr.mxu0 0.0
        %3449 = vmatpush1.msra.mxu0 0.0
        %3450 = vmatprep.subr.mxu0 0.0
        %3451 = vmatpush1.msra.mxu0 0.0
        %3452 = vmatprep.subr.mxu0 0.0
        %3453 = vmatpush1.msra.mxu0 0.0
        %3454 = vmatprep.subr.mxu0 0.0
        %3455 = vmatpush1.msra.mxu0 0.0
        %3456 = vmatprep.subr.mxu0 0.0
        %3457 = vmatpush1.msra.mxu0 0.0
        %3458 = vmatprep.subr.mxu0 0.0
        %3459 = vmatpush1.msra.mxu0 0.0
        %3460 = vmatprep.subr.mxu0 0.0
        %3461 = vmatpush1.msra.mxu0 0.0
        %3462 = vmatprep.mubr.f32.mxu0 %v3316
        %3463 = vmatmul.mubr.f32.gmra.mrb[0].mxu0 %v3237
        %v3464 = vpop.f32.mrb[0].mxu0
        %v3465 = vadd.f32 %v3311, %v3464
        %v3466 = vpop.f32.mrb[0].mxu0
        %3467 = vdwg.mxu0
        %v3468 = vmax.f32 %v3394, 0.0
        %v3469 = vmax.f32 %v3396, 0.0
        %v3470 = vmax.f32 %v3465, 0.0
        %v3471 = vmul.f32 %v3468, %v1084
        %v3472 = vmul.f32 %v3469, %v1088
        %v3473 = vmul.f32 %v3470, %v1092
        %v3477 = vrot.slane %v3471, 4
        %v3478 = vrot.slane %v3472, 4
        %v3479 = vrot.slane %v3473, 4
        %3483 = vst [vmem:[#allocation2 + $0x30] sm:$0xf0] %v3477
        %3484 = vst [vmem:[#allocation2 + $0x38] sm:$0xf0] %v3478
        %3485 = vst.msk [vmem:[#allocation2 + $0x40] sm:$0xf0] %vm737, %v3479
        %v3486 = vld [vmem:[#allocation2] sm:$0xff]
        %v3487 = vld [vmem:[#allocation2 + $0x8] sm:$0xff]
        %v3488 = vld [vmem:[#allocation2 + $0x10] sm:$0xff]
        %v3489 = vld [vmem:[#allocation2 + $0x18] sm:$0xff]
        %v3490 = vld [vmem:[#allocation2 + $0x20] sm:$0xff]
        %v3491 = vld [vmem:[#allocation2 + $0x28] sm:$0xff]
        %v3492 = vld [vmem:[#allocation2 + $0x30] sm:$0xff]
        %v3493 = vld [vmem:[#allocation2 + $0x38] sm:$0xff]
        %v3494 = vld [vmem:[#allocation2 + $0x40] sm:$0xff]
        %3504 = vrot.lane.b32.xlu0 %v3486, 19
        %v3505 = vpop.permute.xlu0 %3504
        %3506 = vrot.lane.b32.xlu0 %v3487, 19
        %v3507 = vpop.permute.xlu0 %3506
        %3508 = vrot.lane.b32.xlu0 %v3488, 19
        %v3509 = vpop.permute.xlu0 %3508
        %3510 = vrot.lane.b32.xlu0 %v3489, 19
        %v3511 = vpop.permute.xlu0 %3510
        %3512 = vrot.lane.b32.xlu0 %v3490, 19
        %v3513 = vpop.permute.xlu0 %3512
        %3514 = vrot.lane.b32.xlu0 %v3491, 19
        %v3515 = vpop.permute.xlu0 %3514
        %3516 = vrot.lane.b32.xlu0 %v3492, 19
        %v3517 = vpop.permute.xlu0 %3516
        %3518 = vrot.lane.b32.xlu0 %v3493, 19
        %v3519 = vpop.permute.xlu0 %3518
        %3520 = vrot.lane.b32.xlu0 %v3494, 19
        %v3521 = vpop.permute.xlu0 %3520
        %v3522 = vsel %vm701, %v3505, %v3507
        %v3523 = vsel %vm701, %v3507, %v3509
        %v3524 = vsel %vm701, %v3511, %v3513
        %v3525 = vsel %vm701, %v3513, %v3515
        %v3526 = vsel %vm701, %v3517, %v3519
        %v3527 = vsel %vm701, %v3519, %v3521
        %3537 = vst.msk [vmem:[#allocation3] sm:$0xff] %vm1128, %v3505
        %3538 = vst [vmem:[#allocation3 + $0x8] sm:$0xff] %v3522
        %3539 = vst.msk [vmem:[#allocation3 + $0x10] sm:$0xff] %vm1131, %v3523
        %3540 = vst.msk [vmem:[#allocation3 + $0x18] sm:$0xff] %vm1128, %v3511
        %3541 = vst [vmem:[#allocation3 + $0x20] sm:$0xff] %v3524
        %3542 = vst.msk [vmem:[#allocation3 + $0x28] sm:$0xff] %vm1131, %v3525
        %3543 = vst.msk [vmem:[#allocation3 + $0x30] sm:$0xff] %vm1128, %v3517
        %3544 = vst [vmem:[#allocation3 + $0x38] sm:$0xff] %v3526
        %3545 = vst.msk [vmem:[#allocation3 + $0x40] sm:$0xff] %vm1131, %v3527
        %3546 = vst.msk [vmem:[#allocation3] sm:$0xff] %vm701, 0.0
        %3547 = vst.msk [vmem:[#allocation3 + $0x18] sm:$0xff] %vm701, 0.0
        %3548 = vst.msk [vmem:[#allocation3 + $0x30] sm:$0xff] %vm701, 0.0
        %v3549 = vld [vmem:[#allocation2] sm:$0xff]
        %v3550 = vld [vmem:[#allocation2 + $0x8] sm:$0xff]
        %v3551 = vld [vmem:[#allocation2 + $0x10] sm:$0xff]
        %v3552 = vld [vmem:[#allocation2 + $0x18] sm:$0xff]
        %v3553 = vld [vmem:[#allocation2 + $0x20] sm:$0xff]
        %v3554 = vld [vmem:[#allocation2 + $0x28] sm:$0xff]
        %v3555 = vld [vmem:[#allocation2 + $0x30] sm:$0xff]
        %v3556 = vld [vmem:[#allocation2 + $0x38] sm:$0xff]
        %v3557 = vld [vmem:[#allocation2 + $0x40] sm:$0xff]
        %3567 = vrot.lane.b32.xlu0 %v3549, 18
        %v3568 = vpop.permute.xlu0 %3567
        %3569 = vrot.lane.b32.xlu0 %v3550, 18
        %v3570 = vpop.permute.xlu0 %3569
        %3571 = vrot.lane.b32.xlu0 %v3551, 18
        %v3572 = vpop.permute.xlu0 %3571
        %3573 = vrot.lane.b32.xlu0 %v3552, 18
        %v3574 = vpop.permute.xlu0 %3573
        %3575 = vrot.lane.b32.xlu0 %v3553, 18
        %v3576 = vpop.permute.xlu0 %3575
        %3577 = vrot.lane.b32.xlu0 %v3554, 18
        %v3578 = vpop.permute.xlu0 %3577
        %3579 = vrot.lane.b32.xlu0 %v3555, 18
        %v3580 = vpop.permute.xlu0 %3579
        %3581 = vrot.lane.b32.xlu0 %v3556, 18
        %v3582 = vpop.permute.xlu0 %3581
        %3583 = vrot.lane.b32.xlu0 %v3557, 18
        %v3584 = vpop.permute.xlu0 %3583
        %v3585 = vsel %vm728, %v3568, %v3570
        %v3586 = vsel %vm728, %v3570, %v3572
        %v3587 = vsel %vm728, %v3574, %v3576
        %v3588 = vsel %vm728, %v3576, %v3578
        %v3589 = vsel %vm728, %v3580, %v3582
        %v3590 = vsel %vm728, %v3582, %v3584
        %3600 = vst.msk [vmem:[#allocation3 + $0x48] sm:$0xff] %vm1151, %v3568
        %3601 = vst [vmem:[#allocation3 + $0x50] sm:$0xff] %v3585
        %3602 = vst.msk [vmem:[#allocation3 + $0x58] sm:$0xff] %vm1131, %v3586
        %3603 = vst.msk [vmem:[#allocation3 + $0x60] sm:$0xff] %vm1151, %v3574
        %3604 = vst [vmem:[#allocation3 + $0x68] sm:$0xff] %v3587
        %3605 = vst.msk [vmem:[#allocation3 + $0x70] sm:$0xff] %vm1131, %v3588
        %3606 = vst.msk [vmem:[#allocation3 + $0x78] sm:$0xff] %vm1151, %v3580
        %3607 = vst [vmem:[#allocation3 + $0x80] sm:$0xff] %v3589
        %3608 = vst.msk [vmem:[#allocation3 + $0x88] sm:$0xff] %vm1131, %v3590
        %3609 = vst.msk [vmem:[#allocation3 + $0x48] sm:$0xff] %vm728, 0.0
        %3610 = vst.msk [vmem:[#allocation3 + $0x60] sm:$0xff] %vm728, 0.0
        %3611 = vst.msk [vmem:[#allocation3 + $0x78] sm:$0xff] %vm728, 0.0
        %v3612 = vld [vmem:[#allocation2] sm:$0xff]
        %v3613 = vld [vmem:[#allocation2 + $0x8] sm:$0xff]
        %v3614 = vld [vmem:[#allocation2 + $0x10] sm:$0xff]
        %v3615 = vld [vmem:[#allocation2 + $0x18] sm:$0xff]
        %v3616 = vld [vmem:[#allocation2 + $0x20] sm:$0xff]
        %v3617 = vld [vmem:[#allocation2 + $0x28] sm:$0xff]
        %v3618 = vld [vmem:[#allocation2 + $0x30] sm:$0xff]
        %v3619 = vld [vmem:[#allocation2 + $0x38] sm:$0xff]
        %v3620 = vld [vmem:[#allocation2 + $0x40] sm:$0xff]
        %3630 = vrot.lane.b32.xlu0 %v3612, 17
        %v3631 = vpop.permute.xlu0 %3630
        %3632 = vrot.lane.b32.xlu0 %v3613, 17
        %v3633 = vpop.permute.xlu0 %3632
        %3634 = vrot.lane.b32.xlu0 %v3614, 17
        %v3635 = vpop.permute.xlu0 %3634
        %3636 = vrot.lane.b32.xlu0 %v3615, 17
        %v3637 = vpop.permute.xlu0 %3636
        %3638 = vrot.lane.b32.xlu0 %v3616, 17
        %v3639 = vpop.permute.xlu0 %3638
        %3640 = vrot.lane.b32.xlu0 %v3617, 17
        %v3641 = vpop.permute.xlu0 %3640
        %3642 = vrot.lane.b32.xlu0 %v3618, 17
        %v3643 = vpop.permute.xlu0 %3642
        %3644 = vrot.lane.b32.xlu0 %v3619, 17
        %v3645 = vpop.permute.xlu0 %3644
        %3646 = vrot.lane.b32.xlu0 %v3620, 17
        %v3647 = vpop.permute.xlu0 %3646
        %v3648 = vsel %vm753, %v3631, %v3633
        %v3649 = vsel %vm753, %v3633, %v3635
        %v3650 = vsel %vm753, %v3637, %v3639
        %v3651 = vsel %vm753, %v3639, %v3641
        %v3652 = vsel %vm753, %v3643, %v3645
        %v3653 = vsel %vm753, %v3645, %v3647
        %3663 = vst.msk [vmem:[#allocation3 + $0x90] sm:$0xff] %vm1173, %v3631
        %3664 = vst [vmem:[#allocation3 + $0x98] sm:$0xff] %v3648
        %3665 = vst.msk [vmem:[#allocation3 + $0xa0] sm:$0xff] %vm1131, %v3649
        %3666 = vst.msk [vmem:[#allocation3 + $0xa8] sm:$0xff] %vm1173, %v3637
        %3667 = vst [vmem:[#allocation3 + $0xb0] sm:$0xff] %v3650
        %3668 = vst.msk [vmem:[#allocation3 + $0xb8] sm:$0xff] %vm1131, %v3651
        %3669 = vst.msk [vmem:[#allocation3 + $0xc0] sm:$0xff] %vm1173, %v3643
        %3670 = vst [vmem:[#allocation3 + $0xc8] sm:$0xff] %v3652
        %3671 = vst.msk [vmem:[#allocation3 + $0xd0] sm:$0xff] %vm1131, %v3653
        %3672 = vst.msk [vmem:[#allocation3 + $0x90] sm:$0xff] %vm753, 0.0
        %3673 = vst.msk [vmem:[#allocation3 + $0xa8] sm:$0xff] %vm753, 0.0
        %3674 = vst.msk [vmem:[#allocation3 + $0xc0] sm:$0xff] %vm753, 0.0
        %v3675 = vld [vmem:[#allocation2] sm:$0xff]
        %v3676 = vld [vmem:[#allocation2 + $0x8] sm:$0xff]
        %v3677 = vld [vmem:[#allocation2 + $0x10] sm:$0xff]
        %v3678 = vld [vmem:[#allocation2 + $0x18] sm:$0xff]
        %v3679 = vld [vmem:[#allocation2 + $0x20] sm:$0xff]
        %v3680 = vld [vmem:[#allocation2 + $0x28] sm:$0xff]
        %v3681 = vld [vmem:[#allocation2 + $0x30] sm:$0xff]
        %v3682 = vld [vmem:[#allocation2 + $0x38] sm:$0xff]
        %v3683 = vld [vmem:[#allocation2 + $0x40] sm:$0xff]
        %3693 = vrot.lane.b32.xlu0 %v3675, 1
        %v3694 = vpop.permute.xlu0 %3693
        %3695 = vrot.lane.b32.xlu0 %v3676, 1
        %v3696 = vpop.permute.xlu0 %3695
        %3697 = vrot.lane.b32.xlu0 %v3677, 1
        %v3698 = vpop.permute.xlu0 %3697
        %3699 = vrot.lane.b32.xlu0 %v3678, 1
        %v3700 = vpop.permute.xlu0 %3699
        %3701 = vrot.lane.b32.xlu0 %v3679, 1
        %v3702 = vpop.permute.xlu0 %3701
        %3703 = vrot.lane.b32.xlu0 %v3680, 1
        %v3704 = vpop.permute.xlu0 %3703
        %3705 = vrot.lane.b32.xlu0 %v3681, 1
        %v3706 = vpop.permute.xlu0 %3705
        %3707 = vrot.lane.b32.xlu0 %v3682, 1
        %v3708 = vpop.permute.xlu0 %3707
        %3709 = vrot.lane.b32.xlu0 %v3683, 1
        %v3710 = vpop.permute.xlu0 %3709
        %v3711 = vsel %vm780, %v3694, %v3696
        %v3712 = vsel %vm780, %v3696, %v3698
        %v3713 = vsel %vm780, %v3700, %v3702
        %v3714 = vsel %vm780, %v3702, %v3704
        %v3715 = vsel %vm780, %v3706, %v3708
        %v3716 = vsel %vm780, %v3708, %v3710
        %3726 = vst.msk [vmem:[#allocation3 + $0xd8] sm:$0xff] %vm1195, %v3694
        %3727 = vst [vmem:[#allocation3 + $0xe0] sm:$0xff] %v3711
        %3728 = vst.msk [vmem:[#allocation3 + $0xe8] sm:$0xff] %vm1131, %v3712
        %3729 = vst.msk [vmem:[#allocation3 + $0xf0] sm:$0xff] %vm1195, %v3700
        %3730 = vst [vmem:[#allocation3 + $0xf8] sm:$0xff] %v3713
        %3731 = vst.msk [vmem:[#allocation3 + $0x100] sm:$0xff] %vm1131, %v3714
        %3732 = vst.msk [vmem:[#allocation3 + $0x108] sm:$0xff] %vm1195, %v3706
        %3733 = vst [vmem:[#allocation3 + $0x110] sm:$0xff] %v3715
        %3734 = vst.msk [vmem:[#allocation3 + $0x118] sm:$0xff] %vm1131, %v3716
        %3735 = vst.msk [vmem:[#allocation3 + $0xd8] sm:$0xff] %vm780, 0.0
        %3736 = vst.msk [vmem:[#allocation3 + $0xf0] sm:$0xff] %vm780, 0.0
        %3737 = vst.msk [vmem:[#allocation3 + $0x108] sm:$0xff] %vm780, 0.0
        %v3738 = vld [vmem:[#allocation2] sm:$0xff]
        %v3739 = vld [vmem:[#allocation2 + $0x8] sm:$0xff]
        %v3740 = vld [vmem:[#allocation2 + $0x10] sm:$0xff]
        %v3741 = vld [vmem:[#allocation2 + $0x18] sm:$0xff]
        %v3742 = vld [vmem:[#allocation2 + $0x20] sm:$0xff]
        %v3743 = vld [vmem:[#allocation2 + $0x28] sm:$0xff]
        %v3744 = vld [vmem:[#allocation2 + $0x30] sm:$0xff]
        %v3745 = vld [vmem:[#allocation2 + $0x38] sm:$0xff]
        %v3746 = vld [vmem:[#allocation2 + $0x40] sm:$0xff]
        %3747 = vst [vmem:[#allocation3 + $0x120] sm:$0xff] %v3738
        %3748 = vst [vmem:[#allocation3 + $0x128] sm:$0xff] %v3739
        %3749 = vst.msk [vmem:[#allocation3 + $0x130] sm:$0xff] %vm1131, %v3740
        %3750 = vst [vmem:[#allocation3 + $0x138] sm:$0xff] %v3741
        %3751 = vst [vmem:[#allocation3 + $0x140] sm:$0xff] %v3742
        %3752 = vst.msk [vmem:[#allocation3 + $0x148] sm:$0xff] %vm1131, %v3743
        %3753 = vst [vmem:[#allocation3 + $0x150] sm:$0xff] %v3744
        %3754 = vst [vmem:[#allocation3 + $0x158] sm:$0xff] %v3745
        %3755 = vst.msk [vmem:[#allocation3 + $0x160] sm:$0xff] %vm1131, %v3746
        %v3756 = vld [vmem:[#allocation2] sm:$0xff]
        %v3757 = vld [vmem:[#allocation2 + $0x8] sm:$0xff]
        %v3758 = vld [vmem:[#allocation2 + $0x10] sm:$0xff]
        %v3759 = vld [vmem:[#allocation2 + $0x18] sm:$0xff]
        %v3760 = vld [vmem:[#allocation2 + $0x20] sm:$0xff]
        %v3761 = vld [vmem:[#allocation2 + $0x28] sm:$0xff]
        %v3762 = vld [vmem:[#allocation2 + $0x30] sm:$0xff]
        %v3763 = vld [vmem:[#allocation2 + $0x38] sm:$0xff]
        %v3764 = vld [vmem:[#allocation2 + $0x40] sm:$0xff]
        %3774 = vrot.lane.b32.xlu0 %v3756, 127
        %v3775 = vpop.permute.xlu0 %3774
        %3776 = vrot.lane.b32.xlu0 %v3757, 127
        %v3777 = vpop.permute.xlu0 %3776
        %3778 = vrot.lane.b32.xlu0 %v3758, 127
        %v3779 = vpop.permute.xlu0 %3778
        %3780 = vrot.lane.b32.xlu0 %v3759, 127
        %v3781 = vpop.permute.xlu0 %3780
        %3782 = vrot.lane.b32.xlu0 %v3760, 127
        %v3783 = vpop.permute.xlu0 %3782
        %3784 = vrot.lane.b32.xlu0 %v3761, 127
        %v3785 = vpop.permute.xlu0 %3784
        %3786 = vrot.lane.b32.xlu0 %v3762, 127
        %v3787 = vpop.permute.xlu0 %3786
        %3788 = vrot.lane.b32.xlu0 %v3763, 127
        %v3789 = vpop.permute.xlu0 %3788
        %3790 = vrot.lane.b32.xlu0 %v3764, 127
        %v3791 = vpop.permute.xlu0 %3790
        %v3792 = vsel %vm813, %v3775, %v3777
        %v3793 = vsel %vm813, %v3777, %v3779
        %v3794 = vsel %vm813, %v3781, %v3783
        %v3795 = vsel %vm813, %v3783, %v3785
        %v3796 = vsel %vm813, %v3787, %v3789
        %v3797 = vsel %vm813, %v3789, %v3791
        %3807 = vst [vmem:[#allocation3 + $0x168] sm:$0xff] %v3792
        %3808 = vst [vmem:[#allocation3 + $0x170] sm:$0xff] %v3793
        %3809 = vst.msk [vmem:[#allocation3 + $0x178] sm:$0xff] %vm1225, %v3779
        %3810 = vst [vmem:[#allocation3 + $0x180] sm:$0xff] %v3794
        %3811 = vst [vmem:[#allocation3 + $0x188] sm:$0xff] %v3795
        %3812 = vst.msk [vmem:[#allocation3 + $0x190] sm:$0xff] %vm1225, %v3785
        %3813 = vst [vmem:[#allocation3 + $0x198] sm:$0xff] %v3796
        %3814 = vst [vmem:[#allocation3 + $0x1a0] sm:$0xff] %v3797
        %3815 = vst.msk [vmem:[#allocation3 + $0x1a8] sm:$0xff] %vm1225, %v3791
        %3816 = vst.msk [vmem:[#allocation3 + $0x178] sm:$0xff] %vm1227, 0.0
        %3817 = vst.msk [vmem:[#allocation3 + $0x190] sm:$0xff] %vm1227, 0.0
        %3818 = vst.msk [vmem:[#allocation3 + $0x1a8] sm:$0xff] %vm1227, 0.0
        %v3819 = vld [vmem:[#allocation2] sm:$0xff]
        %v3820 = vld [vmem:[#allocation2 + $0x8] sm:$0xff]
        %v3821 = vld [vmem:[#allocation2 + $0x10] sm:$0xff]
        %v3822 = vld [vmem:[#allocation2 + $0x18] sm:$0xff]
        %v3823 = vld [vmem:[#allocation2 + $0x20] sm:$0xff]
        %v3824 = vld [vmem:[#allocation2 + $0x28] sm:$0xff]
        %v3825 = vld [vmem:[#allocation2 + $0x30] sm:$0xff]
        %v3826 = vld [vmem:[#allocation2 + $0x38] sm:$0xff]
        %v3827 = vld [vmem:[#allocation2 + $0x40] sm:$0xff]
        %3837 = vrot.lane.b32.xlu0 %v3819, 111
        %v3838 = vpop.permute.xlu0 %3837
        %3839 = vrot.lane.b32.xlu0 %v3820, 111
        %v3840 = vpop.permute.xlu0 %3839
        %3841 = vrot.lane.b32.xlu0 %v3821, 111
        %v3842 = vpop.permute.xlu0 %3841
        %3843 = vrot.lane.b32.xlu0 %v3822, 111
        %v3844 = vpop.permute.xlu0 %3843
        %3845 = vrot.lane.b32.xlu0 %v3823, 111
        %v3846 = vpop.permute.xlu0 %3845
        %3847 = vrot.lane.b32.xlu0 %v3824, 111
        %v3848 = vpop.permute.xlu0 %3847
        %3849 = vrot.lane.b32.xlu0 %v3825, 111
        %v3850 = vpop.permute.xlu0 %3849
        %3851 = vrot.lane.b32.xlu0 %v3826, 111
        %v3852 = vpop.permute.xlu0 %3851
        %3853 = vrot.lane.b32.xlu0 %v3827, 111
        %v3854 = vpop.permute.xlu0 %3853
        %v3855 = vsel %vm837, %v3838, %v3840
        %v3856 = vsel %vm837, %v3840, %v3842
        %v3857 = vsel %vm837, %v3844, %v3846
        %v3858 = vsel %vm837, %v3846, %v3848
        %v3859 = vsel %vm837, %v3850, %v3852
        %v3860 = vsel %vm837, %v3852, %v3854
        %3870 = vst [vmem:[#allocation3 + $0x1b0] sm:$0xff] %v3855
        %3871 = vst [vmem:[#allocation3 + $0x1b8] sm:$0xff] %v3856
        %3872 = vst.msk [vmem:[#allocation3 + $0x1c0] sm:$0xff] %vm1248, %v3842
        %3873 = vst [vmem:[#allocation3 + $0x1c8] sm:$0xff] %v3857
        %3874 = vst [vmem:[#allocation3 + $0x1d0] sm:$0xff] %v3858
        %3875 = vst.msk [vmem:[#allocation3 + $0x1d8] sm:$0xff] %vm1248, %v3848
        %3876 = vst [vmem:[#allocation3 + $0x1e0] sm:$0xff] %v3859
        %3877 = vst [vmem:[#allocation3 + $0x1e8] sm:$0xff] %v3860
        %3878 = vst.msk [vmem:[#allocation3 + $0x1f0] sm:$0xff] %vm1248, %v3854
        %3879 = vst.msk [vmem:[#allocation3 + $0x1c0] sm:$0xff] %vm1250, 0.0
        %3880 = vst.msk [vmem:[#allocation3 + $0x1d8] sm:$0xff] %vm1250, 0.0
        %3881 = vst.msk [vmem:[#allocation3 + $0x1f0] sm:$0xff] %vm1250, 0.0
        %v3882 = vld [vmem:[#allocation2] sm:$0xff]
        %v3883 = vld [vmem:[#allocation2 + $0x8] sm:$0xff]
        %v3884 = vld [vmem:[#allocation2 + $0x10] sm:$0xff]
        %v3885 = vld [vmem:[#allocation2 + $0x18] sm:$0xff]
        %v3886 = vld [vmem:[#allocation2 + $0x20] sm:$0xff]
        %v3887 = vld [vmem:[#allocation2 + $0x28] sm:$0xff]
        %v3888 = vld [vmem:[#allocation2 + $0x30] sm:$0xff]
        %v3889 = vld [vmem:[#allocation2 + $0x38] sm:$0xff]
        %v3890 = vld [vmem:[#allocation2 + $0x40] sm:$0xff]
        %3900 = vrot.lane.b32.xlu0 %v3882, 110
        %v3901 = vpop.permute.xlu0 %3900
        %3902 = vrot.lane.b32.xlu0 %v3883, 110
        %v3903 = vpop.permute.xlu0 %3902
        %3904 = vrot.lane.b32.xlu0 %v3884, 110
        %v3905 = vpop.permute.xlu0 %3904
        %3906 = vrot.lane.b32.xlu0 %v3885, 110
        %v3907 = vpop.permute.xlu0 %3906
        %3908 = vrot.lane.b32.xlu0 %v3886, 110
        %v3909 = vpop.permute.xlu0 %3908
        %3910 = vrot.lane.b32.xlu0 %v3887, 110
        %v3911 = vpop.permute.xlu0 %3910
        %3912 = vrot.lane.b32.xlu0 %v3888, 110
        %v3913 = vpop.permute.xlu0 %3912
        %3914 = vrot.lane.b32.xlu0 %v3889, 110
        %v3915 = vpop.permute.xlu0 %3914
        %3916 = vrot.lane.b32.xlu0 %v3890, 110
        %v3917 = vpop.permute.xlu0 %3916
        %v3918 = vsel %vm864, %v3901, %v3903
        %v3919 = vsel %vm864, %v3903, %v3905
        %v3920 = vsel %vm864, %v3907, %v3909
        %v3921 = vsel %vm864, %v3909, %v3911
        %v3922 = vsel %vm864, %v3913, %v3915
        %v3923 = vsel %vm864, %v3915, %v3917
        %3933 = vst [vmem:[#allocation3 + $0x1f8] sm:$0xff] %v3918
        %3934 = vst [vmem:[#allocation3 + $0x200] sm:$0xff] %v3919
        %3935 = vst.msk [vmem:[#allocation3 + $0x208] sm:$0xff] %vm1271, %v3905
        %3936 = vst [vmem:[#allocation3 + $0x210] sm:$0xff] %v3920
        %3937 = vst [vmem:[#allocation3 + $0x218] sm:$0xff] %v3921
        %3938 = vst.msk [vmem:[#allocation3 + $0x220] sm:$0xff] %vm1271, %v3911
        %3939 = vst [vmem:[#allocation3 + $0x228] sm:$0xff] %v3922
        %3940 = vst [vmem:[#allocation3 + $0x230] sm:$0xff] %v3923
        %3941 = vst.msk [vmem:[#allocation3 + $0x238] sm:$0xff] %vm1271, %v3917
        %3942 = vst.msk [vmem:[#allocation3 + $0x208] sm:$0xff] %vm1273, 0.0
        %3943 = vst.msk [vmem:[#allocation3 + $0x220] sm:$0xff] %vm1273, 0.0
        %3944 = vst.msk [vmem:[#allocation3 + $0x238] sm:$0xff] %vm1273, 0.0
        %v3945 = vld [vmem:[#allocation2] sm:$0xff]
        %v3946 = vld [vmem:[#allocation2 + $0x8] sm:$0xff]
        %v3947 = vld [vmem:[#allocation2 + $0x10] sm:$0xff]
        %v3948 = vld [vmem:[#allocation2 + $0x18] sm:$0xff]
        %v3949 = vld [vmem:[#allocation2 + $0x20] sm:$0xff]
        %v3950 = vld [vmem:[#allocation2 + $0x28] sm:$0xff]
        %v3951 = vld [vmem:[#allocation2 + $0x30] sm:$0xff]
        %v3952 = vld [vmem:[#allocation2 + $0x38] sm:$0xff]
        %v3953 = vld [vmem:[#allocation2 + $0x40] sm:$0xff]
        %3963 = vrot.lane.b32.xlu0 %v3945, 109
        %v3964 = vpop.permute.xlu0 %3963
        %3965 = vrot.lane.b32.xlu0 %v3946, 109
        %v3966 = vpop.permute.xlu0 %3965
        %3967 = vrot.lane.b32.xlu0 %v3947, 109
        %v3968 = vpop.permute.xlu0 %3967
        %3969 = vrot.lane.b32.xlu0 %v3948, 109
        %v3970 = vpop.permute.xlu0 %3969
        %3971 = vrot.lane.b32.xlu0 %v3949, 109
        %v3972 = vpop.permute.xlu0 %3971
        %3973 = vrot.lane.b32.xlu0 %v3950, 109
        %v3974 = vpop.permute.xlu0 %3973
        %3975 = vrot.lane.b32.xlu0 %v3951, 109
        %v3976 = vpop.permute.xlu0 %3975
        %3977 = vrot.lane.b32.xlu0 %v3952, 109
        %v3978 = vpop.permute.xlu0 %3977
        %3979 = vrot.lane.b32.xlu0 %v3953, 109
        %v3980 = vpop.permute.xlu0 %3979
        %v3981 = vsel %vm888, %v3964, %v3966
        %v3982 = vsel %vm888, %v3966, %v3968
        %v3983 = vsel %vm888, %v3970, %v3972
        %v3984 = vsel %vm888, %v3972, %v3974
        %v3985 = vsel %vm888, %v3976, %v3978
        %v3986 = vsel %vm888, %v3978, %v3980
        %3996 = vst [vmem:[#allocation3 + $0x240] sm:$0xff] %v3981
        %3997 = vst [vmem:[#allocation3 + $0x248] sm:$0xff] %v3982
        %3998 = vst.msk [vmem:[#allocation3 + $0x250] sm:$0xff] %vm1294, %v3968
        %3999 = vst [vmem:[#allocation3 + $0x258] sm:$0xff] %v3983
        %4000 = vst [vmem:[#allocation3 + $0x260] sm:$0xff] %v3984
        %4001 = vst.msk [vmem:[#allocation3 + $0x268] sm:$0xff] %vm1294, %v3974
        %4002 = vst [vmem:[#allocation3 + $0x270] sm:$0xff] %v3985
        %4003 = vst [vmem:[#allocation3 + $0x278] sm:$0xff] %v3986
        %4004 = vst.msk [vmem:[#allocation3 + $0x280] sm:$0xff] %vm1294, %v3980
        %4005 = vst.msk [vmem:[#allocation3 + $0x250] sm:$0xff] %vm1296, 0.0
        %4006 = vst.msk [vmem:[#allocation3 + $0x268] sm:$0xff] %vm1296, 0.0
        %4007 = vst.msk [vmem:[#allocation3 + $0x280] sm:$0xff] %vm1296, 0.0
        %v4008 = vld [vmem:[%s14] sm:$0xff]
        %v4009 = vld [vmem:[#allocation3] sm:$0xff]
        %v4010 = vld [vmem:[#allocation3 + $0x8] sm:$0xff]
        %v4011 = vld [vmem:[#allocation3 + $0x10] sm:$0xff]
        %v4012 = vld [vmem:[#allocation3 + $0x18] sm:$0xff]
        %v4013 = vld [vmem:[#allocation3 + $0x20] sm:$0xff]
        %v4014 = vld [vmem:[#allocation3 + $0x28] sm:$0xff]
        %v4015 = vld [vmem:[#allocation3 + $0x30] sm:$0xff]
        %v4016 = vld [vmem:[#allocation3 + $0x38] sm:$0xff]
        %v4017 = vld [vmem:[#allocation3 + $0x40] sm:$0xff]
        %v4018 = vld [vmem:[#allocation3 + $0x48] sm:$0xff]
        %v4019 = vld [vmem:[#allocation3 + $0x50] sm:$0xff]
        %v4020 = vld [vmem:[#allocation3 + $0x58] sm:$0xff]
        %v4021 = vld [vmem:[#allocation3 + $0x60] sm:$0xff]
        %v4022 = vld [vmem:[#allocation3 + $0x68] sm:$0xff]
        %v4023 = vld [vmem:[#allocation3 + $0x70] sm:$0xff]
        %v4024 = vld [vmem:[#allocation3 + $0x78] sm:$0xff]
        %v4025 = vld [vmem:[#allocation3 + $0x80] sm:$0xff]
        %v4026 = vld [vmem:[#allocation3 + $0x88] sm:$0xff]
        %v4027 = vld [vmem:[#allocation3 + $0x90] sm:$0xff]
        %v4028 = vld [vmem:[#allocation3 + $0x98] sm:$0xff]
        %v4029 = vld [vmem:[#allocation3 + $0xa0] sm:$0xff]
        %v4030 = vld [vmem:[#allocation3 + $0xa8] sm:$0xff]
        %v4031 = vld [vmem:[#allocation3 + $0xb0] sm:$0xff]
        %v4032 = vld [vmem:[#allocation3 + $0xb8] sm:$0xff]
        %v4033 = vld [vmem:[#allocation3 + $0xc0] sm:$0xff]
        %v4034 = vld [vmem:[#allocation3 + $0xc8] sm:$0xff]
        %v4035 = vld [vmem:[#allocation3 + $0xd0] sm:$0xff]
        %v4036 = vld [vmem:[#allocation3 + $0xd8] sm:$0xff]
        %v4037 = vld [vmem:[#allocation3 + $0xe0] sm:$0xff]
        %v4038 = vld [vmem:[#allocation3 + $0xe8] sm:$0xff]
        %v4039 = vld [vmem:[#allocation3 + $0xf0] sm:$0xff]
        %v4040 = vld [vmem:[#allocation3 + $0xf8] sm:$0xff]
        %v4041 = vld [vmem:[#allocation3 + $0x100] sm:$0xff]
        %v4042 = vld [vmem:[#allocation3 + $0x108] sm:$0xff]
        %v4043 = vld [vmem:[#allocation3 + $0x110] sm:$0xff]
        %v4044 = vld [vmem:[#allocation3 + $0x118] sm:$0xff]
        %v4045 = vld [vmem:[#allocation3 + $0x120] sm:$0xff]
        %v4046 = vld [vmem:[#allocation3 + $0x128] sm:$0xff]
        %v4047 = vld [vmem:[#allocation3 + $0x130] sm:$0xff]
        %v4048 = vld [vmem:[#allocation3 + $0x138] sm:$0xff]
        %v4049 = vld [vmem:[#allocation3 + $0x140] sm:$0xff]
        %v4050 = vld [vmem:[#allocation3 + $0x148] sm:$0xff]
        %v4051 = vld [vmem:[#allocation3 + $0x150] sm:$0xff]
        %v4052 = vld [vmem:[#allocation3 + $0x158] sm:$0xff]
        %v4053 = vld [vmem:[#allocation3 + $0x160] sm:$0xff]
        %v4054 = vld [vmem:[#allocation3 + $0x168] sm:$0xff]
        %v4055 = vld [vmem:[#allocation3 + $0x170] sm:$0xff]
        %v4056 = vld [vmem:[#allocation3 + $0x178] sm:$0xff]
        %v4057 = vld [vmem:[#allocation3 + $0x180] sm:$0xff]
        %v4058 = vld [vmem:[#allocation3 + $0x188] sm:$0xff]
        %v4059 = vld [vmem:[#allocation3 + $0x190] sm:$0xff]
        %v4060 = vld [vmem:[#allocation3 + $0x198] sm:$0xff]
        %v4061 = vld [vmem:[#allocation3 + $0x1a0] sm:$0xff]
        %v4062 = vld [vmem:[#allocation3 + $0x1a8] sm:$0xff]
        %v4063 = vld [vmem:[#allocation3 + $0x1b0] sm:$0xff]
        %v4064 = vld [vmem:[#allocation3 + $0x1b8] sm:$0xff]
        %v4065 = vld [vmem:[#allocation3 + $0x1c0] sm:$0xff]
        %v4066 = vld [vmem:[#allocation3 + $0x1c8] sm:$0xff]
        %v4067 = vld [vmem:[#allocation3 + $0x1d0] sm:$0xff]
        %v4068 = vld [vmem:[#allocation3 + $0x1d8] sm:$0xff]
        %v4069 = vld [vmem:[#allocation3 + $0x1e0] sm:$0xff]
        %v4070 = vld [vmem:[#allocation3 + $0x1e8] sm:$0xff]
        %v4071 = vld [vmem:[#allocation3 + $0x1f0] sm:$0xff]
        %v4072 = vld [vmem:[#allocation3 + $0x1f8] sm:$0xff]
        %v4073 = vld [vmem:[#allocation3 + $0x200] sm:$0xff]
        %v4074 = vld [vmem:[#allocation3 + $0x208] sm:$0xff]
        %v4075 = vld [vmem:[#allocation3 + $0x210] sm:$0xff]
        %v4076 = vld [vmem:[#allocation3 + $0x218] sm:$0xff]
        %v4077 = vld [vmem:[#allocation3 + $0x220] sm:$0xff]
        %v4078 = vld [vmem:[#allocation3 + $0x228] sm:$0xff]
        %v4079 = vld [vmem:[#allocation3 + $0x230] sm:$0xff]
        %v4080 = vld [vmem:[#allocation3 + $0x238] sm:$0xff]
        %v4081 = vld [vmem:[#allocation3 + $0x240] sm:$0xff]
        %v4082 = vld [vmem:[#allocation3 + $0x248] sm:$0xff]
        %v4083 = vld [vmem:[#allocation3 + $0x250] sm:$0xff]
        %v4084 = vld [vmem:[#allocation3 + $0x258] sm:$0xff]
        %v4085 = vld [vmem:[#allocation3 + $0x260] sm:$0xff]
        %v4086 = vld [vmem:[#allocation3 + $0x268] sm:$0xff]
        %v4087 = vld [vmem:[#allocation3 + $0x270] sm:$0xff]
        %v4088 = vld [vmem:[#allocation3 + $0x278] sm:$0xff]
        %v4089 = vld [vmem:[#allocation3 + $0x280] sm:$0xff]
        %v4090 = vld [vmem:[%s15] sm:$0xf]
        %4092 = vset.pattern.permute.xlu0 0
        %4093 = vperm.xlu0 %4092, %v4090
        %v4094 = vpop.permute.xlu0 %4093
        %v4097 = vcombine.high %v4008, %v4008
        %vm4098 = vcmask 719872
        %v4099 = vsel %vm4098, %v4097, 0
        %4101 = vmatprep.subr.mxu0 %v4010
        %4102 = vmatpush1.msra.mxu0 %v4009
        %4103 = vmatprep.subr.mxu0 %v4013
        %4104 = vmatpush1.msra.mxu0 %v4012
        %4105 = vmatprep.subr.mxu0 %v4016
        %4106 = vmatpush1.msra.mxu0 %v4015
        %4107 = vmatprep.subr.mxu0 %v4019
        %4108 = vmatpush1.msra.mxu0 %v4018
        %4109 = vmatprep.subr.mxu0 %v4022
        %4110 = vmatpush1.msra.mxu0 %v4021
        %4111 = vmatprep.subr.mxu0 %v4025
        %4112 = vmatpush1.msra.mxu0 %v4024
        %4113 = vmatprep.subr.mxu0 %v4028
        %4114 = vmatpush1.msra.mxu0 %v4027
        %4115 = vmatprep.subr.mxu0 %v4031
        %4116 = vmatpush1.msra.mxu0 %v4030
        %4117 = vmatprep.subr.mxu0 %v4034
        %4118 = vmatpush1.msra.mxu0 %v4033
        %4119 = vmatprep.subr.mxu0 %v4037
        %4120 = vmatpush1.msra.mxu0 %v4036
        %4121 = vmatprep.subr.mxu0 %v4040
        %4122 = vmatpush1.msra.mxu0 %v4039
        %4123 = vmatprep.subr.mxu0 %v4043
        %4124 = vmatpush1.msra.mxu0 %v4042
        %4125 = vmatprep.subr.mxu0 %v4046
        %4126 = vmatpush1.msra.mxu0 %v4045
        %4127 = vmatprep.subr.mxu0 %v4049
        %4128 = vmatpush1.msra.mxu0 %v4048
        %4129 = vmatprep.subr.mxu0 %v4052
        %4130 = vmatpush1.msra.mxu0 %v4051
        %4131 = vmatprep.subr.mxu0 %v4055
        %4132 = vmatpush1.msra.mxu0 %v4054
        %4133 = vmatprep.subr.mxu0 %v4058
        %4134 = vmatpush1.msra.mxu0 %v4057
        %4135 = vmatprep.subr.mxu0 %v4061
        %4136 = vmatpush1.msra.mxu0 %v4060
        %4137 = vmatprep.subr.mxu0 %v4064
        %4138 = vmatpush1.msra.mxu0 %v4063
        %4139 = vmatprep.subr.mxu0 %v4067
        %4140 = vmatpush1.msra.mxu0 %v4066
        %4141 = vmatprep.subr.mxu0 %v4070
        %4142 = vmatpush1.msra.mxu0 %v4069
        %4143 = vmatprep.subr.mxu0 %v4073
        %4144 = vmatpush1.msra.mxu0 %v4072
        %4145 = vmatprep.subr.mxu0 %v4076
        %4146 = vmatpush1.msra.mxu0 %v4075
        %4147 = vmatprep.subr.mxu0 %v4079
        %4148 = vmatpush1.msra.mxu0 %v4078
        %4149 = vmatprep.subr.mxu0 %v4082
        %4150 = vmatpush1.msra.mxu0 %v4081
        %4151 = vmatprep.subr.mxu0 %v4085
        %4152 = vmatpush1.msra.mxu0 %v4084
        %4153 = vmatprep.subr.mxu0 %v4088
        %4154 = vmatpush1.msra.mxu0 %v4087
        %4155 = vmatprep.subr.mxu0 0.0
        %4156 = vmatpush1.msra.mxu0 0.0
        %4157 = vmatprep.subr.mxu0 0.0
        %4158 = vmatpush1.msra.mxu0 0.0
        %4159 = vmatprep.subr.mxu0 0.0
        %4160 = vmatpush1.msra.mxu0 0.0
        %4161 = vmatprep.subr.mxu0 0.0
        %4162 = vmatpush1.msra.mxu0 0.0
        %4163 = vmatprep.subr.mxu0 0.0
        %4164 = vmatpush1.msra.mxu0 0.0
        %4165 = vmatprep.mubr.f32.mxu0 %v4099
        %4166 = vmatmul.mubr.f32.gmra.mrb[0].mxu0 %v4008
        %v4167 = vpop.f32.mrb[0].mxu0
        %v4168 = vadd.f32 %v4094, %v4167
        %v4169 = vpop.f32.mrb[0].mxu0
        %v4170 = vadd.f32 %v4094, %v4169
        %4171 = vdwg.mxu0
        %4172 = vmatprep.subr.mxu0 0.0
        %4173 = vmatpush1.msra.mxu0 %v4011
        %4174 = vmatprep.subr.mxu0 0.0
        %4175 = vmatpush1.msra.mxu0 %v4014
        %4176 = vmatprep.subr.mxu0 0.0
        %4177 = vmatpush1.msra.mxu0 %v4017
        %4178 = vmatprep.subr.mxu0 0.0
        %4179 = vmatpush1.msra.mxu0 %v4020
        %4180 = vmatprep.subr.mxu0 0.0
        %4181 = vmatpush1.msra.mxu0 %v4023
        %4182 = vmatprep.subr.mxu0 0.0
        %4183 = vmatpush1.msra.mxu0 %v4026
        %4184 = vmatprep.subr.mxu0 0.0
        %4185 = vmatpush1.msra.mxu0 %v4029
        %4186 = vmatprep.subr.mxu0 0.0
        %4187 = vmatpush1.msra.mxu0 %v4032
        %4188 = vmatprep.subr.mxu0 0.0
        %4189 = vmatpush1.msra.mxu0 %v4035
        %4190 = vmatprep.subr.mxu0 0.0
        %4191 = vmatpush1.msra.mxu0 %v4038
        %4192 = vmatprep.subr.mxu0 0.0
        %4193 = vmatpush1.msra.mxu0 %v4041
        %4194 = vmatprep.subr.mxu0 0.0
        %4195 = vmatpush1.msra.mxu0 %v4044
        %4196 = vmatprep.subr.mxu0 0.0
        %4197 = vmatpush1.msra.mxu0 %v4047
        %4198 = vmatprep.subr.mxu0 0.0
        %4199 = vmatpush1.msra.mxu0 %v4050
        %4200 = vmatprep.subr.mxu0 0.0
        %4201 = vmatpush1.msra.mxu0 %v4053
        %4202 = vmatprep.subr.mxu0 0.0
        %4203 = vmatpush1.msra.mxu0 %v4056
        %4204 = vmatprep.subr.mxu0 0.0
        %4205 = vmatpush1.msra.mxu0 %v4059
        %4206 = vmatprep.subr.mxu0 0.0
        %4207 = vmatpush1.msra.mxu0 %v4062
        %4208 = vmatprep.subr.mxu0 0.0
        %4209 = vmatpush1.msra.mxu0 %v4065
        %4210 = vmatprep.subr.mxu0 0.0
        %4211 = vmatpush1.msra.mxu0 %v4068
        %4212 = vmatprep.subr.mxu0 0.0
        %4213 = vmatpush1.msra.mxu0 %v4071
        %4214 = vmatprep.subr.mxu0 0.0
        %4215 = vmatpush1.msra.mxu0 %v4074
        %4216 = vmatprep.subr.mxu0 0.0
        %4217 = vmatpush1.msra.mxu0 %v4077
        %4218 = vmatprep.subr.mxu0 0.0
        %4219 = vmatpush1.msra.mxu0 %v4080
        %4220 = vmatprep.subr.mxu0 0.0
        %4221 = vmatpush1.msra.mxu0 %v4083
        %4222 = vmatprep.subr.mxu0 0.0
        %4223 = vmatpush1.msra.mxu0 %v4086
        %4224 = vmatprep.subr.mxu0 0.0
        %4225 = vmatpush1.msra.mxu0 %v4089
        %4226 = vmatprep.subr.mxu0 0.0
        %4227 = vmatpush1.msra.mxu0 0.0
        %4228 = vmatprep.subr.mxu0 0.0
        %4229 = vmatpush1.msra.mxu0 0.0
        %4230 = vmatprep.subr.mxu0 0.0
        %4231 = vmatpush1.msra.mxu0 0.0
        %4232 = vmatprep.subr.mxu0 0.0
        %4233 = vmatpush1.msra.mxu0 0.0
        %4234 = vmatprep.subr.mxu0 0.0
        %4235 = vmatpush1.msra.mxu0 0.0
        %4236 = vmatprep.mubr.f32.mxu0 %v4099
        %4237 = vmatmul.mubr.f32.gmra.mrb[0].mxu0 %v4008
        %v4238 = vpop.f32.mrb[0].mxu0
        %v4239 = vadd.f32 %v4094, %v4238
        %v4240 = vpop.f32.mrb[0].mxu0
        %4241 = vdwg.mxu0
        %v4242 = vmax.f32 %v4168, 0.0
        %v4243 = vmax.f32 %v4170, 0.0
        %v4244 = vmax.f32 %v4239, 0.0
        %v4245 = vmul.f32 %v4242, %v1084
        %v4246 = vmul.f32 %v4243, %v1088
        %v4247 = vmul.f32 %v4244, %v1092
        %4248 = vst [vmem:[#allocation2 + $0x48] sm:$0xf] %v4245
        %4249 = vst [vmem:[#allocation2 + $0x50] sm:$0xf] %v4246
        %4250 = vst.msk [vmem:[#allocation2 + $0x58] sm:$0xf] %vm687, %v4247
        %v4251 = vld [vmem:[#allocation2] sm:$0xff]
        %v4252 = vld [vmem:[#allocation2 + $0x8] sm:$0xff]
        %v4253 = vld [vmem:[#allocation2 + $0x10] sm:$0xff]
        %v4254 = vld [vmem:[#allocation2 + $0x18] sm:$0xff]
        %v4255 = vld [vmem:[#allocation2 + $0x20] sm:$0xff]
        %v4256 = vld [vmem:[#allocation2 + $0x28] sm:$0xff]
        %v4257 = vld [vmem:[#allocation2 + $0x30] sm:$0xff]
        %v4258 = vld [vmem:[#allocation2 + $0x38] sm:$0xff]
        %v4259 = vld [vmem:[#allocation2 + $0x40] sm:$0xff]
        %v4260 = vld [vmem:[#allocation2 + $0x48] sm:$0xf]
        %v4261 = vld [vmem:[#allocation2 + $0x50] sm:$0xf]
        %v4262 = vld [vmem:[#allocation2 + $0x58] sm:$0xf]
        %4275 = vrot.lane.b32.xlu0 %v4251, 19
        %v4276 = vpop.permute.xlu0 %4275
        %4277 = vrot.lane.b32.xlu0 %v4252, 19
        %v4278 = vpop.permute.xlu0 %4277
        %4279 = vrot.lane.b32.xlu0 %v4253, 19
        %v4280 = vpop.permute.xlu0 %4279
        %4281 = vrot.lane.b32.xlu0 %v4254, 19
        %v4282 = vpop.permute.xlu0 %4281
        %4283 = vrot.lane.b32.xlu0 %v4255, 19
        %v4284 = vpop.permute.xlu0 %4283
        %4285 = vrot.lane.b32.xlu0 %v4256, 19
        %v4286 = vpop.permute.xlu0 %4285
        %4287 = vrot.lane.b32.xlu0 %v4257, 19
        %v4288 = vpop.permute.xlu0 %4287
        %4289 = vrot.lane.b32.xlu0 %v4258, 19
        %v4290 = vpop.permute.xlu0 %4289
        %4291 = vrot.lane.b32.xlu0 %v4259, 19
        %v4292 = vpop.permute.xlu0 %4291
        %4293 = vrot.lane.b32.xlu0 %v4260, 19
        %v4294 = vpop.permute.xlu0 %4293
        %4295 = vrot.lane.b32.xlu0 %v4261, 19
        %v4296 = vpop.permute.xlu0 %4295
        %4297 = vrot.lane.b32.xlu0 %v4262, 19
        %v4298 = vpop.permute.xlu0 %4297
        %v4299 = vsel %vm701, %v4276, %v4278
        %v4300 = vsel %vm701, %v4278, %v4280
        %v4301 = vsel %vm701, %v4282, %v4284
        %v4302 = vsel %vm701, %v4284, %v4286
        %v4303 = vsel %vm701, %v4288, %v4290
        %v4304 = vsel %vm701, %v4290, %v4292
        %v4305 = vsel %vm701, %v4294, %v4296
        %v4306 = vsel %vm701, %v4296, %v4298
        %4319 = vst.msk [vmem:[#allocation3] sm:$0xff] %vm1128, %v4276
        %4320 = vst [vmem:[#allocation3 + $0x8] sm:$0xff] %v4299
        %4321 = vst.msk [vmem:[#allocation3 + $0x10] sm:$0xff] %vm1131, %v4300
        %4322 = vst.msk [vmem:[#allocation3 + $0x18] sm:$0xff] %vm1128, %v4282
        %4323 = vst [vmem:[#allocation3 + $0x20] sm:$0xff] %v4301
        %4324 = vst.msk [vmem:[#allocation3 + $0x28] sm:$0xff] %vm1131, %v4302
        %4325 = vst.msk [vmem:[#allocation3 + $0x30] sm:$0xff] %vm1128, %v4288
        %4326 = vst [vmem:[#allocation3 + $0x38] sm:$0xff] %v4303
        %4327 = vst.msk [vmem:[#allocation3 + $0x40] sm:$0xff] %vm1131, %v4304
        %4328 = vst.msk [vmem:[#allocation3 + $0x48] sm:$0xf] %vm707, %v4294
        %4329 = vst [vmem:[#allocation3 + $0x50] sm:$0xf] %v4305
        %4330 = vst.msk [vmem:[#allocation3 + $0x58] sm:$0xf] %vm687, %v4306
        %4331 = vst.msk [vmem:[#allocation3] sm:$0xff] %vm701, 0.0
        %4332 = vst.msk [vmem:[#allocation3 + $0x18] sm:$0xff] %vm701, 0.0
        %4333 = vst.msk [vmem:[#allocation3 + $0x30] sm:$0xff] %vm701, 0.0
        %4334 = vst.msk [vmem:[#allocation3 + $0x48] sm:$0xf] %vm711, 0.0
        %v4335 = vld [vmem:[#allocation2] sm:$0xff]
        %v4336 = vld [vmem:[#allocation2 + $0x8] sm:$0xff]
        %v4337 = vld [vmem:[#allocation2 + $0x10] sm:$0xff]
        %v4338 = vld [vmem:[#allocation2 + $0x18] sm:$0xff]
        %v4339 = vld [vmem:[#allocation2 + $0x20] sm:$0xff]
        %v4340 = vld [vmem:[#allocation2 + $0x28] sm:$0xff]
        %v4341 = vld [vmem:[#allocation2 + $0x30] sm:$0xff]
        %v4342 = vld [vmem:[#allocation2 + $0x38] sm:$0xff]
        %v4343 = vld [vmem:[#allocation2 + $0x40] sm:$0xff]
        %v4344 = vld [vmem:[#allocation2 + $0x48] sm:$0xf]
        %v4345 = vld [vmem:[#allocation2 + $0x50] sm:$0xf]
        %v4346 = vld [vmem:[#allocation2 + $0x58] sm:$0xf]
        %v4359 = vrot.slane %v4335, 4
        %v4360 = vrot.slane %v4336, 4
        %v4361 = vrot.slane %v4337, 4
        %v4362 = vrot.slane %v4338, 4
        %v4363 = vsel %vm926, %v4359, %v4362
        %v4364 = vrot.slane %v4339, 4
        %v4365 = vsel %vm926, %v4360, %v4364
        %v4366 = vrot.slane %v4340, 4
        %v4367 = vsel %vm926, %v4361, %v4366
        %v4368 = vrot.slane %v4341, 4
        %v4369 = vsel %vm926, %v4362, %v4368
        %v4370 = vrot.slane %v4342, 4
        %v4371 = vsel %vm926, %v4364, %v4370
        %v4372 = vrot.slane %v4343, 4
        %v4373 = vsel %vm926, %v4366, %v4372
        %v4374 = vrot.slane %v4344, 4
        %v4375 = vsel %vm926, %v4368, %v4374
        %v4376 = vrot.slane %v4345, 4
        %v4377 = vsel %vm926, %v4370, %v4376
        %v4378 = vrot.slane %v4346, 4
        %v4379 = vsel %vm926, %v4372, %v4378
        %4380 = vrot.lane.b32.xlu0 %v4359, 18
        %v4381 = vpop.permute.xlu0 %4380
        %4382 = vrot.lane.b32.xlu0 %v4360, 18
        %v4383 = vpop.permute.xlu0 %4382
        %4384 = vrot.lane.b32.xlu0 %v4361, 18
        %v4385 = vpop.permute.xlu0 %4384
        %4386 = vrot.lane.b32.xlu0 %v4363, 18
        %v4387 = vpop.permute.xlu0 %4386
        %4388 = vrot.lane.b32.xlu0 %v4365, 18
        %v4389 = vpop.permute.xlu0 %4388
        %4390 = vrot.lane.b32.xlu0 %v4367, 18
        %v4391 = vpop.permute.xlu0 %4390
        %4392 = vrot.lane.b32.xlu0 %v4369, 18
        %v4393 = vpop.permute.xlu0 %4392
        %4394 = vrot.lane.b32.xlu0 %v4371, 18
        %v4395 = vpop.permute.xlu0 %4394
        %4396 = vrot.lane.b32.xlu0 %v4373, 18
        %v4397 = vpop.permute.xlu0 %4396
        %4398 = vrot.lane.b32.xlu0 %v4375, 18
        %v4399 = vpop.permute.xlu0 %4398
        %4400 = vrot.lane.b32.xlu0 %v4377, 18
        %v4401 = vpop.permute.xlu0 %4400
        %4402 = vrot.lane.b32.xlu0 %v4379, 18
        %v4403 = vpop.permute.xlu0 %4402
        %v4404 = vsel %vm728, %v4381, %v4383
        %v4405 = vsel %vm728, %v4383, %v4385
        %v4406 = vsel %vm728, %v4387, %v4389
        %v4407 = vsel %vm728, %v4389, %v4391
        %v4408 = vsel %vm728, %v4393, %v4395
        %v4409 = vsel %vm728, %v4395, %v4397
        %v4410 = vsel %vm728, %v4399, %v4401
        %v4411 = vsel %vm728, %v4401, %v4403
        %4424 = vst.msk [vmem:[#allocation3 + $0x48] sm:$0xf0] %vm734, %v4381
        %4425 = vst [vmem:[#allocation3 + $0x50] sm:$0xf0] %v4404
        %4426 = vst.msk [vmem:[#allocation3 + $0x58] sm:$0xf0] %vm737, %v4405
        %4427 = vst.msk [vmem:[#allocation3 + $0x60] sm:$0xff] %vm1151, %v4387
        %4428 = vst [vmem:[#allocation3 + $0x68] sm:$0xff] %v4406
        %4429 = vst.msk [vmem:[#allocation3 + $0x70] sm:$0xff] %vm1131, %v4407
        %4430 = vst.msk [vmem:[#allocation3 + $0x78] sm:$0xff] %vm1151, %v4393
        %4431 = vst [vmem:[#allocation3 + $0x80] sm:$0xff] %v4408
        %4432 = vst.msk [vmem:[#allocation3 + $0x88] sm:$0xff] %vm1131, %v4409
        %4433 = vst.msk [vmem:[#allocation3 + $0x90] sm:$0xff] %vm1151, %v4399
        %4434 = vst [vmem:[#allocation3 + $0x98] sm:$0xff] %v4410
        %4435 = vst.msk [vmem:[#allocation3 + $0xa0] sm:$0xff] %vm1131, %v4411
        %4436 = vst.msk [vmem:[#allocation3 + $0x48] sm:$0xf0] %vm739, 0.0
        %4437 = vst.msk [vmem:[#allocation3 + $0x60] sm:$0xff] %vm728, 0.0
        %4438 = vst.msk [vmem:[#allocation3 + $0x78] sm:$0xff] %vm728, 0.0
        %4439 = vst.msk [vmem:[#allocation3 + $0x90] sm:$0xff] %vm728, 0.0
        %v4440 = vld [vmem:[#allocation2] sm:$0xff]
        %v4441 = vld [vmem:[#allocation2 + $0x8] sm:$0xff]
        %v4442 = vld [vmem:[#allocation2 + $0x10] sm:$0xff]
        %v4443 = vld [vmem:[#allocation2 + $0x18] sm:$0xff]
        %v4444 = vld [vmem:[#allocation2 + $0x20] sm:$0xff]
        %v4445 = vld [vmem:[#allocation2 + $0x28] sm:$0xff]
        %v4446 = vld [vmem:[#allocation2 + $0x30] sm:$0xff]
        %v4447 = vld [vmem:[#allocation2 + $0x38] sm:$0xff]
        %v4448 = vld [vmem:[#allocation2 + $0x40] sm:$0xff]
        %v4449 = vld [vmem:[#allocation2 + $0x48] sm:$0xf]
        %v4450 = vld [vmem:[#allocation2 + $0x50] sm:$0xf]
        %v4451 = vld [vmem:[#allocation2 + $0x58] sm:$0xf]
        %4464 = vrot.lane.b32.xlu0 %v4440, 17
        %v4465 = vpop.permute.xlu0 %4464
        %4466 = vrot.lane.b32.xlu0 %v4441, 17
        %v4467 = vpop.permute.xlu0 %4466
        %4468 = vrot.lane.b32.xlu0 %v4442, 17
        %v4469 = vpop.permute.xlu0 %4468
        %4470 = vrot.lane.b32.xlu0 %v4443, 17
        %v4471 = vpop.permute.xlu0 %4470
        %4472 = vrot.lane.b32.xlu0 %v4444, 17
        %v4473 = vpop.permute.xlu0 %4472
        %4474 = vrot.lane.b32.xlu0 %v4445, 17
        %v4475 = vpop.permute.xlu0 %4474
        %4476 = vrot.lane.b32.xlu0 %v4446, 17
        %v4477 = vpop.permute.xlu0 %4476
        %4478 = vrot.lane.b32.xlu0 %v4447, 17
        %v4479 = vpop.permute.xlu0 %4478
        %4480 = vrot.lane.b32.xlu0 %v4448, 17
        %v4481 = vpop.permute.xlu0 %4480
        %4482 = vrot.lane.b32.xlu0 %v4449, 17
        %v4483 = vpop.permute.xlu0 %4482
        %4484 = vrot.lane.b32.xlu0 %v4450, 17
        %v4485 = vpop.permute.xlu0 %4484
        %4486 = vrot.lane.b32.xlu0 %v4451, 17
        %v4487 = vpop.permute.xlu0 %4486
        %v4488 = vsel %vm753, %v4465, %v4467
        %v4489 = vsel %vm753, %v4467, %v4469
        %v4490 = vsel %vm753, %v4471, %v4473
        %v4491 = vsel %vm753, %v4473, %v4475
        %v4492 = vsel %vm753, %v4477, %v4479
        %v4493 = vsel %vm753, %v4479, %v4481
        %v4494 = vsel %vm753, %v4483, %v4485
        %v4495 = vsel %vm753, %v4485, %v4487
        %4508 = vst.msk [vmem:[#allocation3 + $0xa8] sm:$0xff] %vm1173, %v4465
        %4509 = vst [vmem:[#allocation3 + $0xb0] sm:$0xff] %v4488
        %4510 = vst.msk [vmem:[#allocation3 + $0xb8] sm:$0xff] %vm1131, %v4489
        %4511 = vst.msk [vmem:[#allocation3 + $0xc0] sm:$0xff] %vm1173, %v4471
        %4512 = vst [vmem:[#allocation3 + $0xc8] sm:$0xff] %v4490
        %4513 = vst.msk [vmem:[#allocation3 + $0xd0] sm:$0xff] %vm1131, %v4491
        %4514 = vst.msk [vmem:[#allocation3 + $0xd8] sm:$0xff] %vm1173, %v4477
        %4515 = vst [vmem:[#allocation3 + $0xe0] sm:$0xff] %v4492
        %4516 = vst.msk [vmem:[#allocation3 + $0xe8] sm:$0xff] %vm1131, %v4493
        %4517 = vst.msk [vmem:[#allocation3 + $0xf0] sm:$0xf] %vm759, %v4483
        %4518 = vst [vmem:[#allocation3 + $0xf8] sm:$0xf] %v4494
        %4519 = vst.msk [vmem:[#allocation3 + $0x100] sm:$0xf] %vm687, %v4495
        %4520 = vst.msk [vmem:[#allocation3 + $0xa8] sm:$0xff] %vm753, 0.0
        %4521 = vst.msk [vmem:[#allocation3 + $0xc0] sm:$0xff] %vm753, 0.0
        %4522 = vst.msk [vmem:[#allocation3 + $0xd8] sm:$0xff] %vm753, 0.0
        %4523 = vst.msk [vmem:[#allocation3 + $0xf0] sm:$0xf] %vm763, 0.0
        %v4524 = vld [vmem:[#allocation2] sm:$0xff]
        %v4525 = vld [vmem:[#allocation2 + $0x8] sm:$0xff]
        %v4526 = vld [vmem:[#allocation2 + $0x10] sm:$0xff]
        %v4527 = vld [vmem:[#allocation2 + $0x18] sm:$0xff]
        %v4528 = vld [vmem:[#allocation2 + $0x20] sm:$0xff]
        %v4529 = vld [vmem:[#allocation2 + $0x28] sm:$0xff]
        %v4530 = vld [vmem:[#allocation2 + $0x30] sm:$0xff]
        %v4531 = vld [vmem:[#allocation2 + $0x38] sm:$0xff]
        %v4532 = vld [vmem:[#allocation2 + $0x40] sm:$0xff]
        %v4533 = vld [vmem:[#allocation2 + $0x48] sm:$0xf]
        %v4534 = vld [vmem:[#allocation2 + $0x50] sm:$0xf]
        %v4535 = vld [vmem:[#allocation2 + $0x58] sm:$0xf]
        %v4548 = vrot.slane %v4524, 4
        %v4549 = vrot.slane %v4525, 4
        %v4550 = vrot.slane %v4526, 4
        %v4551 = vrot.slane %v4527, 4
        %v4552 = vsel %vm926, %v4548, %v4551
        %v4553 = vrot.slane %v4528, 4
        %v4554 = vsel %vm926, %v4549, %v4553
        %v4555 = vrot.slane %v4529, 4
        %v4556 = vsel %vm926, %v4550, %v4555
        %v4557 = vrot.slane %v4530, 4
        %v4558 = vsel %vm926, %v4551, %v4557
        %v4559 = vrot.slane %v4531, 4
        %v4560 = vsel %vm926, %v4553, %v4559
        %v4561 = vrot.slane %v4532, 4
        %v4562 = vsel %vm926, %v4555, %v4561
        %v4563 = vrot.slane %v4533, 4
        %v4564 = vsel %vm926, %v4557, %v4563
        %v4565 = vrot.slane %v4534, 4
        %v4566 = vsel %vm926, %v4559, %v4565
        %v4567 = vrot.slane %v4535, 4
        %v4568 = vsel %vm926, %v4561, %v4567
        %4569 = vrot.lane.b32.xlu0 %v4548, 1
        %v4570 = vpop.permute.xlu0 %4569
        %4571 = vrot.lane.b32.xlu0 %v4549, 1
        %v4572 = vpop.permute.xlu0 %4571
        %4573 = vrot.lane.b32.xlu0 %v4550, 1
        %v4574 = vpop.permute.xlu0 %4573
        %4575 = vrot.lane.b32.xlu0 %v4552, 1
        %v4576 = vpop.permute.xlu0 %4575
        %4577 = vrot.lane.b32.xlu0 %v4554, 1
        %v4578 = vpop.permute.xlu0 %4577
        %4579 = vrot.lane.b32.xlu0 %v4556, 1
        %v4580 = vpop.permute.xlu0 %4579
        %4581 = vrot.lane.b32.xlu0 %v4558, 1
        %v4582 = vpop.permute.xlu0 %4581
        %4583 = vrot.lane.b32.xlu0 %v4560, 1
        %v4584 = vpop.permute.xlu0 %4583
        %4585 = vrot.lane.b32.xlu0 %v4562, 1
        %v4586 = vpop.permute.xlu0 %4585
        %4587 = vrot.lane.b32.xlu0 %v4564, 1
        %v4588 = vpop.permute.xlu0 %4587
        %4589 = vrot.lane.b32.xlu0 %v4566, 1
        %v4590 = vpop.permute.xlu0 %4589
        %4591 = vrot.lane.b32.xlu0 %v4568, 1
        %v4592 = vpop.permute.xlu0 %4591
        %v4593 = vsel %vm780, %v4570, %v4572
        %v4594 = vsel %vm780, %v4572, %v4574
        %v4595 = vsel %vm780, %v4576, %v4578
        %v4596 = vsel %vm780, %v4578, %v4580
        %v4597 = vsel %vm780, %v4582, %v4584
        %v4598 = vsel %vm780, %v4584, %v4586
        %v4599 = vsel %vm780, %v4588, %v4590
        %v4600 = vsel %vm780, %v4590, %v4592
        %4613 = vst.msk [vmem:[#allocation3 + $0xf0] sm:$0xf0] %vm786, %v4570
        %4614 = vst [vmem:[#allocation3 + $0xf8] sm:$0xf0] %v4593
        %4615 = vst.msk [vmem:[#allocation3 + $0x100] sm:$0xf0] %vm737, %v4594
        %4616 = vst.msk [vmem:[#allocation3 + $0x108] sm:$0xff] %vm1195, %v4576
        %4617 = vst [vmem:[#allocation3 + $0x110] sm:$0xff] %v4595
        %4618 = vst.msk [vmem:[#allocation3 + $0x118] sm:$0xff] %vm1131, %v4596
        %4619 = vst.msk [vmem:[#allocation3 + $0x120] sm:$0xff] %vm1195, %v4582
        %4620 = vst [vmem:[#allocation3 + $0x128] sm:$0xff] %v4597
        %4621 = vst.msk [vmem:[#allocation3 + $0x130] sm:$0xff] %vm1131, %v4598
        %4622 = vst.msk [vmem:[#allocation3 + $0x138] sm:$0xff] %vm1195, %v4588
        %4623 = vst [vmem:[#allocation3 + $0x140] sm:$0xff] %v4599
        %4624 = vst.msk [vmem:[#allocation3 + $0x148] sm:$0xff] %vm1131, %v4600
        %4625 = vst.msk [vmem:[#allocation3 + $0xf0] sm:$0xf0] %vm790, 0.0
        %4626 = vst.msk [vmem:[#allocation3 + $0x108] sm:$0xff] %vm780, 0.0
        %4627 = vst.msk [vmem:[#allocation3 + $0x120] sm:$0xff] %vm780, 0.0
        %4628 = vst.msk [vmem:[#allocation3 + $0x138] sm:$0xff] %vm780, 0.0
        %v4629 = vld [vmem:[#allocation2] sm:$0xff]
        %v4630 = vld [vmem:[#allocation2 + $0x8] sm:$0xff]
        %v4631 = vld [vmem:[#allocation2 + $0x10] sm:$0xff]
        %v4632 = vld [vmem:[#allocation2 + $0x18] sm:$0xff]
        %v4633 = vld [vmem:[#allocation2 + $0x20] sm:$0xff]
        %v4634 = vld [vmem:[#allocation2 + $0x28] sm:$0xff]
        %v4635 = vld [vmem:[#allocation2 + $0x30] sm:$0xff]
        %v4636 = vld [vmem:[#allocation2 + $0x38] sm:$0xff]
        %v4637 = vld [vmem:[#allocation2 + $0x40] sm:$0xff]
        %v4638 = vld [vmem:[#allocation2 + $0x48] sm:$0xf]
        %v4639 = vld [vmem:[#allocation2 + $0x50] sm:$0xf]
        %v4640 = vld [vmem:[#allocation2 + $0x58] sm:$0xf]
        %4641 = vst [vmem:[#allocation3 + $0x150] sm:$0xff] %v4629
        %4642 = vst [vmem:[#allocation3 + $0x158] sm:$0xff] %v4630
        %4643 = vst.msk [vmem:[#allocation3 + $0x160] sm:$0xff] %vm1131, %v4631
        %4644 = vst [vmem:[#allocation3 + $0x168] sm:$0xff] %v4632
        %4645 = vst [vmem:[#allocation3 + $0x170] sm:$0xff] %v4633
        %4646 = vst.msk [vmem:[#allocation3 + $0x178] sm:$0xff] %vm1131, %v4634
        %4647 = vst [vmem:[#allocation3 + $0x180] sm:$0xff] %v4635
        %4648 = vst [vmem:[#allocation3 + $0x188] sm:$0xff] %v4636
        %4649 = vst.msk [vmem:[#allocation3 + $0x190] sm:$0xff] %vm1131, %v4637
        %4650 = vst [vmem:[#allocation3 + $0x198] sm:$0xf] %v4638
        %4651 = vst [vmem:[#allocation3 + $0x1a0] sm:$0xf] %v4639
        %4652 = vst.msk [vmem:[#allocation3 + $0x1a8] sm:$0xf] %vm687, %v4640
        %v4653 = vld [vmem:[#allocation2] sm:$0xff]
        %v4654 = vld [vmem:[#allocation2 + $0x8] sm:$0xff]
        %v4655 = vld [vmem:[#allocation2 + $0x10] sm:$0xff]
        %v4656 = vld [vmem:[#allocation2 + $0x18] sm:$0xff]
        %v4657 = vld [vmem:[#allocation2 + $0x20] sm:$0xff]
        %v4658 = vld [vmem:[#allocation2 + $0x28] sm:$0xff]
        %v4659 = vld [vmem:[#allocation2 + $0x30] sm:$0xff]
        %v4660 = vld [vmem:[#allocation2 + $0x38] sm:$0xff]
        %v4661 = vld [vmem:[#allocation2 + $0x40] sm:$0xff]
        %v4662 = vld [vmem:[#allocation2 + $0x48] sm:$0xf]
        %v4663 = vld [vmem:[#allocation2 + $0x50] sm:$0xf]
        %v4664 = vld [vmem:[#allocation2 + $0x58] sm:$0xf]
        %v4677 = vrot.slane %v4653, 4
        %v4678 = vrot.slane %v4654, 4
        %v4679 = vrot.slane %v4655, 4
        %v4680 = vrot.slane %v4656, 4
        %v4681 = vsel %vm926, %v4677, %v4680
        %v4682 = vrot.slane %v4657, 4
        %v4683 = vsel %vm926, %v4678, %v4682
        %v4684 = vrot.slane %v4658, 4
        %v4685 = vsel %vm926, %v4679, %v4684
        %v4686 = vrot.slane %v4659, 4
        %v4687 = vsel %vm926, %v4680, %v4686
        %v4688 = vrot.slane %v4660, 4
        %v4689 = vsel %vm926, %v4682, %v4688
        %v4690 = vrot.slane %v4661, 4
        %v4691 = vsel %vm926, %v4684, %v4690
        %v4692 = vrot.slane %v4662, 4
        %v4693 = vsel %vm926, %v4686, %v4692
        %v4694 = vrot.slane %v4663, 4
        %v4695 = vsel %vm926, %v4688, %v4694
        %v4696 = vrot.slane %v4664, 4
        %v4697 = vsel %vm926, %v4690, %v4696
        %4698 = vrot.lane.b32.xlu0 %v4677, 127
        %v4699 = vpop.permute.xlu0 %4698
        %4700 = vrot.lane.b32.xlu0 %v4678, 127
        %v4701 = vpop.permute.xlu0 %4700
        %4702 = vrot.lane.b32.xlu0 %v4679, 127
        %v4703 = vpop.permute.xlu0 %4702
        %4704 = vrot.lane.b32.xlu0 %v4681, 127
        %v4705 = vpop.permute.xlu0 %4704
        %4706 = vrot.lane.b32.xlu0 %v4683, 127
        %v4707 = vpop.permute.xlu0 %4706
        %4708 = vrot.lane.b32.xlu0 %v4685, 127
        %v4709 = vpop.permute.xlu0 %4708
        %4710 = vrot.lane.b32.xlu0 %v4687, 127
        %v4711 = vpop.permute.xlu0 %4710
        %4712 = vrot.lane.b32.xlu0 %v4689, 127
        %v4713 = vpop.permute.xlu0 %4712
        %4714 = vrot.lane.b32.xlu0 %v4691, 127
        %v4715 = vpop.permute.xlu0 %4714
        %4716 = vrot.lane.b32.xlu0 %v4693, 127
        %v4717 = vpop.permute.xlu0 %4716
        %4718 = vrot.lane.b32.xlu0 %v4695, 127
        %v4719 = vpop.permute.xlu0 %4718
        %4720 = vrot.lane.b32.xlu0 %v4697, 127
        %v4721 = vpop.permute.xlu0 %4720
        %v4722 = vsel %vm813, %v4699, %v4701
        %v4723 = vsel %vm813, %v4701, %v4703
        %v4724 = vsel %vm813, %v4705, %v4707
        %v4725 = vsel %vm813, %v4707, %v4709
        %v4726 = vsel %vm813, %v4711, %v4713
        %v4727 = vsel %vm813, %v4713, %v4715
        %v4728 = vsel %vm813, %v4717, %v4719
        %v4729 = vsel %vm813, %v4719, %v4721
        %4742 = vst [vmem:[#allocation3 + $0x198] sm:$0xf0] %v4722
        %4743 = vst [vmem:[#allocation3 + $0x1a0] sm:$0xf0] %v4723
        %4744 = vst.msk [vmem:[#allocation3 + $0x1a8] sm:$0xf0] %vm821, %v4703
        %4745 = vst [vmem:[#allocation3 + $0x1b0] sm:$0xff] %v4724
        %4746 = vst [vmem:[#allocation3 + $0x1b8] sm:$0xff] %v4725
        %4747 = vst.msk [vmem:[#allocation3 + $0x1c0] sm:$0xff] %vm1225, %v4709
        %4748 = vst [vmem:[#allocation3 + $0x1c8] sm:$0xff] %v4726
        %4749 = vst [vmem:[#allocation3 + $0x1d0] sm:$0xff] %v4727
        %4750 = vst.msk [vmem:[#allocation3 + $0x1d8] sm:$0xff] %vm1225, %v4715
        %4751 = vst [vmem:[#allocation3 + $0x1e0] sm:$0xff] %v4728
        %4752 = vst [vmem:[#allocation3 + $0x1e8] sm:$0xff] %v4729
        %4753 = vst.msk [vmem:[#allocation3 + $0x1f0] sm:$0xff] %vm1225, %v4721
        %4754 = vst.msk [vmem:[#allocation3 + $0x1a8] sm:$0xf0] %vm823, 0.0
        %4755 = vst.msk [vmem:[#allocation3 + $0x1c0] sm:$0xff] %vm1227, 0.0
        %4756 = vst.msk [vmem:[#allocation3 + $0x1d8] sm:$0xff] %vm1227, 0.0
        %4757 = vst.msk [vmem:[#allocation3 + $0x1f0] sm:$0xff] %vm1227, 0.0
        %v4758 = vld [vmem:[#allocation2] sm:$0xff]
        %v4759 = vld [vmem:[#allocation2 + $0x8] sm:$0xff]
        %v4760 = vld [vmem:[#allocation2 + $0x10] sm:$0xff]
        %v4761 = vld [vmem:[#allocation2 + $0x18] sm:$0xff]
        %v4762 = vld [vmem:[#allocation2 + $0x20] sm:$0xff]
        %v4763 = vld [vmem:[#allocation2 + $0x28] sm:$0xff]
        %v4764 = vld [vmem:[#allocation2 + $0x30] sm:$0xff]
        %v4765 = vld [vmem:[#allocation2 + $0x38] sm:$0xff]
        %v4766 = vld [vmem:[#allocation2 + $0x40] sm:$0xff]
        %v4767 = vld [vmem:[#allocation2 + $0x48] sm:$0xf]
        %v4768 = vld [vmem:[#allocation2 + $0x50] sm:$0xf]
        %v4769 = vld [vmem:[#allocation2 + $0x58] sm:$0xf]
        %4782 = vrot.lane.b32.xlu0 %v4758, 111
        %v4783 = vpop.permute.xlu0 %4782
        %4784 = vrot.lane.b32.xlu0 %v4759, 111
        %v4785 = vpop.permute.xlu0 %4784
        %4786 = vrot.lane.b32.xlu0 %v4760, 111
        %v4787 = vpop.permute.xlu0 %4786
        %4788 = vrot.lane.b32.xlu0 %v4761, 111
        %v4789 = vpop.permute.xlu0 %4788
        %4790 = vrot.lane.b32.xlu0 %v4762, 111
        %v4791 = vpop.permute.xlu0 %4790
        %4792 = vrot.lane.b32.xlu0 %v4763, 111
        %v4793 = vpop.permute.xlu0 %4792
        %4794 = vrot.lane.b32.xlu0 %v4764, 111
        %v4795 = vpop.permute.xlu0 %4794
        %4796 = vrot.lane.b32.xlu0 %v4765, 111
        %v4797 = vpop.permute.xlu0 %4796
        %4798 = vrot.lane.b32.xlu0 %v4766, 111
        %v4799 = vpop.permute.xlu0 %4798
        %4800 = vrot.lane.b32.xlu0 %v4767, 111
        %v4801 = vpop.permute.xlu0 %4800
        %4802 = vrot.lane.b32.xlu0 %v4768, 111
        %v4803 = vpop.permute.xlu0 %4802
        %4804 = vrot.lane.b32.xlu0 %v4769, 111
        %v4805 = vpop.permute.xlu0 %4804
        %v4806 = vsel %vm837, %v4783, %v4785
        %v4807 = vsel %vm837, %v4785, %v4787
        %v4808 = vsel %vm837, %v4789, %v4791
        %v4809 = vsel %vm837, %v4791, %v4793
        %v4810 = vsel %vm837, %v4795, %v4797
        %v4811 = vsel %vm837, %v4797, %v4799
        %v4812 = vsel %vm837, %v4801, %v4803
        %v4813 = vsel %vm837, %v4803, %v4805
        %4826 = vst [vmem:[#allocation3 + $0x1f8] sm:$0xff] %v4806
        %4827 = vst [vmem:[#allocation3 + $0x200] sm:$0xff] %v4807
        %4828 = vst.msk [vmem:[#allocation3 + $0x208] sm:$0xff] %vm1248, %v4787
        %4829 = vst [vmem:[#allocation3 + $0x210] sm:$0xff] %v4808
        %4830 = vst [vmem:[#allocation3 + $0x218] sm:$0xff] %v4809
        %4831 = vst.msk [vmem:[#allocation3 + $0x220] sm:$0xff] %vm1248, %v4793
        %4832 = vst [vmem:[#allocation3 + $0x228] sm:$0xff] %v4810
        %4833 = vst [vmem:[#allocation3 + $0x230] sm:$0xff] %v4811
        %4834 = vst.msk [vmem:[#allocation3 + $0x238] sm:$0xff] %vm1248, %v4799
        %4835 = vst [vmem:[#allocation3 + $0x240] sm:$0xf] %v4812
        %4836 = vst [vmem:[#allocation3 + $0x248] sm:$0xf] %v4813
        %4837 = vst.msk [vmem:[#allocation3 + $0x250] sm:$0xf] %vm845, %v4805
        %4838 = vst.msk [vmem:[#allocation3 + $0x208] sm:$0xff] %vm1250, 0.0
        %4839 = vst.msk [vmem:[#allocation3 + $0x220] sm:$0xff] %vm1250, 0.0
        %4840 = vst.msk [vmem:[#allocation3 + $0x238] sm:$0xff] %vm1250, 0.0
        %4841 = vst.msk [vmem:[#allocation3 + $0x250] sm:$0xf] %vm847, 0.0
        %v4842 = vld [vmem:[#allocation2] sm:$0xff]
        %v4843 = vld [vmem:[#allocation2 + $0x8] sm:$0xff]
        %v4844 = vld [vmem:[#allocation2 + $0x10] sm:$0xff]
        %v4845 = vld [vmem:[#allocation2 + $0x18] sm:$0xff]
        %v4846 = vld [vmem:[#allocation2 + $0x20] sm:$0xff]
        %v4847 = vld [vmem:[#allocation2 + $0x28] sm:$0xff]
        %v4848 = vld [vmem:[#allocation2 + $0x30] sm:$0xff]
        %v4849 = vld [vmem:[#allocation2 + $0x38] sm:$0xff]
        %v4850 = vld [vmem:[#allocation2 + $0x40] sm:$0xff]
        %v4851 = vld [vmem:[#allocation2 + $0x48] sm:$0xf]
        %v4852 = vld [vmem:[#allocation2 + $0x50] sm:$0xf]
        %v4853 = vld [vmem:[#allocation2 + $0x58] sm:$0xf]
        %v4866 = vrot.slane %v4842, 4
        %v4867 = vrot.slane %v4843, 4
        %v4868 = vrot.slane %v4844, 4
        %v4869 = vrot.slane %v4845, 4
        %v4870 = vsel %vm926, %v4866, %v4869
        %v4871 = vrot.slane %v4846, 4
        %v4872 = vsel %vm926, %v4867, %v4871
        %v4873 = vrot.slane %v4847, 4
        %v4874 = vsel %vm926, %v4868, %v4873
        %v4875 = vrot.slane %v4848, 4
        %v4876 = vsel %vm926, %v4869, %v4875
        %v4877 = vrot.slane %v4849, 4
        %v4878 = vsel %vm926, %v4871, %v4877
        %v4879 = vrot.slane %v4850, 4
        %v4880 = vsel %vm926, %v4873, %v4879
        %v4881 = vrot.slane %v4851, 4
        %v4882 = vsel %vm926, %v4875, %v4881
        %v4883 = vrot.slane %v4852, 4
        %v4884 = vsel %vm926, %v4877, %v4883
        %v4885 = vrot.slane %v4853, 4
        %v4886 = vsel %vm926, %v4879, %v4885
        %4887 = vrot.lane.b32.xlu0 %v4866, 110
        %v4888 = vpop.permute.xlu0 %4887
        %4889 = vrot.lane.b32.xlu0 %v4867, 110
        %v4890 = vpop.permute.xlu0 %4889
        %4891 = vrot.lane.b32.xlu0 %v4868, 110
        %v4892 = vpop.permute.xlu0 %4891
        %4893 = vrot.lane.b32.xlu0 %v4870, 110
        %v4894 = vpop.permute.xlu0 %4893
        %4895 = vrot.lane.b32.xlu0 %v4872, 110
        %v4896 = vpop.permute.xlu0 %4895
        %4897 = vrot.lane.b32.xlu0 %v4874, 110
        %v4898 = vpop.permute.xlu0 %4897
        %4899 = vrot.lane.b32.xlu0 %v4876, 110
        %v4900 = vpop.permute.xlu0 %4899
        %4901 = vrot.lane.b32.xlu0 %v4878, 110
        %v4902 = vpop.permute.xlu0 %4901
        %4903 = vrot.lane.b32.xlu0 %v4880, 110
        %v4904 = vpop.permute.xlu0 %4903
        %4905 = vrot.lane.b32.xlu0 %v4882, 110
        %v4906 = vpop.permute.xlu0 %4905
        %4907 = vrot.lane.b32.xlu0 %v4884, 110
        %v4908 = vpop.permute.xlu0 %4907
        %4909 = vrot.lane.b32.xlu0 %v4886, 110
        %v4910 = vpop.permute.xlu0 %4909
        %v4911 = vsel %vm864, %v4888, %v4890
        %v4912 = vsel %vm864, %v4890, %v4892
        %v4913 = vsel %vm864, %v4894, %v4896
        %v4914 = vsel %vm864, %v4896, %v4898
        %v4915 = vsel %vm864, %v4900, %v4902
        %v4916 = vsel %vm864, %v4902, %v4904
        %v4917 = vsel %vm864, %v4906, %v4908
        %v4918 = vsel %vm864, %v4908, %v4910
        %4931 = vst [vmem:[#allocation3 + $0x240] sm:$0xf0] %v4911
        %4932 = vst [vmem:[#allocation3 + $0x248] sm:$0xf0] %v4912
        %4933 = vst.msk [vmem:[#allocation3 + $0x250] sm:$0xf0] %vm872, %v4892
        %4934 = vst [vmem:[#allocation3 + $0x258] sm:$0xff] %v4913
        %4935 = vst [vmem:[#allocation3 + $0x260] sm:$0xff] %v4914
        %4936 = vst.msk [vmem:[#allocation3 + $0x268] sm:$0xff] %vm1271, %v4898
        %4937 = vst [vmem:[#allocation3 + $0x270] sm:$0xff] %v4915
        %4938 = vst [vmem:[#allocation3 + $0x278] sm:$0xff] %v4916
        %4939 = vst.msk [vmem:[#allocation3 + $0x280] sm:$0xff] %vm1271, %v4904
        %4940 = vst [vmem:[#allocation3 + $0x288] sm:$0xff] %v4917
        %4941 = vst [vmem:[#allocation3 + $0x290] sm:$0xff] %v4918
        %4942 = vst.msk [vmem:[#allocation3 + $0x298] sm:$0xff] %vm1271, %v4910
        %4943 = vst.msk [vmem:[#allocation3 + $0x250] sm:$0xf0] %vm874, 0.0
        %4944 = vst.msk [vmem:[#allocation3 + $0x268] sm:$0xff] %vm1273, 0.0
        %4945 = vst.msk [vmem:[#allocation3 + $0x280] sm:$0xff] %vm1273, 0.0
        %4946 = vst.msk [vmem:[#allocation3 + $0x298] sm:$0xff] %vm1273, 0.0
        %v4947 = vld [vmem:[#allocation2] sm:$0xff]
        %v4948 = vld [vmem:[#allocation2 + $0x8] sm:$0xff]
        %v4949 = vld [vmem:[#allocation2 + $0x10] sm:$0xff]
        %v4950 = vld [vmem:[#allocation2 + $0x18] sm:$0xff]
        %v4951 = vld [vmem:[#allocation2 + $0x20] sm:$0xff]
        %v4952 = vld [vmem:[#allocation2 + $0x28] sm:$0xff]
        %v4953 = vld [vmem:[#allocation2 + $0x30] sm:$0xff]
        %v4954 = vld [vmem:[#allocation2 + $0x38] sm:$0xff]
        %v4955 = vld [vmem:[#allocation2 + $0x40] sm:$0xff]
        %v4956 = vld [vmem:[#allocation2 + $0x48] sm:$0xf]
        %v4957 = vld [vmem:[#allocation2 + $0x50] sm:$0xf]
        %v4958 = vld [vmem:[#allocation2 + $0x58] sm:$0xf]
        %4971 = vrot.lane.b32.xlu0 %v4947, 109
        %v4972 = vpop.permute.xlu0 %4971
        %4973 = vrot.lane.b32.xlu0 %v4948, 109
        %v4974 = vpop.permute.xlu0 %4973
        %4975 = vrot.lane.b32.xlu0 %v4949, 109
        %v4976 = vpop.permute.xlu0 %4975
        %4977 = vrot.lane.b32.xlu0 %v4950, 109
        %v4978 = vpop.permute.xlu0 %4977
        %4979 = vrot.lane.b32.xlu0 %v4951, 109
        %v4980 = vpop.permute.xlu0 %4979
        %4981 = vrot.lane.b32.xlu0 %v4952, 109
        %v4982 = vpop.permute.xlu0 %4981
        %4983 = vrot.lane.b32.xlu0 %v4953, 109
        %v4984 = vpop.permute.xlu0 %4983
        %4985 = vrot.lane.b32.xlu0 %v4954, 109
        %v4986 = vpop.permute.xlu0 %4985
        %4987 = vrot.lane.b32.xlu0 %v4955, 109
        %v4988 = vpop.permute.xlu0 %4987
        %4989 = vrot.lane.b32.xlu0 %v4956, 109
        %v4990 = vpop.permute.xlu0 %4989
        %4991 = vrot.lane.b32.xlu0 %v4957, 109
        %v4992 = vpop.permute.xlu0 %4991
        %4993 = vrot.lane.b32.xlu0 %v4958, 109
        %v4994 = vpop.permute.xlu0 %4993
        %v4995 = vsel %vm888, %v4972, %v4974
        %v4996 = vsel %vm888, %v4974, %v4976
        %v4997 = vsel %vm888, %v4978, %v4980
        %v4998 = vsel %vm888, %v4980, %v4982
        %v4999 = vsel %vm888, %v4984, %v4986
        %v5000 = vsel %vm888, %v4986, %v4988
        %v5001 = vsel %vm888, %v4990, %v4992
        %v5002 = vsel %vm888, %v4992, %v4994
        %5015 = vst [vmem:[#allocation3 + $0x2a0] sm:$0xff] %v4995
        %5016 = vst [vmem:[#allocation3 + $0x2a8] sm:$0xff] %v4996
        %5017 = vst.msk [vmem:[#allocation3 + $0x2b0] sm:$0xff] %vm1294, %v4976
        %5018 = vst [vmem:[#allocation3 + $0x2b8] sm:$0xff] %v4997
        %5019 = vst [vmem:[#allocation3 + $0x2c0] sm:$0xff] %v4998
        %5020 = vst.msk [vmem:[#allocation3 + $0x2c8] sm:$0xff] %vm1294, %v4982
        %5021 = vst [vmem:[#allocation3 + $0x2d0] sm:$0xff] %v4999
        %5022 = vst [vmem:[#allocation3 + $0x2d8] sm:$0xff] %v5000
        %5023 = vst.msk [vmem:[#allocation3 + $0x2e0] sm:$0xff] %vm1294, %v4988
        %5024 = vst [vmem:[#allocation3 + $0x2e8] sm:$0xf] %v5001
        %5025 = vst [vmem:[#allocation3 + $0x2f0] sm:$0xf] %v5002
        %5026 = vst.msk [vmem:[#allocation3 + $0x2f8] sm:$0xf] %vm896, %v4994
        %5027 = vst.msk [vmem:[#allocation3 + $0x2b0] sm:$0xff] %vm1296, 0.0
        %5028 = vst.msk [vmem:[#allocation3 + $0x2c8] sm:$0xff] %vm1296, 0.0
        %5029 = vst.msk [vmem:[#allocation3 + $0x2e0] sm:$0xff] %vm1296, 0.0
        %5030 = vst.msk [vmem:[#allocation3 + $0x2f8] sm:$0xf] %vm898, 0.0
        %v5031 = vld [vmem:[%s16] sm:$0xff]
        %v5032 = vld [vmem:[#allocation3] sm:$0xff]
        %v5033 = vld [vmem:[#allocation3 + $0x8] sm:$0xff]
        %v5034 = vld [vmem:[#allocation3 + $0x10] sm:$0xff]
        %v5035 = vld [vmem:[#allocation3 + $0x18] sm:$0xff]
        %v5036 = vld [vmem:[#allocation3 + $0x20] sm:$0xff]
        %v5037 = vld [vmem:[#allocation3 + $0x28] sm:$0xff]
        %v5038 = vld [vmem:[#allocation3 + $0x30] sm:$0xff]
        %v5039 = vld [vmem:[#allocation3 + $0x38] sm:$0xff]
        %v5040 = vld [vmem:[#allocation3 + $0x40] sm:$0xff]
        %v5041 = vld [vmem:[#allocation3 + $0x48] sm:$0xff]
        %v5042 = vld [vmem:[#allocation3 + $0x50] sm:$0xff]
        %v5043 = vld [vmem:[#allocation3 + $0x58] sm:$0xff]
        %v5044 = vld [vmem:[#allocation3 + $0x60] sm:$0xff]
        %v5045 = vld [vmem:[#allocation3 + $0x68] sm:$0xff]
        %v5046 = vld [vmem:[#allocation3 + $0x70] sm:$0xff]
        %v5047 = vld [vmem:[#allocation3 + $0x78] sm:$0xff]
        %v5048 = vld [vmem:[#allocation3 + $0x80] sm:$0xff]
        %v5049 = vld [vmem:[#allocation3 + $0x88] sm:$0xff]
        %v5050 = vld [vmem:[#allocation3 + $0x90] sm:$0xff]
        %v5051 = vld [vmem:[#allocation3 + $0x98] sm:$0xff]
        %v5052 = vld [vmem:[#allocation3 + $0xa0] sm:$0xff]
        %v5053 = vld [vmem:[#allocation3 + $0xa8] sm:$0xff]
        %v5054 = vld [vmem:[#allocation3 + $0xb0] sm:$0xff]
        %v5055 = vld [vmem:[#allocation3 + $0xb8] sm:$0xff]
        %v5056 = vld [vmem:[#allocation3 + $0xc0] sm:$0xff]
        %v5057 = vld [vmem:[#allocation3 + $0xc8] sm:$0xff]
        %v5058 = vld [vmem:[#allocation3 + $0xd0] sm:$0xff]
        %v5059 = vld [vmem:[#allocation3 + $0xd8] sm:$0xff]
        %v5060 = vld [vmem:[#allocation3 + $0xe0] sm:$0xff]
        %v5061 = vld [vmem:[#allocation3 + $0xe8] sm:$0xff]
        %v5062 = vld [vmem:[#allocation3 + $0xf0] sm:$0xff]
        %v5063 = vld [vmem:[#allocation3 + $0xf8] sm:$0xff]
        %v5064 = vld [vmem:[#allocation3 + $0x100] sm:$0xff]
        %v5065 = vld [vmem:[#allocation3 + $0x108] sm:$0xff]
        %v5066 = vld [vmem:[#allocation3 + $0x110] sm:$0xff]
        %v5067 = vld [vmem:[#allocation3 + $0x118] sm:$0xff]
        %v5068 = vld [vmem:[#allocation3 + $0x120] sm:$0xff]
        %v5069 = vld [vmem:[#allocation3 + $0x128] sm:$0xff]
        %v5070 = vld [vmem:[#allocation3 + $0x130] sm:$0xff]
        %v5071 = vld [vmem:[#allocation3 + $0x138] sm:$0xff]
        %v5072 = vld [vmem:[#allocation3 + $0x140] sm:$0xff]
        %v5073 = vld [vmem:[#allocation3 + $0x148] sm:$0xff]
        %v5074 = vld [vmem:[#allocation3 + $0x150] sm:$0xff]
        %v5075 = vld [vmem:[#allocation3 + $0x158] sm:$0xff]
        %v5076 = vld [vmem:[#allocation3 + $0x160] sm:$0xff]
        %v5077 = vld [vmem:[#allocation3 + $0x168] sm:$0xff]
        %v5078 = vld [vmem:[#allocation3 + $0x170] sm:$0xff]
        %v5079 = vld [vmem:[#allocation3 + $0x178] sm:$0xff]
        %v5080 = vld [vmem:[#allocation3 + $0x180] sm:$0xff]
        %v5081 = vld [vmem:[#allocation3 + $0x188] sm:$0xff]
        %v5082 = vld [vmem:[#allocation3 + $0x190] sm:$0xff]
        %v5083 = vld [vmem:[#allocation3 + $0x198] sm:$0xff]
        %v5084 = vld [vmem:[#allocation3 + $0x1a0] sm:$0xff]
        %v5085 = vld [vmem:[#allocation3 + $0x1a8] sm:$0xff]
        %v5086 = vld [vmem:[#allocation3 + $0x1b0] sm:$0xff]
        %v5087 = vld [vmem:[#allocation3 + $0x1b8] sm:$0xff]
        %v5088 = vld [vmem:[#allocation3 + $0x1c0] sm:$0xff]
        %v5089 = vld [vmem:[#allocation3 + $0x1c8] sm:$0xff]
        %v5090 = vld [vmem:[#allocation3 + $0x1d0] sm:$0xff]
        %v5091 = vld [vmem:[#allocation3 + $0x1d8] sm:$0xff]
        %v5092 = vld [vmem:[#allocation3 + $0x1e0] sm:$0xff]
        %v5093 = vld [vmem:[#allocation3 + $0x1e8] sm:$0xff]
        %v5094 = vld [vmem:[#allocation3 + $0x1f0] sm:$0xff]
        %v5095 = vld [vmem:[#allocation3 + $0x1f8] sm:$0xff]
        %v5096 = vld [vmem:[#allocation3 + $0x200] sm:$0xff]
        %v5097 = vld [vmem:[#allocation3 + $0x208] sm:$0xff]
        %v5098 = vld [vmem:[#allocation3 + $0x210] sm:$0xff]
        %v5099 = vld [vmem:[#allocation3 + $0x218] sm:$0xff]
        %v5100 = vld [vmem:[#allocation3 + $0x220] sm:$0xff]
        %v5101 = vld [vmem:[#allocation3 + $0x228] sm:$0xff]
        %v5102 = vld [vmem:[#allocation3 + $0x230] sm:$0xff]
        %v5103 = vld [vmem:[#allocation3 + $0x238] sm:$0xff]
        %v5104 = vld [vmem:[#allocation3 + $0x240] sm:$0xff]
        %v5105 = vld [vmem:[#allocation3 + $0x248] sm:$0xff]
        %v5106 = vld [vmem:[#allocation3 + $0x250] sm:$0xff]
        %v5107 = vld [vmem:[#allocation3 + $0x258] sm:$0xff]
        %v5108 = vld [vmem:[#allocation3 + $0x260] sm:$0xff]
        %v5109 = vld [vmem:[#allocation3 + $0x268] sm:$0xff]
        %v5110 = vld [vmem:[#allocation3 + $0x270] sm:$0xff]
        %v5111 = vld [vmem:[#allocation3 + $0x278] sm:$0xff]
        %v5112 = vld [vmem:[#allocation3 + $0x280] sm:$0xff]
        %v5113 = vld [vmem:[#allocation3 + $0x288] sm:$0xff]
        %v5114 = vld [vmem:[#allocation3 + $0x290] sm:$0xff]
        %v5115 = vld [vmem:[#allocation3 + $0x298] sm:$0xff]
        %v5116 = vld [vmem:[#allocation3 + $0x2a0] sm:$0xff]
        %v5117 = vld [vmem:[#allocation3 + $0x2a8] sm:$0xff]
        %v5118 = vld [vmem:[#allocation3 + $0x2b0] sm:$0xff]
        %v5119 = vld [vmem:[#allocation3 + $0x2b8] sm:$0xff]
        %v5120 = vld [vmem:[#allocation3 + $0x2c0] sm:$0xff]
        %v5121 = vld [vmem:[#allocation3 + $0x2c8] sm:$0xff]
        %v5122 = vld [vmem:[#allocation3 + $0x2d0] sm:$0xff]
        %v5123 = vld [vmem:[#allocation3 + $0x2d8] sm:$0xff]
        %v5124 = vld [vmem:[#allocation3 + $0x2e0] sm:$0xff]
        %v5125 = vld [vmem:[#allocation3 + $0x2e8] sm:$0xf]
        %v5126 = vld [vmem:[#allocation3 + $0x2f0] sm:$0xf]
        %v5127 = vld [vmem:[#allocation3 + $0x2f8] sm:$0xf]
        %v5128 = vld [vmem:[%s17] sm:$0xf]
        %5130 = vset.pattern.permute.xlu0 0
        %5131 = vperm.xlu0 %5130, %v5128
        %v5132 = vpop.permute.xlu0 %5131
        %v5135 = vcombine.high %v5031, %v5031
        %vm5136 = vcmask 1014784
        %v5137 = vsel %vm5136, %v5135, 0
        %v5140 = vsel %vm926, %v5125, 0
        %v5143 = vsel %vm926, %v5126, 0
        %v5146 = vsel %vm926, %v5127, 0
        %5148 = vmatprep.subr.mxu0 %v5033
        %5149 = vmatpush1.msra.mxu0 %v5032
        %5150 = vmatprep.subr.mxu0 %v5036
        %5151 = vmatpush1.msra.mxu0 %v5035
        %5152 = vmatprep.subr.mxu0 %v5039
        %5153 = vmatpush1.msra.mxu0 %v5038
        %5154 = vmatprep.subr.mxu0 %v5042
        %5155 = vmatpush1.msra.mxu0 %v5041
        %5156 = vmatprep.subr.mxu0 %v5045
        %5157 = vmatpush1.msra.mxu0 %v5044
        %5158 = vmatprep.subr.mxu0 %v5048
        %5159 = vmatpush1.msra.mxu0 %v5047
        %5160 = vmatprep.subr.mxu0 %v5051
        %5161 = vmatpush1.msra.mxu0 %v5050
        %5162 = vmatprep.subr.mxu0 %v5054
        %5163 = vmatpush1.msra.mxu0 %v5053
        %5164 = vmatprep.subr.mxu0 %v5057
        %5165 = vmatpush1.msra.mxu0 %v5056
        %5166 = vmatprep.subr.mxu0 %v5060
        %5167 = vmatpush1.msra.mxu0 %v5059
        %5168 = vmatprep.subr.mxu0 %v5063
        %5169 = vmatpush1.msra.mxu0 %v5062
        %5170 = vmatprep.subr.mxu0 %v5066
        %5171 = vmatpush1.msra.mxu0 %v5065
        %5172 = vmatprep.subr.mxu0 %v5069
        %5173 = vmatpush1.msra.mxu0 %v5068
        %5174 = vmatprep.subr.mxu0 %v5072
        %5175 = vmatpush1.msra.mxu0 %v5071
        %5176 = vmatprep.subr.mxu0 %v5075
        %5177 = vmatpush1.msra.mxu0 %v5074
        %5178 = vmatprep.subr.mxu0 %v5078
        %5179 = vmatpush1.msra.mxu0 %v5077
        %5180 = vmatprep.subr.mxu0 %v5081
        %5181 = vmatpush1.msra.mxu0 %v5080
        %5182 = vmatprep.subr.mxu0 %v5084
        %5183 = vmatpush1.msra.mxu0 %v5083
        %5184 = vmatprep.subr.mxu0 %v5087
        %5185 = vmatpush1.msra.mxu0 %v5086
        %5186 = vmatprep.subr.mxu0 %v5090
        %5187 = vmatpush1.msra.mxu0 %v5089
        %5188 = vmatprep.subr.mxu0 %v5093
        %5189 = vmatpush1.msra.mxu0 %v5092
        %5190 = vmatprep.subr.mxu0 %v5096
        %5191 = vmatpush1.msra.mxu0 %v5095
        %5192 = vmatprep.subr.mxu0 %v5099
        %5193 = vmatpush1.msra.mxu0 %v5098
        %5194 = vmatprep.subr.mxu0 %v5102
        %5195 = vmatpush1.msra.mxu0 %v5101
        %5196 = vmatprep.subr.mxu0 %v5105
        %5197 = vmatpush1.msra.mxu0 %v5104
        %5198 = vmatprep.subr.mxu0 %v5108
        %5199 = vmatpush1.msra.mxu0 %v5107
        %5200 = vmatprep.subr.mxu0 %v5111
        %5201 = vmatpush1.msra.mxu0 %v5110
        %5202 = vmatprep.subr.mxu0 %v5114
        %5203 = vmatpush1.msra.mxu0 %v5113
        %5204 = vmatprep.subr.mxu0 %v5117
        %5205 = vmatpush1.msra.mxu0 %v5116
        %5206 = vmatprep.subr.mxu0 %v5120
        %5207 = vmatpush1.msra.mxu0 %v5119
        %5208 = vmatprep.subr.mxu0 %v5123
        %5209 = vmatpush1.msra.mxu0 %v5122
        %5210 = vmatprep.subr.mxu0 %v5143
        %5211 = vmatpush1.msra.mxu0 %v5140
        %5212 = vmatprep.mubr.f32.mxu0 %v5137
        %5213 = vmatmul.mubr.f32.gmra.mrb[0].mxu0 %v5031
        %v5214 = vpop.f32.mrb[0].mxu0
        %v5215 = vadd.f32 %v5132, %v5214
        %v5216 = vpop.f32.mrb[0].mxu0
        %v5217 = vadd.f32 %v5132, %v5216
        %5218 = vdwg.mxu0
        %5219 = vmatprep.subr.mxu0 0.0
        %5220 = vmatpush1.msra.mxu0 %v5034
        %5221 = vmatprep.subr.mxu0 0.0
        %5222 = vmatpush1.msra.mxu0 %v5037
        %5223 = vmatprep.subr.mxu0 0.0
        %5224 = vmatpush1.msra.mxu0 %v5040
        %5225 = vmatprep.subr.mxu0 0.0
        %5226 = vmatpush1.msra.mxu0 %v5043
        %5227 = vmatprep.subr.mxu0 0.0
        %5228 = vmatpush1.msra.mxu0 %v5046
        %5229 = vmatprep.subr.mxu0 0.0
        %5230 = vmatpush1.msra.mxu0 %v5049
        %5231 = vmatprep.subr.mxu0 0.0
        %5232 = vmatpush1.msra.mxu0 %v5052
        %5233 = vmatprep.subr.mxu0 0.0
        %5234 = vmatpush1.msra.mxu0 %v5055
        %5235 = vmatprep.subr.mxu0 0.0
        %5236 = vmatpush1.msra.mxu0 %v5058
        %5237 = vmatprep.subr.mxu0 0.0
        %5238 = vmatpush1.msra.mxu0 %v5061
        %5239 = vmatprep.subr.mxu0 0.0
        %5240 = vmatpush1.msra.mxu0 %v5064
        %5241 = vmatprep.subr.mxu0 0.0
        %5242 = vmatpush1.msra.mxu0 %v5067
        %5243 = vmatprep.subr.mxu0 0.0
        %5244 = vmatpush1.msra.mxu0 %v5070
        %5245 = vmatprep.subr.mxu0 0.0
        %5246 = vmatpush1.msra.mxu0 %v5073
        %5247 = vmatprep.subr.mxu0 0.0
        %5248 = vmatpush1.msra.mxu0 %v5076
        %5249 = vmatprep.subr.mxu0 0.0
        %5250 = vmatpush1.msra.mxu0 %v5079
        %5251 = vmatprep.subr.mxu0 0.0
        %5252 = vmatpush1.msra.mxu0 %v5082
        %5253 = vmatprep.subr.mxu0 0.0
        %5254 = vmatpush1.msra.mxu0 %v5085
        %5255 = vmatprep.subr.mxu0 0.0
        %5256 = vmatpush1.msra.mxu0 %v5088
        %5257 = vmatprep.subr.mxu0 0.0
        %5258 = vmatpush1.msra.mxu0 %v5091
        %5259 = vmatprep.subr.mxu0 0.0
        %5260 = vmatpush1.msra.mxu0 %v5094
        %5261 = vmatprep.subr.mxu0 0.0
        %5262 = vmatpush1.msra.mxu0 %v5097
        %5263 = vmatprep.subr.mxu0 0.0
        %5264 = vmatpush1.msra.mxu0 %v5100
        %5265 = vmatprep.subr.mxu0 0.0
        %5266 = vmatpush1.msra.mxu0 %v5103
        %5267 = vmatprep.subr.mxu0 0.0
        %5268 = vmatpush1.msra.mxu0 %v5106
        %5269 = vmatprep.subr.mxu0 0.0
        %5270 = vmatpush1.msra.mxu0 %v5109
        %5271 = vmatprep.subr.mxu0 0.0
        %5272 = vmatpush1.msra.mxu0 %v5112
        %5273 = vmatprep.subr.mxu0 0.0
        %5274 = vmatpush1.msra.mxu0 %v5115
        %5275 = vmatprep.subr.mxu0 0.0
        %5276 = vmatpush1.msra.mxu0 %v5118
        %5277 = vmatprep.subr.mxu0 0.0
        %5278 = vmatpush1.msra.mxu0 %v5121
        %5279 = vmatprep.subr.mxu0 0.0
        %5280 = vmatpush1.msra.mxu0 %v5124
        %5281 = vmatprep.subr.mxu0 0.0
        %5282 = vmatpush1.msra.mxu0 %v5146
        %5283 = vmatprep.mubr.f32.mxu0 %v5137
        %5284 = vmatmul.mubr.f32.gmra.mrb[0].mxu0 %v5031
        %v5285 = vpop.f32.mrb[0].mxu0
        %v5286 = vadd.f32 %v5132, %v5285
        %v5287 = vpop.f32.mrb[0].mxu0
        %5288 = vdwg.mxu0
        %v5289 = vmax.f32 %v5215, 0.0
        %v5290 = vmax.f32 %v5217, 0.0
        %v5291 = vmax.f32 %v5286, 0.0
        %v5292 = vmul.f32 %v5289, %v1084
        %v5293 = vmul.f32 %v5290, %v1088
        %v5294 = vmul.f32 %v5291, %v1092
        %v5298 = vrot.slane %v5292, 4
        %v5299 = vrot.slane %v5293, 4
        %v5300 = vrot.slane %v5294, 4
        %5304 = vst [vmem:[#allocation2 + $0x48] sm:$0xf0] %v5298
        %5305 = vst [vmem:[#allocation2 + $0x50] sm:$0xf0] %v5299
        %5306 = vst.msk [vmem:[#allocation2 + $0x58] sm:$0xf0] %vm737, %v5300
        %v5307 = vld [vmem:[#allocation2] sm:$0xff]
        %v5308 = vld [vmem:[#allocation2 + $0x8] sm:$0xff]
        %v5309 = vld [vmem:[#allocation2 + $0x10] sm:$0xff]
        %v5310 = vld [vmem:[#allocation2 + $0x18] sm:$0xff]
        %v5311 = vld [vmem:[#allocation2 + $0x20] sm:$0xff]
        %v5312 = vld [vmem:[#allocation2 + $0x28] sm:$0xff]
        %v5313 = vld [vmem:[#allocation2 + $0x30] sm:$0xff]
        %v5314 = vld [vmem:[#allocation2 + $0x38] sm:$0xff]
        %v5315 = vld [vmem:[#allocation2 + $0x40] sm:$0xff]
        %v5316 = vld [vmem:[#allocation2 + $0x48] sm:$0xff]
        %v5317 = vld [vmem:[#allocation2 + $0x50] sm:$0xff]
        %v5318 = vld [vmem:[#allocation2 + $0x58] sm:$0xff]
        %5331 = vrot.lane.b32.xlu0 %v5307, 19
        %v5332 = vpop.permute.xlu0 %5331
        %5333 = vrot.lane.b32.xlu0 %v5308, 19
        %v5334 = vpop.permute.xlu0 %5333
        %5335 = vrot.lane.b32.xlu0 %v5309, 19
        %v5336 = vpop.permute.xlu0 %5335
        %5337 = vrot.lane.b32.xlu0 %v5310, 19
        %v5338 = vpop.permute.xlu0 %5337
        %5339 = vrot.lane.b32.xlu0 %v5311, 19
        %v5340 = vpop.permute.xlu0 %5339
        %5341 = vrot.lane.b32.xlu0 %v5312, 19
        %v5342 = vpop.permute.xlu0 %5341
        %5343 = vrot.lane.b32.xlu0 %v5313, 19
        %v5344 = vpop.permute.xlu0 %5343
        %5345 = vrot.lane.b32.xlu0 %v5314, 19
        %v5346 = vpop.permute.xlu0 %5345
        %5347 = vrot.lane.b32.xlu0 %v5315, 19
        %v5348 = vpop.permute.xlu0 %5347
        %5349 = vrot.lane.b32.xlu0 %v5316, 19
        %v5350 = vpop.permute.xlu0 %5349
        %5351 = vrot.lane.b32.xlu0 %v5317, 19
        %v5352 = vpop.permute.xlu0 %5351
        %5353 = vrot.lane.b32.xlu0 %v5318, 19
        %v5354 = vpop.permute.xlu0 %5353
        %v5355 = vsel %vm701, %v5332, %v5334
        %v5356 = vsel %vm701, %v5334, %v5336
        %v5357 = vsel %vm701, %v5338, %v5340
        %v5358 = vsel %vm701, %v5340, %v5342
        %v5359 = vsel %vm701, %v5344, %v5346
        %v5360 = vsel %vm701, %v5346, %v5348
        %v5361 = vsel %vm701, %v5350, %v5352
        %v5362 = vsel %vm701, %v5352, %v5354
        %5375 = vst.msk [vmem:[#allocation3] sm:$0xff] %vm1128, %v5332
        %5376 = vst [vmem:[#allocation3 + $0x8] sm:$0xff] %v5355
        %5377 = vst.msk [vmem:[#allocation3 + $0x10] sm:$0xff] %vm1131, %v5356
        %5378 = vst.msk [vmem:[#allocation3 + $0x18] sm:$0xff] %vm1128, %v5338
        %5379 = vst [vmem:[#allocation3 + $0x20] sm:$0xff] %v5357
        %5380 = vst.msk [vmem:[#allocation3 + $0x28] sm:$0xff] %vm1131, %v5358
        %5381 = vst.msk [vmem:[#allocation3 + $0x30] sm:$0xff] %vm1128, %v5344
        %5382 = vst [vmem:[#allocation3 + $0x38] sm:$0xff] %v5359
        %5383 = vst.msk [vmem:[#allocation3 + $0x40] sm:$0xff] %vm1131, %v5360
        %5384 = vst.msk [vmem:[#allocation3 + $0x48] sm:$0xff] %vm1128, %v5350
        %5385 = vst [vmem:[#allocation3 + $0x50] sm:$0xff] %v5361
        %5386 = vst.msk [vmem:[#allocation3 + $0x58] sm:$0xff] %vm1131, %v5362
        %5387 = vst.msk [vmem:[#allocation3] sm:$0xff] %vm701, 0.0
        %5388 = vst.msk [vmem:[#allocation3 + $0x18] sm:$0xff] %vm701, 0.0
        %5389 = vst.msk [vmem:[#allocation3 + $0x30] sm:$0xff] %vm701, 0.0
        %5390 = vst.msk [vmem:[#allocation3 + $0x48] sm:$0xff] %vm701, 0.0
        %v5391 = vld [vmem:[#allocation2] sm:$0xff]
        %v5392 = vld [vmem:[#allocation2 + $0x8] sm:$0xff]
        %v5393 = vld [vmem:[#allocation2 + $0x10] sm:$0xff]
        %v5394 = vld [vmem:[#allocation2 + $0x18] sm:$0xff]
        %v5395 = vld [vmem:[#allocation2 + $0x20] sm:$0xff]
        %v5396 = vld [vmem:[#allocation2 + $0x28] sm:$0xff]
        %v5397 = vld [vmem:[#allocation2 + $0x30] sm:$0xff]
        %v5398 = vld [vmem:[#allocation2 + $0x38] sm:$0xff]
        %v5399 = vld [vmem:[#allocation2 + $0x40] sm:$0xff]
        %v5400 = vld [vmem:[#allocation2 + $0x48] sm:$0xff]
        %v5401 = vld [vmem:[#allocation2 + $0x50] sm:$0xff]
        %v5402 = vld [vmem:[#allocation2 + $0x58] sm:$0xff]
        %5415 = vrot.lane.b32.xlu0 %v5391, 18
        %v5416 = vpop.permute.xlu0 %5415
        %5417 = vrot.lane.b32.xlu0 %v5392, 18
        %v5418 = vpop.permute.xlu0 %5417
        %5419 = vrot.lane.b32.xlu0 %v5393, 18
        %v5420 = vpop.permute.xlu0 %5419
        %5421 = vrot.lane.b32.xlu0 %v5394, 18
        %v5422 = vpop.permute.xlu0 %5421
        %5423 = vrot.lane.b32.xlu0 %v5395, 18
        %v5424 = vpop.permute.xlu0 %5423
        %5425 = vrot.lane.b32.xlu0 %v5396, 18
        %v5426 = vpop.permute.xlu0 %5425
        %5427 = vrot.lane.b32.xlu0 %v5397, 18
        %v5428 = vpop.permute.xlu0 %5427
        %5429 = vrot.lane.b32.xlu0 %v5398, 18
        %v5430 = vpop.permute.xlu0 %5429
        %5431 = vrot.lane.b32.xlu0 %v5399, 18
        %v5432 = vpop.permute.xlu0 %5431
        %5433 = vrot.lane.b32.xlu0 %v5400, 18
        %v5434 = vpop.permute.xlu0 %5433
        %5435 = vrot.lane.b32.xlu0 %v5401, 18
        %v5436 = vpop.permute.xlu0 %5435
        %5437 = vrot.lane.b32.xlu0 %v5402, 18
        %v5438 = vpop.permute.xlu0 %5437
        %v5439 = vsel %vm728, %v5416, %v5418
        %v5440 = vsel %vm728, %v5418, %v5420
        %v5441 = vsel %vm728, %v5422, %v5424
        %v5442 = vsel %vm728, %v5424, %v5426
        %v5443 = vsel %vm728, %v5428, %v5430
        %v5444 = vsel %vm728, %v5430, %v5432
        %v5445 = vsel %vm728, %v5434, %v5436
        %v5446 = vsel %vm728, %v5436, %v5438
        %5459 = vst.msk [vmem:[#allocation3 + $0x60] sm:$0xff] %vm1151, %v5416
        %5460 = vst [vmem:[#allocation3 + $0x68] sm:$0xff] %v5439
        %5461 = vst.msk [vmem:[#allocation3 + $0x70] sm:$0xff] %vm1131, %v5440
        %5462 = vst.msk [vmem:[#allocation3 + $0x78] sm:$0xff] %vm1151, %v5422
        %5463 = vst [vmem:[#allocation3 + $0x80] sm:$0xff] %v5441
        %5464 = vst.msk [vmem:[#allocation3 + $0x88] sm:$0xff] %vm1131, %v5442
        %5465 = vst.msk [vmem:[#allocation3 + $0x90] sm:$0xff] %vm1151, %v5428
        %5466 = vst [vmem:[#allocation3 + $0x98] sm:$0xff] %v5443
        %5467 = vst.msk [vmem:[#allocation3 + $0xa0] sm:$0xff] %vm1131, %v5444
        %5468 = vst.msk [vmem:[#allocation3 + $0xa8] sm:$0xff] %vm1151, %v5434
        %5469 = vst [vmem:[#allocation3 + $0xb0] sm:$0xff] %v5445
        %5470 = vst.msk [vmem:[#allocation3 + $0xb8] sm:$0xff] %vm1131, %v5446
        %5471 = vst.msk [vmem:[#allocation3 + $0x60] sm:$0xff] %vm728, 0.0
        %5472 = vst.msk [vmem:[#allocation3 + $0x78] sm:$0xff] %vm728, 0.0
        %5473 = vst.msk [vmem:[#allocation3 + $0x90] sm:$0xff] %vm728, 0.0
        %5474 = vst.msk [vmem:[#allocation3 + $0xa8] sm:$0xff] %vm728, 0.0
        %v5475 = vld [vmem:[#allocation2] sm:$0xff]
        %v5476 = vld [vmem:[#allocation2 + $0x8] sm:$0xff]
        %v5477 = vld [vmem:[#allocation2 + $0x10] sm:$0xff]
        %v5478 = vld [vmem:[#allocation2 + $0x18] sm:$0xff]
        %v5479 = vld [vmem:[#allocation2 + $0x20] sm:$0xff]
        %v5480 = vld [vmem:[#allocation2 + $0x28] sm:$0xff]
        %v5481 = vld [vmem:[#allocation2 + $0x30] sm:$0xff]
        %v5482 = vld [vmem:[#allocation2 + $0x38] sm:$0xff]
        %v5483 = vld [vmem:[#allocation2 + $0x40] sm:$0xff]
        %v5484 = vld [vmem:[#allocation2 + $0x48] sm:$0xff]
        %v5485 = vld [vmem:[#allocation2 + $0x50] sm:$0xff]
        %v5486 = vld [vmem:[#allocation2 + $0x58] sm:$0xff]
        %5499 = vrot.lane.b32.xlu0 %v5475, 17
        %v5500 = vpop.permute.xlu0 %5499
        %5501 = vrot.lane.b32.xlu0 %v5476, 17
        %v5502 = vpop.permute.xlu0 %5501
        %5503 = vrot.lane.b32.xlu0 %v5477, 17
        %v5504 = vpop.permute.xlu0 %5503
        %5505 = vrot.lane.b32.xlu0 %v5478, 17
        %v5506 = vpop.permute.xlu0 %5505
        %5507 = vrot.lane.b32.xlu0 %v5479, 17
        %v5508 = vpop.permute.xlu0 %5507
        %5509 = vrot.lane.b32.xlu0 %v5480, 17
        %v5510 = vpop.permute.xlu0 %5509
        %5511 = vrot.lane.b32.xlu0 %v5481, 17
        %v5512 = vpop.permute.xlu0 %5511
        %5513 = vrot.lane.b32.xlu0 %v5482, 17
        %v5514 = vpop.permute.xlu0 %5513
        %5515 = vrot.lane.b32.xlu0 %v5483, 17
        %v5516 = vpop.permute.xlu0 %5515
        %5517 = vrot.lane.b32.xlu0 %v5484, 17
        %v5518 = vpop.permute.xlu0 %5517
        %5519 = vrot.lane.b32.xlu0 %v5485, 17
        %v5520 = vpop.permute.xlu0 %5519
        %5521 = vrot.lane.b32.xlu0 %v5486, 17
        %v5522 = vpop.permute.xlu0 %5521
        %v5523 = vsel %vm753, %v5500, %v5502
        %v5524 = vsel %vm753, %v5502, %v5504
        %v5525 = vsel %vm753, %v5506, %v5508
        %v5526 = vsel %vm753, %v5508, %v5510
        %v5527 = vsel %vm753, %v5512, %v5514
        %v5528 = vsel %vm753, %v5514, %v5516
        %v5529 = vsel %vm753, %v5518, %v5520
        %v5530 = vsel %vm753, %v5520, %v5522
        %5543 = vst.msk [vmem:[#allocation3 + $0xc0] sm:$0xff] %vm1173, %v5500
        %5544 = vst [vmem:[#allocation3 + $0xc8] sm:$0xff] %v5523
        %5545 = vst.msk [vmem:[#allocation3 + $0xd0] sm:$0xff] %vm1131, %v5524
        %5546 = vst.msk [vmem:[#allocation3 + $0xd8] sm:$0xff] %vm1173, %v5506
        %5547 = vst [vmem:[#allocation3 + $0xe0] sm:$0xff] %v5525
        %5548 = vst.msk [vmem:[#allocation3 + $0xe8] sm:$0xff] %vm1131, %v5526
        %5549 = vst.msk [vmem:[#allocation3 + $0xf0] sm:$0xff] %vm1173, %v5512
        %5550 = vst [vmem:[#allocation3 + $0xf8] sm:$0xff] %v5527
        %5551 = vst.msk [vmem:[#allocation3 + $0x100] sm:$0xff] %vm1131, %v5528
        %5552 = vst.msk [vmem:[#allocation3 + $0x108] sm:$0xff] %vm1173, %v5518
        %5553 = vst [vmem:[#allocation3 + $0x110] sm:$0xff] %v5529
        %5554 = vst.msk [vmem:[#allocation3 + $0x118] sm:$0xff] %vm1131, %v5530
        %5555 = vst.msk [vmem:[#allocation3 + $0xc0] sm:$0xff] %vm753, 0.0
        %5556 = vst.msk [vmem:[#allocation3 + $0xd8] sm:$0xff] %vm753, 0.0
        %5557 = vst.msk [vmem:[#allocation3 + $0xf0] sm:$0xff] %vm753, 0.0
        %5558 = vst.msk [vmem:[#allocation3 + $0x108] sm:$0xff] %vm753, 0.0
        %v5559 = vld [vmem:[#allocation2] sm:$0xff]
        %v5560 = vld [vmem:[#allocation2 + $0x8] sm:$0xff]
        %v5561 = vld [vmem:[#allocation2 + $0x10] sm:$0xff]
        %v5562 = vld [vmem:[#allocation2 + $0x18] sm:$0xff]
        %v5563 = vld [vmem:[#allocation2 + $0x20] sm:$0xff]
        %v5564 = vld [vmem:[#allocation2 + $0x28] sm:$0xff]
        %v5565 = vld [vmem:[#allocation2 + $0x30] sm:$0xff]
        %v5566 = vld [vmem:[#allocation2 + $0x38] sm:$0xff]
        %v5567 = vld [vmem:[#allocation2 + $0x40] sm:$0xff]
        %v5568 = vld [vmem:[#allocation2 + $0x48] sm:$0xff]
        %v5569 = vld [vmem:[#allocation2 + $0x50] sm:$0xff]
        %v5570 = vld [vmem:[#allocation2 + $0x58] sm:$0xff]
        %5583 = vrot.lane.b32.xlu0 %v5559, 1
        %v5584 = vpop.permute.xlu0 %5583
        %5585 = vrot.lane.b32.xlu0 %v5560, 1
        %v5586 = vpop.permute.xlu0 %5585
        %5587 = vrot.lane.b32.xlu0 %v5561, 1
        %v5588 = vpop.permute.xlu0 %5587
        %5589 = vrot.lane.b32.xlu0 %v5562, 1
        %v5590 = vpop.permute.xlu0 %5589
        %5591 = vrot.lane.b32.xlu0 %v5563, 1
        %v5592 = vpop.permute.xlu0 %5591
        %5593 = vrot.lane.b32.xlu0 %v5564, 1
        %v5594 = vpop.permute.xlu0 %5593
        %5595 = vrot.lane.b32.xlu0 %v5565, 1
        %v5596 = vpop.permute.xlu0 %5595
        %5597 = vrot.lane.b32.xlu0 %v5566, 1
        %v5598 = vpop.permute.xlu0 %5597
        %5599 = vrot.lane.b32.xlu0 %v5567, 1
        %v5600 = vpop.permute.xlu0 %5599
        %5601 = vrot.lane.b32.xlu0 %v5568, 1
        %v5602 = vpop.permute.xlu0 %5601
        %5603 = vrot.lane.b32.xlu0 %v5569, 1
        %v5604 = vpop.permute.xlu0 %5603
        %5605 = vrot.lane.b32.xlu0 %v5570, 1
        %v5606 = vpop.permute.xlu0 %5605
        %v5607 = vsel %vm780, %v5584, %v5586
        %v5608 = vsel %vm780, %v5586, %v5588
        %v5609 = vsel %vm780, %v5590, %v5592
        %v5610 = vsel %vm780, %v5592, %v5594
        %v5611 = vsel %vm780, %v5596, %v5598
        %v5612 = vsel %vm780, %v5598, %v5600
        %v5613 = vsel %vm780, %v5602, %v5604
        %v5614 = vsel %vm780, %v5604, %v5606
        %5627 = vst.msk [vmem:[#allocation3 + $0x120] sm:$0xff] %vm1195, %v5584
        %5628 = vst [vmem:[#allocation3 + $0x128] sm:$0xff] %v5607
        %5629 = vst.msk [vmem:[#allocation3 + $0x130] sm:$0xff] %vm1131, %v5608
        %5630 = vst.msk [vmem:[#allocation3 + $0x138] sm:$0xff] %vm1195, %v5590
        %5631 = vst [vmem:[#allocation3 + $0x140] sm:$0xff] %v5609
        %5632 = vst.msk [vmem:[#allocation3 + $0x148] sm:$0xff] %vm1131, %v5610
        %5633 = vst.msk [vmem:[#allocation3 + $0x150] sm:$0xff] %vm1195, %v5596
        %5634 = vst [vmem:[#allocation3 + $0x158] sm:$0xff] %v5611
        %5635 = vst.msk [vmem:[#allocation3 + $0x160] sm:$0xff] %vm1131, %v5612
        %5636 = vst.msk [vmem:[#allocation3 + $0x168] sm:$0xff] %vm1195, %v5602
        %5637 = vst [vmem:[#allocation3 + $0x170] sm:$0xff] %v5613
        %5638 = vst.msk [vmem:[#allocation3 + $0x178] sm:$0xff] %vm1131, %v5614
        %5639 = vst.msk [vmem:[#allocation3 + $0x120] sm:$0xff] %vm780, 0.0
        %5640 = vst.msk [vmem:[#allocation3 + $0x138] sm:$0xff] %vm780, 0.0
        %5641 = vst.msk [vmem:[#allocation3 + $0x150] sm:$0xff] %vm780, 0.0
        %5642 = vst.msk [vmem:[#allocation3 + $0x168] sm:$0xff] %vm780, 0.0
        %v5643 = vld [vmem:[#allocation2] sm:$0xff]
        %v5644 = vld [vmem:[#allocation2 + $0x8] sm:$0xff]
        %v5645 = vld [vmem:[#allocation2 + $0x10] sm:$0xff]
        %v5646 = vld [vmem:[#allocation2 + $0x18] sm:$0xff]
        %v5647 = vld [vmem:[#allocation2 + $0x20] sm:$0xff]
        %v5648 = vld [vmem:[#allocation2 + $0x28] sm:$0xff]
        %v5649 = vld [vmem:[#allocation2 + $0x30] sm:$0xff]
        %v5650 = vld [vmem:[#allocation2 + $0x38] sm:$0xff]
        %v5651 = vld [vmem:[#allocation2 + $0x40] sm:$0xff]
        %v5652 = vld [vmem:[#allocation2 + $0x48] sm:$0xff]
        %v5653 = vld [vmem:[#allocation2 + $0x50] sm:$0xff]
        %v5654 = vld [vmem:[#allocation2 + $0x58] sm:$0xff]
        %5655 = vst [vmem:[#allocation3 + $0x180] sm:$0xff] %v5643
        %5656 = vst [vmem:[#allocation3 + $0x188] sm:$0xff] %v5644
        %5657 = vst.msk [vmem:[#allocation3 + $0x190] sm:$0xff] %vm1131, %v5645
        %5658 = vst [vmem:[#allocation3 + $0x198] sm:$0xff] %v5646
        %5659 = vst [vmem:[#allocation3 + $0x1a0] sm:$0xff] %v5647
        %5660 = vst.msk [vmem:[#allocation3 + $0x1a8] sm:$0xff] %vm1131, %v5648
        %5661 = vst [vmem:[#allocation3 + $0x1b0] sm:$0xff] %v5649
        %5662 = vst [vmem:[#allocation3 + $0x1b8] sm:$0xff] %v5650
        %5663 = vst.msk [vmem:[#allocation3 + $0x1c0] sm:$0xff] %vm1131, %v5651
        %5664 = vst [vmem:[#allocation3 + $0x1c8] sm:$0xff] %v5652
        %5665 = vst [vmem:[#allocation3 + $0x1d0] sm:$0xff] %v5653
        %5666 = vst.msk [vmem:[#allocation3 + $0x1d8] sm:$0xff] %vm1131, %v5654
        %v5667 = vld [vmem:[#allocation2] sm:$0xff]
        %v5668 = vld [vmem:[#allocation2 + $0x8] sm:$0xff]
        %v5669 = vld [vmem:[#allocation2 + $0x10] sm:$0xff]
        %v5670 = vld [vmem:[#allocation2 + $0x18] sm:$0xff]
        %v5671 = vld [vmem:[#allocation2 + $0x20] sm:$0xff]
        %v5672 = vld [vmem:[#allocation2 + $0x28] sm:$0xff]
        %v5673 = vld [vmem:[#allocation2 + $0x30] sm:$0xff]
        %v5674 = vld [vmem:[#allocation2 + $0x38] sm:$0xff]
        %v5675 = vld [vmem:[#allocation2 + $0x40] sm:$0xff]
        %v5676 = vld [vmem:[#allocation2 + $0x48] sm:$0xff]
        %v5677 = vld [vmem:[#allocation2 + $0x50] sm:$0xff]
        %v5678 = vld [vmem:[#allocation2 + $0x58] sm:$0xff]
        %5691 = vrot.lane.b32.xlu0 %v5667, 127
        %v5692 = vpop.permute.xlu0 %5691
        %5693 = vrot.lane.b32.xlu0 %v5668, 127
        %v5694 = vpop.permute.xlu0 %5693
        %5695 = vrot.lane.b32.xlu0 %v5669, 127
        %v5696 = vpop.permute.xlu0 %5695
        %5697 = vrot.lane.b32.xlu0 %v5670, 127
        %v5698 = vpop.permute.xlu0 %5697
        %5699 = vrot.lane.b32.xlu0 %v5671, 127
        %v5700 = vpop.permute.xlu0 %5699
        %5701 = vrot.lane.b32.xlu0 %v5672, 127
        %v5702 = vpop.permute.xlu0 %5701
        %5703 = vrot.lane.b32.xlu0 %v5673, 127
        %v5704 = vpop.permute.xlu0 %5703
        %5705 = vrot.lane.b32.xlu0 %v5674, 127
        %v5706 = vpop.permute.xlu0 %5705
        %5707 = vrot.lane.b32.xlu0 %v5675, 127
        %v5708 = vpop.permute.xlu0 %5707
        %5709 = vrot.lane.b32.xlu0 %v5676, 127
        %v5710 = vpop.permute.xlu0 %5709
        %5711 = vrot.lane.b32.xlu0 %v5677, 127
        %v5712 = vpop.permute.xlu0 %5711
        %5713 = vrot.lane.b32.xlu0 %v5678, 127
        %v5714 = vpop.permute.xlu0 %5713
        %v5715 = vsel %vm813, %v5692, %v5694
        %v5716 = vsel %vm813, %v5694, %v5696
        %v5717 = vsel %vm813, %v5698, %v5700
        %v5718 = vsel %vm813, %v5700, %v5702
        %v5719 = vsel %vm813, %v5704, %v5706
        %v5720 = vsel %vm813, %v5706, %v5708
        %v5721 = vsel %vm813, %v5710, %v5712
        %v5722 = vsel %vm813, %v5712, %v5714
        %5735 = vst [vmem:[#allocation3 + $0x1e0] sm:$0xff] %v5715
        %5736 = vst [vmem:[#allocation3 + $0x1e8] sm:$0xff] %v5716
        %5737 = vst.msk [vmem:[#allocation3 + $0x1f0] sm:$0xff] %vm1225, %v5696
        %5738 = vst [vmem:[#allocation3 + $0x1f8] sm:$0xff] %v5717
        %5739 = vst [vmem:[#allocation3 + $0x200] sm:$0xff] %v5718
        %5740 = vst.msk [vmem:[#allocation3 + $0x208] sm:$0xff] %vm1225, %v5702
        %5741 = vst [vmem:[#allocation3 + $0x210] sm:$0xff] %v5719
        %5742 = vst [vmem:[#allocation3 + $0x218] sm:$0xff] %v5720
        %5743 = vst.msk [vmem:[#allocation3 + $0x220] sm:$0xff] %vm1225, %v5708
        %5744 = vst [vmem:[#allocation3 + $0x228] sm:$0xff] %v5721
        %5745 = vst [vmem:[#allocation3 + $0x230] sm:$0xff] %v5722
        %5746 = vst.msk [vmem:[#allocation3 + $0x238] sm:$0xff] %vm1225, %v5714
        %5747 = vst.msk [vmem:[#allocation3 + $0x1f0] sm:$0xff] %vm1227, 0.0
        %5748 = vst.msk [vmem:[#allocation3 + $0x208] sm:$0xff] %vm1227, 0.0
        %5749 = vst.msk [vmem:[#allocation3 + $0x220] sm:$0xff] %vm1227, 0.0
        %5750 = vst.msk [vmem:[#allocation3 + $0x238] sm:$0xff] %vm1227, 0.0
        %v5751 = vld [vmem:[#allocation2] sm:$0xff]
        %v5752 = vld [vmem:[#allocation2 + $0x8] sm:$0xff]
        %v5753 = vld [vmem:[#allocation2 + $0x10] sm:$0xff]
        %v5754 = vld [vmem:[#allocation2 + $0x18] sm:$0xff]
        %v5755 = vld [vmem:[#allocation2 + $0x20] sm:$0xff]
        %v5756 = vld [vmem:[#allocation2 + $0x28] sm:$0xff]
        %v5757 = vld [vmem:[#allocation2 + $0x30] sm:$0xff]
        %v5758 = vld [vmem:[#allocation2 + $0x38] sm:$0xff]
        %v5759 = vld [vmem:[#allocation2 + $0x40] sm:$0xff]
        %v5760 = vld [vmem:[#allocation2 + $0x48] sm:$0xff]
        %v5761 = vld [vmem:[#allocation2 + $0x50] sm:$0xff]
        %v5762 = vld [vmem:[#allocation2 + $0x58] sm:$0xff]
        %5775 = vrot.lane.b32.xlu0 %v5751, 111
        %v5776 = vpop.permute.xlu0 %5775
        %5777 = vrot.lane.b32.xlu0 %v5752, 111
        %v5778 = vpop.permute.xlu0 %5777
        %5779 = vrot.lane.b32.xlu0 %v5753, 111
        %v5780 = vpop.permute.xlu0 %5779
        %5781 = vrot.lane.b32.xlu0 %v5754, 111
        %v5782 = vpop.permute.xlu0 %5781
        %5783 = vrot.lane.b32.xlu0 %v5755, 111
        %v5784 = vpop.permute.xlu0 %5783
        %5785 = vrot.lane.b32.xlu0 %v5756, 111
        %v5786 = vpop.permute.xlu0 %5785
        %5787 = vrot.lane.b32.xlu0 %v5757, 111
        %v5788 = vpop.permute.xlu0 %5787
        %5789 = vrot.lane.b32.xlu0 %v5758, 111
        %v5790 = vpop.permute.xlu0 %5789
        %5791 = vrot.lane.b32.xlu0 %v5759, 111
        %v5792 = vpop.permute.xlu0 %5791
        %5793 = vrot.lane.b32.xlu0 %v5760, 111
        %v5794 = vpop.permute.xlu0 %5793
        %5795 = vrot.lane.b32.xlu0 %v5761, 111
        %v5796 = vpop.permute.xlu0 %5795
        %5797 = vrot.lane.b32.xlu0 %v5762, 111
        %v5798 = vpop.permute.xlu0 %5797
        %v5799 = vsel %vm837, %v5776, %v5778
        %v5800 = vsel %vm837, %v5778, %v5780
        %v5801 = vsel %vm837, %v5782, %v5784
        %v5802 = vsel %vm837, %v5784, %v5786
        %v5803 = vsel %vm837, %v5788, %v5790
        %v5804 = vsel %vm837, %v5790, %v5792
        %v5805 = vsel %vm837, %v5794, %v5796
        %v5806 = vsel %vm837, %v5796, %v5798
        %5819 = vst [vmem:[#allocation3 + $0x240] sm:$0xff] %v5799
        %5820 = vst [vmem:[#allocation3 + $0x248] sm:$0xff] %v5800
        %5821 = vst.msk [vmem:[#allocation3 + $0x250] sm:$0xff] %vm1248, %v5780
        %5822 = vst [vmem:[#allocation3 + $0x258] sm:$0xff] %v5801
        %5823 = vst [vmem:[#allocation3 + $0x260] sm:$0xff] %v5802
        %5824 = vst.msk [vmem:[#allocation3 + $0x268] sm:$0xff] %vm1248, %v5786
        %5825 = vst [vmem:[#allocation3 + $0x270] sm:$0xff] %v5803
        %5826 = vst [vmem:[#allocation3 + $0x278] sm:$0xff] %v5804
        %5827 = vst.msk [vmem:[#allocation3 + $0x280] sm:$0xff] %vm1248, %v5792
        %5828 = vst [vmem:[#allocation3 + $0x288] sm:$0xff] %v5805
        %5829 = vst [vmem:[#allocation3 + $0x290] sm:$0xff] %v5806
        %5830 = vst.msk [vmem:[#allocation3 + $0x298] sm:$0xff] %vm1248, %v5798
        %5831 = vst.msk [vmem:[#allocation3 + $0x250] sm:$0xff] %vm1250, 0.0
        %5832 = vst.msk [vmem:[#allocation3 + $0x268] sm:$0xff] %vm1250, 0.0
        %5833 = vst.msk [vmem:[#allocation3 + $0x280] sm:$0xff] %vm1250, 0.0
        %5834 = vst.msk [vmem:[#allocation3 + $0x298] sm:$0xff] %vm1250, 0.0
        %v5835 = vld [vmem:[#allocation2] sm:$0xff]
        %v5836 = vld [vmem:[#allocation2 + $0x8] sm:$0xff]
        %v5837 = vld [vmem:[#allocation2 + $0x10] sm:$0xff]
        %v5838 = vld [vmem:[#allocation2 + $0x18] sm:$0xff]
        %v5839 = vld [vmem:[#allocation2 + $0x20] sm:$0xff]
        %v5840 = vld [vmem:[#allocation2 + $0x28] sm:$0xff]
        %v5841 = vld [vmem:[#allocation2 + $0x30] sm:$0xff]
        %v5842 = vld [vmem:[#allocation2 + $0x38] sm:$0xff]
        %v5843 = vld [vmem:[#allocation2 + $0x40] sm:$0xff]
        %v5844 = vld [vmem:[#allocation2 + $0x48] sm:$0xff]
        %v5845 = vld [vmem:[#allocation2 + $0x50] sm:$0xff]
        %v5846 = vld [vmem:[#allocation2 + $0x58] sm:$0xff]
        %5859 = vrot.lane.b32.xlu0 %v5835, 110
        %v5860 = vpop.permute.xlu0 %5859
        %5861 = vrot.lane.b32.xlu0 %v5836, 110
        %v5862 = vpop.permute.xlu0 %5861
        %5863 = vrot.lane.b32.xlu0 %v5837, 110
        %v5864 = vpop.permute.xlu0 %5863
        %5865 = vrot.lane.b32.xlu0 %v5838, 110
        %v5866 = vpop.permute.xlu0 %5865
        %5867 = vrot.lane.b32.xlu0 %v5839, 110
        %v5868 = vpop.permute.xlu0 %5867
        %5869 = vrot.lane.b32.xlu0 %v5840, 110
        %v5870 = vpop.permute.xlu0 %5869
        %5871 = vrot.lane.b32.xlu0 %v5841, 110
        %v5872 = vpop.permute.xlu0 %5871
        %5873 = vrot.lane.b32.xlu0 %v5842, 110
        %v5874 = vpop.permute.xlu0 %5873
        %5875 = vrot.lane.b32.xlu0 %v5843, 110
        %v5876 = vpop.permute.xlu0 %5875
        %5877 = vrot.lane.b32.xlu0 %v5844, 110
        %v5878 = vpop.permute.xlu0 %5877
        %5879 = vrot.lane.b32.xlu0 %v5845, 110
        %v5880 = vpop.permute.xlu0 %5879
        %5881 = vrot.lane.b32.xlu0 %v5846, 110
        %v5882 = vpop.permute.xlu0 %5881
        %v5883 = vsel %vm864, %v5860, %v5862
        %v5884 = vsel %vm864, %v5862, %v5864
        %v5885 = vsel %vm864, %v5866, %v5868
        %v5886 = vsel %vm864, %v5868, %v5870
        %v5887 = vsel %vm864, %v5872, %v5874
        %v5888 = vsel %vm864, %v5874, %v5876
        %v5889 = vsel %vm864, %v5878, %v5880
        %v5890 = vsel %vm864, %v5880, %v5882
        %5903 = vst [vmem:[#allocation3 + $0x2a0] sm:$0xff] %v5883
        %5904 = vst [vmem:[#allocation3 + $0x2a8] sm:$0xff] %v5884
        %5905 = vst.msk [vmem:[#allocation3 + $0x2b0] sm:$0xff] %vm1271, %v5864
        %5906 = vst [vmem:[#allocation3 + $0x2b8] sm:$0xff] %v5885
        %5907 = vst [vmem:[#allocation3 + $0x2c0] sm:$0xff] %v5886
        %5908 = vst.msk [vmem:[#allocation3 + $0x2c8] sm:$0xff] %vm1271, %v5870
        %5909 = vst [vmem:[#allocation3 + $0x2d0] sm:$0xff] %v5887
        %5910 = vst [vmem:[#allocation3 + $0x2d8] sm:$0xff] %v5888
        %5911 = vst.msk [vmem:[#allocation3 + $0x2e0] sm:$0xff] %vm1271, %v5876
        %5912 = vst [vmem:[#allocation3 + $0x2e8] sm:$0xff] %v5889
        %5913 = vst [vmem:[#allocation3 + $0x2f0] sm:$0xff] %v5890
        %5914 = vst.msk [vmem:[#allocation3 + $0x2f8] sm:$0xff] %vm1271, %v5882
        %5915 = vst.msk [vmem:[#allocation3 + $0x2b0] sm:$0xff] %vm1273, 0.0
        %5916 = vst.msk [vmem:[#allocation3 + $0x2c8] sm:$0xff] %vm1273, 0.0
        %5917 = vst.msk [vmem:[#allocation3 + $0x2e0] sm:$0xff] %vm1273, 0.0
        %5918 = vst.msk [vmem:[#allocation3 + $0x2f8] sm:$0xff] %vm1273, 0.0
        %v5919 = vld [vmem:[#allocation2] sm:$0xff]
        %v5920 = vld [vmem:[#allocation2 + $0x8] sm:$0xff]
        %v5921 = vld [vmem:[#allocation2 + $0x10] sm:$0xff]
        %v5922 = vld [vmem:[#allocation2 + $0x18] sm:$0xff]
        %v5923 = vld [vmem:[#allocation2 + $0x20] sm:$0xff]
        %v5924 = vld [vmem:[#allocation2 + $0x28] sm:$0xff]
        %v5925 = vld [vmem:[#allocation2 + $0x30] sm:$0xff]
        %v5926 = vld [vmem:[#allocation2 + $0x38] sm:$0xff]
        %v5927 = vld [vmem:[#allocation2 + $0x40] sm:$0xff]
        %v5928 = vld [vmem:[#allocation2 + $0x48] sm:$0xff]
        %v5929 = vld [vmem:[#allocation2 + $0x50] sm:$0xff]
        %v5930 = vld [vmem:[#allocation2 + $0x58] sm:$0xff]
        %5943 = vrot.lane.b32.xlu0 %v5919, 109
        %v5944 = vpop.permute.xlu0 %5943
        %5945 = vrot.lane.b32.xlu0 %v5920, 109
        %v5946 = vpop.permute.xlu0 %5945
        %5947 = vrot.lane.b32.xlu0 %v5921, 109
        %v5948 = vpop.permute.xlu0 %5947
        %5949 = vrot.lane.b32.xlu0 %v5922, 109
        %v5950 = vpop.permute.xlu0 %5949
        %5951 = vrot.lane.b32.xlu0 %v5923, 109
        %v5952 = vpop.permute.xlu0 %5951
        %5953 = vrot.lane.b32.xlu0 %v5924, 109
        %v5954 = vpop.permute.xlu0 %5953
        %5955 = vrot.lane.b32.xlu0 %v5925, 109
        %v5956 = vpop.permute.xlu0 %5955
        %5957 = vrot.lane.b32.xlu0 %v5926, 109
        %v5958 = vpop.permute.xlu0 %5957
        %5959 = vrot.lane.b32.xlu0 %v5927, 109
        %v5960 = vpop.permute.xlu0 %5959
        %5961 = vrot.lane.b32.xlu0 %v5928, 109
        %v5962 = vpop.permute.xlu0 %5961
        %5963 = vrot.lane.b32.xlu0 %v5929, 109
        %v5964 = vpop.permute.xlu0 %5963
        %5965 = vrot.lane.b32.xlu0 %v5930, 109
        %v5966 = vpop.permute.xlu0 %5965
        %v5967 = vsel %vm888, %v5944, %v5946
        %v5968 = vsel %vm888, %v5946, %v5948
        %v5969 = vsel %vm888, %v5950, %v5952
        %v5970 = vsel %vm888, %v5952, %v5954
        %v5971 = vsel %vm888, %v5956, %v5958
        %v5972 = vsel %vm888, %v5958, %v5960
        %v5973 = vsel %vm888, %v5962, %v5964
        %v5974 = vsel %vm888, %v5964, %v5966
        %5987 = vst [vmem:[#allocation3 + $0x300] sm:$0xff] %v5967
        %5988 = vst [vmem:[#allocation3 + $0x308] sm:$0xff] %v5968
        %5989 = vst.msk [vmem:[#allocation3 + $0x310] sm:$0xff] %vm1294, %v5948
        %5990 = vst [vmem:[#allocation3 + $0x318] sm:$0xff] %v5969
        %5991 = vst [vmem:[#allocation3 + $0x320] sm:$0xff] %v5970
        %5992 = vst.msk [vmem:[#allocation3 + $0x328] sm:$0xff] %vm1294, %v5954
        %5993 = vst [vmem:[#allocation3 + $0x330] sm:$0xff] %v5971
        %5994 = vst [vmem:[#allocation3 + $0x338] sm:$0xff] %v5972
        %5995 = vst.msk [vmem:[#allocation3 + $0x340] sm:$0xff] %vm1294, %v5960
        %5996 = vst [vmem:[#allocation3 + $0x348] sm:$0xff] %v5973
        %5997 = vst [vmem:[#allocation3 + $0x350] sm:$0xff] %v5974
        %5998 = vst.msk [vmem:[#allocation3 + $0x358] sm:$0xff] %vm1294, %v5966
        %5999 = vst.msk [vmem:[#allocation3 + $0x310] sm:$0xff] %vm1296, 0.0
        %6000 = vst.msk [vmem:[#allocation3 + $0x328] sm:$0xff] %vm1296, 0.0
        %6001 = vst.msk [vmem:[#allocation3 + $0x340] sm:$0xff] %vm1296, 0.0
        %6002 = vst.msk [vmem:[#allocation3 + $0x358] sm:$0xff] %vm1296, 0.0
        %v6003 = vld [vmem:[%s18] sm:$0xff]
        %v6004 = vld [vmem:[%s18 + $0x8] sm:$0xf]
        %v6005 = vld [vmem:[#allocation3] sm:$0xff]
        %v6006 = vld [vmem:[#allocation3 + $0x8] sm:$0xff]
        %v6007 = vld [vmem:[#allocation3 + $0x10] sm:$0xff]
        %v6008 = vld [vmem:[#allocation3 + $0x18] sm:$0xff]
        %v6009 = vld [vmem:[#allocation3 + $0x20] sm:$0xff]
        %v6010 = vld [vmem:[#allocation3 + $0x28] sm:$0xff]
        %v6011 = vld [vmem:[#allocation3 + $0x30] sm:$0xff]
        %v6012 = vld [vmem:[#allocation3 + $0x38] sm:$0xff]
        %v6013 = vld [vmem:[#allocation3 + $0x40] sm:$0xff]
        %v6014 = vld [vmem:[#allocation3 + $0x48] sm:$0xff]
        %v6015 = vld [vmem:[#allocation3 + $0x50] sm:$0xff]
        %v6016 = vld [vmem:[#allocation3 + $0x58] sm:$0xff]
        %v6017 = vld [vmem:[#allocation3 + $0x60] sm:$0xff]
        %v6018 = vld [vmem:[#allocation3 + $0x68] sm:$0xff]
        %v6019 = vld [vmem:[#allocation3 + $0x70] sm:$0xff]
        %v6020 = vld [vmem:[#allocation3 + $0x78] sm:$0xff]
        %v6021 = vld [vmem:[#allocation3 + $0x80] sm:$0xff]
        %v6022 = vld [vmem:[#allocation3 + $0x88] sm:$0xff]
        %v6023 = vld [vmem:[#allocation3 + $0x90] sm:$0xff]
        %v6024 = vld [vmem:[#allocation3 + $0x98] sm:$0xff]
        %v6025 = vld [vmem:[#allocation3 + $0xa0] sm:$0xff]
        %v6026 = vld [vmem:[#allocation3 + $0xa8] sm:$0xff]
        %v6027 = vld [vmem:[#allocation3 + $0xb0] sm:$0xff]
        %v6028 = vld [vmem:[#allocation3 + $0xb8] sm:$0xff]
        %v6029 = vld [vmem:[#allocation3 + $0xc0] sm:$0xff]
        %v6030 = vld [vmem:[#allocation3 + $0xc8] sm:$0xff]
        %v6031 = vld [vmem:[#allocation3 + $0xd0] sm:$0xff]
        %v6032 = vld [vmem:[#allocation3 + $0xd8] sm:$0xff]
        %v6033 = vld [vmem:[#allocation3 + $0xe0] sm:$0xff]
        %v6034 = vld [vmem:[#allocation3 + $0xe8] sm:$0xff]
        %v6035 = vld [vmem:[#allocation3 + $0xf0] sm:$0xff]
        %v6036 = vld [vmem:[#allocation3 + $0xf8] sm:$0xff]
        %v6037 = vld [vmem:[#allocation3 + $0x100] sm:$0xff]
        %v6038 = vld [vmem:[#allocation3 + $0x108] sm:$0xff]
        %v6039 = vld [vmem:[#allocation3 + $0x110] sm:$0xff]
        %v6040 = vld [vmem:[#allocation3 + $0x118] sm:$0xff]
        %v6041 = vld [vmem:[#allocation3 + $0x120] sm:$0xff]
        %v6042 = vld [vmem:[#allocation3 + $0x128] sm:$0xff]
        %v6043 = vld [vmem:[#allocation3 + $0x130] sm:$0xff]
        %v6044 = vld [vmem:[#allocation3 + $0x138] sm:$0xff]
        %v6045 = vld [vmem:[#allocation3 + $0x140] sm:$0xff]
        %v6046 = vld [vmem:[#allocation3 + $0x148] sm:$0xff]
        %v6047 = vld [vmem:[#allocation3 + $0x150] sm:$0xff]
        %v6048 = vld [vmem:[#allocation3 + $0x158] sm:$0xff]
        %v6049 = vld [vmem:[#allocation3 + $0x160] sm:$0xff]
        %v6050 = vld [vmem:[#allocation3 + $0x168] sm:$0xff]
        %v6051 = vld [vmem:[#allocation3 + $0x170] sm:$0xff]
        %v6052 = vld [vmem:[#allocation3 + $0x178] sm:$0xff]
        %v6053 = vld [vmem:[#allocation3 + $0x180] sm:$0xff]
        %v6054 = vld [vmem:[#allocation3 + $0x188] sm:$0xff]
        %v6055 = vld [vmem:[#allocation3 + $0x190] sm:$0xff]
        %v6056 = vld [vmem:[#allocation3 + $0x198] sm:$0xff]
        %v6057 = vld [vmem:[#allocation3 + $0x1a0] sm:$0xff]
        %v6058 = vld [vmem:[#allocation3 + $0x1a8] sm:$0xff]
        %v6059 = vld [vmem:[#allocation3 + $0x1b0] sm:$0xff]
        %v6060 = vld [vmem:[#allocation3 + $0x1b8] sm:$0xff]
        %v6061 = vld [vmem:[#allocation3 + $0x1c0] sm:$0xff]
        %v6062 = vld [vmem:[#allocation3 + $0x1c8] sm:$0xff]
        %v6063 = vld [vmem:[#allocation3 + $0x1d0] sm:$0xff]
        %v6064 = vld [vmem:[#allocation3 + $0x1d8] sm:$0xff]
        %v6065 = vld [vmem:[#allocation3 + $0x1e0] sm:$0xff]
        %v6066 = vld [vmem:[#allocation3 + $0x1e8] sm:$0xff]
        %v6067 = vld [vmem:[#allocation3 + $0x1f0] sm:$0xff]
        %v6068 = vld [vmem:[#allocation3 + $0x1f8] sm:$0xff]
        %v6069 = vld [vmem:[#allocation3 + $0x200] sm:$0xff]
        %v6070 = vld [vmem:[#allocation3 + $0x208] sm:$0xff]
        %v6071 = vld [vmem:[#allocation3 + $0x210] sm:$0xff]
        %v6072 = vld [vmem:[#allocation3 + $0x218] sm:$0xff]
        %v6073 = vld [vmem:[#allocation3 + $0x220] sm:$0xff]
        %v6074 = vld [vmem:[#allocation3 + $0x228] sm:$0xff]
        %v6075 = vld [vmem:[#allocation3 + $0x230] sm:$0xff]
        %v6076 = vld [vmem:[#allocation3 + $0x238] sm:$0xff]
        %v6077 = vld [vmem:[#allocation3 + $0x240] sm:$0xff]
        %v6078 = vld [vmem:[#allocation3 + $0x248] sm:$0xff]
        %v6079 = vld [vmem:[#allocation3 + $0x250] sm:$0xff]
        %v6080 = vld [vmem:[#allocation3 + $0x258] sm:$0xff]
        %v6081 = vld [vmem:[#allocation3 + $0x260] sm:$0xff]
        %v6082 = vld [vmem:[#allocation3 + $0x268] sm:$0xff]
        %v6083 = vld [vmem:[#allocation3 + $0x270] sm:$0xff]
        %v6084 = vld [vmem:[#allocation3 + $0x278] sm:$0xff]
        %v6085 = vld [vmem:[#allocation3 + $0x280] sm:$0xff]
        %v6086 = vld [vmem:[#allocation3 + $0x288] sm:$0xff]
        %v6087 = vld [vmem:[#allocation3 + $0x290] sm:$0xff]
        %v6088 = vld [vmem:[#allocation3 + $0x298] sm:$0xff]
        %v6089 = vld [vmem:[#allocation3 + $0x2a0] sm:$0xff]
        %v6090 = vld [vmem:[#allocation3 + $0x2a8] sm:$0xff]
        %v6091 = vld [vmem:[#allocation3 + $0x2b0] sm:$0xff]
        %v6092 = vld [vmem:[#allocation3 + $0x2b8] sm:$0xff]
        %v6093 = vld [vmem:[#allocation3 + $0x2c0] sm:$0xff]
        %v6094 = vld [vmem:[#allocation3 + $0x2c8] sm:$0xff]
        %v6095 = vld [vmem:[#allocation3 + $0x2d0] sm:$0xff]
        %v6096 = vld [vmem:[#allocation3 + $0x2d8] sm:$0xff]
        %v6097 = vld [vmem:[#allocation3 + $0x2e0] sm:$0xff]
        %v6098 = vld [vmem:[#allocation3 + $0x2e8] sm:$0xff]
        %v6099 = vld [vmem:[#allocation3 + $0x2f0] sm:$0xff]
        %v6100 = vld [vmem:[#allocation3 + $0x2f8] sm:$0xff]
        %v6101 = vld [vmem:[#allocation3 + $0x300] sm:$0xff]
        %v6102 = vld [vmem:[#allocation3 + $0x308] sm:$0xff]
        %v6103 = vld [vmem:[#allocation3 + $0x310] sm:$0xff]
        %v6104 = vld [vmem:[#allocation3 + $0x318] sm:$0xff]
        %v6105 = vld [vmem:[#allocation3 + $0x320] sm:$0xff]
        %v6106 = vld [vmem:[#allocation3 + $0x328] sm:$0xff]
        %v6107 = vld [vmem:[#allocation3 + $0x330] sm:$0xff]
        %v6108 = vld [vmem:[#allocation3 + $0x338] sm:$0xff]
        %v6109 = vld [vmem:[#allocation3 + $0x340] sm:$0xff]
        %v6110 = vld [vmem:[#allocation3 + $0x348] sm:$0xff]
        %v6111 = vld [vmem:[#allocation3 + $0x350] sm:$0xff]
        %v6112 = vld [vmem:[#allocation3 + $0x358] sm:$0xff]
        %v6113 = vld [vmem:[%s19] sm:$0xf]
        %6115 = vset.pattern.permute.xlu0 0
        %6116 = vperm.xlu0 %6115, %v6113
        %v6117 = vpop.permute.xlu0 %6116
        %v6121 = vcombine.high %v6003, %v6003
        %vm6123 = vcmask 261120
        %v6124 = vsel %vm6123, %v6004, 0
        %6126 = vmatprep.subr.mxu0 %v6006
        %6127 = vmatpush1.msra.mxu0 %v6005
        %6128 = vmatprep.subr.mxu0 %v6009
        %6129 = vmatpush1.msra.mxu0 %v6008
        %6130 = vmatprep.subr.mxu0 %v6012
        %6131 = vmatpush1.msra.mxu0 %v6011
        %6132 = vmatprep.subr.mxu0 %v6015
        %6133 = vmatpush1.msra.mxu0 %v6014
        %6134 = vmatprep.subr.mxu0 %v6018
        %6135 = vmatpush1.msra.mxu0 %v6017
        %6136 = vmatprep.subr.mxu0 %v6021
        %6137 = vmatpush1.msra.mxu0 %v6020
        %6138 = vmatprep.subr.mxu0 %v6024
        %6139 = vmatpush1.msra.mxu0 %v6023
        %6140 = vmatprep.subr.mxu0 %v6027
        %6141 = vmatpush1.msra.mxu0 %v6026
        %6142 = vmatprep.subr.mxu0 %v6030
        %6143 = vmatpush1.msra.mxu0 %v6029
        %6144 = vmatprep.subr.mxu0 %v6033
        %6145 = vmatpush1.msra.mxu0 %v6032
        %6146 = vmatprep.subr.mxu0 %v6036
        %6147 = vmatpush1.msra.mxu0 %v6035
        %6148 = vmatprep.subr.mxu0 %v6039
        %6149 = vmatpush1.msra.mxu0 %v6038
        %6150 = vmatprep.subr.mxu0 %v6042
        %6151 = vmatpush1.msra.mxu0 %v6041
        %6152 = vmatprep.subr.mxu0 %v6045
        %6153 = vmatpush1.msra.mxu0 %v6044
        %6154 = vmatprep.subr.mxu0 %v6048
        %6155 = vmatpush1.msra.mxu0 %v6047
        %6156 = vmatprep.subr.mxu0 %v6051
        %6157 = vmatpush1.msra.mxu0 %v6050
        %6158 = vmatprep.subr.mxu0 %v6054
        %6159 = vmatpush1.msra.mxu0 %v6053
        %6160 = vmatprep.subr.mxu0 %v6057
        %6161 = vmatpush1.msra.mxu0 %v6056
        %6162 = vmatprep.subr.mxu0 %v6060
        %6163 = vmatpush1.msra.mxu0 %v6059
        %6164 = vmatprep.subr.mxu0 %v6063
        %6165 = vmatpush1.msra.mxu0 %v6062
        %6166 = vmatprep.subr.mxu0 %v6066
        %6167 = vmatpush1.msra.mxu0 %v6065
        %6168 = vmatprep.subr.mxu0 %v6069
        %6169 = vmatpush1.msra.mxu0 %v6068
        %6170 = vmatprep.subr.mxu0 %v6072
        %6171 = vmatpush1.msra.mxu0 %v6071
        %6172 = vmatprep.subr.mxu0 %v6075
        %6173 = vmatpush1.msra.mxu0 %v6074
        %6174 = vmatprep.subr.mxu0 %v6078
        %6175 = vmatpush1.msra.mxu0 %v6077
        %6176 = vmatprep.subr.mxu0 %v6081
        %6177 = vmatpush1.msra.mxu0 %v6080
        %6178 = vmatprep.subr.mxu0 %v6084
        %6179 = vmatpush1.msra.mxu0 %v6083
        %6180 = vmatprep.subr.mxu0 %v6087
        %6181 = vmatpush1.msra.mxu0 %v6086
        %6182 = vmatprep.subr.mxu0 %v6090
        %6183 = vmatpush1.msra.mxu0 %v6089
        %6184 = vmatprep.subr.mxu0 %v6093
        %6185 = vmatpush1.msra.mxu0 %v6092
        %6186 = vmatprep.subr.mxu0 %v6096
        %6187 = vmatpush1.msra.mxu0 %v6095
        %6188 = vmatprep.subr.mxu0 %v6099
        %6189 = vmatpush1.msra.mxu0 %v6098
        %6190 = vmatprep.mubr.f32.mxu0 %v6121
        %6191 = vmatmul.mubr.f32.gmra.mrb[0].mxu0 %v6003
        %v6192 = vpop.f32.mrb[0].mxu0
        %v6193 = vadd.f32 %v6117, %v6192
        %v6194 = vpop.f32.mrb[0].mxu0
        %v6195 = vadd.f32 %v6117, %v6194
        %6196 = vdwg.mxu0
        %6197 = vmatprep.subr.mxu0 %v6102
        %6198 = vmatpush1.msra.mxu0 %v6101
        %6199 = vmatprep.subr.mxu0 %v6105
        %6200 = vmatpush1.msra.mxu0 %v6104
        %6201 = vmatprep.subr.mxu0 %v6108
        %6202 = vmatpush1.msra.mxu0 %v6107
        %6203 = vmatprep.subr.mxu0 %v6111
        %6204 = vmatpush1.msra.mxu0 %v6110
        %6205 = vmatprep.subr.mxu0 0.0
        %6206 = vmatpush1.msra.mxu0 0.0
        %6207 = vmatprep.subr.mxu0 0.0
        %6208 = vmatpush1.msra.mxu0 0.0
        %6209 = vmatprep.subr.mxu0 0.0
        %6210 = vmatpush1.msra.mxu0 0.0
        %6211 = vmatprep.subr.mxu0 0.0
        %6212 = vmatpush1.msra.mxu0 0.0
        %6213 = vmatprep.subr.mxu0 0.0
        %6214 = vmatpush1.msra.mxu0 0.0
        %6215 = vmatprep.subr.mxu0 0.0
        %6216 = vmatpush1.msra.mxu0 0.0
        %6217 = vmatprep.subr.mxu0 0.0
        %6218 = vmatpush1.msra.mxu0 0.0
        %6219 = vmatprep.subr.mxu0 0.0
        %6220 = vmatpush1.msra.mxu0 0.0
        %6221 = vmatprep.subr.mxu0 0.0
        %6222 = vmatpush1.msra.mxu0 0.0
        %6223 = vmatprep.subr.mxu0 0.0
        %6224 = vmatpush1.msra.mxu0 0.0
        %6225 = vmatprep.subr.mxu0 0.0
        %6226 = vmatpush1.msra.mxu0 0.0
        %6227 = vmatprep.subr.mxu0 0.0
        %6228 = vmatpush1.msra.mxu0 0.0
        %6229 = vmatprep.subr.mxu0 0.0
        %6230 = vmatpush1.msra.mxu0 0.0
        %6231 = vmatprep.subr.mxu0 0.0
        %6232 = vmatpush1.msra.mxu0 0.0
        %6233 = vmatprep.subr.mxu0 0.0
        %6234 = vmatpush1.msra.mxu0 0.0
        %6235 = vmatprep.subr.mxu0 0.0
        %6236 = vmatpush1.msra.mxu0 0.0
        %6237 = vmatprep.subr.mxu0 0.0
        %6238 = vmatpush1.msra.mxu0 0.0
        %6239 = vmatprep.subr.mxu0 0.0
        %6240 = vmatpush1.msra.mxu0 0.0
        %6241 = vmatprep.subr.mxu0 0.0
        %6242 = vmatpush1.msra.mxu0 0.0
        %6243 = vmatprep.subr.mxu0 0.0
        %6244 = vmatpush1.msra.mxu0 0.0
        %6245 = vmatprep.subr.mxu0 0.0
        %6246 = vmatpush1.msra.mxu0 0.0
        %6247 = vmatprep.subr.mxu0 0.0
        %6248 = vmatpush1.msra.mxu0 0.0
        %6249 = vmatprep.subr.mxu0 0.0
        %6250 = vmatpush1.msra.mxu0 0.0
        %6251 = vmatprep.subr.mxu0 0.0
        %6252 = vmatpush1.msra.mxu0 0.0
        %6253 = vmatprep.subr.mxu0 0.0
        %6254 = vmatpush1.msra.mxu0 0.0
        %6255 = vmatprep.subr.mxu0 0.0
        %6256 = vmatpush1.msra.mxu0 0.0
        %6257 = vmatprep.subr.mxu0 0.0
        %6258 = vmatpush1.msra.mxu0 0.0
        %6259 = vmatprep.subr.mxu0 0.0
        %6260 = vmatpush1.msra.mxu0 0.0
        %6261 = vmatprep.mubr.f32.mxu0 0.0
        %6262 = vmatmul.mubr.f32.gmra.mrb[0].mxu0 %v6124
        %v6263 = vpop.f32.mrb[0].mxu0
        %v6264 = vadd.f32 %v6193, %v6263
        %v6265 = vpop.f32.mrb[0].mxu0
        %v6266 = vadd.f32 %v6195, %v6265
        %6267 = vdwg.mxu0
        %6268 = vmatprep.subr.mxu0 0.0
        %6269 = vmatpush1.msra.mxu0 %v6007
        %6270 = vmatprep.subr.mxu0 0.0
        %6271 = vmatpush1.msra.mxu0 %v6010
        %6272 = vmatprep.subr.mxu0 0.0
        %6273 = vmatpush1.msra.mxu0 %v6013
        %6274 = vmatprep.subr.mxu0 0.0
        %6275 = vmatpush1.msra.mxu0 %v6016
        %6276 = vmatprep.subr.mxu0 0.0
        %6277 = vmatpush1.msra.mxu0 %v6019
        %6278 = vmatprep.subr.mxu0 0.0
        %6279 = vmatpush1.msra.mxu0 %v6022
        %6280 = vmatprep.subr.mxu0 0.0
        %6281 = vmatpush1.msra.mxu0 %v6025
        %6282 = vmatprep.subr.mxu0 0.0
        %6283 = vmatpush1.msra.mxu0 %v6028
        %6284 = vmatprep.subr.mxu0 0.0
        %6285 = vmatpush1.msra.mxu0 %v6031
        %6286 = vmatprep.subr.mxu0 0.0
        %6287 = vmatpush1.msra.mxu0 %v6034
        %6288 = vmatprep.subr.mxu0 0.0
        %6289 = vmatpush1.msra.mxu0 %v6037
        %6290 = vmatprep.subr.mxu0 0.0
        %6291 = vmatpush1.msra.mxu0 %v6040
        %6292 = vmatprep.subr.mxu0 0.0
        %6293 = vmatpush1.msra.mxu0 %v6043
        %6294 = vmatprep.subr.mxu0 0.0
        %6295 = vmatpush1.msra.mxu0 %v6046
        %6296 = vmatprep.subr.mxu0 0.0
        %6297 = vmatpush1.msra.mxu0 %v6049
        %6298 = vmatprep.subr.mxu0 0.0
        %6299 = vmatpush1.msra.mxu0 %v6052
        %6300 = vmatprep.subr.mxu0 0.0
        %6301 = vmatpush1.msra.mxu0 %v6055
        %6302 = vmatprep.subr.mxu0 0.0
        %6303 = vmatpush1.msra.mxu0 %v6058
        %6304 = vmatprep.subr.mxu0 0.0
        %6305 = vmatpush1.msra.mxu0 %v6061
        %6306 = vmatprep.subr.mxu0 0.0
        %6307 = vmatpush1.msra.mxu0 %v6064
        %6308 = vmatprep.subr.mxu0 0.0
        %6309 = vmatpush1.msra.mxu0 %v6067
        %6310 = vmatprep.subr.mxu0 0.0
        %6311 = vmatpush1.msra.mxu0 %v6070
        %6312 = vmatprep.subr.mxu0 0.0
        %6313 = vmatpush1.msra.mxu0 %v6073
        %6314 = vmatprep.subr.mxu0 0.0
        %6315 = vmatpush1.msra.mxu0 %v6076
        %6316 = vmatprep.subr.mxu0 0.0
        %6317 = vmatpush1.msra.mxu0 %v6079
        %6318 = vmatprep.subr.mxu0 0.0
        %6319 = vmatpush1.msra.mxu0 %v6082
        %6320 = vmatprep.subr.mxu0 0.0
        %6321 = vmatpush1.msra.mxu0 %v6085
        %6322 = vmatprep.subr.mxu0 0.0
        %6323 = vmatpush1.msra.mxu0 %v6088
        %6324 = vmatprep.subr.mxu0 0.0
        %6325 = vmatpush1.msra.mxu0 %v6091
        %6326 = vmatprep.subr.mxu0 0.0
        %6327 = vmatpush1.msra.mxu0 %v6094
        %6328 = vmatprep.subr.mxu0 0.0
        %6329 = vmatpush1.msra.mxu0 %v6097
        %6330 = vmatprep.subr.mxu0 0.0
        %6331 = vmatpush1.msra.mxu0 %v6100
        %6332 = vmatprep.mubr.f32.mxu0 %v6121
        %6333 = vmatmul.mubr.f32.gmra.mrb[0].mxu0 %v6003
        %v6334 = vpop.f32.mrb[0].mxu0
        %v6335 = vadd.f32 %v6117, %v6334
        %v6336 = vpop.f32.mrb[0].mxu0
        %6337 = vdwg.mxu0
        %6338 = vmatprep.subr.mxu0 0.0
        %6339 = vmatpush1.msra.mxu0 %v6103
        %6340 = vmatprep.subr.mxu0 0.0
        %6341 = vmatpush1.msra.mxu0 %v6106
        %6342 = vmatprep.subr.mxu0 0.0
        %6343 = vmatpush1.msra.mxu0 %v6109
        %6344 = vmatprep.subr.mxu0 0.0
        %6345 = vmatpush1.msra.mxu0 %v6112
        %6346 = vmatprep.subr.mxu0 0.0
        %6347 = vmatpush1.msra.mxu0 0.0
        %6348 = vmatprep.subr.mxu0 0.0
        %6349 = vmatpush1.msra.mxu0 0.0
        %6350 = vmatprep.subr.mxu0 0.0
        %6351 = vmatpush1.msra.mxu0 0.0
        %6352 = vmatprep.subr.mxu0 0.0
        %6353 = vmatpush1.msra.mxu0 0.0
        %6354 = vmatprep.subr.mxu0 0.0
        %6355 = vmatpush1.msra.mxu0 0.0
        %6356 = vmatprep.subr.mxu0 0.0
        %6357 = vmatpush1.msra.mxu0 0.0
        %6358 = vmatprep.subr.mxu0 0.0
        %6359 = vmatpush1.msra.mxu0 0.0
        %6360 = vmatprep.subr.mxu0 0.0
        %6361 = vmatpush1.msra.mxu0 0.0
        %6362 = vmatprep.subr.mxu0 0.0
        %6363 = vmatpush1.msra.mxu0 0.0
        %6364 = vmatprep.subr.mxu0 0.0
        %6365 = vmatpush1.msra.mxu0 0.0
        %6366 = vmatprep.subr.mxu0 0.0
        %6367 = vmatpush1.msra.mxu0 0.0
        %6368 = vmatprep.subr.mxu0 0.0
        %6369 = vmatpush1.msra.mxu0 0.0
        %6370 = vmatprep.subr.mxu0 0.0
        %6371 = vmatpush1.msra.mxu0 0.0
        %6372 = vmatprep.subr.mxu0 0.0
        %6373 = vmatpush1.msra.mxu0 0.0
        %6374 = vmatprep.subr.mxu0 0.0
        %6375 = vmatpush1.msra.mxu0 0.0
        %6376 = vmatprep.subr.mxu0 0.0
        %6377 = vmatpush1.msra.mxu0 0.0
        %6378 = vmatprep.subr.mxu0 0.0
        %6379 = vmatpush1.msra.mxu0 0.0
        %6380 = vmatprep.subr.mxu0 0.0
        %6381 = vmatpush1.msra.mxu0 0.0
        %6382 = vmatprep.subr.mxu0 0.0
        %6383 = vmatpush1.msra.mxu0 0.0
        %6384 = vmatprep.subr.mxu0 0.0
        %6385 = vmatpush1.msra.mxu0 0.0
        %6386 = vmatprep.subr.mxu0 0.0
        %6387 = vmatpush1.msra.mxu0 0.0
        %6388 = vmatprep.subr.mxu0 0.0
        %6389 = vmatpush1.msra.mxu0 0.0
        %6390 = vmatprep.subr.mxu0 0.0
        %6391 = vmatpush1.msra.mxu0 0.0
        %6392 = vmatprep.subr.mxu0 0.0
        %6393 = vmatpush1.msra.mxu0 0.0
        %6394 = vmatprep.subr.mxu0 0.0
        %6395 = vmatpush1.msra.mxu0 0.0
        %6396 = vmatprep.subr.mxu0 0.0
        %6397 = vmatpush1.msra.mxu0 0.0
        %6398 = vmatprep.subr.mxu0 0.0
        %6399 = vmatpush1.msra.mxu0 0.0
        %6400 = vmatprep.subr.mxu0 0.0
        %6401 = vmatpush1.msra.mxu0 0.0
        %6402 = vmatprep.mubr.f32.mxu0 0.0
        %6403 = vmatmul.mubr.f32.gmra.mrb[0].mxu0 %v6124
        %v6404 = vpop.f32.mrb[0].mxu0
        %v6405 = vadd.f32 %v6335, %v6404
        %v6406 = vpop.f32.mrb[0].mxu0
        %6407 = vdwg.mxu0
        %v6408 = vmax.f32 %v6264, 0.0
        %v6409 = vmax.f32 %v6266, 0.0
        %v6410 = vmax.f32 %v6405, 0.0
        %v6411 = vmul.f32 %v6408, %v1084
        %v6412 = vmul.f32 %v6409, %v1088
        %v6413 = vmul.f32 %v6410, %v1092
        %6414 = vst [vmem:[#allocation2 + $0x60] sm:$0xf] %v6411
        %6415 = vst [vmem:[#allocation2 + $0x68] sm:$0xf] %v6412
        %6416 = vst.msk [vmem:[#allocation2 + $0x70] sm:$0xf] %vm687, %v6413
        %v6417 = vld [vmem:[#allocation7] sm:$0xf]
        %v6418 = vld [vmem:[#allocation2] sm:$0xff]
        %v6419 = vld [vmem:[#allocation2 + $0x8] sm:$0xff]
        %v6420 = vld [vmem:[#allocation2 + $0x10] sm:$0xff]
        %v6421 = vld [vmem:[#allocation2 + $0x18] sm:$0xff]
        %v6422 = vld [vmem:[#allocation2 + $0x20] sm:$0xff]
        %v6423 = vld [vmem:[#allocation2 + $0x28] sm:$0xff]
        %v6424 = vld [vmem:[#allocation2 + $0x30] sm:$0xff]
        %v6425 = vld [vmem:[#allocation2 + $0x38] sm:$0xff]
        %v6426 = vld [vmem:[#allocation2 + $0x40] sm:$0xff]
        %v6427 = vld [vmem:[#allocation2 + $0x48] sm:$0xff]
        %v6428 = vld [vmem:[#allocation2 + $0x50] sm:$0xff]
        %v6429 = vld [vmem:[#allocation2 + $0x58] sm:$0xff]
        %v6430 = vld [vmem:[#allocation2 + $0x60] sm:$0xf]
        %v6431 = vld [vmem:[#allocation2 + $0x68] sm:$0xf]
        %v6432 = vld [vmem:[#allocation2 + $0x70] sm:$0xf]
        %v6433 = vld [vmem:[%s3] sm:$0xf]
        %6435 = vset.pattern.permute.xlu0 0
        %6436 = vperm.xlu0 %6435, %v6433
        %v6437 = vpop.permute.xlu0 %6436
        %v6440 = vsel %vm922, %v6417, 0
        %v6443 = vsel %vm926, %v6430, 0
        %v6446 = vsel %vm926, %v6431, 0
        %v6449 = vsel %vm926, %v6432, 0
        %6451 = vmatprep.subr.mxu0 %v6419
        %6452 = vmatpush1.msra.mxu0 %v6418
        %6453 = vmatprep.subr.mxu0 %v6422
        %6454 = vmatpush1.msra.mxu0 %v6421
        %6455 = vmatprep.subr.mxu0 %v6425
        %6456 = vmatpush1.msra.mxu0 %v6424
        %6457 = vmatprep.subr.mxu0 %v6428
        %6458 = vmatpush1.msra.mxu0 %v6427
        %6459 = vmatprep.subr.mxu0 %v6446
        %6460 = vmatpush1.msra.mxu0 %v6443
        %6461 = vmatprep.subr.mxu0 0.0
        %6462 = vmatpush1.msra.mxu0 0.0
        %6463 = vmatprep.subr.mxu0 0.0
        %6464 = vmatpush1.msra.mxu0 0.0
        %6465 = vmatprep.subr.mxu0 0.0
        %6466 = vmatpush1.msra.mxu0 0.0
        %6467 = vmatprep.subr.mxu0 0.0
        %6468 = vmatpush1.msra.mxu0 0.0
        %6469 = vmatprep.subr.mxu0 0.0
        %6470 = vmatpush1.msra.mxu0 0.0
        %6471 = vmatprep.subr.mxu0 0.0
        %6472 = vmatpush1.msra.mxu0 0.0
        %6473 = vmatprep.subr.mxu0 0.0
        %6474 = vmatpush1.msra.mxu0 0.0
        %6475 = vmatprep.subr.mxu0 0.0
        %6476 = vmatpush1.msra.mxu0 0.0
        %6477 = vmatprep.subr.mxu0 0.0
        %6478 = vmatpush1.msra.mxu0 0.0
        %6479 = vmatprep.subr.mxu0 0.0
        %6480 = vmatpush1.msra.mxu0 0.0
        %6481 = vmatprep.subr.mxu0 0.0
        %6482 = vmatpush1.msra.mxu0 0.0
        %6483 = vmatprep.subr.mxu0 0.0
        %6484 = vmatpush1.msra.mxu0 0.0
        %6485 = vmatprep.subr.mxu0 0.0
        %6486 = vmatpush1.msra.mxu0 0.0
        %6487 = vmatprep.subr.mxu0 0.0
        %6488 = vmatpush1.msra.mxu0 0.0
        %6489 = vmatprep.subr.mxu0 0.0
        %6490 = vmatpush1.msra.mxu0 0.0
        %6491 = vmatprep.subr.mxu0 0.0
        %6492 = vmatpush1.msra.mxu0 0.0
        %6493 = vmatprep.subr.mxu0 0.0
        %6494 = vmatpush1.msra.mxu0 0.0
        %6495 = vmatprep.subr.mxu0 0.0
        %6496 = vmatpush1.msra.mxu0 0.0
        %6497 = vmatprep.subr.mxu0 0.0
        %6498 = vmatpush1.msra.mxu0 0.0
        %6499 = vmatprep.subr.mxu0 0.0
        %6500 = vmatpush1.msra.mxu0 0.0
        %6501 = vmatprep.subr.mxu0 0.0
        %6502 = vmatpush1.msra.mxu0 0.0
        %6503 = vmatprep.subr.mxu0 0.0
        %6504 = vmatpush1.msra.mxu0 0.0
        %6505 = vmatprep.subr.mxu0 0.0
        %6506 = vmatpush1.msra.mxu0 0.0
        %6507 = vmatprep.subr.mxu0 0.0
        %6508 = vmatpush1.msra.mxu0 0.0
        %6509 = vmatprep.subr.mxu0 0.0
        %6510 = vmatpush1.msra.mxu0 0.0
        %6511 = vmatprep.subr.mxu0 0.0
        %6512 = vmatpush1.msra.mxu0 0.0
        %6513 = vmatprep.subr.mxu0 0.0
        %6514 = vmatpush1.msra.mxu0 0.0
        %6515 = vmatprep.mubr.f32.mxu0 0.0
        %6516 = vmatmul.mubr.f32.gmra.mrb[0].mxu0 %v6440
        %v6517 = vpop.f32.mrb[0].mxu0
        %v6518 = vadd.f32 %v6437, %v6517
        %v6519 = vpop.f32.mrb[0].mxu0
        %v6520 = vadd.f32 %v6437, %v6519
        %6521 = vdwg.mxu0
        %6522 = vmatprep.subr.mxu0 0.0
        %6523 = vmatpush1.msra.mxu0 %v6420
        %6524 = vmatprep.subr.mxu0 0.0
        %6525 = vmatpush1.msra.mxu0 %v6423
        %6526 = vmatprep.subr.mxu0 0.0
        %6527 = vmatpush1.msra.mxu0 %v6426
        %6528 = vmatprep.subr.mxu0 0.0
        %6529 = vmatpush1.msra.mxu0 %v6429
        %6530 = vmatprep.subr.mxu0 0.0
        %6531 = vmatpush1.msra.mxu0 %v6449
        %6532 = vmatprep.subr.mxu0 0.0
        %6533 = vmatpush1.msra.mxu0 0.0
        %6534 = vmatprep.subr.mxu0 0.0
        %6535 = vmatpush1.msra.mxu0 0.0
        %6536 = vmatprep.subr.mxu0 0.0
        %6537 = vmatpush1.msra.mxu0 0.0
        %6538 = vmatprep.subr.mxu0 0.0
        %6539 = vmatpush1.msra.mxu0 0.0
        %6540 = vmatprep.subr.mxu0 0.0
        %6541 = vmatpush1.msra.mxu0 0.0
        %6542 = vmatprep.subr.mxu0 0.0
        %6543 = vmatpush1.msra.mxu0 0.0
        %6544 = vmatprep.subr.mxu0 0.0
        %6545 = vmatpush1.msra.mxu0 0.0
        %6546 = vmatprep.subr.mxu0 0.0
        %6547 = vmatpush1.msra.mxu0 0.0
        %6548 = vmatprep.subr.mxu0 0.0
        %6549 = vmatpush1.msra.mxu0 0.0
        %6550 = vmatprep.subr.mxu0 0.0
        %6551 = vmatpush1.msra.mxu0 0.0
        %6552 = vmatprep.subr.mxu0 0.0
        %6553 = vmatpush1.msra.mxu0 0.0
        %6554 = vmatprep.subr.mxu0 0.0
        %6555 = vmatpush1.msra.mxu0 0.0
        %6556 = vmatprep.subr.mxu0 0.0
        %6557 = vmatpush1.msra.mxu0 0.0
        %6558 = vmatprep.subr.mxu0 0.0
        %6559 = vmatpush1.msra.mxu0 0.0
        %6560 = vmatprep.subr.mxu0 0.0
        %6561 = vmatpush1.msra.mxu0 0.0
        %6562 = vmatprep.subr.mxu0 0.0
        %6563 = vmatpush1.msra.mxu0 0.0
        %6564 = vmatprep.subr.mxu0 0.0
        %6565 = vmatpush1.msra.mxu0 0.0
        %6566 = vmatprep.subr.mxu0 0.0
        %6567 = vmatpush1.msra.mxu0 0.0
        %6568 = vmatprep.subr.mxu0 0.0
        %6569 = vmatpush1.msra.mxu0 0.0
        %6570 = vmatprep.subr.mxu0 0.0
        %6571 = vmatpush1.msra.mxu0 0.0
        %6572 = vmatprep.subr.mxu0 0.0
        %6573 = vmatpush1.msra.mxu0 0.0
        %6574 = vmatprep.subr.mxu0 0.0
        %6575 = vmatpush1.msra.mxu0 0.0
        %6576 = vmatprep.subr.mxu0 0.0
        %6577 = vmatpush1.msra.mxu0 0.0
        %6578 = vmatprep.subr.mxu0 0.0
        %6579 = vmatpush1.msra.mxu0 0.0
        %6580 = vmatprep.subr.mxu0 0.0
        %6581 = vmatpush1.msra.mxu0 0.0
        %6582 = vmatprep.subr.mxu0 0.0
        %6583 = vmatpush1.msra.mxu0 0.0
        %6584 = vmatprep.subr.mxu0 0.0
        %6585 = vmatpush1.msra.mxu0 0.0
        %6586 = vmatprep.mubr.f32.mxu0 0.0
        %6587 = vmatmul.mubr.f32.gmra.mrb[0].mxu0 %v6440
        %v6588 = vpop.f32.mrb[0].mxu0
        %v6589 = vadd.f32 %v6437, %v6588
        %v6590 = vpop.f32.mrb[0].mxu0
        %6591 = vdwg.mxu0
        %v6592 = vld [vmem:[#allocation2] sm:$0xf]
        %v6593 = vld [vmem:[#allocation2 + $0x8] sm:$0xf]
        %v6594 = vld [vmem:[#allocation2 + $0x10] sm:$0xf]
        %v6595 = vadd.f32 %v6518, %v6592
        %v6596 = vadd.f32 %v6520, %v6593
        %v6597 = vadd.f32 %v6589, %v6594
        %6598 = vst [vmem:[#allocation3] sm:$0xf] %v6595
        %6599 = vst [vmem:[#allocation3 + $0x8] sm:$0xf] %v6596
        %6600 = vst.msk [vmem:[#allocation3 + $0x10] sm:$0xf] %vm687, %v6597
        %v6601 = vld [vmem:[#allocation3] sm:$0xf]
        %6603 = vrot.lane.b32.xlu0 %v6601, 109
        %v6604 = vpop.permute.xlu0 %6603
        %vm6606 = vcmask 125952
        %6607 = vst.msk [vmem:[%s673] sm:$0xf] %vm6606, %v6604
        %v6608 = vld [vmem:[#allocation3] sm:$0xf]
        %6610 = vrot.lane.b32.xlu0 %v6608, 107
        %v6611 = vpop.permute.xlu0 %6610
        %vm6613 = vcmask 257152
        %6614 = vst.msk [vmem:[%s673] sm:$0xf] %vm6613, %v6611
        %v6615 = vld [vmem:[#allocation3] sm:$0xf]
        %6617 = vrot.lane.b32.xlu0 %v6615, 105
        %v6618 = vpop.permute.xlu0 %6617
        %vm6620 = vcmask 388352
        %6621 = vst.msk [vmem:[%s673] sm:$0xf] %vm6620, %v6618
        %v6622 = vld [vmem:[#allocation3] sm:$0xf]
        %6624 = vrot.lane.b32.xlu0 %v6622, 103
        %v6625 = vpop.permute.xlu0 %6624
        %vm6627 = vcmask 519552
        %6628 = vst.msk [vmem:[%s673] sm:$0xf] %vm6627, %v6625
        %v6629 = vld [vmem:[#allocation3] sm:$0xf]
        %6631 = vrot.lane.b32.xlu0 %v6629, 101
        %v6632 = vpop.permute.xlu0 %6631
        %vm6634 = vcmask 650752
        %6635 = vst.msk [vmem:[%s673] sm:$0xf] %vm6634, %v6632
        %v6636 = vld [vmem:[#allocation3] sm:$0xf]
        %6638 = vrot.lane.b32.xlu0 %v6636, 99
        %v6639 = vpop.permute.xlu0 %6638
        %vm6641 = vcmask 781952
        %6642 = vst.msk [vmem:[%s673] sm:$0xf] %vm6641, %v6639
        %v6643 = vld [vmem:[#allocation3] sm:$0xf]
        %v6644 = vld [vmem:[#allocation3 + $0x8] sm:$0xf]
        %v6647 = vcombine.low %v6643, %v6644
        %6648 = vrot.lane.b32.xlu0 %v6647, 97
        %v6649 = vpop.permute.xlu0 %6648
        %v6650 = vrot.slane %v6649, 4
        %vm6651 = vcmask 793600
        %v6652 = vsel %vm6651, %v6649, %v6650
        %vm6654 = vcmask 913152
        %6655 = vst.msk [vmem:[%s673] sm:$0xf] %vm6654, %v6652
        %v6656 = vld [vmem:[#allocation3 + $0x8] sm:$0xf]
        %6658 = vrot.lane.b32.xlu0 %v6656, 95
        %v6659 = vpop.permute.xlu0 %6658
        %vm6661 = vcmask 1044352
        %6662 = vst.msk [vmem:[%s673] sm:$0xf] %vm6661, %v6659
        %v6663 = vld [vmem:[#allocation3 + $0x8] sm:$0xf]
        %6665 = vrot.lane.b32.xlu0 %v6663, 93
        %v6666 = vpop.permute.xlu0 %6665
        %6668 = vst.msk [vmem:[%s673 + $0x4] sm:$0xf] %vm6606, %v6666
        %v6669 = vld [vmem:[#allocation3 + $0x8] sm:$0xf]
        %6671 = vrot.lane.b32.xlu0 %v6669, 91
        %v6672 = vpop.permute.xlu0 %6671
        %6674 = vst.msk [vmem:[%s673 + $0x4] sm:$0xf] %vm6613, %v6672
        %v6675 = vld [vmem:[#allocation3 + $0x8] sm:$0xf]
        %6677 = vrot.lane.b32.xlu0 %v6675, 89
        %v6678 = vpop.permute.xlu0 %6677
        %6680 = vst.msk [vmem:[%s673 + $0x4] sm:$0xf] %vm6620, %v6678
        %v6681 = vld [vmem:[#allocation3 + $0x8] sm:$0xf]
        %6683 = vrot.lane.b32.xlu0 %v6681, 87
        %v6684 = vpop.permute.xlu0 %6683
        %6686 = vst.msk [vmem:[%s673 + $0x4] sm:$0xf] %vm6627, %v6684
        %v6687 = vld [vmem:[#allocation3 + $0x8] sm:$0xf]
        %6689 = vrot.lane.b32.xlu0 %v6687, 85
        %v6690 = vpop.permute.xlu0 %6689
        %6692 = vst.msk [vmem:[%s673 + $0x4] sm:$0xf] %vm6634, %v6690
        %v6693 = vld [vmem:[#allocation3 + $0x8] sm:$0xf]
        %v6694 = vld [vmem:[#allocation3 + $0x10] sm:$0xf]
        %v6697 = vcombine.low %v6693, %v6694
        %6698 = vrot.lane.b32.xlu0 %v6697, 83
        %v6699 = vpop.permute.xlu0 %6698
        %v6700 = vrot.slane %v6699, 4
        %vm6701 = vcmask 678912
        %v6702 = vsel %vm6701, %v6699, %v6700
        %6704 = vst.msk [vmem:[%s673 + $0x4] sm:$0xf] %vm6641, %v6702
        %v6705 = vld [vmem:[#allocation3 + $0x10] sm:$0xf]
        %6707 = vrot.lane.b32.xlu0 %v6705, 81
        %v6708 = vpop.permute.xlu0 %6707
        %6710 = vst.msk [vmem:[%s673 + $0x4] sm:$0xf] %vm6654, %v6708
        %v6711 = vld [vmem:[#allocation3 + $0x10] sm:$0xf]
        %6713 = vrot.lane.b32.xlu0 %v6711, 79
        %v6714 = vpop.permute.xlu0 %6713
        %6716 = vst.msk [vmem:[%s673 + $0x4] sm:$0xf] %vm6661, %v6714
        %s6717 = sand.u32 %s470, 1
        %s6718 = scalar_lea.sflag [#allocation6], %s6717
        %s6719 = sand.u32 %s470, 1
        %s6720 = smul.addr %s6719, 8
        %s6721 = scalar_lea.vmem [#allocation12], %s6720
        // Predicated region
        $region117: #{tpu_custom_call.1} parent=99 // pred_check
          %p6722 = pneg %p480
        $region118: #{tpu_custom_call.1} parent=99 // pred_check_branch
          %6724 = sbr.rel (%p6722) target = $region120
        $region119: #{tpu_custom_call.1} parent=99 // pred_region
          %s6726 = ssub.s32 128, 128
          %6727 = vsyncadd %s6718, %s6726
          %s6728 = smul.addr %s37, 2
          %s6729 = smul.addr %s6728, 64
          %s6730 = scalar_lea.hbm %s20, %s6729
          %s6732 = sshll.u32 %s6721, 4
          %s6733 = int_to_ptr.vmem [resolvable:$true] %s6732
          %6735 = dma.vmem_to_hbm [thread:$0]  %s6733, 128, %s6730, %s6718
        $region120: #{tpu_custom_call.1} parent=99 // pred_fallthru
          _
      $region100: #{tpu_custom_call.1} parent=5 // pred_fallthru
        _
      %p6736 = scmp.le.s32.totalorder 2, %s32
      // Predicated region
      $region121: #{tpu_custom_call.1} parent=5 // pred_check
        %p6737 = pneg %p6736
      $region122: #{tpu_custom_call.1} parent=5 // pred_check_branch
        %6739 = sbr.rel (%p6737) target = $region124
      $region123: #{tpu_custom_call.1} parent=5 // pred_region
        %s6740 = ssub.s32 %s32, 2
        // Predicated region
        $region125: #{tpu_custom_call.1} parent=123 // pred_check
          %p6741 = pneg %p486
        $region126: #{tpu_custom_call.1} parent=123 // pred_check_branch
          %6743 = sbr.rel (%p6741) target = $region128
        $region127: #{tpu_custom_call.1} parent=123 // pred_region
          %s6744 = sand.u32 %s471, 1
          %s6745 = scalar_lea.sflag [#allocation6], %s6744
          %s6746 = sand.u32 %s471, 1
          %s6747 = smul.addr %s6746, 8
          %s6748 = scalar_lea.vmem [#allocation12], %s6747
          %6749 = dma.done %s6745, 128
        $region128: #{tpu_custom_call.1} parent=123 // pred_fallthru
          _
      $region124: #{tpu_custom_call.1} parent=5 // pred_fallthru
        _
    $region6: #{tpu_custom_call.1} parent=1 // loop_footer
      %s36 = sadd.s32 1, %s32
    $region7: #{tpu_custom_call.1} parent=1 // loop_footer_branch
      %31 = sbr.rel target = $region3
    $region8: #{tpu_custom_call.1} parent=1 // loop_exit
      _
    %6750 = vsyncpa [#allocation5], 1
    %s6751 = scalar_lea.sflag [#allocation5], 1
    %6752 = vsyncpa %s6751, 1
    %6753 = vsyncpa [#allocation8], 1
    %6754 = vsyncpa [#allocation11], 1
    %6755 = vsyncpa [#allocation6], 1
    %s6756 = scalar_lea.sflag [#allocation6], 1
    %6757 = vsyncpa %s6756, 1

</llo_original>
